<compile_context>
chip_gen: v5e
topology: v5e:2x2
jax: 0.10.0
libtpu: 0.0.40
codegen_flags: <defaults>
</compile_context>

<pallas_src>
import functools

import jax
import jax.numpy as jnp
import numpy as np
from jax.experimental import pallas as pl
from jax.experimental.pallas import tpu as pltpu

EPS = 1e-5
LANE = 128                                    # TPU lane width; all channel axes padded to this
_VMEM = pl.BlockSpec(memory_space=pltpu.MemorySpace.VMEM)


# ---------------------------------------------------------------- kernel ----
def _bn(h, gamma, beta):
    """Training-mode BatchNorm over axis 0 (single read: E[x^2]-E[x]^2), folded affine."""
    mean = jnp.mean(h, axis=0, keepdims=True)
    mean_sq = jnp.mean(h * h, axis=0, keepdims=True)
    var = mean_sq - mean * mean
    scale = gamma * jax.lax.rsqrt(var + EPS)      # padded lanes: gamma=0 -> scale=0 (finite)
    shift = beta - mean * scale
    return h * scale + shift


def _bottleneck_kernel(x_ref, w1_ref, w2_ref, w3_ref,
                       g1_ref, b1_ref, g2_ref, b2_ref, g3_ref, b3_ref,
                       o_ref, h1buf_ref, *, n, h, w, guard):
    nhw = n * h * w
    x = x_ref[...]                                             # (NHW, 128) f32 (identity too)

    # ---- conv1 (1x1) + BN1 + ReLU -------------------------------------------
    h1 = jnp.dot(x, w1_ref[...].astype(jnp.float32),
                 preferred_element_type=jnp.float32)
    h1 = jnp.maximum(_bn(h1, g1_ref[...], b1_ref[...]), 0.0)

    # Stage h1 into a guard-padded VMEM row buffer so every 3x3 tap is a
    # contiguous shifted pl.ds load (guard rows are zero; aligned store).
    h1buf_ref[...] = jnp.zeros_like(h1buf_ref)
    h1buf_ref[pl.ds(guard, nhw), :] = h1

    # Per-row spatial indices for the boundary masks (no div needed).
    row = jax.lax.broadcasted_iota(jnp.int32, (nhw, 1), 0)
    hw = h * w
    if (w & (w - 1)) == 0 and (hw & (hw - 1)) == 0:            # power-of-two fast path
        col = row & (w - 1)                                    # w position within the row
        rip = row & (hw - 1)                                   # flat position within the image
    else:
        col = row % w
        rip = row % hw

    # ---- conv2 (3x3, stride=1, pad=1) as 9 shifted + masked matmuls ---------
    # Row r of the flattened image is pixel (n, y, x); neighbour (y+dy, x+dx)
    # lives at row r + dy*W + dx of the same image (masked at image borders).
    acc = jnp.zeros((nhw, LANE), jnp.float32)
    for kh in range(3):
        for kw in range(3):
            dy, dx = kh - 1, kw - 1
            delta = dy * w + dx
            tap = h1buf_ref[pl.ds(guard + delta, nhw), :]      # shifted (NHW, 128) view
            if (dy, dx) != (0, 0):
                ok_w = (col + dx >= 0) & (col + dx < w)
                ok_h = (rip + dy * w >= 0) & (rip + dy * w < hw)
                tap = jnp.where(ok_w & ok_h, tap, 0.0)
            acc = acc + jnp.dot(tap, w2_ref[kh * 3 + kw].astype(jnp.float32),
                                preferred_element_type=jnp.float32)
    h2 = jnp.maximum(_bn(acc, g2_ref[...], b2_ref[...]), 0.0)

    # ---- conv3 (1x1) + BN3 + residual add + ReLU ----------------------------
    h3 = jnp.dot(h2, w3_ref[...].astype(jnp.float32),
                 preferred_element_type=jnp.float32)
    h3 = _bn(h3, g3_ref[...], b3_ref[...])
    o_ref[...] = jnp.maximum(h3 + x, 0.0)                      # downsample=None -> identity = x


# ---------------------------------------------------------------- wrapper ---
def resnet_bottleneck_forward(x_nchw, params):
    N, Cin, H, W = x_nchw.shape
    NHW = N * H * W
    # NCHW -> NHWC -> (NHW, Cin), zero-pad channels to the 128-lane width.
    # (At real sizes keep the model NHWC end-to-end; this is a one-off layout
    #  fix for the PyTorch NCHW interface at toy scale.)
    x2d = jnp.transpose(x_nchw, (0, 2, 3, 1)).reshape(NHW, Cin)
    xp = jnp.pad(x2d, ((0, 0), (0, LANE - Cin)))

    guard = ((W + 1 + 7) // 8) * 8                 # sublane-aligned halo >= max row shift (W+1)
    kernel = functools.partial(_bottleneck_kernel, n=N, h=H, w=W, guard=guard)

    out = pl.pallas_call(
        kernel,
        out_shape=jax.ShapeDtypeStruct((NHW, LANE), jnp.float32),
        in_specs=[_VMEM] * 10,
        out_specs=_VMEM,
        scratch_shapes=[pltpu.VMEM((NHW + 2 * guard, LANE), jnp.float32)],
        compiler_params=pltpu.CompilerParams(vmem_limit_bytes=32 * 1024 * 1024),
    )(xp, params["w1p"], params["w2p"], params["w3p"],
      params["g1p"], params["b1p"], params["g2p"], params["b2p"],
      params["g3p"], params["b3p"])

    # (NHW, 128) -> valid channels -> NHWC -> NCHW
    out = out[:, :Cin].reshape(N, H, W, Cin)
    return jnp.transpose(out, (0, 3, 1, 2))


# ------------------------------------------------------------- parameters ---
def init_params(key, in_planes=16, planes=4):
    expansion = 4
    out_planes = expansion * planes
    assert in_planes == out_planes                 # identity residual (no downsample, stride=1)
    assert max(in_planes, out_planes, planes) <= LANE
    ks = jax.random.split(key, 9)
    # kaiming-normal (fan_out, relu) std, as in the PyTorch __init__
    std1 = (2.0 / (planes * 1 * 1)) ** 0.5
    std2 = (2.0 / (planes * 3 * 3)) ** 0.5
    std3 = (2.0 / (out_planes * 1 * 1)) ** 0.5

    def bf16_round(a):
        # weights live in HBM as bf16; round once so kernel & f32 reference use identical values
        return a.astype(jnp.bfloat16).astype(jnp.float32)

    # torch-layout (O, I, kh, kw) weights
    w1_t = bf16_round(jax.random.normal(ks[0], (planes, in_planes, 1, 1), jnp.float32) * std1)
    w2_t = bf16_round(jax.random.normal(ks[1], (planes, planes, 3, 3), jnp.float32) * std2)
    w3_t = bf16_round(jax.random.normal(ks[2], (out_planes, planes, 1, 1), jnp.float32) * std3)
    # BN affine params (random, non-zero -> non-trivial path; see header note)
    g1 = jax.random.uniform(ks[3], (planes,), jnp.float32, 0.5, 1.5)
    b1 = 0.1 * jax.random.normal(ks[4], (planes,), jnp.float32)
    g2 = jax.random.uniform(ks[5], (planes,), jnp.float32, 0.5, 1.5)
    b2 = 0.1 * jax.random.normal(ks[6], (planes,), jnp.float32)
    g3 = jax.random.uniform(ks[7], (out_planes,), jnp.float32, 0.5, 1.5)
    b3 = 0.1 * jax.random.normal(ks[8], (out_planes,), jnp.float32)

    # ----- lane-dense (zero-padded to 128), kernel-layout parameters ----------
    def pad_vec(v):
        return jnp.zeros((1, LANE), jnp.float32).at[0, :v.shape[0]].set(v)

    w1p = jnp.zeros((LANE, LANE), jnp.float32).at[:in_planes, :planes].set(
        jnp.transpose(w1_t[:, :, 0, 0], (1, 0)))
    w3p = jnp.zeros((LANE, LANE), jnp.float32).at[:planes, :out_planes].set(
        jnp.transpose(w3_t[:, :, 0, 0], (1, 0)))
    w2p = jnp.zeros((9, LANE, LANE), jnp.float32)
    for kh in range(3):
        for kw in range(3):
            w2p = w2p.at[kh * 3 + kw, :planes, :planes].set(
                jnp.transpose(w2_t[:, :, kh, kw], (1, 0)))

    return {
        # kernel-side parameters (weights as bf16 to halve HBM traffic)
        "w1p": w1p.astype(jnp.bfloat16),
        "w2p": w2p.astype(jnp.bfloat16),
        "w3p": w3p.astype(jnp.bfloat16),
        "g1p": pad_vec(g1), "b1p": pad_vec(b1),
        "g2p": pad_vec(g2), "b2p": pad_vec(b2),
        "g3p": pad_vec(g3), "b3p": pad_vec(b3),
        # torch-layout weights / raw BN params for the pure-JAX reference
        "w1_t": w1_t, "w2_t": w2_t, "w3_t": w3_t,
        "g1": g1, "b1": b1, "g2": g2, "b2": b2, "g3": g3, "b3": b3,
    }


# ----------------------------------------------------- pure-JAX reference ---
def reference_forward(x_nchw, params):
    def conv(x, w, stride=1, pad=0):
        return jax.lax.conv_general_dilated(
            x, w, (stride, stride), [(pad, pad), (pad, pad)],
            dimension_numbers=("NCHW", "OIHW", "NCHW"))

    def bn(x, g, b):
        mean = jnp.mean(x, axis=(0, 2, 3), keepdims=True)
        var = jnp.mean((x - mean) ** 2, axis=(0, 2, 3), keepdims=True)
        xh = (x - mean) * jax.lax.rsqrt(var + EPS)
        return xh * g.reshape(1, -1, 1, 1) + b.reshape(1, -1, 1, 1)

    relu = lambda t: jnp.maximum(t, 0.0)
    out = relu(bn(conv(x_nchw, params["w1_t"]), params["g1"], params["b1"]))
    out = relu(bn(conv(out, params["w2_t"], stride=1, pad=1), params["g2"], params["b2"]))
    out = bn(conv(out, params["w3_t"]), params["g3"], params["b3"])
    return relu(out + x_nchw)


# -------------------------------------------------------------------- main --
if __name__ == "__main__":
    key = jax.random.PRNGKey(0)
    k_x, k_p = jax.random.split(key)

    N, in_planes, planes, H, W = 2, 16, 4, 16, 16   # in_planes == 4*planes (no downsample)
    x = jax.random.normal(k_x, (N, in_planes, H, W), jnp.float32)
    params = init_params(k_p, in_planes=in_planes, planes=planes)

    out = jax.block_until_ready(resnet_bottleneck_forward(x, params))
    ref = jax.block_until_ready(reference_forward(x, params))
    np.testing.assert_allclose(np.asarray(out), np.asarray(ref), rtol=1e-4, atol=1e-4)

    assert out.shape == (N, 4 * planes, H, W)
    print("KERNEL_OK")
</pallas_src>

<mosaic_0001>
module attributes {stable_mosaic.version = 11 : i64} {
  func.func @_bottleneck_kernel(%arg0: memref<512x128xf32, #tpu.memory_space<vmem>>, %arg1: memref<128x128xbf16, #tpu.memory_space<vmem>>, %arg2: memref<9x128x128xbf16, #tpu.memory_space<vmem>>, %arg3: memref<128x128xbf16, #tpu.memory_space<vmem>>, %arg4: memref<1x128xf32, #tpu.memory_space<vmem>>, %arg5: memref<1x128xf32, #tpu.memory_space<vmem>>, %arg6: memref<1x128xf32, #tpu.memory_space<vmem>>, %arg7: memref<1x128xf32, #tpu.memory_space<vmem>>, %arg8: memref<1x128xf32, #tpu.memory_space<vmem>>, %arg9: memref<1x128xf32, #tpu.memory_space<vmem>>, %arg10: memref<512x128xf32, #tpu.memory_space<vmem>>, %arg11: memref<560x128xf32, #tpu.memory_space<vmem>>) attributes {dimension_semantics = [], scalar_prefetch = 0 : i64, scratch_operands = 1 : i64, tpu.core_type = #tpu.core_type<tc>} {
    %c0 = arith.constant 0 : index
    %c0_0 = arith.constant 0 : index
    %0 = vector.load %arg0[%c0, %c0_0] : memref<512x128xf32, #tpu.memory_space<vmem>>, vector<512x128xf32>
    %c0_1 = arith.constant 0 : index
    %c0_2 = arith.constant 0 : index
    %1 = vector.load %arg1[%c0_1, %c0_2] : memref<128x128xbf16, #tpu.memory_space<vmem>>, vector<128x128xbf16>
    %2 = arith.extf %1 : vector<128x128xbf16> to vector<128x128xf32>
    %cst = arith.constant dense<0.000000e+00> : vector<512x128xf32>
    %3 = tpu.matmul %0, %2, %cst {dimension_numbers = #tpu.dot_dimension_numbers<[1], [0], [0], [1], [0, 0, 1, 1], [], []>} : vector<512x128xf32>, vector<128x128xf32>, vector<512x128xf32> -> vector<512x128xf32>
    %c0_3 = arith.constant 0 : index
    %c0_4 = arith.constant 0 : index
    %4 = vector.load %arg4[%c0_3, %c0_4] : memref<1x128xf32, #tpu.memory_space<vmem>>, vector<1x128xf32>
    %c0_5 = arith.constant 0 : index
    %c0_6 = arith.constant 0 : index
    %5 = vector.load %arg5[%c0_5, %c0_6] : memref<1x128xf32, #tpu.memory_space<vmem>>, vector<1x128xf32>
    %cst_7 = arith.constant dense<0.000000e+00> : vector<128xf32>
    %6 = vector.multi_reduction <add>, %3, %cst_7 [0] : vector<512x128xf32> to vector<128xf32>
    %7 = vector.shape_cast %6 : vector<128xf32> to vector<1x128xf32>
    %cst_8 = arith.constant 5.120000e+02 : f32
    %8 = vector.broadcast %cst_8 : f32 to vector<1x128xf32>
    %9 = arith.divf %7, %8 : vector<1x128xf32>
    %10 = arith.mulf %3, %3 : vector<512x128xf32>
    %cst_9 = arith.constant dense<0.000000e+00> : vector<128xf32>
    %11 = vector.multi_reduction <add>, %10, %cst_9 [0] : vector<512x128xf32> to vector<128xf32>
    %12 = vector.shape_cast %11 : vector<128xf32> to vector<1x128xf32>
    %cst_10 = arith.constant 5.120000e+02 : f32
    %13 = vector.broadcast %cst_10 : f32 to vector<1x128xf32>
    %14 = arith.divf %12, %13 : vector<1x128xf32>
    %15 = arith.mulf %9, %9 : vector<1x128xf32>
    %16 = arith.subf %14, %15 : vector<1x128xf32>
    %cst_11 = arith.constant 9.99999974E-6 : f32
    %17 = vector.broadcast %cst_11 : f32 to vector<1x128xf32>
    %18 = arith.addf %16, %17 : vector<1x128xf32>
    %19 = math.rsqrt %18 : vector<1x128xf32>
    %20 = arith.mulf %4, %19 : vector<1x128xf32>
    %21 = arith.mulf %9, %20 : vector<1x128xf32>
    %22 = arith.subf %5, %21 : vector<1x128xf32>
    %23 = vector.broadcast %20 : vector<1x128xf32> to vector<512x128xf32>
    %24 = arith.mulf %3, %23 : vector<512x128xf32>
    %25 = vector.broadcast %22 : vector<1x128xf32> to vector<512x128xf32>
    %26 = arith.addf %24, %25 : vector<512x128xf32>
    %cst_12 = arith.constant 0.000000e+00 : f32
    %27 = vector.broadcast %cst_12 : f32 to vector<512x128xf32>
    %28 = arith.maximumf %26, %27 : vector<512x128xf32>
    %cst_13 = arith.constant 0.000000e+00 : f32
    %29 = vector.broadcast %cst_13 : f32 to vector<560x128xf32>
    %c0_14 = arith.constant 0 : index
    %c0_15 = arith.constant 0 : index
    %30 = vector.load %arg11[%c0_14, %c0_15] : memref<560x128xf32, #tpu.memory_space<vmem>>, vector<560x128xf32>
    tpu.vector_store %arg11[%c0_14, %c0_15], %29 {strides = array<i32>} : memref<560x128xf32, #tpu.memory_space<vmem>>, vector<560x128xf32>,
    %c24 = arith.constant 24 : index
    %c0_16 = arith.constant 0 : index
    %31 = vector.load %arg11[%c24, %c0_16] : memref<560x128xf32, #tpu.memory_space<vmem>>, vector<512x128xf32>
    tpu.vector_store %arg11[%c24, %c0_16], %28 {strides = array<i32>} : memref<560x128xf32, #tpu.memory_space<vmem>>, vector<512x128xf32>,
    %32 = tpu.iota {dimensions = array<i32: 0>} : vector<512x1xi32>
    %c15_i32 = arith.constant 15 : i32
    %33 = vector.broadcast %c15_i32 : i32 to vector<512x1xi32>
    %34 = arith.andi %32, %33 : vector<512x1xi32>
    %c255_i32 = arith.constant 255 : i32
    %35 = vector.broadcast %c255_i32 : i32 to vector<512x1xi32>
    %36 = arith.andi %32, %35 : vector<512x1xi32>
    %cst_17 = arith.constant 0.000000e+00 : f32
    %37 = vector.broadcast %cst_17 : f32 to vector<512x128xf32>
    %c7 = arith.constant 7 : index
    %c0_18 = arith.constant 0 : index
    %38 = vector.load %arg11[%c7, %c0_18] : memref<560x128xf32, #tpu.memory_space<vmem>>, vector<512x128xf32>
    %c-1_i32 = arith.constant -1 : i32
    %39 = vector.broadcast %c-1_i32 : i32 to vector<512x1xi32>
    %40 = arith.addi %34, %39 : vector<512x1xi32>
    %c0_i32 = arith.constant 0 : i32
    %41 = vector.broadcast %c0_i32 : i32 to vector<512x1xi32>
    %42 = arith.cmpi sge, %40, %41 : vector<512x1xi32>
    %c-1_i32_19 = arith.constant -1 : i32
    %43 = vector.broadcast %c-1_i32_19 : i32 to vector<512x1xi32>
    %44 = arith.addi %34, %43 : vector<512x1xi32>
    %c16_i32 = arith.constant 16 : i32
    %45 = vector.broadcast %c16_i32 : i32 to vector<512x1xi32>
    %46 = arith.cmpi slt, %44, %45 : vector<512x1xi32>
    %47 = arith.andi %42, %46 : vector<512x1xi1>
    %c-16_i32 = arith.constant -16 : i32
    %48 = vector.broadcast %c-16_i32 : i32 to vector<512x1xi32>
    %49 = arith.addi %36, %48 : vector<512x1xi32>
    %c0_i32_20 = arith.constant 0 : i32
    %50 = vector.broadcast %c0_i32_20 : i32 to vector<512x1xi32>
    %51 = arith.cmpi sge, %49, %50 : vector<512x1xi32>
    %c-16_i32_21 = arith.constant -16 : i32
    %52 = vector.broadcast %c-16_i32_21 : i32 to vector<512x1xi32>
    %53 = arith.addi %36, %52 : vector<512x1xi32>
    %c256_i32 = arith.constant 256 : i32
    %54 = vector.broadcast %c256_i32 : i32 to vector<512x1xi32>
    %55 = arith.cmpi slt, %53, %54 : vector<512x1xi32>
    %56 = arith.andi %51, %55 : vector<512x1xi1>
    %57 = arith.andi %47, %56 : vector<512x1xi1>
    %cst_22 = arith.constant 0.000000e+00 : f32
    %58 = vector.shape_cast %57 : vector<512x1xi1> to vector<512x1xi1>
    %59 = vector.broadcast %58 : vector<512x1xi1> to vector<512x128xi1>
    %60 = vector.broadcast %cst_22 : f32 to vector<512x128xf32>
    %61 = arith.select %59, %38, %60 : vector<512x128xi1>, vector<512x128xf32>
    %c0_23 = arith.constant 0 : index
    %c0_24 = arith.constant 0 : index
    %c0_25 = arith.constant 0 : index
    %62 = vector.load %arg2[%c0_23, %c0_24, %c0_25] : memref<9x128x128xbf16, #tpu.memory_space<vmem>>, vector<1x128x128xbf16>
    %63 = vector.shape_cast %62 : vector<1x128x128xbf16> to vector<128x128xbf16>
    %64 = arith.extf %63 : vector<128x128xbf16> to vector<128x128xf32>
    %cst_26 = arith.constant dense<0.000000e+00> : vector<512x128xf32>
    %65 = tpu.matmul %61, %64, %cst_26 {dimension_numbers = #tpu.dot_dimension_numbers<[1], [0], [0], [1], [0, 0, 1, 1], [], []>} : vector<512x128xf32>, vector<128x128xf32>, vector<512x128xf32> -> vector<512x128xf32>
    %66 = arith.addf %37, %65 : vector<512x128xf32>
    %c8 = arith.constant 8 : index
    %c0_27 = arith.constant 0 : index
    %67 = vector.load %arg11[%c8, %c0_27] : memref<560x128xf32, #tpu.memory_space<vmem>>, vector<512x128xf32>
    %c0_i32_28 = arith.constant 0 : i32
    %68 = vector.broadcast %c0_i32_28 : i32 to vector<512x1xi32>
    %69 = arith.addi %34, %68 : vector<512x1xi32>
    %c0_i32_29 = arith.constant 0 : i32
    %70 = vector.broadcast %c0_i32_29 : i32 to vector<512x1xi32>
    %71 = arith.cmpi sge, %69, %70 : vector<512x1xi32>
    %c0_i32_30 = arith.constant 0 : i32
    %72 = vector.broadcast %c0_i32_30 : i32 to vector<512x1xi32>
    %73 = arith.addi %34, %72 : vector<512x1xi32>
    %c16_i32_31 = arith.constant 16 : i32
    %74 = vector.broadcast %c16_i32_31 : i32 to vector<512x1xi32>
    %75 = arith.cmpi slt, %73, %74 : vector<512x1xi32>
    %76 = arith.andi %71, %75 : vector<512x1xi1>
    %c-16_i32_32 = arith.constant -16 : i32
    %77 = vector.broadcast %c-16_i32_32 : i32 to vector<512x1xi32>
    %78 = arith.addi %36, %77 : vector<512x1xi32>
    %c0_i32_33 = arith.constant 0 : i32
    %79 = vector.broadcast %c0_i32_33 : i32 to vector<512x1xi32>
    %80 = arith.cmpi sge, %78, %79 : vector<512x1xi32>
    %c-16_i32_34 = arith.constant -16 : i32
    %81 = vector.broadcast %c-16_i32_34 : i32 to vector<512x1xi32>
    %82 = arith.addi %36, %81 : vector<512x1xi32>
    %c256_i32_35 = arith.constant 256 : i32
    %83 = vector.broadcast %c256_i32_35 : i32 to vector<512x1xi32>
    %84 = arith.cmpi slt, %82, %83 : vector<512x1xi32>
    %85 = arith.andi %80, %84 : vector<512x1xi1>
    %86 = arith.andi %76, %85 : vector<512x1xi1>
    %cst_36 = arith.constant 0.000000e+00 : f32
    %87 = vector.shape_cast %86 : vector<512x1xi1> to vector<512x1xi1>
    %88 = vector.broadcast %87 : vector<512x1xi1> to vector<512x128xi1>
    %89 = vector.broadcast %cst_36 : f32 to vector<512x128xf32>
    %90 = arith.select %88, %67, %89 : vector<512x128xi1>, vector<512x128xf32>
    %c1 = arith.constant 1 : index
    %c0_37 = arith.constant 0 : index
    %c0_38 = arith.constant 0 : index
    %91 = vector.load %arg2[%c1, %c0_37, %c0_38] : memref<9x128x128xbf16, #tpu.memory_space<vmem>>, vector<1x128x128xbf16>
    %92 = vector.shape_cast %91 : vector<1x128x128xbf16> to vector<128x128xbf16>
    %93 = arith.extf %92 : vector<128x128xbf16> to vector<128x128xf32>
    %cst_39 = arith.constant dense<0.000000e+00> : vector<512x128xf32>
    %94 = tpu.matmul %90, %93, %cst_39 {dimension_numbers = #tpu.dot_dimension_numbers<[1], [0], [0], [1], [0, 0, 1, 1], [], []>} : vector<512x128xf32>, vector<128x128xf32>, vector<512x128xf32> -> vector<512x128xf32>
    %95 = arith.addf %66, %94 : vector<512x128xf32>
    %c9 = arith.constant 9 : index
    %c0_40 = arith.constant 0 : index
    %96 = vector.load %arg11[%c9, %c0_40] : memref<560x128xf32, #tpu.memory_space<vmem>>, vector<512x128xf32>
    %c1_i32 = arith.constant 1 : i32
    %97 = vector.broadcast %c1_i32 : i32 to vector<512x1xi32>
    %98 = arith.addi %34, %97 : vector<512x1xi32>
    %c0_i32_41 = arith.constant 0 : i32
    %99 = vector.broadcast %c0_i32_41 : i32 to vector<512x1xi32>
    %100 = arith.cmpi sge, %98, %99 : vector<512x1xi32>
    %c1_i32_42 = arith.constant 1 : i32
    %101 = vector.broadcast %c1_i32_42 : i32 to vector<512x1xi32>
    %102 = arith.addi %34, %101 : vector<512x1xi32>
    %c16_i32_43 = arith.constant 16 : i32
    %103 = vector.broadcast %c16_i32_43 : i32 to vector<512x1xi32>
    %104 = arith.cmpi slt, %102, %103 : vector<512x1xi32>
    %105 = arith.andi %100, %104 : vector<512x1xi1>
    %c-16_i32_44 = arith.constant -16 : i32
    %106 = vector.broadcast %c-16_i32_44 : i32 to vector<512x1xi32>
    %107 = arith.addi %36, %106 : vector<512x1xi32>
    %c0_i32_45 = arith.constant 0 : i32
    %108 = vector.broadcast %c0_i32_45 : i32 to vector<512x1xi32>
    %109 = arith.cmpi sge, %107, %108 : vector<512x1xi32>
    %c-16_i32_46 = arith.constant -16 : i32
    %110 = vector.broadcast %c-16_i32_46 : i32 to vector<512x1xi32>
    %111 = arith.addi %36, %110 : vector<512x1xi32>
    %c256_i32_47 = arith.constant 256 : i32
    %112 = vector.broadcast %c256_i32_47 : i32 to vector<512x1xi32>
    %113 = arith.cmpi slt, %111, %112 : vector<512x1xi32>
    %114 = arith.andi %109, %113 : vector<512x1xi1>
    %115 = arith.andi %105, %114 : vector<512x1xi1>
    %cst_48 = arith.constant 0.000000e+00 : f32
    %116 = vector.shape_cast %115 : vector<512x1xi1> to vector<512x1xi1>
    %117 = vector.broadcast %116 : vector<512x1xi1> to vector<512x128xi1>
    %118 = vector.broadcast %cst_48 : f32 to vector<512x128xf32>
    %119 = arith.select %117, %96, %118 : vector<512x128xi1>, vector<512x128xf32>
    %c2 = arith.constant 2 : index
    %c0_49 = arith.constant 0 : index
    %c0_50 = arith.constant 0 : index
    %120 = vector.load %arg2[%c2, %c0_49, %c0_50] : memref<9x128x128xbf16, #tpu.memory_space<vmem>>, vector<1x128x128xbf16>
    %121 = vector.shape_cast %120 : vector<1x128x128xbf16> to vector<128x128xbf16>
    %122 = arith.extf %121 : vector<128x128xbf16> to vector<128x128xf32>
    %cst_51 = arith.constant dense<0.000000e+00> : vector<512x128xf32>
    %123 = tpu.matmul %119, %122, %cst_51 {dimension_numbers = #tpu.dot_dimension_numbers<[1], [0], [0], [1], [0, 0, 1, 1], [], []>} : vector<512x128xf32>, vector<128x128xf32>, vector<512x128xf32> -> vector<512x128xf32>
    %124 = arith.addf %95, %123 : vector<512x128xf32>
    %c23 = arith.constant 23 : index
    %c0_52 = arith.constant 0 : index
    %125 = vector.load %arg11[%c23, %c0_52] : memref<560x128xf32, #tpu.memory_space<vmem>>, vector<512x128xf32>
    %c-1_i32_53 = arith.constant -1 : i32
    %126 = vector.broadcast %c-1_i32_53 : i32 to vector<512x1xi32>
    %127 = arith.addi %34, %126 : vector<512x1xi32>
    %c0_i32_54 = arith.constant 0 : i32
    %128 = vector.broadcast %c0_i32_54 : i32 to vector<512x1xi32>
    %129 = arith.cmpi sge, %127, %128 : vector<512x1xi32>
    %c-1_i32_55 = arith.constant -1 : i32
    %130 = vector.broadcast %c-1_i32_55 : i32 to vector<512x1xi32>
    %131 = arith.addi %34, %130 : vector<512x1xi32>
    %c16_i32_56 = arith.constant 16 : i32
    %132 = vector.broadcast %c16_i32_56 : i32 to vector<512x1xi32>
    %133 = arith.cmpi slt, %131, %132 : vector<512x1xi32>
    %134 = arith.andi %129, %133 : vector<512x1xi1>
    %c0_i32_57 = arith.constant 0 : i32
    %135 = vector.broadcast %c0_i32_57 : i32 to vector<512x1xi32>
    %136 = arith.addi %36, %135 : vector<512x1xi32>
    %c0_i32_58 = arith.constant 0 : i32
    %137 = vector.broadcast %c0_i32_58 : i32 to vector<512x1xi32>
    %138 = arith.cmpi sge, %136, %137 : vector<512x1xi32>
    %c0_i32_59 = arith.constant 0 : i32
    %139 = vector.broadcast %c0_i32_59 : i32 to vector<512x1xi32>
    %140 = arith.addi %36, %139 : vector<512x1xi32>
    %c256_i32_60 = arith.constant 256 : i32
    %141 = vector.broadcast %c256_i32_60 : i32 to vector<512x1xi32>
    %142 = arith.cmpi slt, %140, %141 : vector<512x1xi32>
    %143 = arith.andi %138, %142 : vector<512x1xi1>
    %144 = arith.andi %134, %143 : vector<512x1xi1>
    %cst_61 = arith.constant 0.000000e+00 : f32
    %145 = vector.shape_cast %144 : vector<512x1xi1> to vector<512x1xi1>
    %146 = vector.broadcast %145 : vector<512x1xi1> to vector<512x128xi1>
    %147 = vector.broadcast %cst_61 : f32 to vector<512x128xf32>
    %148 = arith.select %146, %125, %147 : vector<512x128xi1>, vector<512x128xf32>
    %c3 = arith.constant 3 : index
    %c0_62 = arith.constant 0 : index
    %c0_63 = arith.constant 0 : index
    %149 = vector.load %arg2[%c3, %c0_62, %c0_63] : memref<9x128x128xbf16, #tpu.memory_space<vmem>>, vector<1x128x128xbf16>
    %150 = vector.shape_cast %149 : vector<1x128x128xbf16> to vector<128x128xbf16>
    %151 = arith.extf %150 : vector<128x128xbf16> to vector<128x128xf32>
    %cst_64 = arith.constant dense<0.000000e+00> : vector<512x128xf32>
    %152 = tpu.matmul %148, %151, %cst_64 {dimension_numbers = #tpu.dot_dimension_numbers<[1], [0], [0], [1], [0, 0, 1, 1], [], []>} : vector<512x128xf32>, vector<128x128xf32>, vector<512x128xf32> -> vector<512x128xf32>
    %153 = arith.addf %124, %152 : vector<512x128xf32>
    %c24_65 = arith.constant 24 : index
    %c0_66 = arith.constant 0 : index
    %154 = vector.load %arg11[%c24_65, %c0_66] : memref<560x128xf32, #tpu.memory_space<vmem>>, vector<512x128xf32>
    %c4 = arith.constant 4 : index
    %c0_67 = arith.constant 0 : index
    %c0_68 = arith.constant 0 : index
    %155 = vector.load %arg2[%c4, %c0_67, %c0_68] : memref<9x128x128xbf16, #tpu.memory_space<vmem>>, vector<1x128x128xbf16>
    %156 = vector.shape_cast %155 : vector<1x128x128xbf16> to vector<128x128xbf16>
    %157 = arith.extf %156 : vector<128x128xbf16> to vector<128x128xf32>
    %cst_69 = arith.constant dense<0.000000e+00> : vector<512x128xf32>
    %158 = tpu.matmul %154, %157, %cst_69 {dimension_numbers = #tpu.dot_dimension_numbers<[1], [0], [0], [1], [0, 0, 1, 1], [], []>} : vector<512x128xf32>, vector<128x128xf32>, vector<512x128xf32> -> vector<512x128xf32>
    %159 = arith.addf %153, %158 : vector<512x128xf32>
    %c25 = arith.constant 25 : index
    %c0_70 = arith.constant 0 : index
    %160 = vector.load %arg11[%c25, %c0_70] : memref<560x128xf32, #tpu.memory_space<vmem>>, vector<512x128xf32>
    %c1_i32_71 = arith.constant 1 : i32
    %161 = vector.broadcast %c1_i32_71 : i32 to vector<512x1xi32>
    %162 = arith.addi %34, %161 : vector<512x1xi32>
    %c0_i32_72 = arith.constant 0 : i32
    %163 = vector.broadcast %c0_i32_72 : i32 to vector<512x1xi32>
    %164 = arith.cmpi sge, %162, %163 : vector<512x1xi32>
    %c1_i32_73 = arith.constant 1 : i32
    %165 = vector.broadcast %c1_i32_73 : i32 to vector<512x1xi32>
    %166 = arith.addi %34, %165 : vector<512x1xi32>
    %c16_i32_74 = arith.constant 16 : i32
    %167 = vector.broadcast %c16_i32_74 : i32 to vector<512x1xi32>
    %168 = arith.cmpi slt, %166, %167 : vector<512x1xi32>
    %169 = arith.andi %164, %168 : vector<512x1xi1>
    %c0_i32_75 = arith.constant 0 : i32
    %170 = vector.broadcast %c0_i32_75 : i32 to vector<512x1xi32>
    %171 = arith.addi %36, %170 : vector<512x1xi32>
    %c0_i32_76 = arith.constant 0 : i32
    %172 = vector.broadcast %c0_i32_76 : i32 to vector<512x1xi32>
    %173 = arith.cmpi sge, %171, %172 : vector<512x1xi32>
    %c0_i32_77 = arith.constant 0 : i32
    %174 = vector.broadcast %c0_i32_77 : i32 to vector<512x1xi32>
    %175 = arith.addi %36, %174 : vector<512x1xi32>
    %c256_i32_78 = arith.constant 256 : i32
    %176 = vector.broadcast %c256_i32_78 : i32 to vector<512x1xi32>
    %177 = arith.cmpi slt, %175, %176 : vector<512x1xi32>
    %178 = arith.andi %173, %177 : vector<512x1xi1>
    %179 = arith.andi %169, %178 : vector<512x1xi1>
    %cst_79 = arith.constant 0.000000e+00 : f32
    %180 = vector.shape_cast %179 : vector<512x1xi1> to vector<512x1xi1>
    %181 = vector.broadcast %180 : vector<512x1xi1> to vector<512x128xi1>
    %182 = vector.broadcast %cst_79 : f32 to vector<512x128xf32>
    %183 = arith.select %181, %160, %182 : vector<512x128xi1>, vector<512x128xf32>
    %c5 = arith.constant 5 : index
    %c0_80 = arith.constant 0 : index
    %c0_81 = arith.constant 0 : index
    %184 = vector.load %arg2[%c5, %c0_80, %c0_81] : memref<9x128x128xbf16, #tpu.memory_space<vmem>>, vector<1x128x128xbf16>
    %185 = vector.shape_cast %184 : vector<1x128x128xbf16> to vector<128x128xbf16>
    %186 = arith.extf %185 : vector<128x128xbf16> to vector<128x128xf32>
    %cst_82 = arith.constant dense<0.000000e+00> : vector<512x128xf32>
    %187 = tpu.matmul %183, %186, %cst_82 {dimension_numbers = #tpu.dot_dimension_numbers<[1], [0], [0], [1], [0, 0, 1, 1], [], []>} : vector<512x128xf32>, vector<128x128xf32>, vector<512x128xf32> -> vector<512x128xf32>
    %188 = arith.addf %159, %187 : vector<512x128xf32>
    %c39 = arith.constant 39 : index
    %c0_83 = arith.constant 0 : index
    %189 = vector.load %arg11[%c39, %c0_83] : memref<560x128xf32, #tpu.memory_space<vmem>>, vector<512x128xf32>
    %c-1_i32_84 = arith.constant -1 : i32
    %190 = vector.broadcast %c-1_i32_84 : i32 to vector<512x1xi32>
    %191 = arith.addi %34, %190 : vector<512x1xi32>
    %c0_i32_85 = arith.constant 0 : i32
    %192 = vector.broadcast %c0_i32_85 : i32 to vector<512x1xi32>
    %193 = arith.cmpi sge, %191, %192 : vector<512x1xi32>
    %c-1_i32_86 = arith.constant -1 : i32
    %194 = vector.broadcast %c-1_i32_86 : i32 to vector<512x1xi32>
    %195 = arith.addi %34, %194 : vector<512x1xi32>
    %c16_i32_87 = arith.constant 16 : i32
    %196 = vector.broadcast %c16_i32_87 : i32 to vector<512x1xi32>
    %197 = arith.cmpi slt, %195, %196 : vector<512x1xi32>
    %198 = arith.andi %193, %197 : vector<512x1xi1>
    %c16_i32_88 = arith.constant 16 : i32
    %199 = vector.broadcast %c16_i32_88 : i32 to vector<512x1xi32>
    %200 = arith.addi %36, %199 : vector<512x1xi32>
    %c0_i32_89 = arith.constant 0 : i32
    %201 = vector.broadcast %c0_i32_89 : i32 to vector<512x1xi32>
    %202 = arith.cmpi sge, %200, %201 : vector<512x1xi32>
    %c16_i32_90 = arith.constant 16 : i32
    %203 = vector.broadcast %c16_i32_90 : i32 to vector<512x1xi32>
    %204 = arith.addi %36, %203 : vector<512x1xi32>
    %c256_i32_91 = arith.constant 256 : i32
    %205 = vector.broadcast %c256_i32_91 : i32 to vector<512x1xi32>
    %206 = arith.cmpi slt, %204, %205 : vector<512x1xi32>
    %207 = arith.andi %202, %206 : vector<512x1xi1>
    %208 = arith.andi %198, %207 : vector<512x1xi1>
    %cst_92 = arith.constant 0.000000e+00 : f32
    %209 = vector.shape_cast %208 : vector<512x1xi1> to vector<512x1xi1>
    %210 = vector.broadcast %209 : vector<512x1xi1> to vector<512x128xi1>
    %211 = vector.broadcast %cst_92 : f32 to vector<512x128xf32>
    %212 = arith.select %210, %189, %211 : vector<512x128xi1>, vector<512x128xf32>
    %c6 = arith.constant 6 : index
    %c0_93 = arith.constant 0 : index
    %c0_94 = arith.constant 0 : index
    %213 = vector.load %arg2[%c6, %c0_93, %c0_94] : memref<9x128x128xbf16, #tpu.memory_space<vmem>>, vector<1x128x128xbf16>
    %214 = vector.shape_cast %213 : vector<1x128x128xbf16> to vector<128x128xbf16>
    %215 = arith.extf %214 : vector<128x128xbf16> to vector<128x128xf32>
    %cst_95 = arith.constant dense<0.000000e+00> : vector<512x128xf32>
    %216 = tpu.matmul %212, %215, %cst_95 {dimension_numbers = #tpu.dot_dimension_numbers<[1], [0], [0], [1], [0, 0, 1, 1], [], []>} : vector<512x128xf32>, vector<128x128xf32>, vector<512x128xf32> -> vector<512x128xf32>
    %217 = arith.addf %188, %216 : vector<512x128xf32>
    %c40 = arith.constant 40 : index
    %c0_96 = arith.constant 0 : index
    %218 = vector.load %arg11[%c40, %c0_96] : memref<560x128xf32, #tpu.memory_space<vmem>>, vector<512x128xf32>
    %c0_i32_97 = arith.constant 0 : i32
    %219 = vector.broadcast %c0_i32_97 : i32 to vector<512x1xi32>
    %220 = arith.addi %34, %219 : vector<512x1xi32>
    %c0_i32_98 = arith.constant 0 : i32
    %221 = vector.broadcast %c0_i32_98 : i32 to vector<512x1xi32>
    %222 = arith.cmpi sge, %220, %221 : vector<512x1xi32>
    %c0_i32_99 = arith.constant 0 : i32
    %223 = vector.broadcast %c0_i32_99 : i32 to vector<512x1xi32>
    %224 = arith.addi %34, %223 : vector<512x1xi32>
    %c16_i32_100 = arith.constant 16 : i32
    %225 = vector.broadcast %c16_i32_100 : i32 to vector<512x1xi32>
    %226 = arith.cmpi slt, %224, %225 : vector<512x1xi32>
    %227 = arith.andi %222, %226 : vector<512x1xi1>
    %c16_i32_101 = arith.constant 16 : i32
    %228 = vector.broadcast %c16_i32_101 : i32 to vector<512x1xi32>
    %229 = arith.addi %36, %228 : vector<512x1xi32>
    %c0_i32_102 = arith.constant 0 : i32
    %230 = vector.broadcast %c0_i32_102 : i32 to vector<512x1xi32>
    %231 = arith.cmpi sge, %229, %230 : vector<512x1xi32>
    %c16_i32_103 = arith.constant 16 : i32
    %232 = vector.broadcast %c16_i32_103 : i32 to vector<512x1xi32>
    %233 = arith.addi %36, %232 : vector<512x1xi32>
    %c256_i32_104 = arith.constant 256 : i32
    %234 = vector.broadcast %c256_i32_104 : i32 to vector<512x1xi32>
    %235 = arith.cmpi slt, %233, %234 : vector<512x1xi32>
    %236 = arith.andi %231, %235 : vector<512x1xi1>
    %237 = arith.andi %227, %236 : vector<512x1xi1>
    %cst_105 = arith.constant 0.000000e+00 : f32
    %238 = vector.shape_cast %237 : vector<512x1xi1> to vector<512x1xi1>
    %239 = vector.broadcast %238 : vector<512x1xi1> to vector<512x128xi1>
    %240 = vector.broadcast %cst_105 : f32 to vector<512x128xf32>
    %241 = arith.select %239, %218, %240 : vector<512x128xi1>, vector<512x128xf32>
    %c7_106 = arith.constant 7 : index
    %c0_107 = arith.constant 0 : index
    %c0_108 = arith.constant 0 : index
    %242 = vector.load %arg2[%c7_106, %c0_107, %c0_108] : memref<9x128x128xbf16, #tpu.memory_space<vmem>>, vector<1x128x128xbf16>
    %243 = vector.shape_cast %242 : vector<1x128x128xbf16> to vector<128x128xbf16>
    %244 = arith.extf %243 : vector<128x128xbf16> to vector<128x128xf32>
    %cst_109 = arith.constant dense<0.000000e+00> : vector<512x128xf32>
    %245 = tpu.matmul %241, %244, %cst_109 {dimension_numbers = #tpu.dot_dimension_numbers<[1], [0], [0], [1], [0, 0, 1, 1], [], []>} : vector<512x128xf32>, vector<128x128xf32>, vector<512x128xf32> -> vector<512x128xf32>
    %246 = arith.addf %217, %245 : vector<512x128xf32>
    %c41 = arith.constant 41 : index
    %c0_110 = arith.constant 0 : index
    %247 = vector.load %arg11[%c41, %c0_110] : memref<560x128xf32, #tpu.memory_space<vmem>>, vector<512x128xf32>
    %c1_i32_111 = arith.constant 1 : i32
    %248 = vector.broadcast %c1_i32_111 : i32 to vector<512x1xi32>
    %249 = arith.addi %34, %248 : vector<512x1xi32>
    %c0_i32_112 = arith.constant 0 : i32
    %250 = vector.broadcast %c0_i32_112 : i32 to vector<512x1xi32>
    %251 = arith.cmpi sge, %249, %250 : vector<512x1xi32>
    %c1_i32_113 = arith.constant 1 : i32
    %252 = vector.broadcast %c1_i32_113 : i32 to vector<512x1xi32>
    %253 = arith.addi %34, %252 : vector<512x1xi32>
    %c16_i32_114 = arith.constant 16 : i32
    %254 = vector.broadcast %c16_i32_114 : i32 to vector<512x1xi32>
    %255 = arith.cmpi slt, %253, %254 : vector<512x1xi32>
    %256 = arith.andi %251, %255 : vector<512x1xi1>
    %c16_i32_115 = arith.constant 16 : i32
    %257 = vector.broadcast %c16_i32_115 : i32 to vector<512x1xi32>
    %258 = arith.addi %36, %257 : vector<512x1xi32>
    %c0_i32_116 = arith.constant 0 : i32
    %259 = vector.broadcast %c0_i32_116 : i32 to vector<512x1xi32>
    %260 = arith.cmpi sge, %258, %259 : vector<512x1xi32>
    %c16_i32_117 = arith.constant 16 : i32
    %261 = vector.broadcast %c16_i32_117 : i32 to vector<512x1xi32>
    %262 = arith.addi %36, %261 : vector<512x1xi32>
    %c256_i32_118 = arith.constant 256 : i32
    %263 = vector.broadcast %c256_i32_118 : i32 to vector<512x1xi32>
    %264 = arith.cmpi slt, %262, %263 : vector<512x1xi32>
    %265 = arith.andi %260, %264 : vector<512x1xi1>
    %266 = arith.andi %256, %265 : vector<512x1xi1>
    %cst_119 = arith.constant 0.000000e+00 : f32
    %267 = vector.shape_cast %266 : vector<512x1xi1> to vector<512x1xi1>
    %268 = vector.broadcast %267 : vector<512x1xi1> to vector<512x128xi1>
    %269 = vector.broadcast %cst_119 : f32 to vector<512x128xf32>
    %270 = arith.select %268, %247, %269 : vector<512x128xi1>, vector<512x128xf32>
    %c8_120 = arith.constant 8 : index
    %c0_121 = arith.constant 0 : index
    %c0_122 = arith.constant 0 : index
    %271 = vector.load %arg2[%c8_120, %c0_121, %c0_122] : memref<9x128x128xbf16, #tpu.memory_space<vmem>>, vector<1x128x128xbf16>
    %272 = vector.shape_cast %271 : vector<1x128x128xbf16> to vector<128x128xbf16>
    %273 = arith.extf %272 : vector<128x128xbf16> to vector<128x128xf32>
    %cst_123 = arith.constant dense<0.000000e+00> : vector<512x128xf32>
    %274 = tpu.matmul %270, %273, %cst_123 {dimension_numbers = #tpu.dot_dimension_numbers<[1], [0], [0], [1], [0, 0, 1, 1], [], []>} : vector<512x128xf32>, vector<128x128xf32>, vector<512x128xf32> -> vector<512x128xf32>
    %275 = arith.addf %246, %274 : vector<512x128xf32>
    %c0_124 = arith.constant 0 : index
    %c0_125 = arith.constant 0 : index
    %276 = vector.load %arg6[%c0_124, %c0_125] : memref<1x128xf32, #tpu.memory_space<vmem>>, vector<1x128xf32>
    %c0_126 = arith.constant 0 : index
    %c0_127 = arith.constant 0 : index
    %277 = vector.load %arg7[%c0_126, %c0_127] : memref<1x128xf32, #tpu.memory_space<vmem>>, vector<1x128xf32>
    %cst_128 = arith.constant dense<0.000000e+00> : vector<128xf32>
    %278 = vector.multi_reduction <add>, %275, %cst_128 [0] : vector<512x128xf32> to vector<128xf32>
    %279 = vector.shape_cast %278 : vector<128xf32> to vector<1x128xf32>
    %cst_129 = arith.constant 5.120000e+02 : f32
    %280 = vector.broadcast %cst_129 : f32 to vector<1x128xf32>
    %281 = arith.divf %279, %280 : vector<1x128xf32>
    %282 = arith.mulf %275, %275 : vector<512x128xf32>
    %cst_130 = arith.constant dense<0.000000e+00> : vector<128xf32>
    %283 = vector.multi_reduction <add>, %282, %cst_130 [0] : vector<512x128xf32> to vector<128xf32>
    %284 = vector.shape_cast %283 : vector<128xf32> to vector<1x128xf32>
    %cst_131 = arith.constant 5.120000e+02 : f32
    %285 = vector.broadcast %cst_131 : f32 to vector<1x128xf32>
    %286 = arith.divf %284, %285 : vector<1x128xf32>
    %287 = arith.mulf %281, %281 : vector<1x128xf32>
    %288 = arith.subf %286, %287 : vector<1x128xf32>
    %cst_132 = arith.constant 9.99999974E-6 : f32
    %289 = vector.broadcast %cst_132 : f32 to vector<1x128xf32>
    %290 = arith.addf %288, %289 : vector<1x128xf32>
    %291 = math.rsqrt %290 : vector<1x128xf32>
    %292 = arith.mulf %276, %291 : vector<1x128xf32>
    %293 = arith.mulf %281, %292 : vector<1x128xf32>
    %294 = arith.subf %277, %293 : vector<1x128xf32>
    %295 = vector.broadcast %292 : vector<1x128xf32> to vector<512x128xf32>
    %296 = arith.mulf %275, %295 : vector<512x128xf32>
    %297 = vector.broadcast %294 : vector<1x128xf32> to vector<512x128xf32>
    %298 = arith.addf %296, %297 : vector<512x128xf32>
    %cst_133 = arith.constant 0.000000e+00 : f32
    %299 = vector.broadcast %cst_133 : f32 to vector<512x128xf32>
    %300 = arith.maximumf %298, %299 : vector<512x128xf32>
    %c0_134 = arith.constant 0 : index
    %c0_135 = arith.constant 0 : index
    %301 = vector.load %arg3[%c0_134, %c0_135] : memref<128x128xbf16, #tpu.memory_space<vmem>>, vector<128x128xbf16>
    %302 = arith.extf %301 : vector<128x128xbf16> to vector<128x128xf32>
    %cst_136 = arith.constant dense<0.000000e+00> : vector<512x128xf32>
    %303 = tpu.matmul %300, %302, %cst_136 {dimension_numbers = #tpu.dot_dimension_numbers<[1], [0], [0], [1], [0, 0, 1, 1], [], []>} : vector<512x128xf32>, vector<128x128xf32>, vector<512x128xf32> -> vector<512x128xf32>
    %c0_137 = arith.constant 0 : index
    %c0_138 = arith.constant 0 : index
    %304 = vector.load %arg8[%c0_137, %c0_138] : memref<1x128xf32, #tpu.memory_space<vmem>>, vector<1x128xf32>
    %c0_139 = arith.constant 0 : index
    %c0_140 = arith.constant 0 : index
    %305 = vector.load %arg9[%c0_139, %c0_140] : memref<1x128xf32, #tpu.memory_space<vmem>>, vector<1x128xf32>
    %cst_141 = arith.constant dense<0.000000e+00> : vector<128xf32>
    %306 = vector.multi_reduction <add>, %303, %cst_141 [0] : vector<512x128xf32> to vector<128xf32>
    %307 = vector.shape_cast %306 : vector<128xf32> to vector<1x128xf32>
    %cst_142 = arith.constant 5.120000e+02 : f32
    %308 = vector.broadcast %cst_142 : f32 to vector<1x128xf32>
    %309 = arith.divf %307, %308 : vector<1x128xf32>
    %310 = arith.mulf %303, %303 : vector<512x128xf32>
    %cst_143 = arith.constant dense<0.000000e+00> : vector<128xf32>
    %311 = vector.multi_reduction <add>, %310, %cst_143 [0] : vector<512x128xf32> to vector<128xf32>
    %312 = vector.shape_cast %311 : vector<128xf32> to vector<1x128xf32>
    %cst_144 = arith.constant 5.120000e+02 : f32
    %313 = vector.broadcast %cst_144 : f32 to vector<1x128xf32>
    %314 = arith.divf %312, %313 : vector<1x128xf32>
    %315 = arith.mulf %309, %309 : vector<1x128xf32>
    %316 = arith.subf %314, %315 : vector<1x128xf32>
    %cst_145 = arith.constant 9.99999974E-6 : f32
    %317 = vector.broadcast %cst_145 : f32 to vector<1x128xf32>
    %318 = arith.addf %316, %317 : vector<1x128xf32>
    %319 = math.rsqrt %318 : vector<1x128xf32>
    %320 = arith.mulf %304, %319 : vector<1x128xf32>
    %321 = arith.mulf %309, %320 : vector<1x128xf32>
    %322 = arith.subf %305, %321 : vector<1x128xf32>
    %323 = vector.broadcast %320 : vector<1x128xf32> to vector<512x128xf32>
    %324 = arith.mulf %303, %323 : vector<512x128xf32>
    %325 = vector.broadcast %322 : vector<1x128xf32> to vector<512x128xf32>
    %326 = arith.addf %324, %325 : vector<512x128xf32>
    %327 = arith.addf %326, %0 : vector<512x128xf32>
    %cst_146 = arith.constant 0.000000e+00 : f32
    %328 = vector.broadcast %cst_146 : f32 to vector<512x128xf32>
    %329 = arith.maximumf %327, %328 : vector<512x128xf32>
    %c0_147 = arith.constant 0 : index
    %c0_148 = arith.constant 0 : index
    %330 = vector.load %arg10[%c0_147, %c0_148] : memref<512x128xf32, #tpu.memory_space<vmem>>, vector<512x128xf32>
    tpu.vector_store %arg10[%c0_147, %c0_148], %329 {strides = array<i32>} : memref<512x128xf32, #tpu.memory_space<vmem>>, vector<512x128xf32>,
    return
  }
}

</mosaic_0001>

<llo_original>
// kernel: tpu_custom_call.1
$region0: #{tpu_custom_call.1}
  #allocation0 [shape = 'u32[]', space=smem, size = 0x4, offset = 0x4, fixed_abs, tag = 'smem constant byte address 0x4 - core index']
  #allocation1 [shape = 'u32[72,128]{1,0:T(1,128)}', space=vmem, size = 0x9000, scoped, tag = 'internal scratch']
  #allocation2 [shape = 'f32[560,128]{1,0:T(8,128)}', space=vmem, size = 0x46000, scoped, tag = 'scratch operand']
  %s0 = inlined_call_operand.hbm [shape: f32[512,128], index: 0, kind: input, shape index: {}]
  %s1 = inlined_call_operand.hbm [shape: bf16[128,128], index: 1, kind: input, shape index: {}]
  %s2 = inlined_call_operand.hbm [shape: bf16[9,128,128], index: 2, kind: input, shape index: {}]
  %s3 = inlined_call_operand.hbm [shape: bf16[128,128], index: 3, kind: input, shape index: {}]
  %s4 = inlined_call_operand.vmem [shape: f32[1,128], index: 4, kind: input, shape index: {}]
  %s5 = inlined_call_operand.vmem [shape: f32[1,128], index: 5, kind: input, shape index: {}]
  %s6 = inlined_call_operand.vmem [shape: f32[1,128], index: 6, kind: input, shape index: {}]
  %s7 = inlined_call_operand.vmem [shape: f32[1,128], index: 7, kind: input, shape index: {}]
  %s8 = inlined_call_operand.vmem [shape: f32[1,128], index: 8, kind: input, shape index: {}]
  %s9 = inlined_call_operand.vmem [shape: f32[1,128], index: 9, kind: input, shape index: {}]
  %s10 = inlined_call_operand.hbm [shape: f32[512,128], index: 10, kind: output, shape index: {}]
  %s11 = sld [smem:[#allocation0]]
  $region66: #{tpu_custom_call.1} parent=0
    _
  %s13 = ssub.s32 1, %s11
  %s14 = scalar_select 0, %s13, %s11
  $region1: #{tpu_custom_call.1} parent=0
    #allocation3 [shape = 'u8[262144]{0}', space=vmem, size = 0x40000, scoped, tag = 'input window, operand 0, single buffered']
    #allocation4 [shape = 's32[1]{0}', space=sflag, size = 0x4, scoped, tag = 'scoped memory for tpu_custom_call.1']
    #allocation5 [shape = 's32[1]{0}', space=sflag, size = 0x4, scoped, tag = 'scoped memory for tpu_custom_call.1']
    #allocation6 [shape = 'u8[32768]{0}', space=vmem, size = 0x8000, scoped, tag = 'input window, operand 1, single buffered']
    #allocation7 [shape = 's32[1]{0}', space=sflag, size = 0x4, scoped, tag = 'scoped memory for tpu_custom_call.1']
    #allocation8 [shape = 'u8[294912]{0}', space=vmem, size = 0x48000, scoped, tag = 'input window, operand 2, single buffered']
    #allocation9 [shape = 'u8[32768]{0}', space=vmem, size = 0x8000, scoped, tag = 'input window, operand 3, single buffered']
    #allocation10 [shape = 's32[1]{0}', space=sflag, size = 0x4, scoped, tag = 'scoped memory for tpu_custom_call.1']
    #allocation11 [shape = 'u8[262144]{0}', space=vmem, size = 0x40000, scoped, tag = 'output window, operand 0, single buffered']
    %15 = vsyncpa [#allocation4], 0
    %16 = vsyncpa [#allocation7], 0
    %17 = vsyncpa [#allocation10], 0
    %18 = vsyncpa [#allocation5], 0
    // Predicated region
    $region2: #{tpu_custom_call.1} parent=1 // pred_check
      _
    $region3: #{tpu_custom_call.1} parent=1 // pred_check_branch
      %20 = sbr.rel (0) target = $region5
    $region4: #{tpu_custom_call.1} parent=1 // pred_region
      %22 = vsyncadd [#allocation4], 0
      %s23 = sshll.u32 %s0, 4
      %s24 = int_to_ptr.hbm [resolvable:$true] %s23
      %s25 = sshll.u32 [#allocation3], 4
      %s26 = int_to_ptr.vmem [resolvable:$true] %s25
      %31 = dma.hbm_to_vmem [thread:$0]  %s24, 8192, %s26, [#allocation4], 128, 128, 8
    $region5: #{tpu_custom_call.1} parent=1 // pred_fallthru
      _
    // Predicated region
    $region6: #{tpu_custom_call.1} parent=1 // pred_check
      _
    $region7: #{tpu_custom_call.1} parent=1 // pred_check_branch
      %33 = sbr.rel (0) target = $region9
    $region8: #{tpu_custom_call.1} parent=1 // pred_region
      %35 = vsyncadd [#allocation7], 0
      %s36 = sshll.u32 %s1, 4
      %s37 = int_to_ptr.hbm [resolvable:$true] %s36
      %s38 = sshll.u32 [#allocation6], 4
      %s39 = int_to_ptr.vmem [resolvable:$true] %s38
      %44 = dma.hbm_to_vmem [thread:$0]  %s37, 1024, %s39, [#allocation7], 64, 64, 4
    $region9: #{tpu_custom_call.1} parent=1 // pred_fallthru
      _
    // Predicated region
    $region10: #{tpu_custom_call.1} parent=1 // pred_check
      _
    $region11: #{tpu_custom_call.1} parent=1 // pred_check_branch
      %46 = sbr.rel (0) target = $region13
    $region12: #{tpu_custom_call.1} parent=1 // pred_region
      %48 = vsyncadd [#allocation7], 0
      %s49 = sshll.u32 %s2, 4
      %s50 = int_to_ptr.hbm [resolvable:$true] %s49
      %s51 = sshll.u32 [#allocation8], 4
      %s52 = int_to_ptr.vmem [resolvable:$true] %s51
      %57 = dma.hbm_to_vmem [thread:$0]  %s50, 9216, %s52, [#allocation7], 64, 64, 4
    $region13: #{tpu_custom_call.1} parent=1 // pred_fallthru
      _
    // Predicated region
    $region14: #{tpu_custom_call.1} parent=1 // pred_check
      _
    $region15: #{tpu_custom_call.1} parent=1 // pred_check_branch
      %59 = sbr.rel (0) target = $region17
    $region16: #{tpu_custom_call.1} parent=1 // pred_region
      %61 = vsyncadd [#allocation10], 0
      %s62 = sshll.u32 %s3, 4
      %s63 = int_to_ptr.hbm [resolvable:$true] %s62
      %s64 = sshll.u32 [#allocation9], 4
      %s65 = int_to_ptr.vmem [resolvable:$true] %s64
      %70 = dma.hbm_to_vmem [thread:$0]  %s63, 1024, %s65, [#allocation10], 64, 64, 4
    $region17: #{tpu_custom_call.1} parent=1 // pred_fallthru
      _
    // Predicated region
    $region18: #{tpu_custom_call.1} parent=1 // pred_check
      _
    $region19: #{tpu_custom_call.1} parent=1 // pred_check_branch
      %72 = sbr.rel (0) target = $region21
    $region20: #{tpu_custom_call.1} parent=1 // pred_region
      _
    $region21: #{tpu_custom_call.1} parent=1 // pred_fallthru
      _
    // Predicated region
    $region22: #{tpu_custom_call.1} parent=1 // pred_check
      _
    $region23: #{tpu_custom_call.1} parent=1 // pred_check_branch
      %74 = sbr.rel (0) target = $region25
    $region24: #{tpu_custom_call.1} parent=1 // pred_region
      _
    $region25: #{tpu_custom_call.1} parent=1 // pred_fallthru
      _
    // Predicated region
    $region26: #{tpu_custom_call.1} parent=1 // pred_check
      _
    $region27: #{tpu_custom_call.1} parent=1 // pred_check_branch
      %76 = sbr.rel (0) target = $region29
    $region28: #{tpu_custom_call.1} parent=1 // pred_region
      _
    $region29: #{tpu_custom_call.1} parent=1 // pred_fallthru
      _
    // Predicated region
    $region30: #{tpu_custom_call.1} parent=1 // pred_check
      _
    $region31: #{tpu_custom_call.1} parent=1 // pred_check_branch
      %78 = sbr.rel (0) target = $region33
    $region32: #{tpu_custom_call.1} parent=1 // pred_region
      _
    $region33: #{tpu_custom_call.1} parent=1 // pred_fallthru
      _
    // Predicated region
    $region34: #{tpu_custom_call.1} parent=1 // pred_check
      _
    $region35: #{tpu_custom_call.1} parent=1 // pred_check_branch
      %80 = sbr.rel (0) target = $region37
    $region36: #{tpu_custom_call.1} parent=1 // pred_region
      _
    $region37: #{tpu_custom_call.1} parent=1 // pred_fallthru
      _
    // Predicated region
    $region38: #{tpu_custom_call.1} parent=1 // pred_check
      _
    $region39: #{tpu_custom_call.1} parent=1 // pred_check_branch
      %82 = sbr.rel (0) target = $region41
    $region40: #{tpu_custom_call.1} parent=1 // pred_region
      _
    $region41: #{tpu_custom_call.1} parent=1 // pred_fallthru
      _
    // Predicated region
    $region42: #{tpu_custom_call.1} parent=1 // pred_check
      _
    $region43: #{tpu_custom_call.1} parent=1 // pred_check_branch
      %84 = sbr.rel (0) target = $region45
    $region44: #{tpu_custom_call.1} parent=1 // pred_region
      %86 = dma.done [#allocation4], 8192
    $region45: #{tpu_custom_call.1} parent=1 // pred_fallthru
      _
    // Predicated region
    $region46: #{tpu_custom_call.1} parent=1 // pred_check
      _
    $region47: #{tpu_custom_call.1} parent=1 // pred_check_branch
      %88 = sbr.rel (0) target = $region49
    $region48: #{tpu_custom_call.1} parent=1 // pred_region
      %90 = dma.done [#allocation7], 1024
    $region49: #{tpu_custom_call.1} parent=1 // pred_fallthru
      _
    // Predicated region
    $region50: #{tpu_custom_call.1} parent=1 // pred_check
      _
    $region51: #{tpu_custom_call.1} parent=1 // pred_check_branch
      %92 = sbr.rel (0) target = $region53
    $region52: #{tpu_custom_call.1} parent=1 // pred_region
      %94 = dma.done [#allocation7], 9216
    $region53: #{tpu_custom_call.1} parent=1 // pred_fallthru
      _
    // Predicated region
    $region54: #{tpu_custom_call.1} parent=1 // pred_check
      _
    $region55: #{tpu_custom_call.1} parent=1 // pred_check_branch
      %96 = sbr.rel (0) target = $region57
    $region56: #{tpu_custom_call.1} parent=1 // pred_region
      %98 = dma.done [#allocation10], 1024
    $region57: #{tpu_custom_call.1} parent=1 // pred_fallthru
      _
    %v99 = vld [vmem:[#allocation3] sm:$0xff]
    %v100 = vld [vmem:[#allocation3 + $0x8] sm:$0xff]
    %v101 = vld [vmem:[#allocation3 + $0x10] sm:$0xff]
    %v102 = vld [vmem:[#allocation3 + $0x18] sm:$0xff]
    %v103 = vld [vmem:[#allocation3 + $0x20] sm:$0xff]
    %v104 = vld [vmem:[#allocation3 + $0x28] sm:$0xff]
    %v105 = vld [vmem:[#allocation3 + $0x30] sm:$0xff]
    %v106 = vld [vmem:[#allocation3 + $0x38] sm:$0xff]
    %v107 = vld [vmem:[#allocation3 + $0x40] sm:$0xff]
    %v108 = vld [vmem:[#allocation3 + $0x48] sm:$0xff]
    %v109 = vld [vmem:[#allocation3 + $0x50] sm:$0xff]
    %v110 = vld [vmem:[#allocation3 + $0x58] sm:$0xff]
    %v111 = vld [vmem:[#allocation3 + $0x60] sm:$0xff]
    %v112 = vld [vmem:[#allocation3 + $0x68] sm:$0xff]
    %v113 = vld [vmem:[#allocation3 + $0x70] sm:$0xff]
    %v114 = vld [vmem:[#allocation3 + $0x78] sm:$0xff]
    %v115 = vld [vmem:[#allocation3 + $0x80] sm:$0xff]
    %v116 = vld [vmem:[#allocation3 + $0x88] sm:$0xff]
    %v117 = vld [vmem:[#allocation3 + $0x90] sm:$0xff]
    %v118 = vld [vmem:[#allocation3 + $0x98] sm:$0xff]
    %v119 = vld [vmem:[#allocation3 + $0xa0] sm:$0xff]
    %v120 = vld [vmem:[#allocation3 + $0xa8] sm:$0xff]
    %v121 = vld [vmem:[#allocation3 + $0xb0] sm:$0xff]
    %v122 = vld [vmem:[#allocation3 + $0xb8] sm:$0xff]
    %v123 = vld [vmem:[#allocation3 + $0xc0] sm:$0xff]
    %v124 = vld [vmem:[#allocation3 + $0xc8] sm:$0xff]
    %v125 = vld [vmem:[#allocation3 + $0xd0] sm:$0xff]
    %v126 = vld [vmem:[#allocation3 + $0xd8] sm:$0xff]
    %v127 = vld [vmem:[#allocation3 + $0xe0] sm:$0xff]
    %v128 = vld [vmem:[#allocation3 + $0xe8] sm:$0xff]
    %v129 = vld [vmem:[#allocation3 + $0xf0] sm:$0xff]
    %v130 = vld [vmem:[#allocation3 + $0xf8] sm:$0xff]
    %v131 = vld [vmem:[#allocation3 + $0x100] sm:$0xff]
    %v132 = vld [vmem:[#allocation3 + $0x108] sm:$0xff]
    %v133 = vld [vmem:[#allocation3 + $0x110] sm:$0xff]
    %v134 = vld [vmem:[#allocation3 + $0x118] sm:$0xff]
    %v135 = vld [vmem:[#allocation3 + $0x120] sm:$0xff]
    %v136 = vld [vmem:[#allocation3 + $0x128] sm:$0xff]
    %v137 = vld [vmem:[#allocation3 + $0x130] sm:$0xff]
    %v138 = vld [vmem:[#allocation3 + $0x138] sm:$0xff]
    %v139 = vld [vmem:[#allocation3 + $0x140] sm:$0xff]
    %v140 = vld [vmem:[#allocation3 + $0x148] sm:$0xff]
    %v141 = vld [vmem:[#allocation3 + $0x150] sm:$0xff]
    %v142 = vld [vmem:[#allocation3 + $0x158] sm:$0xff]
    %v143 = vld [vmem:[#allocation3 + $0x160] sm:$0xff]
    %v144 = vld [vmem:[#allocation3 + $0x168] sm:$0xff]
    %v145 = vld [vmem:[#allocation3 + $0x170] sm:$0xff]
    %v146 = vld [vmem:[#allocation3 + $0x178] sm:$0xff]
    %v147 = vld [vmem:[#allocation3 + $0x180] sm:$0xff]
    %v148 = vld [vmem:[#allocation3 + $0x188] sm:$0xff]
    %v149 = vld [vmem:[#allocation3 + $0x190] sm:$0xff]
    %v150 = vld [vmem:[#allocation3 + $0x198] sm:$0xff]
    %v151 = vld [vmem:[#allocation3 + $0x1a0] sm:$0xff]
    %v152 = vld [vmem:[#allocation3 + $0x1a8] sm:$0xff]
    %v153 = vld [vmem:[#allocation3 + $0x1b0] sm:$0xff]
    %v154 = vld [vmem:[#allocation3 + $0x1b8] sm:$0xff]
    %v155 = vld [vmem:[#allocation3 + $0x1c0] sm:$0xff]
    %v156 = vld [vmem:[#allocation3 + $0x1c8] sm:$0xff]
    %v157 = vld [vmem:[#allocation3 + $0x1d0] sm:$0xff]
    %v158 = vld [vmem:[#allocation3 + $0x1d8] sm:$0xff]
    %v159 = vld [vmem:[#allocation3 + $0x1e0] sm:$0xff]
    %v160 = vld [vmem:[#allocation3 + $0x1e8] sm:$0xff]
    %v161 = vld [vmem:[#allocation3 + $0x1f0] sm:$0xff]
    %v162 = vld [vmem:[#allocation3 + $0x1f8] sm:$0xff]
    %v163 = vld [vmem:[#allocation6] sm:$0xf]
    %v164 = vld [vmem:[#allocation6 + $0x4] sm:$0xf]
    %v165 = vld [vmem:[#allocation6 + $0x8] sm:$0xf]
    %v166 = vld [vmem:[#allocation6 + $0xc] sm:$0xf]
    %v167 = vld [vmem:[#allocation6 + $0x10] sm:$0xf]
    %v168 = vld [vmem:[#allocation6 + $0x14] sm:$0xf]
    %v169 = vld [vmem:[#allocation6 + $0x18] sm:$0xf]
    %v170 = vld [vmem:[#allocation6 + $0x1c] sm:$0xf]
    %v171 = vld [vmem:[#allocation6 + $0x20] sm:$0xf]
    %v172 = vld [vmem:[#allocation6 + $0x24] sm:$0xf]
    %v173 = vld [vmem:[#allocation6 + $0x28] sm:$0xf]
    %v174 = vld [vmem:[#allocation6 + $0x2c] sm:$0xf]
    %v175 = vld [vmem:[#allocation6 + $0x30] sm:$0xf]
    %v176 = vld [vmem:[#allocation6 + $0x34] sm:$0xf]
    %v177 = vld [vmem:[#allocation6 + $0x38] sm:$0xf]
    %v178 = vld [vmem:[#allocation6 + $0x3c] sm:$0xf]
    %v179 = vunpack.c.l.bf16 %v163
    %v180 = vunpack.c.l.bf16 %v164
    %v181 = vunpack.c.l.bf16 %v165
    %v182 = vunpack.c.l.bf16 %v166
    %v183 = vunpack.c.l.bf16 %v167
    %v184 = vunpack.c.l.bf16 %v168
    %v185 = vunpack.c.l.bf16 %v169
    %v186 = vunpack.c.l.bf16 %v170
    %v187 = vunpack.c.l.bf16 %v171
    %v188 = vunpack.c.l.bf16 %v172
    %v189 = vunpack.c.l.bf16 %v173
    %v190 = vunpack.c.l.bf16 %v174
    %v191 = vunpack.c.l.bf16 %v175
    %v192 = vunpack.c.l.bf16 %v176
    %v193 = vunpack.c.l.bf16 %v177
    %v194 = vunpack.c.l.bf16 %v178
    %195 = vmatpush.msra.mxu0 %v194
    %196 = vmatpush.msra.mxu0 %v193
    %197 = vmatpush.msra.mxu0 %v192
    %198 = vmatpush.msra.mxu0 %v191
    %199 = vmatpush.msra.mxu0 %v190
    %200 = vmatpush.msra.mxu0 %v189
    %201 = vmatpush.msra.mxu0 %v188
    %202 = vmatpush.msra.mxu0 %v187
    %203 = vmatpush.msra.mxu0 %v186
    %204 = vmatpush.msra.mxu0 %v185
    %205 = vmatpush.msra.mxu0 %v184
    %206 = vmatpush.msra.mxu0 %v183
    %207 = vmatpush.msra.mxu0 %v182
    %208 = vmatpush.msra.mxu0 %v181
    %209 = vmatpush.msra.mxu0 %v180
    %210 = vmatpush.msra.mxu0 %v179
    %211 = vmatmul.f32.gmra.mxu0 %v99
    %v212 = vpop.f32.mrf.mxu0
    %v213 = vadd.f32 0.0, %v212
    %214 = vmatmul.f32.gmra.mxu0 %v100
    %v215 = vpop.f32.mrf.mxu0
    %v216 = vadd.f32 0.0, %v215
    %217 = vmatmul.f32.gmra.mxu0 %v101
    %v218 = vpop.f32.mrf.mxu0
    %v219 = vadd.f32 0.0, %v218
    %220 = vmatmul.f32.gmra.mxu0 %v102
    %v221 = vpop.f32.mrf.mxu0
    %v222 = vadd.f32 0.0, %v221
    %223 = vmatmul.f32.gmra.mxu0 %v103
    %v224 = vpop.f32.mrf.mxu0
    %v225 = vadd.f32 0.0, %v224
    %226 = vmatmul.f32.gmra.mxu0 %v104
    %v227 = vpop.f32.mrf.mxu0
    %v228 = vadd.f32 0.0, %v227
    %229 = vmatmul.f32.gmra.mxu0 %v105
    %v230 = vpop.f32.mrf.mxu0
    %v231 = vadd.f32 0.0, %v230
    %232 = vmatmul.f32.gmra.mxu0 %v106
    %v233 = vpop.f32.mrf.mxu0
    %v234 = vadd.f32 0.0, %v233
    %235 = vmatmul.f32.gmra.mxu0 %v107
    %v236 = vpop.f32.mrf.mxu0
    %v237 = vadd.f32 0.0, %v236
    %238 = vmatmul.f32.gmra.mxu0 %v108
    %v239 = vpop.f32.mrf.mxu0
    %v240 = vadd.f32 0.0, %v239
    %241 = vmatmul.f32.gmra.mxu0 %v109
    %v242 = vpop.f32.mrf.mxu0
    %v243 = vadd.f32 0.0, %v242
    %244 = vmatmul.f32.gmra.mxu0 %v110
    %v245 = vpop.f32.mrf.mxu0
    %v246 = vadd.f32 0.0, %v245
    %247 = vmatmul.f32.gmra.mxu0 %v111
    %v248 = vpop.f32.mrf.mxu0
    %v249 = vadd.f32 0.0, %v248
    %250 = vmatmul.f32.gmra.mxu0 %v112
    %v251 = vpop.f32.mrf.mxu0
    %v252 = vadd.f32 0.0, %v251
    %253 = vmatmul.f32.gmra.mxu0 %v113
    %v254 = vpop.f32.mrf.mxu0
    %v255 = vadd.f32 0.0, %v254
    %256 = vmatmul.f32.gmra.mxu0 %v114
    %v257 = vpop.f32.mrf.mxu0
    %v258 = vadd.f32 0.0, %v257
    %259 = vmatmul.f32.gmra.mxu0 %v115
    %v260 = vpop.f32.mrf.mxu0
    %v261 = vadd.f32 0.0, %v260
    %262 = vmatmul.f32.gmra.mxu0 %v116
    %v263 = vpop.f32.mrf.mxu0
    %v264 = vadd.f32 0.0, %v263
    %265 = vmatmul.f32.gmra.mxu0 %v117
    %v266 = vpop.f32.mrf.mxu0
    %v267 = vadd.f32 0.0, %v266
    %268 = vmatmul.f32.gmra.mxu0 %v118
    %v269 = vpop.f32.mrf.mxu0
    %v270 = vadd.f32 0.0, %v269
    %271 = vmatmul.f32.gmra.mxu0 %v119
    %v272 = vpop.f32.mrf.mxu0
    %v273 = vadd.f32 0.0, %v272
    %274 = vmatmul.f32.gmra.mxu0 %v120
    %v275 = vpop.f32.mrf.mxu0
    %v276 = vadd.f32 0.0, %v275
    %277 = vmatmul.f32.gmra.mxu0 %v121
    %v278 = vpop.f32.mrf.mxu0
    %v279 = vadd.f32 0.0, %v278
    %280 = vmatmul.f32.gmra.mxu0 %v122
    %v281 = vpop.f32.mrf.mxu0
    %v282 = vadd.f32 0.0, %v281
    %283 = vmatmul.f32.gmra.mxu0 %v123
    %v284 = vpop.f32.mrf.mxu0
    %v285 = vadd.f32 0.0, %v284
    %286 = vmatmul.f32.gmra.mxu0 %v124
    %v287 = vpop.f32.mrf.mxu0
    %v288 = vadd.f32 0.0, %v287
    %289 = vmatmul.f32.gmra.mxu0 %v125
    %v290 = vpop.f32.mrf.mxu0
    %v291 = vadd.f32 0.0, %v290
    %292 = vmatmul.f32.gmra.mxu0 %v126
    %v293 = vpop.f32.mrf.mxu0
    %v294 = vadd.f32 0.0, %v293
    %295 = vmatmul.f32.gmra.mxu0 %v127
    %v296 = vpop.f32.mrf.mxu0
    %v297 = vadd.f32 0.0, %v296
    %298 = vmatmul.f32.gmra.mxu0 %v128
    %v299 = vpop.f32.mrf.mxu0
    %v300 = vadd.f32 0.0, %v299
    %301 = vmatmul.f32.gmra.mxu0 %v129
    %v302 = vpop.f32.mrf.mxu0
    %v303 = vadd.f32 0.0, %v302
    %304 = vmatmul.f32.gmra.mxu0 %v130
    %v305 = vpop.f32.mrf.mxu0
    %v306 = vadd.f32 0.0, %v305
    %307 = vmatmul.f32.gmra.mxu0 %v131
    %v308 = vpop.f32.mrf.mxu0
    %v309 = vadd.f32 0.0, %v308
    %310 = vmatmul.f32.gmra.mxu0 %v132
    %v311 = vpop.f32.mrf.mxu0
    %v312 = vadd.f32 0.0, %v311
    %313 = vmatmul.f32.gmra.mxu0 %v133
    %v314 = vpop.f32.mrf.mxu0
    %v315 = vadd.f32 0.0, %v314
    %316 = vmatmul.f32.gmra.mxu0 %v134
    %v317 = vpop.f32.mrf.mxu0
    %v318 = vadd.f32 0.0, %v317
    %319 = vmatmul.f32.gmra.mxu0 %v135
    %v320 = vpop.f32.mrf.mxu0
    %v321 = vadd.f32 0.0, %v320
    %322 = vmatmul.f32.gmra.mxu0 %v136
    %v323 = vpop.f32.mrf.mxu0
    %v324 = vadd.f32 0.0, %v323
    %325 = vmatmul.f32.gmra.mxu0 %v137
    %v326 = vpop.f32.mrf.mxu0
    %v327 = vadd.f32 0.0, %v326
    %328 = vmatmul.f32.gmra.mxu0 %v138
    %v329 = vpop.f32.mrf.mxu0
    %v330 = vadd.f32 0.0, %v329
    %331 = vmatmul.f32.gmra.mxu0 %v139
    %v332 = vpop.f32.mrf.mxu0
    %v333 = vadd.f32 0.0, %v332
    %334 = vmatmul.f32.gmra.mxu0 %v140
    %v335 = vpop.f32.mrf.mxu0
    %v336 = vadd.f32 0.0, %v335
    %337 = vmatmul.f32.gmra.mxu0 %v141
    %v338 = vpop.f32.mrf.mxu0
    %v339 = vadd.f32 0.0, %v338
    %340 = vmatmul.f32.gmra.mxu0 %v142
    %v341 = vpop.f32.mrf.mxu0
    %v342 = vadd.f32 0.0, %v341
    %343 = vmatmul.f32.gmra.mxu0 %v143
    %v344 = vpop.f32.mrf.mxu0
    %v345 = vadd.f32 0.0, %v344
    %346 = vmatmul.f32.gmra.mxu0 %v144
    %v347 = vpop.f32.mrf.mxu0
    %v348 = vadd.f32 0.0, %v347
    %349 = vmatmul.f32.gmra.mxu0 %v145
    %v350 = vpop.f32.mrf.mxu0
    %v351 = vadd.f32 0.0, %v350
    %352 = vmatmul.f32.gmra.mxu0 %v146
    %v353 = vpop.f32.mrf.mxu0
    %v354 = vadd.f32 0.0, %v353
    %355 = vmatmul.f32.gmra.mxu0 %v147
    %v356 = vpop.f32.mrf.mxu0
    %v357 = vadd.f32 0.0, %v356
    %358 = vmatmul.f32.gmra.mxu0 %v148
    %v359 = vpop.f32.mrf.mxu0
    %v360 = vadd.f32 0.0, %v359
    %361 = vmatmul.f32.gmra.mxu0 %v149
    %v362 = vpop.f32.mrf.mxu0
    %v363 = vadd.f32 0.0, %v362
    %364 = vmatmul.f32.gmra.mxu0 %v150
    %v365 = vpop.f32.mrf.mxu0
    %v366 = vadd.f32 0.0, %v365
    %367 = vmatmul.f32.gmra.mxu0 %v151
    %v368 = vpop.f32.mrf.mxu0
    %v369 = vadd.f32 0.0, %v368
    %370 = vmatmul.f32.gmra.mxu0 %v152
    %v371 = vpop.f32.mrf.mxu0
    %v372 = vadd.f32 0.0, %v371
    %373 = vmatmul.f32.gmra.mxu0 %v153
    %v374 = vpop.f32.mrf.mxu0
    %v375 = vadd.f32 0.0, %v374
    %376 = vmatmul.f32.gmra.mxu0 %v154
    %v377 = vpop.f32.mrf.mxu0
    %v378 = vadd.f32 0.0, %v377
    %379 = vmatmul.f32.gmra.mxu0 %v155
    %v380 = vpop.f32.mrf.mxu0
    %v381 = vadd.f32 0.0, %v380
    %382 = vmatmul.f32.gmra.mxu0 %v156
    %v383 = vpop.f32.mrf.mxu0
    %v384 = vadd.f32 0.0, %v383
    %385 = vmatmul.f32.gmra.mxu0 %v157
    %v386 = vpop.f32.mrf.mxu0
    %v387 = vadd.f32 0.0, %v386
    %388 = vmatmul.f32.gmra.mxu0 %v158
    %v389 = vpop.f32.mrf.mxu0
    %v390 = vadd.f32 0.0, %v389
    %391 = vmatmul.f32.gmra.mxu0 %v159
    %v392 = vpop.f32.mrf.mxu0
    %v393 = vadd.f32 0.0, %v392
    %394 = vmatmul.f32.gmra.mxu0 %v160
    %v395 = vpop.f32.mrf.mxu0
    %v396 = vadd.f32 0.0, %v395
    %397 = vmatmul.f32.gmra.mxu0 %v161
    %v398 = vpop.f32.mrf.mxu0
    %v399 = vadd.f32 0.0, %v398
    %400 = vmatmul.f32.gmra.mxu0 %v162
    %v401 = vpop.f32.mrf.mxu0
    %v402 = vadd.f32 0.0, %v401
    %403 = vdwg.mxu0
    %v404 = vld [vmem:[%s4] sm:$0x1]
    %v405 = vld [vmem:[%s5] sm:$0x1]
    %v406 = vadd.f32 %v213, %v216
    %v407 = vadd.f32 %v406, %v219
    %v408 = vadd.f32 %v407, %v222
    %v409 = vadd.f32 %v408, %v225
    %v410 = vadd.f32 %v409, %v228
    %v411 = vadd.f32 %v410, %v231
    %v412 = vadd.f32 %v411, %v234
    %v413 = vadd.f32 %v412, %v237
    %v414 = vadd.f32 %v413, %v240
    %v415 = vadd.f32 %v414, %v243
    %v416 = vadd.f32 %v415, %v246
    %v417 = vadd.f32 %v416, %v249
    %v418 = vadd.f32 %v417, %v252
    %v419 = vadd.f32 %v418, %v255
    %v420 = vadd.f32 %v419, %v258
    %v421 = vadd.f32 %v420, %v261
    %v422 = vadd.f32 %v421, %v264
    %v423 = vadd.f32 %v422, %v267
    %v424 = vadd.f32 %v423, %v270
    %v425 = vadd.f32 %v424, %v273
    %v426 = vadd.f32 %v425, %v276
    %v427 = vadd.f32 %v426, %v279
    %v428 = vadd.f32 %v427, %v282
    %v429 = vadd.f32 %v428, %v285
    %v430 = vadd.f32 %v429, %v288
    %v431 = vadd.f32 %v430, %v291
    %v432 = vadd.f32 %v431, %v294
    %v433 = vadd.f32 %v432, %v297
    %v434 = vadd.f32 %v433, %v300
    %v435 = vadd.f32 %v434, %v303
    %v436 = vadd.f32 %v435, %v306
    %v437 = vadd.f32 %v436, %v309
    %v438 = vadd.f32 %v437, %v312
    %v439 = vadd.f32 %v438, %v315
    %v440 = vadd.f32 %v439, %v318
    %v441 = vadd.f32 %v440, %v321
    %v442 = vadd.f32 %v441, %v324
    %v443 = vadd.f32 %v442, %v327
    %v444 = vadd.f32 %v443, %v330
    %v445 = vadd.f32 %v444, %v333
    %v446 = vadd.f32 %v445, %v336
    %v447 = vadd.f32 %v446, %v339
    %v448 = vadd.f32 %v447, %v342
    %v449 = vadd.f32 %v448, %v345
    %v450 = vadd.f32 %v449, %v348
    %v451 = vadd.f32 %v450, %v351
    %v452 = vadd.f32 %v451, %v354
    %v453 = vadd.f32 %v452, %v357
    %v454 = vadd.f32 %v453, %v360
    %v455 = vadd.f32 %v454, %v363
    %v456 = vadd.f32 %v455, %v366
    %v457 = vadd.f32 %v456, %v369
    %v458 = vadd.f32 %v457, %v372
    %v459 = vadd.f32 %v458, %v375
    %v460 = vadd.f32 %v459, %v378
    %v461 = vadd.f32 %v460, %v381
    %v462 = vadd.f32 %v461, %v384
    %v463 = vadd.f32 %v462, %v387
    %v464 = vadd.f32 %v463, %v390
    %v465 = vadd.f32 %v464, %v393
    %v466 = vadd.f32 %v465, %v396
    %v467 = vadd.f32 %v466, %v399
    %v468 = vadd.f32 %v467, %v402
    %v469 = vrot.slane %v468, 4
    %v470 = vadd.f32 %v468, %v469
    %v471 = vrot.slane %v470, 2
    %v472 = vadd.f32 %v470, %v471
    %v473 = vrot.slane %v472, 1
    %v474 = vadd.f32 %v472, %v473
    %v475 = vrcp.pop 512.0
    %v476 = vmul.f32 512.0, %v475
    %v477 = vsub.f32 1.0, %v476
    %v478 = vmul.f32 %v475, %v477
    %v479 = vadd.f32 %v475, %v478
    %vm480 = vweird.f32 %v475
    %v481 = vsel %vm480, %v475, %v479
    %v482 = vmul.f32 %v474, %v481
    %v483 = vmul.f32 %v213, %v213
    %v484 = vmul.f32 %v216, %v216
    %v485 = vmul.f32 %v219, %v219
    %v486 = vmul.f32 %v222, %v222
    %v487 = vmul.f32 %v225, %v225
    %v488 = vmul.f32 %v228, %v228
    %v489 = vmul.f32 %v231, %v231
    %v490 = vmul.f32 %v234, %v234
    %v491 = vmul.f32 %v237, %v237
    %v492 = vmul.f32 %v240, %v240
    %v493 = vmul.f32 %v243, %v243
    %v494 = vmul.f32 %v246, %v246
    %v495 = vmul.f32 %v249, %v249
    %v496 = vmul.f32 %v252, %v252
    %v497 = vmul.f32 %v255, %v255
    %v498 = vmul.f32 %v258, %v258
    %v499 = vmul.f32 %v261, %v261
    %v500 = vmul.f32 %v264, %v264
    %v501 = vmul.f32 %v267, %v267
    %v502 = vmul.f32 %v270, %v270
    %v503 = vmul.f32 %v273, %v273
    %v504 = vmul.f32 %v276, %v276
    %v505 = vmul.f32 %v279, %v279
    %v506 = vmul.f32 %v282, %v282
    %v507 = vmul.f32 %v285, %v285
    %v508 = vmul.f32 %v288, %v288
    %v509 = vmul.f32 %v291, %v291
    %v510 = vmul.f32 %v294, %v294
    %v511 = vmul.f32 %v297, %v297
    %v512 = vmul.f32 %v300, %v300
    %v513 = vmul.f32 %v303, %v303
    %v514 = vmul.f32 %v306, %v306
    %v515 = vmul.f32 %v309, %v309
    %v516 = vmul.f32 %v312, %v312
    %v517 = vmul.f32 %v315, %v315
    %v518 = vmul.f32 %v318, %v318
    %v519 = vmul.f32 %v321, %v321
    %v520 = vmul.f32 %v324, %v324
    %v521 = vmul.f32 %v327, %v327
    %v522 = vmul.f32 %v330, %v330
    %v523 = vmul.f32 %v333, %v333
    %v524 = vmul.f32 %v336, %v336
    %v525 = vmul.f32 %v339, %v339
    %v526 = vmul.f32 %v342, %v342
    %v527 = vmul.f32 %v345, %v345
    %v528 = vmul.f32 %v348, %v348
    %v529 = vmul.f32 %v351, %v351
    %v530 = vmul.f32 %v354, %v354
    %v531 = vmul.f32 %v357, %v357
    %v532 = vmul.f32 %v360, %v360
    %v533 = vmul.f32 %v363, %v363
    %v534 = vmul.f32 %v366, %v366
    %v535 = vmul.f32 %v369, %v369
    %v536 = vmul.f32 %v372, %v372
    %v537 = vmul.f32 %v375, %v375
    %v538 = vmul.f32 %v378, %v378
    %v539 = vmul.f32 %v381, %v381
    %v540 = vmul.f32 %v384, %v384
    %v541 = vmul.f32 %v387, %v387
    %v542 = vmul.f32 %v390, %v390
    %v543 = vmul.f32 %v393, %v393
    %v544 = vmul.f32 %v396, %v396
    %v545 = vmul.f32 %v399, %v399
    %v546 = vmul.f32 %v402, %v402
    %v547 = vadd.f32 %v483, %v484
    %v548 = vadd.f32 %v547, %v485
    %v549 = vadd.f32 %v548, %v486
    %v550 = vadd.f32 %v549, %v487
    %v551 = vadd.f32 %v550, %v488
    %v552 = vadd.f32 %v551, %v489
    %v553 = vadd.f32 %v552, %v490
    %v554 = vadd.f32 %v553, %v491
    %v555 = vadd.f32 %v554, %v492
    %v556 = vadd.f32 %v555, %v493
    %v557 = vadd.f32 %v556, %v494
    %v558 = vadd.f32 %v557, %v495
    %v559 = vadd.f32 %v558, %v496
    %v560 = vadd.f32 %v559, %v497
    %v561 = vadd.f32 %v560, %v498
    %v562 = vadd.f32 %v561, %v499
    %v563 = vadd.f32 %v562, %v500
    %v564 = vadd.f32 %v563, %v501
    %v565 = vadd.f32 %v564, %v502
    %v566 = vadd.f32 %v565, %v503
    %v567 = vadd.f32 %v566, %v504
    %v568 = vadd.f32 %v567, %v505
    %v569 = vadd.f32 %v568, %v506
    %v570 = vadd.f32 %v569, %v507
    %v571 = vadd.f32 %v570, %v508
    %v572 = vadd.f32 %v571, %v509
    %v573 = vadd.f32 %v572, %v510
    %v574 = vadd.f32 %v573, %v511
    %v575 = vadd.f32 %v574, %v512
    %v576 = vadd.f32 %v575, %v513
    %v577 = vadd.f32 %v576, %v514
    %v578 = vadd.f32 %v577, %v515
    %v579 = vadd.f32 %v578, %v516
    %v580 = vadd.f32 %v579, %v517
    %v581 = vadd.f32 %v580, %v518
    %v582 = vadd.f32 %v581, %v519
    %v583 = vadd.f32 %v582, %v520
    %v584 = vadd.f32 %v583, %v521
    %v585 = vadd.f32 %v584, %v522
    %v586 = vadd.f32 %v585, %v523
    %v587 = vadd.f32 %v586, %v524
    %v588 = vadd.f32 %v587, %v525
    %v589 = vadd.f32 %v588, %v526
    %v590 = vadd.f32 %v589, %v527
    %v591 = vadd.f32 %v590, %v528
    %v592 = vadd.f32 %v591, %v529
    %v593 = vadd.f32 %v592, %v530
    %v594 = vadd.f32 %v593, %v531
    %v595 = vadd.f32 %v594, %v532
    %v596 = vadd.f32 %v595, %v533
    %v597 = vadd.f32 %v596, %v534
    %v598 = vadd.f32 %v597, %v535
    %v599 = vadd.f32 %v598, %v536
    %v600 = vadd.f32 %v599, %v537
    %v601 = vadd.f32 %v600, %v538
    %v602 = vadd.f32 %v601, %v539
    %v603 = vadd.f32 %v602, %v540
    %v604 = vadd.f32 %v603, %v541
    %v605 = vadd.f32 %v604, %v542
    %v606 = vadd.f32 %v605, %v543
    %v607 = vadd.f32 %v606, %v544
    %v608 = vadd.f32 %v607, %v545
    %v609 = vadd.f32 %v608, %v546
    %v610 = vrot.slane %v609, 4
    %v611 = vadd.f32 %v609, %v610
    %v612 = vrot.slane %v611, 2
    %v613 = vadd.f32 %v611, %v612
    %v614 = vrot.slane %v613, 1
    %v615 = vadd.f32 %v613, %v614
    %v616 = vmul.f32 %v615, %v481
    %v617 = vmul.f32 %v482, %v482
    %v618 = vsub.f32 %v616, %v617
    %v619 = vadd.f32 %v618, 1e-05
    %v620 = vrsqrt.pop %v619
    %v621 = vmul.f32 %v620, %v619
    %v622 = vmul.f32 %v621, %v620
    %v623 = vmul.f32 0.5, %v622
    %v624 = vsub.f32 1.5, %v623
    %v625 = vmul.f32 %v620, %v624
    %vm626 = vweird.f32 %v619
    %vm627 = vweird.f32 %v620
    %vm628 = vmor %vm626, %vm627
    %v629 = vsel %vm628, %v620, %v625
    %v630 = vmul.f32 %v404, %v629
    %v631 = vmul.f32 %v482, %v630
    %v632 = vsub.f32 %v405, %v631
    %v634 = vperm.slane %v630, 0
    %v636 = vmul.f32 %v213, %v634
    %v637 = vmul.f32 %v216, %v634
    %v638 = vmul.f32 %v219, %v634
    %v639 = vmul.f32 %v222, %v634
    %v640 = vmul.f32 %v225, %v634
    %v641 = vmul.f32 %v228, %v634
    %v642 = vmul.f32 %v231, %v634
    %v643 = vmul.f32 %v234, %v634
    %v644 = vmul.f32 %v237, %v634
    %v645 = vmul.f32 %v240, %v634
    %v646 = vmul.f32 %v243, %v634
    %v647 = vmul.f32 %v246, %v634
    %v648 = vmul.f32 %v249, %v634
    %v649 = vmul.f32 %v252, %v634
    %v650 = vmul.f32 %v255, %v634
    %v651 = vmul.f32 %v258, %v634
    %v652 = vmul.f32 %v261, %v634
    %v653 = vmul.f32 %v264, %v634
    %v654 = vmul.f32 %v267, %v634
    %v655 = vmul.f32 %v270, %v634
    %v656 = vmul.f32 %v273, %v634
    %v657 = vmul.f32 %v276, %v634
    %v658 = vmul.f32 %v279, %v634
    %v659 = vmul.f32 %v282, %v634
    %v660 = vmul.f32 %v285, %v634
    %v661 = vmul.f32 %v288, %v634
    %v662 = vmul.f32 %v291, %v634
    %v663 = vmul.f32 %v294, %v634
    %v664 = vmul.f32 %v297, %v634
    %v665 = vmul.f32 %v300, %v634
    %v666 = vmul.f32 %v303, %v634
    %v667 = vmul.f32 %v306, %v634
    %v668 = vmul.f32 %v309, %v634
    %v669 = vmul.f32 %v312, %v634
    %v670 = vmul.f32 %v315, %v634
    %v671 = vmul.f32 %v318, %v634
    %v672 = vmul.f32 %v321, %v634
    %v673 = vmul.f32 %v324, %v634
    %v674 = vmul.f32 %v327, %v634
    %v675 = vmul.f32 %v330, %v634
    %v676 = vmul.f32 %v333, %v634
    %v677 = vmul.f32 %v336, %v634
    %v678 = vmul.f32 %v339, %v634
    %v679 = vmul.f32 %v342, %v634
    %v680 = vmul.f32 %v345, %v634
    %v681 = vmul.f32 %v348, %v634
    %v682 = vmul.f32 %v351, %v634
    %v683 = vmul.f32 %v354, %v634
    %v684 = vmul.f32 %v357, %v634
    %v685 = vmul.f32 %v360, %v634
    %v686 = vmul.f32 %v363, %v634
    %v687 = vmul.f32 %v366, %v634
    %v688 = vmul.f32 %v369, %v634
    %v689 = vmul.f32 %v372, %v634
    %v690 = vmul.f32 %v375, %v634
    %v691 = vmul.f32 %v378, %v634
    %v692 = vmul.f32 %v381, %v634
    %v693 = vmul.f32 %v384, %v634
    %v694 = vmul.f32 %v387, %v634
    %v695 = vmul.f32 %v390, %v634
    %v696 = vmul.f32 %v393, %v634
    %v697 = vmul.f32 %v396, %v634
    %v698 = vmul.f32 %v399, %v634
    %v699 = vmul.f32 %v402, %v634
    %v701 = vperm.slane %v632, 0
    %v703 = vadd.f32 %v636, %v701
    %v704 = vadd.f32 %v637, %v701
    %v705 = vadd.f32 %v638, %v701
    %v706 = vadd.f32 %v639, %v701
    %v707 = vadd.f32 %v640, %v701
    %v708 = vadd.f32 %v641, %v701
    %v709 = vadd.f32 %v642, %v701
    %v710 = vadd.f32 %v643, %v701
    %v711 = vadd.f32 %v644, %v701
    %v712 = vadd.f32 %v645, %v701
    %v713 = vadd.f32 %v646, %v701
    %v714 = vadd.f32 %v647, %v701
    %v715 = vadd.f32 %v648, %v701
    %v716 = vadd.f32 %v649, %v701
    %v717 = vadd.f32 %v650, %v701
    %v718 = vadd.f32 %v651, %v701
    %v719 = vadd.f32 %v652, %v701
    %v720 = vadd.f32 %v653, %v701
    %v721 = vadd.f32 %v654, %v701
    %v722 = vadd.f32 %v655, %v701
    %v723 = vadd.f32 %v656, %v701
    %v724 = vadd.f32 %v657, %v701
    %v725 = vadd.f32 %v658, %v701
    %v726 = vadd.f32 %v659, %v701
    %v727 = vadd.f32 %v660, %v701
    %v728 = vadd.f32 %v661, %v701
    %v729 = vadd.f32 %v662, %v701
    %v730 = vadd.f32 %v663, %v701
    %v731 = vadd.f32 %v664, %v701
    %v732 = vadd.f32 %v665, %v701
    %v733 = vadd.f32 %v666, %v701
    %v734 = vadd.f32 %v667, %v701
    %v735 = vadd.f32 %v668, %v701
    %v736 = vadd.f32 %v669, %v701
    %v737 = vadd.f32 %v670, %v701
    %v738 = vadd.f32 %v671, %v701
    %v739 = vadd.f32 %v672, %v701
    %v740 = vadd.f32 %v673, %v701
    %v741 = vadd.f32 %v674, %v701
    %v742 = vadd.f32 %v675, %v701
    %v743 = vadd.f32 %v676, %v701
    %v744 = vadd.f32 %v677, %v701
    %v745 = vadd.f32 %v678, %v701
    %v746 = vadd.f32 %v679, %v701
    %v747 = vadd.f32 %v680, %v701
    %v748 = vadd.f32 %v681, %v701
    %v749 = vadd.f32 %v682, %v701
    %v750 = vadd.f32 %v683, %v701
    %v751 = vadd.f32 %v684, %v701
    %v752 = vadd.f32 %v685, %v701
    %v753 = vadd.f32 %v686, %v701
    %v754 = vadd.f32 %v687, %v701
    %v755 = vadd.f32 %v688, %v701
    %v756 = vadd.f32 %v689, %v701
    %v757 = vadd.f32 %v690, %v701
    %v758 = vadd.f32 %v691, %v701
    %v759 = vadd.f32 %v692, %v701
    %v760 = vadd.f32 %v693, %v701
    %v761 = vadd.f32 %v694, %v701
    %v762 = vadd.f32 %v695, %v701
    %v763 = vadd.f32 %v696, %v701
    %v764 = vadd.f32 %v697, %v701
    %v765 = vadd.f32 %v698, %v701
    %v766 = vadd.f32 %v699, %v701
    %v767 = vmax.f32 %v703, 0.0
    %v768 = vmax.f32 %v704, 0.0
    %v769 = vmax.f32 %v705, 0.0
    %v770 = vmax.f32 %v706, 0.0
    %v771 = vmax.f32 %v707, 0.0
    %v772 = vmax.f32 %v708, 0.0
    %v773 = vmax.f32 %v709, 0.0
    %v774 = vmax.f32 %v710, 0.0
    %v775 = vmax.f32 %v711, 0.0
    %v776 = vmax.f32 %v712, 0.0
    %v777 = vmax.f32 %v713, 0.0
    %v778 = vmax.f32 %v714, 0.0
    %v779 = vmax.f32 %v715, 0.0
    %v780 = vmax.f32 %v716, 0.0
    %v781 = vmax.f32 %v717, 0.0
    %v782 = vmax.f32 %v718, 0.0
    %v783 = vmax.f32 %v719, 0.0
    %v784 = vmax.f32 %v720, 0.0
    %v785 = vmax.f32 %v721, 0.0
    %v786 = vmax.f32 %v722, 0.0
    %v787 = vmax.f32 %v723, 0.0
    %v788 = vmax.f32 %v724, 0.0
    %v789 = vmax.f32 %v725, 0.0
    %v790 = vmax.f32 %v726, 0.0
    %v791 = vmax.f32 %v727, 0.0
    %v792 = vmax.f32 %v728, 0.0
    %v793 = vmax.f32 %v729, 0.0
    %v794 = vmax.f32 %v730, 0.0
    %v795 = vmax.f32 %v731, 0.0
    %v796 = vmax.f32 %v732, 0.0
    %v797 = vmax.f32 %v733, 0.0
    %v798 = vmax.f32 %v734, 0.0
    %v799 = vmax.f32 %v735, 0.0
    %v800 = vmax.f32 %v736, 0.0
    %v801 = vmax.f32 %v737, 0.0
    %v802 = vmax.f32 %v738, 0.0
    %v803 = vmax.f32 %v739, 0.0
    %v804 = vmax.f32 %v740, 0.0
    %v805 = vmax.f32 %v741, 0.0
    %v806 = vmax.f32 %v742, 0.0
    %v807 = vmax.f32 %v743, 0.0
    %v808 = vmax.f32 %v744, 0.0
    %v809 = vmax.f32 %v745, 0.0
    %v810 = vmax.f32 %v746, 0.0
    %v811 = vmax.f32 %v747, 0.0
    %v812 = vmax.f32 %v748, 0.0
    %v813 = vmax.f32 %v749, 0.0
    %v814 = vmax.f32 %v750, 0.0
    %v815 = vmax.f32 %v751, 0.0
    %v816 = vmax.f32 %v752, 0.0
    %v817 = vmax.f32 %v753, 0.0
    %v818 = vmax.f32 %v754, 0.0
    %v819 = vmax.f32 %v755, 0.0
    %v820 = vmax.f32 %v756, 0.0
    %v821 = vmax.f32 %v757, 0.0
    %v822 = vmax.f32 %v758, 0.0
    %v823 = vmax.f32 %v759, 0.0
    %v824 = vmax.f32 %v760, 0.0
    %v825 = vmax.f32 %v761, 0.0
    %v826 = vmax.f32 %v762, 0.0
    %v827 = vmax.f32 %v763, 0.0
    %v828 = vmax.f32 %v764, 0.0
    %v829 = vmax.f32 %v765, 0.0
    %v830 = vmax.f32 %v766, 0.0
    %831 = vst [vmem:[#allocation2] sm:$0xff] 0.0
    %832 = vst [vmem:[#allocation2 + $0x8] sm:$0xff] 0.0
    %833 = vst [vmem:[#allocation2 + $0x10] sm:$0xff] 0.0
    %834 = vst [vmem:[#allocation2 + $0x18] sm:$0xff] 0.0
    %835 = vst [vmem:[#allocation2 + $0x20] sm:$0xff] 0.0
    %836 = vst [vmem:[#allocation2 + $0x28] sm:$0xff] 0.0
    %837 = vst [vmem:[#allocation2 + $0x30] sm:$0xff] 0.0
    %838 = vst [vmem:[#allocation2 + $0x38] sm:$0xff] 0.0
    %839 = vst [vmem:[#allocation2 + $0x40] sm:$0xff] 0.0
    %840 = vst [vmem:[#allocation2 + $0x48] sm:$0xff] 0.0
    %841 = vst [vmem:[#allocation2 + $0x50] sm:$0xff] 0.0
    %842 = vst [vmem:[#allocation2 + $0x58] sm:$0xff] 0.0
    %843 = vst [vmem:[#allocation2 + $0x60] sm:$0xff] 0.0
    %844 = vst [vmem:[#allocation2 + $0x68] sm:$0xff] 0.0
    %845 = vst [vmem:[#allocation2 + $0x70] sm:$0xff] 0.0
    %846 = vst [vmem:[#allocation2 + $0x78] sm:$0xff] 0.0
    %847 = vst [vmem:[#allocation2 + $0x80] sm:$0xff] 0.0
    %848 = vst [vmem:[#allocation2 + $0x88] sm:$0xff] 0.0
    %849 = vst [vmem:[#allocation2 + $0x90] sm:$0xff] 0.0
    %850 = vst [vmem:[#allocation2 + $0x98] sm:$0xff] 0.0
    %851 = vst [vmem:[#allocation2 + $0xa0] sm:$0xff] 0.0
    %852 = vst [vmem:[#allocation2 + $0xa8] sm:$0xff] 0.0
    %853 = vst [vmem:[#allocation2 + $0xb0] sm:$0xff] 0.0
    %854 = vst [vmem:[#allocation2 + $0xb8] sm:$0xff] 0.0
    %855 = vst [vmem:[#allocation2 + $0xc0] sm:$0xff] 0.0
    %856 = vst [vmem:[#allocation2 + $0xc8] sm:$0xff] 0.0
    %857 = vst [vmem:[#allocation2 + $0xd0] sm:$0xff] 0.0
    %858 = vst [vmem:[#allocation2 + $0xd8] sm:$0xff] 0.0
    %859 = vst [vmem:[#allocation2 + $0xe0] sm:$0xff] 0.0
    %860 = vst [vmem:[#allocation2 + $0xe8] sm:$0xff] 0.0
    %861 = vst [vmem:[#allocation2 + $0xf0] sm:$0xff] 0.0
    %862 = vst [vmem:[#allocation2 + $0xf8] sm:$0xff] 0.0
    %863 = vst [vmem:[#allocation2 + $0x100] sm:$0xff] 0.0
    %864 = vst [vmem:[#allocation2 + $0x108] sm:$0xff] 0.0
    %865 = vst [vmem:[#allocation2 + $0x110] sm:$0xff] 0.0
    %866 = vst [vmem:[#allocation2 + $0x118] sm:$0xff] 0.0
    %867 = vst [vmem:[#allocation2 + $0x120] sm:$0xff] 0.0
    %868 = vst [vmem:[#allocation2 + $0x128] sm:$0xff] 0.0
    %869 = vst [vmem:[#allocation2 + $0x130] sm:$0xff] 0.0
    %870 = vst [vmem:[#allocation2 + $0x138] sm:$0xff] 0.0
    %871 = vst [vmem:[#allocation2 + $0x140] sm:$0xff] 0.0
    %872 = vst [vmem:[#allocation2 + $0x148] sm:$0xff] 0.0
    %873 = vst [vmem:[#allocation2 + $0x150] sm:$0xff] 0.0
    %874 = vst [vmem:[#allocation2 + $0x158] sm:$0xff] 0.0
    %875 = vst [vmem:[#allocation2 + $0x160] sm:$0xff] 0.0
    %876 = vst [vmem:[#allocation2 + $0x168] sm:$0xff] 0.0
    %877 = vst [vmem:[#allocation2 + $0x170] sm:$0xff] 0.0
    %878 = vst [vmem:[#allocation2 + $0x178] sm:$0xff] 0.0
    %879 = vst [vmem:[#allocation2 + $0x180] sm:$0xff] 0.0
    %880 = vst [vmem:[#allocation2 + $0x188] sm:$0xff] 0.0
    %881 = vst [vmem:[#allocation2 + $0x190] sm:$0xff] 0.0
    %882 = vst [vmem:[#allocation2 + $0x198] sm:$0xff] 0.0
    %883 = vst [vmem:[#allocation2 + $0x1a0] sm:$0xff] 0.0
    %884 = vst [vmem:[#allocation2 + $0x1a8] sm:$0xff] 0.0
    %885 = vst [vmem:[#allocation2 + $0x1b0] sm:$0xff] 0.0
    %886 = vst [vmem:[#allocation2 + $0x1b8] sm:$0xff] 0.0
    %887 = vst [vmem:[#allocation2 + $0x1c0] sm:$0xff] 0.0
    %888 = vst [vmem:[#allocation2 + $0x1c8] sm:$0xff] 0.0
    %889 = vst [vmem:[#allocation2 + $0x1d0] sm:$0xff] 0.0
    %890 = vst [vmem:[#allocation2 + $0x1d8] sm:$0xff] 0.0
    %891 = vst [vmem:[#allocation2 + $0x1e0] sm:$0xff] 0.0
    %892 = vst [vmem:[#allocation2 + $0x1e8] sm:$0xff] 0.0
    %893 = vst [vmem:[#allocation2 + $0x1f0] sm:$0xff] 0.0
    %894 = vst [vmem:[#allocation2 + $0x1f8] sm:$0xff] 0.0
    %895 = vst [vmem:[#allocation2 + $0x200] sm:$0xff] 0.0
    %896 = vst [vmem:[#allocation2 + $0x208] sm:$0xff] 0.0
    %897 = vst [vmem:[#allocation2 + $0x210] sm:$0xff] 0.0
    %898 = vst [vmem:[#allocation2 + $0x218] sm:$0xff] 0.0
    %899 = vst [vmem:[#allocation2 + $0x220] sm:$0xff] 0.0
    %900 = vst [vmem:[#allocation2 + $0x228] sm:$0xff] 0.0
    %901 = vst [vmem:[#allocation2 + $0x18] sm:$0xff] %v767
    %902 = vst [vmem:[#allocation2 + $0x20] sm:$0xff] %v768
    %903 = vst [vmem:[#allocation2 + $0x28] sm:$0xff] %v769
    %904 = vst [vmem:[#allocation2 + $0x30] sm:$0xff] %v770
    %905 = vst [vmem:[#allocation2 + $0x38] sm:$0xff] %v771
    %906 = vst [vmem:[#allocation2 + $0x40] sm:$0xff] %v772
    %907 = vst [vmem:[#allocation2 + $0x48] sm:$0xff] %v773
    %908 = vst [vmem:[#allocation2 + $0x50] sm:$0xff] %v774
    %909 = vst [vmem:[#allocation2 + $0x58] sm:$0xff] %v775
    %910 = vst [vmem:[#allocation2 + $0x60] sm:$0xff] %v776
    %911 = vst [vmem:[#allocation2 + $0x68] sm:$0xff] %v777
    %912 = vst [vmem:[#allocation2 + $0x70] sm:$0xff] %v778
    %913 = vst [vmem:[#allocation2 + $0x78] sm:$0xff] %v779
    %914 = vst [vmem:[#allocation2 + $0x80] sm:$0xff] %v780
    %915 = vst [vmem:[#allocation2 + $0x88] sm:$0xff] %v781
    %916 = vst [vmem:[#allocation2 + $0x90] sm:$0xff] %v782
    %917 = vst [vmem:[#allocation2 + $0x98] sm:$0xff] %v783
    %918 = vst [vmem:[#allocation2 + $0xa0] sm:$0xff] %v784
    %919 = vst [vmem:[#allocation2 + $0xa8] sm:$0xff] %v785
    %920 = vst [vmem:[#allocation2 + $0xb0] sm:$0xff] %v786
    %921 = vst [vmem:[#allocation2 + $0xb8] sm:$0xff] %v787
    %922 = vst [vmem:[#allocation2 + $0xc0] sm:$0xff] %v788
    %923 = vst [vmem:[#allocation2 + $0xc8] sm:$0xff] %v789
    %924 = vst [vmem:[#allocation2 + $0xd0] sm:$0xff] %v790
    %925 = vst [vmem:[#allocation2 + $0xd8] sm:$0xff] %v791
    %926 = vst [vmem:[#allocation2 + $0xe0] sm:$0xff] %v792
    %927 = vst [vmem:[#allocation2 + $0xe8] sm:$0xff] %v793
    %928 = vst [vmem:[#allocation2 + $0xf0] sm:$0xff] %v794
    %929 = vst [vmem:[#allocation2 + $0xf8] sm:$0xff] %v795
    %930 = vst [vmem:[#allocation2 + $0x100] sm:$0xff] %v796
    %931 = vst [vmem:[#allocation2 + $0x108] sm:$0xff] %v797
    %932 = vst [vmem:[#allocation2 + $0x110] sm:$0xff] %v798
    %933 = vst [vmem:[#allocation2 + $0x118] sm:$0xff] %v799
    %934 = vst [vmem:[#allocation2 + $0x120] sm:$0xff] %v800
    %935 = vst [vmem:[#allocation2 + $0x128] sm:$0xff] %v801
    %936 = vst [vmem:[#allocation2 + $0x130] sm:$0xff] %v802
    %937 = vst [vmem:[#allocation2 + $0x138] sm:$0xff] %v803
    %938 = vst [vmem:[#allocation2 + $0x140] sm:$0xff] %v804
    %939 = vst [vmem:[#allocation2 + $0x148] sm:$0xff] %v805
    %940 = vst [vmem:[#allocation2 + $0x150] sm:$0xff] %v806
    %941 = vst [vmem:[#allocation2 + $0x158] sm:$0xff] %v807
    %942 = vst [vmem:[#allocation2 + $0x160] sm:$0xff] %v808
    %943 = vst [vmem:[#allocation2 + $0x168] sm:$0xff] %v809
    %944 = vst [vmem:[#allocation2 + $0x170] sm:$0xff] %v810
    %945 = vst [vmem:[#allocation2 + $0x178] sm:$0xff] %v811
    %946 = vst [vmem:[#allocation2 + $0x180] sm:$0xff] %v812
    %947 = vst [vmem:[#allocation2 + $0x188] sm:$0xff] %v813
    %948 = vst [vmem:[#allocation2 + $0x190] sm:$0xff] %v814
    %949 = vst [vmem:[#allocation2 + $0x198] sm:$0xff] %v815
    %950 = vst [vmem:[#allocation2 + $0x1a0] sm:$0xff] %v816
    %951 = vst [vmem:[#allocation2 + $0x1a8] sm:$0xff] %v817
    %952 = vst [vmem:[#allocation2 + $0x1b0] sm:$0xff] %v818
    %953 = vst [vmem:[#allocation2 + $0x1b8] sm:$0xff] %v819
    %954 = vst [vmem:[#allocation2 + $0x1c0] sm:$0xff] %v820
    %955 = vst [vmem:[#allocation2 + $0x1c8] sm:$0xff] %v821
    %956 = vst [vmem:[#allocation2 + $0x1d0] sm:$0xff] %v822
    %957 = vst [vmem:[#allocation2 + $0x1d8] sm:$0xff] %v823
    %958 = vst [vmem:[#allocation2 + $0x1e0] sm:$0xff] %v824
    %959 = vst [vmem:[#allocation2 + $0x1e8] sm:$0xff] %v825
    %960 = vst [vmem:[#allocation2 + $0x1f0] sm:$0xff] %v826
    %961 = vst [vmem:[#allocation2 + $0x1f8] sm:$0xff] %v827
    %962 = vst [vmem:[#allocation2 + $0x200] sm:$0xff] %v828
    %963 = vst [vmem:[#allocation2 + $0x208] sm:$0xff] %v829
    %964 = vst [vmem:[#allocation2 + $0x210] sm:$0xff] %v830
    %v965 = vlaneseq
    %v966 = vshrl.u32 %v965, 7
    %v967 = vadd.s32 %v966, 8
    %v968 = vadd.s32 %v966, 16
    %v969 = vadd.s32 %v966, 24
    %v970 = vadd.s32 %v966, 32
    %v971 = vadd.s32 %v966, 40
    %v972 = vadd.s32 %v966, 48
    %v973 = vadd.s32 %v966, 56
    %v974 = vadd.s32 %v966, 64
    %v975 = vadd.s32 %v966, 72
    %v976 = vadd.s32 %v966, 80
    %v977 = vadd.s32 %v966, 88
    %v978 = vadd.s32 %v966, 96
    %v979 = vadd.s32 %v966, 104
    %v980 = vadd.s32 %v966, 112
    %v981 = vadd.s32 %v966, 120
    %v982 = vadd.s32 %v966, 128
    %v983 = vadd.s32 %v966, 136
    %v984 = vadd.s32 %v966, 144
    %v985 = vadd.s32 %v966, 152
    %v986 = vadd.s32 %v966, 160
    %v987 = vadd.s32 %v966, 168
    %v988 = vadd.s32 %v966, 176
    %v989 = vadd.s32 %v966, 184
    %v990 = vadd.s32 %v966, 192
    %v991 = vadd.s32 %v966, 200
    %v992 = vadd.s32 %v966, 208
    %v993 = vadd.s32 %v966, 216
    %v994 = vadd.s32 %v966, 224
    %v995 = vadd.s32 %v966, 232
    %v996 = vadd.s32 %v966, 240
    %v997 = vadd.s32 %v966, 248
    %v998 = vadd.s32 %v966, 256
    %v999 = vadd.s32 %v966, 264
    %v1000 = vadd.s32 %v966, 272
    %v1001 = vadd.s32 %v966, 280
    %v1002 = vadd.s32 %v966, 288
    %v1003 = vadd.s32 %v966, 296
    %v1004 = vadd.s32 %v966, 304
    %v1005 = vadd.s32 %v966, 312
    %v1006 = vadd.s32 %v966, 320
    %v1007 = vadd.s32 %v966, 328
    %v1008 = vadd.s32 %v966, 336
    %v1009 = vadd.s32 %v966, 344
    %v1010 = vadd.s32 %v966, 352
    %v1011 = vadd.s32 %v966, 360
    %v1012 = vadd.s32 %v966, 368
    %v1013 = vadd.s32 %v966, 376
    %v1014 = vadd.s32 %v966, 384
    %v1015 = vadd.s32 %v966, 392
    %v1016 = vadd.s32 %v966, 400
    %v1017 = vadd.s32 %v966, 408
    %v1018 = vadd.s32 %v966, 416
    %v1019 = vadd.s32 %v966, 424
    %v1020 = vadd.s32 %v966, 432
    %v1021 = vadd.s32 %v966, 440
    %v1022 = vadd.s32 %v966, 448
    %v1023 = vadd.s32 %v966, 456
    %v1024 = vadd.s32 %v966, 464
    %v1025 = vadd.s32 %v966, 472
    %v1026 = vadd.s32 %v966, 480
    %v1027 = vadd.s32 %v966, 488
    %v1028 = vadd.s32 %v966, 496
    %v1029 = vadd.s32 %v966, 504
    %v1030 = vand.u32 %v966, 15
    %v1031 = vand.u32 %v967, 15
    %v1032 = vand.u32 %v968, 15
    %v1033 = vand.u32 %v969, 15
    %v1034 = vand.u32 %v970, 15
    %v1035 = vand.u32 %v971, 15
    %v1036 = vand.u32 %v972, 15
    %v1037 = vand.u32 %v973, 15
    %v1038 = vand.u32 %v974, 15
    %v1039 = vand.u32 %v975, 15
    %v1040 = vand.u32 %v976, 15
    %v1041 = vand.u32 %v977, 15
    %v1042 = vand.u32 %v978, 15
    %v1043 = vand.u32 %v979, 15
    %v1044 = vand.u32 %v980, 15
    %v1045 = vand.u32 %v981, 15
    %v1046 = vand.u32 %v982, 15
    %v1047 = vand.u32 %v983, 15
    %v1048 = vand.u32 %v984, 15
    %v1049 = vand.u32 %v985, 15
    %v1050 = vand.u32 %v986, 15
    %v1051 = vand.u32 %v987, 15
    %v1052 = vand.u32 %v988, 15
    %v1053 = vand.u32 %v989, 15
    %v1054 = vand.u32 %v990, 15
    %v1055 = vand.u32 %v991, 15
    %v1056 = vand.u32 %v992, 15
    %v1057 = vand.u32 %v993, 15
    %v1058 = vand.u32 %v994, 15
    %v1059 = vand.u32 %v995, 15
    %v1060 = vand.u32 %v996, 15
    %v1061 = vand.u32 %v997, 15
    %v1062 = vand.u32 %v998, 15
    %v1063 = vand.u32 %v999, 15
    %v1064 = vand.u32 %v1000, 15
    %v1065 = vand.u32 %v1001, 15
    %v1066 = vand.u32 %v1002, 15
    %v1067 = vand.u32 %v1003, 15
    %v1068 = vand.u32 %v1004, 15
    %v1069 = vand.u32 %v1005, 15
    %v1070 = vand.u32 %v1006, 15
    %v1071 = vand.u32 %v1007, 15
    %v1072 = vand.u32 %v1008, 15
    %v1073 = vand.u32 %v1009, 15
    %v1074 = vand.u32 %v1010, 15
    %v1075 = vand.u32 %v1011, 15
    %v1076 = vand.u32 %v1012, 15
    %v1077 = vand.u32 %v1013, 15
    %v1078 = vand.u32 %v1014, 15
    %v1079 = vand.u32 %v1015, 15
    %v1080 = vand.u32 %v1016, 15
    %v1081 = vand.u32 %v1017, 15
    %v1082 = vand.u32 %v1018, 15
    %v1083 = vand.u32 %v1019, 15
    %v1084 = vand.u32 %v1020, 15
    %v1085 = vand.u32 %v1021, 15
    %v1086 = vand.u32 %v1022, 15
    %v1087 = vand.u32 %v1023, 15
    %v1088 = vand.u32 %v1024, 15
    %v1089 = vand.u32 %v1025, 15
    %v1090 = vand.u32 %v1026, 15
    %v1091 = vand.u32 %v1027, 15
    %v1092 = vand.u32 %v1028, 15
    %v1093 = vand.u32 %v1029, 15
    %v1094 = vand.u32 %v966, 255
    %v1095 = vand.u32 %v967, 255
    %v1096 = vand.u32 %v968, 255
    %v1097 = vand.u32 %v969, 255
    %v1098 = vand.u32 %v970, 255
    %v1099 = vand.u32 %v971, 255
    %v1100 = vand.u32 %v972, 255
    %v1101 = vand.u32 %v973, 255
    %v1102 = vand.u32 %v974, 255
    %v1103 = vand.u32 %v975, 255
    %v1104 = vand.u32 %v976, 255
    %v1105 = vand.u32 %v977, 255
    %v1106 = vand.u32 %v978, 255
    %v1107 = vand.u32 %v979, 255
    %v1108 = vand.u32 %v980, 255
    %v1109 = vand.u32 %v981, 255
    %v1110 = vand.u32 %v982, 255
    %v1111 = vand.u32 %v983, 255
    %v1112 = vand.u32 %v984, 255
    %v1113 = vand.u32 %v985, 255
    %v1114 = vand.u32 %v986, 255
    %v1115 = vand.u32 %v987, 255
    %v1116 = vand.u32 %v988, 255
    %v1117 = vand.u32 %v989, 255
    %v1118 = vand.u32 %v990, 255
    %v1119 = vand.u32 %v991, 255
    %v1120 = vand.u32 %v992, 255
    %v1121 = vand.u32 %v993, 255
    %v1122 = vand.u32 %v994, 255
    %v1123 = vand.u32 %v995, 255
    %v1124 = vand.u32 %v996, 255
    %v1125 = vand.u32 %v997, 255
    %v1126 = vand.u32 %v998, 255
    %v1127 = vand.u32 %v999, 255
    %v1128 = vand.u32 %v1000, 255
    %v1129 = vand.u32 %v1001, 255
    %v1130 = vand.u32 %v1002, 255
    %v1131 = vand.u32 %v1003, 255
    %v1132 = vand.u32 %v1004, 255
    %v1133 = vand.u32 %v1005, 255
    %v1134 = vand.u32 %v1006, 255
    %v1135 = vand.u32 %v1007, 255
    %v1136 = vand.u32 %v1008, 255
    %v1137 = vand.u32 %v1009, 255
    %v1138 = vand.u32 %v1010, 255
    %v1139 = vand.u32 %v1011, 255
    %v1140 = vand.u32 %v1012, 255
    %v1141 = vand.u32 %v1013, 255
    %v1142 = vand.u32 %v1014, 255
    %v1143 = vand.u32 %v1015, 255
    %v1144 = vand.u32 %v1016, 255
    %v1145 = vand.u32 %v1017, 255
    %v1146 = vand.u32 %v1018, 255
    %v1147 = vand.u32 %v1019, 255
    %v1148 = vand.u32 %v1020, 255
    %v1149 = vand.u32 %v1021, 255
    %v1150 = vand.u32 %v1022, 255
    %v1151 = vand.u32 %v1023, 255
    %v1152 = vand.u32 %v1024, 255
    %v1153 = vand.u32 %v1025, 255
    %v1154 = vand.u32 %v1026, 255
    %v1155 = vand.u32 %v1027, 255
    %v1156 = vand.u32 %v1028, 255
    %v1157 = vand.u32 %v1029, 255
    %v1158 = vld [vmem:[#allocation2 + $0x7] sm:$0xff]
    %v1159 = vld [vmem:[#allocation2 + $0xf] sm:$0xff]
    %v1160 = vld [vmem:[#allocation2 + $0x17] sm:$0xff]
    %v1161 = vld [vmem:[#allocation2 + $0x1f] sm:$0xff]
    %v1162 = vld [vmem:[#allocation2 + $0x27] sm:$0xff]
    %v1163 = vld [vmem:[#allocation2 + $0x2f] sm:$0xff]
    %v1164 = vld [vmem:[#allocation2 + $0x37] sm:$0xff]
    %v1165 = vld [vmem:[#allocation2 + $0x3f] sm:$0xff]
    %v1166 = vld [vmem:[#allocation2 + $0x47] sm:$0xff]
    %v1167 = vld [vmem:[#allocation2 + $0x4f] sm:$0xff]
    %v1168 = vld [vmem:[#allocation2 + $0x57] sm:$0xff]
    %v1169 = vld [vmem:[#allocation2 + $0x5f] sm:$0xff]
    %v1170 = vld [vmem:[#allocation2 + $0x67] sm:$0xff]
    %v1171 = vld [vmem:[#allocation2 + $0x6f] sm:$0xff]
    %v1172 = vld [vmem:[#allocation2 + $0x77] sm:$0xff]
    %v1173 = vld [vmem:[#allocation2 + $0x7f] sm:$0xff]
    %v1174 = vld [vmem:[#allocation2 + $0x87] sm:$0xff]
    %v1175 = vld [vmem:[#allocation2 + $0x8f] sm:$0xff]
    %v1176 = vld [vmem:[#allocation2 + $0x97] sm:$0xff]
    %v1177 = vld [vmem:[#allocation2 + $0x9f] sm:$0xff]
    %v1178 = vld [vmem:[#allocation2 + $0xa7] sm:$0xff]
    %v1179 = vld [vmem:[#allocation2 + $0xaf] sm:$0xff]
    %v1180 = vld [vmem:[#allocation2 + $0xb7] sm:$0xff]
    %v1181 = vld [vmem:[#allocation2 + $0xbf] sm:$0xff]
    %v1182 = vld [vmem:[#allocation2 + $0xc7] sm:$0xff]
    %v1183 = vld [vmem:[#allocation2 + $0xcf] sm:$0xff]
    %v1184 = vld [vmem:[#allocation2 + $0xd7] sm:$0xff]
    %v1185 = vld [vmem:[#allocation2 + $0xdf] sm:$0xff]
    %v1186 = vld [vmem:[#allocation2 + $0xe7] sm:$0xff]
    %v1187 = vld [vmem:[#allocation2 + $0xef] sm:$0xff]
    %v1188 = vld [vmem:[#allocation2 + $0xf7] sm:$0xff]
    %v1189 = vld [vmem:[#allocation2 + $0xff] sm:$0xff]
    %v1190 = vld [vmem:[#allocation2 + $0x107] sm:$0xff]
    %v1191 = vld [vmem:[#allocation2 + $0x10f] sm:$0xff]
    %v1192 = vld [vmem:[#allocation2 + $0x117] sm:$0xff]
    %v1193 = vld [vmem:[#allocation2 + $0x11f] sm:$0xff]
    %v1194 = vld [vmem:[#allocation2 + $0x127] sm:$0xff]
    %v1195 = vld [vmem:[#allocation2 + $0x12f] sm:$0xff]
    %v1196 = vld [vmem:[#allocation2 + $0x137] sm:$0xff]
    %v1197 = vld [vmem:[#allocation2 + $0x13f] sm:$0xff]
    %v1198 = vld [vmem:[#allocation2 + $0x147] sm:$0xff]
    %v1199 = vld [vmem:[#allocation2 + $0x14f] sm:$0xff]
    %v1200 = vld [vmem:[#allocation2 + $0x157] sm:$0xff]
    %v1201 = vld [vmem:[#allocation2 + $0x15f] sm:$0xff]
    %v1202 = vld [vmem:[#allocation2 + $0x167] sm:$0xff]
    %v1203 = vld [vmem:[#allocation2 + $0x16f] sm:$0xff]
    %v1204 = vld [vmem:[#allocation2 + $0x177] sm:$0xff]
    %v1205 = vld [vmem:[#allocation2 + $0x17f] sm:$0xff]
    %v1206 = vld [vmem:[#allocation2 + $0x187] sm:$0xff]
    %v1207 = vld [vmem:[#allocation2 + $0x18f] sm:$0xff]
    %v1208 = vld [vmem:[#allocation2 + $0x197] sm:$0xff]
    %v1209 = vld [vmem:[#allocation2 + $0x19f] sm:$0xff]
    %v1210 = vld [vmem:[#allocation2 + $0x1a7] sm:$0xff]
    %v1211 = vld [vmem:[#allocation2 + $0x1af] sm:$0xff]
    %v1212 = vld [vmem:[#allocation2 + $0x1b7] sm:$0xff]
    %v1213 = vld [vmem:[#allocation2 + $0x1bf] sm:$0xff]
    %v1214 = vld [vmem:[#allocation2 + $0x1c7] sm:$0xff]
    %v1215 = vld [vmem:[#allocation2 + $0x1cf] sm:$0xff]
    %v1216 = vld [vmem:[#allocation2 + $0x1d7] sm:$0xff]
    %v1217 = vld [vmem:[#allocation2 + $0x1df] sm:$0xff]
    %v1218 = vld [vmem:[#allocation2 + $0x1e7] sm:$0xff]
    %v1219 = vld [vmem:[#allocation2 + $0x1ef] sm:$0xff]
    %v1220 = vld [vmem:[#allocation2 + $0x1f7] sm:$0xff]
    %v1221 = vld [vmem:[#allocation2 + $0x1ff] sm:$0xff]
    %v1222 = vadd.s32 %v1030, 4294967295
    %v1223 = vadd.s32 %v1031, 4294967295
    %v1224 = vadd.s32 %v1032, 4294967295
    %v1225 = vadd.s32 %v1033, 4294967295
    %v1226 = vadd.s32 %v1034, 4294967295
    %v1227 = vadd.s32 %v1035, 4294967295
    %v1228 = vadd.s32 %v1036, 4294967295
    %v1229 = vadd.s32 %v1037, 4294967295
    %v1230 = vadd.s32 %v1038, 4294967295
    %v1231 = vadd.s32 %v1039, 4294967295
    %v1232 = vadd.s32 %v1040, 4294967295
    %v1233 = vadd.s32 %v1041, 4294967295
    %v1234 = vadd.s32 %v1042, 4294967295
    %v1235 = vadd.s32 %v1043, 4294967295
    %v1236 = vadd.s32 %v1044, 4294967295
    %v1237 = vadd.s32 %v1045, 4294967295
    %v1238 = vadd.s32 %v1046, 4294967295
    %v1239 = vadd.s32 %v1047, 4294967295
    %v1240 = vadd.s32 %v1048, 4294967295
    %v1241 = vadd.s32 %v1049, 4294967295
    %v1242 = vadd.s32 %v1050, 4294967295
    %v1243 = vadd.s32 %v1051, 4294967295
    %v1244 = vadd.s32 %v1052, 4294967295
    %v1245 = vadd.s32 %v1053, 4294967295
    %v1246 = vadd.s32 %v1054, 4294967295
    %v1247 = vadd.s32 %v1055, 4294967295
    %v1248 = vadd.s32 %v1056, 4294967295
    %v1249 = vadd.s32 %v1057, 4294967295
    %v1250 = vadd.s32 %v1058, 4294967295
    %v1251 = vadd.s32 %v1059, 4294967295
    %v1252 = vadd.s32 %v1060, 4294967295
    %v1253 = vadd.s32 %v1061, 4294967295
    %v1254 = vadd.s32 %v1062, 4294967295
    %v1255 = vadd.s32 %v1063, 4294967295
    %v1256 = vadd.s32 %v1064, 4294967295
    %v1257 = vadd.s32 %v1065, 4294967295
    %v1258 = vadd.s32 %v1066, 4294967295
    %v1259 = vadd.s32 %v1067, 4294967295
    %v1260 = vadd.s32 %v1068, 4294967295
    %v1261 = vadd.s32 %v1069, 4294967295
    %v1262 = vadd.s32 %v1070, 4294967295
    %v1263 = vadd.s32 %v1071, 4294967295
    %v1264 = vadd.s32 %v1072, 4294967295
    %v1265 = vadd.s32 %v1073, 4294967295
    %v1266 = vadd.s32 %v1074, 4294967295
    %v1267 = vadd.s32 %v1075, 4294967295
    %v1268 = vadd.s32 %v1076, 4294967295
    %v1269 = vadd.s32 %v1077, 4294967295
    %v1270 = vadd.s32 %v1078, 4294967295
    %v1271 = vadd.s32 %v1079, 4294967295
    %v1272 = vadd.s32 %v1080, 4294967295
    %v1273 = vadd.s32 %v1081, 4294967295
    %v1274 = vadd.s32 %v1082, 4294967295
    %v1275 = vadd.s32 %v1083, 4294967295
    %v1276 = vadd.s32 %v1084, 4294967295
    %v1277 = vadd.s32 %v1085, 4294967295
    %v1278 = vadd.s32 %v1086, 4294967295
    %v1279 = vadd.s32 %v1087, 4294967295
    %v1280 = vadd.s32 %v1088, 4294967295
    %v1281 = vadd.s32 %v1089, 4294967295
    %v1282 = vadd.s32 %v1090, 4294967295
    %v1283 = vadd.s32 %v1091, 4294967295
    %v1284 = vadd.s32 %v1092, 4294967295
    %v1285 = vadd.s32 %v1093, 4294967295
    %vm1286 = vcmp.ge.s32.totalorder %v1222, 0
    %vm1287 = vcmp.ge.s32.totalorder %v1223, 0
    %vm1288 = vcmp.ge.s32.totalorder %v1224, 0
    %vm1289 = vcmp.ge.s32.totalorder %v1225, 0
    %vm1290 = vcmp.ge.s32.totalorder %v1226, 0
    %vm1291 = vcmp.ge.s32.totalorder %v1227, 0
    %vm1292 = vcmp.ge.s32.totalorder %v1228, 0
    %vm1293 = vcmp.ge.s32.totalorder %v1229, 0
    %vm1294 = vcmp.ge.s32.totalorder %v1230, 0
    %vm1295 = vcmp.ge.s32.totalorder %v1231, 0
    %vm1296 = vcmp.ge.s32.totalorder %v1232, 0
    %vm1297 = vcmp.ge.s32.totalorder %v1233, 0
    %vm1298 = vcmp.ge.s32.totalorder %v1234, 0
    %vm1299 = vcmp.ge.s32.totalorder %v1235, 0
    %vm1300 = vcmp.ge.s32.totalorder %v1236, 0
    %vm1301 = vcmp.ge.s32.totalorder %v1237, 0
    %vm1302 = vcmp.ge.s32.totalorder %v1238, 0
    %vm1303 = vcmp.ge.s32.totalorder %v1239, 0
    %vm1304 = vcmp.ge.s32.totalorder %v1240, 0
    %vm1305 = vcmp.ge.s32.totalorder %v1241, 0
    %vm1306 = vcmp.ge.s32.totalorder %v1242, 0
    %vm1307 = vcmp.ge.s32.totalorder %v1243, 0
    %vm1308 = vcmp.ge.s32.totalorder %v1244, 0
    %vm1309 = vcmp.ge.s32.totalorder %v1245, 0
    %vm1310 = vcmp.ge.s32.totalorder %v1246, 0
    %vm1311 = vcmp.ge.s32.totalorder %v1247, 0
    %vm1312 = vcmp.ge.s32.totalorder %v1248, 0
    %vm1313 = vcmp.ge.s32.totalorder %v1249, 0
    %vm1314 = vcmp.ge.s32.totalorder %v1250, 0
    %vm1315 = vcmp.ge.s32.totalorder %v1251, 0
    %vm1316 = vcmp.ge.s32.totalorder %v1252, 0
    %vm1317 = vcmp.ge.s32.totalorder %v1253, 0
    %vm1318 = vcmp.ge.s32.totalorder %v1254, 0
    %vm1319 = vcmp.ge.s32.totalorder %v1255, 0
    %vm1320 = vcmp.ge.s32.totalorder %v1256, 0
    %vm1321 = vcmp.ge.s32.totalorder %v1257, 0
    %vm1322 = vcmp.ge.s32.totalorder %v1258, 0
    %vm1323 = vcmp.ge.s32.totalorder %v1259, 0
    %vm1324 = vcmp.ge.s32.totalorder %v1260, 0
    %vm1325 = vcmp.ge.s32.totalorder %v1261, 0
    %vm1326 = vcmp.ge.s32.totalorder %v1262, 0
    %vm1327 = vcmp.ge.s32.totalorder %v1263, 0
    %vm1328 = vcmp.ge.s32.totalorder %v1264, 0
    %vm1329 = vcmp.ge.s32.totalorder %v1265, 0
    %vm1330 = vcmp.ge.s32.totalorder %v1266, 0
    %vm1331 = vcmp.ge.s32.totalorder %v1267, 0
    %vm1332 = vcmp.ge.s32.totalorder %v1268, 0
    %vm1333 = vcmp.ge.s32.totalorder %v1269, 0
    %vm1334 = vcmp.ge.s32.totalorder %v1270, 0
    %vm1335 = vcmp.ge.s32.totalorder %v1271, 0
    %vm1336 = vcmp.ge.s32.totalorder %v1272, 0
    %vm1337 = vcmp.ge.s32.totalorder %v1273, 0
    %vm1338 = vcmp.ge.s32.totalorder %v1274, 0
    %vm1339 = vcmp.ge.s32.totalorder %v1275, 0
    %vm1340 = vcmp.ge.s32.totalorder %v1276, 0
    %vm1341 = vcmp.ge.s32.totalorder %v1277, 0
    %vm1342 = vcmp.ge.s32.totalorder %v1278, 0
    %vm1343 = vcmp.ge.s32.totalorder %v1279, 0
    %vm1344 = vcmp.ge.s32.totalorder %v1280, 0
    %vm1345 = vcmp.ge.s32.totalorder %v1281, 0
    %vm1346 = vcmp.ge.s32.totalorder %v1282, 0
    %vm1347 = vcmp.ge.s32.totalorder %v1283, 0
    %vm1348 = vcmp.ge.s32.totalorder %v1284, 0
    %vm1349 = vcmp.ge.s32.totalorder %v1285, 0
    %vm1350 = vcmp.lt.s32.totalorder %v1222, 16
    %vm1351 = vcmp.lt.s32.totalorder %v1223, 16
    %vm1352 = vcmp.lt.s32.totalorder %v1224, 16
    %vm1353 = vcmp.lt.s32.totalorder %v1225, 16
    %vm1354 = vcmp.lt.s32.totalorder %v1226, 16
    %vm1355 = vcmp.lt.s32.totalorder %v1227, 16
    %vm1356 = vcmp.lt.s32.totalorder %v1228, 16
    %vm1357 = vcmp.lt.s32.totalorder %v1229, 16
    %vm1358 = vcmp.lt.s32.totalorder %v1230, 16
    %vm1359 = vcmp.lt.s32.totalorder %v1231, 16
    %vm1360 = vcmp.lt.s32.totalorder %v1232, 16
    %vm1361 = vcmp.lt.s32.totalorder %v1233, 16
    %vm1362 = vcmp.lt.s32.totalorder %v1234, 16
    %vm1363 = vcmp.lt.s32.totalorder %v1235, 16
    %vm1364 = vcmp.lt.s32.totalorder %v1236, 16
    %vm1365 = vcmp.lt.s32.totalorder %v1237, 16
    %vm1366 = vcmp.lt.s32.totalorder %v1238, 16
    %vm1367 = vcmp.lt.s32.totalorder %v1239, 16
    %vm1368 = vcmp.lt.s32.totalorder %v1240, 16
    %vm1369 = vcmp.lt.s32.totalorder %v1241, 16
    %vm1370 = vcmp.lt.s32.totalorder %v1242, 16
    %vm1371 = vcmp.lt.s32.totalorder %v1243, 16
    %vm1372 = vcmp.lt.s32.totalorder %v1244, 16
    %vm1373 = vcmp.lt.s32.totalorder %v1245, 16
    %vm1374 = vcmp.lt.s32.totalorder %v1246, 16
    %vm1375 = vcmp.lt.s32.totalorder %v1247, 16
    %vm1376 = vcmp.lt.s32.totalorder %v1248, 16
    %vm1377 = vcmp.lt.s32.totalorder %v1249, 16
    %vm1378 = vcmp.lt.s32.totalorder %v1250, 16
    %vm1379 = vcmp.lt.s32.totalorder %v1251, 16
    %vm1380 = vcmp.lt.s32.totalorder %v1252, 16
    %vm1381 = vcmp.lt.s32.totalorder %v1253, 16
    %vm1382 = vcmp.lt.s32.totalorder %v1254, 16
    %vm1383 = vcmp.lt.s32.totalorder %v1255, 16
    %vm1384 = vcmp.lt.s32.totalorder %v1256, 16
    %vm1385 = vcmp.lt.s32.totalorder %v1257, 16
    %vm1386 = vcmp.lt.s32.totalorder %v1258, 16
    %vm1387 = vcmp.lt.s32.totalorder %v1259, 16
    %vm1388 = vcmp.lt.s32.totalorder %v1260, 16
    %vm1389 = vcmp.lt.s32.totalorder %v1261, 16
    %vm1390 = vcmp.lt.s32.totalorder %v1262, 16
    %vm1391 = vcmp.lt.s32.totalorder %v1263, 16
    %vm1392 = vcmp.lt.s32.totalorder %v1264, 16
    %vm1393 = vcmp.lt.s32.totalorder %v1265, 16
    %vm1394 = vcmp.lt.s32.totalorder %v1266, 16
    %vm1395 = vcmp.lt.s32.totalorder %v1267, 16
    %vm1396 = vcmp.lt.s32.totalorder %v1268, 16
    %vm1397 = vcmp.lt.s32.totalorder %v1269, 16
    %vm1398 = vcmp.lt.s32.totalorder %v1270, 16
    %vm1399 = vcmp.lt.s32.totalorder %v1271, 16
    %vm1400 = vcmp.lt.s32.totalorder %v1272, 16
    %vm1401 = vcmp.lt.s32.totalorder %v1273, 16
    %vm1402 = vcmp.lt.s32.totalorder %v1274, 16
    %vm1403 = vcmp.lt.s32.totalorder %v1275, 16
    %vm1404 = vcmp.lt.s32.totalorder %v1276, 16
    %vm1405 = vcmp.lt.s32.totalorder %v1277, 16
    %vm1406 = vcmp.lt.s32.totalorder %v1278, 16
    %vm1407 = vcmp.lt.s32.totalorder %v1279, 16
    %vm1408 = vcmp.lt.s32.totalorder %v1280, 16
    %vm1409 = vcmp.lt.s32.totalorder %v1281, 16
    %vm1410 = vcmp.lt.s32.totalorder %v1282, 16
    %vm1411 = vcmp.lt.s32.totalorder %v1283, 16
    %vm1412 = vcmp.lt.s32.totalorder %v1284, 16
    %vm1413 = vcmp.lt.s32.totalorder %v1285, 16
    %vm1414 = vmand %vm1286, %vm1350
    %vm1415 = vmand %vm1287, %vm1351
    %vm1416 = vmand %vm1288, %vm1352
    %vm1417 = vmand %vm1289, %vm1353
    %vm1418 = vmand %vm1290, %vm1354
    %vm1419 = vmand %vm1291, %vm1355
    %vm1420 = vmand %vm1292, %vm1356
    %vm1421 = vmand %vm1293, %vm1357
    %vm1422 = vmand %vm1294, %vm1358
    %vm1423 = vmand %vm1295, %vm1359
    %vm1424 = vmand %vm1296, %vm1360
    %vm1425 = vmand %vm1297, %vm1361
    %vm1426 = vmand %vm1298, %vm1362
    %vm1427 = vmand %vm1299, %vm1363
    %vm1428 = vmand %vm1300, %vm1364
    %vm1429 = vmand %vm1301, %vm1365
    %vm1430 = vmand %vm1302, %vm1366
    %vm1431 = vmand %vm1303, %vm1367
    %vm1432 = vmand %vm1304, %vm1368
    %vm1433 = vmand %vm1305, %vm1369
    %vm1434 = vmand %vm1306, %vm1370
    %vm1435 = vmand %vm1307, %vm1371
    %vm1436 = vmand %vm1308, %vm1372
    %vm1437 = vmand %vm1309, %vm1373
    %vm1438 = vmand %vm1310, %vm1374
    %vm1439 = vmand %vm1311, %vm1375
    %vm1440 = vmand %vm1312, %vm1376
    %vm1441 = vmand %vm1313, %vm1377
    %vm1442 = vmand %vm1314, %vm1378
    %vm1443 = vmand %vm1315, %vm1379
    %vm1444 = vmand %vm1316, %vm1380
    %vm1445 = vmand %vm1317, %vm1381
    %vm1446 = vmand %vm1318, %vm1382
    %vm1447 = vmand %vm1319, %vm1383
    %vm1448 = vmand %vm1320, %vm1384
    %vm1449 = vmand %vm1321, %vm1385
    %vm1450 = vmand %vm1322, %vm1386
    %vm1451 = vmand %vm1323, %vm1387
    %vm1452 = vmand %vm1324, %vm1388
    %vm1453 = vmand %vm1325, %vm1389
    %vm1454 = vmand %vm1326, %vm1390
    %vm1455 = vmand %vm1327, %vm1391
    %vm1456 = vmand %vm1328, %vm1392
    %vm1457 = vmand %vm1329, %vm1393
    %vm1458 = vmand %vm1330, %vm1394
    %vm1459 = vmand %vm1331, %vm1395
    %vm1460 = vmand %vm1332, %vm1396
    %vm1461 = vmand %vm1333, %vm1397
    %vm1462 = vmand %vm1334, %vm1398
    %vm1463 = vmand %vm1335, %vm1399
    %vm1464 = vmand %vm1336, %vm1400
    %vm1465 = vmand %vm1337, %vm1401
    %vm1466 = vmand %vm1338, %vm1402
    %vm1467 = vmand %vm1339, %vm1403
    %vm1468 = vmand %vm1340, %vm1404
    %vm1469 = vmand %vm1341, %vm1405
    %vm1470 = vmand %vm1342, %vm1406
    %vm1471 = vmand %vm1343, %vm1407
    %vm1472 = vmand %vm1344, %vm1408
    %vm1473 = vmand %vm1345, %vm1409
    %vm1474 = vmand %vm1346, %vm1410
    %vm1475 = vmand %vm1347, %vm1411
    %vm1476 = vmand %vm1348, %vm1412
    %vm1477 = vmand %vm1349, %vm1413
    %v1478 = vadd.s32 %v1094, 4294967280
    %v1479 = vadd.s32 %v1095, 4294967280
    %v1480 = vadd.s32 %v1096, 4294967280
    %v1481 = vadd.s32 %v1097, 4294967280
    %v1482 = vadd.s32 %v1098, 4294967280
    %v1483 = vadd.s32 %v1099, 4294967280
    %v1484 = vadd.s32 %v1100, 4294967280
    %v1485 = vadd.s32 %v1101, 4294967280
    %v1486 = vadd.s32 %v1102, 4294967280
    %v1487 = vadd.s32 %v1103, 4294967280
    %v1488 = vadd.s32 %v1104, 4294967280
    %v1489 = vadd.s32 %v1105, 4294967280
    %v1490 = vadd.s32 %v1106, 4294967280
    %v1491 = vadd.s32 %v1107, 4294967280
    %v1492 = vadd.s32 %v1108, 4294967280
    %v1493 = vadd.s32 %v1109, 4294967280
    %v1494 = vadd.s32 %v1110, 4294967280
    %v1495 = vadd.s32 %v1111, 4294967280
    %v1496 = vadd.s32 %v1112, 4294967280
    %v1497 = vadd.s32 %v1113, 4294967280
    %v1498 = vadd.s32 %v1114, 4294967280
    %v1499 = vadd.s32 %v1115, 4294967280
    %v1500 = vadd.s32 %v1116, 4294967280
    %v1501 = vadd.s32 %v1117, 4294967280
    %v1502 = vadd.s32 %v1118, 4294967280
    %v1503 = vadd.s32 %v1119, 4294967280
    %v1504 = vadd.s32 %v1120, 4294967280
    %v1505 = vadd.s32 %v1121, 4294967280
    %v1506 = vadd.s32 %v1122, 4294967280
    %v1507 = vadd.s32 %v1123, 4294967280
    %v1508 = vadd.s32 %v1124, 4294967280
    %v1509 = vadd.s32 %v1125, 4294967280
    %v1510 = vadd.s32 %v1126, 4294967280
    %v1511 = vadd.s32 %v1127, 4294967280
    %v1512 = vadd.s32 %v1128, 4294967280
    %v1513 = vadd.s32 %v1129, 4294967280
    %v1514 = vadd.s32 %v1130, 4294967280
    %v1515 = vadd.s32 %v1131, 4294967280
    %v1516 = vadd.s32 %v1132, 4294967280
    %v1517 = vadd.s32 %v1133, 4294967280
    %v1518 = vadd.s32 %v1134, 4294967280
    %v1519 = vadd.s32 %v1135, 4294967280
    %v1520 = vadd.s32 %v1136, 4294967280
    %v1521 = vadd.s32 %v1137, 4294967280
    %v1522 = vadd.s32 %v1138, 4294967280
    %v1523 = vadd.s32 %v1139, 4294967280
    %v1524 = vadd.s32 %v1140, 4294967280
    %v1525 = vadd.s32 %v1141, 4294967280
    %v1526 = vadd.s32 %v1142, 4294967280
    %v1527 = vadd.s32 %v1143, 4294967280
    %v1528 = vadd.s32 %v1144, 4294967280
    %v1529 = vadd.s32 %v1145, 4294967280
    %v1530 = vadd.s32 %v1146, 4294967280
    %v1531 = vadd.s32 %v1147, 4294967280
    %v1532 = vadd.s32 %v1148, 4294967280
    %v1533 = vadd.s32 %v1149, 4294967280
    %v1534 = vadd.s32 %v1150, 4294967280
    %v1535 = vadd.s32 %v1151, 4294967280
    %v1536 = vadd.s32 %v1152, 4294967280
    %v1537 = vadd.s32 %v1153, 4294967280
    %v1538 = vadd.s32 %v1154, 4294967280
    %v1539 = vadd.s32 %v1155, 4294967280
    %v1540 = vadd.s32 %v1156, 4294967280
    %v1541 = vadd.s32 %v1157, 4294967280
    %vm1542 = vcmp.ge.s32.totalorder %v1478, 0
    %vm1543 = vcmp.ge.s32.totalorder %v1479, 0
    %vm1544 = vcmp.ge.s32.totalorder %v1480, 0
    %vm1545 = vcmp.ge.s32.totalorder %v1481, 0
    %vm1546 = vcmp.ge.s32.totalorder %v1482, 0
    %vm1547 = vcmp.ge.s32.totalorder %v1483, 0
    %vm1548 = vcmp.ge.s32.totalorder %v1484, 0
    %vm1549 = vcmp.ge.s32.totalorder %v1485, 0
    %vm1550 = vcmp.ge.s32.totalorder %v1486, 0
    %vm1551 = vcmp.ge.s32.totalorder %v1487, 0
    %vm1552 = vcmp.ge.s32.totalorder %v1488, 0
    %vm1553 = vcmp.ge.s32.totalorder %v1489, 0
    %vm1554 = vcmp.ge.s32.totalorder %v1490, 0
    %vm1555 = vcmp.ge.s32.totalorder %v1491, 0
    %vm1556 = vcmp.ge.s32.totalorder %v1492, 0
    %vm1557 = vcmp.ge.s32.totalorder %v1493, 0
    %vm1558 = vcmp.ge.s32.totalorder %v1494, 0
    %vm1559 = vcmp.ge.s32.totalorder %v1495, 0
    %vm1560 = vcmp.ge.s32.totalorder %v1496, 0
    %vm1561 = vcmp.ge.s32.totalorder %v1497, 0
    %vm1562 = vcmp.ge.s32.totalorder %v1498, 0
    %vm1563 = vcmp.ge.s32.totalorder %v1499, 0
    %vm1564 = vcmp.ge.s32.totalorder %v1500, 0
    %vm1565 = vcmp.ge.s32.totalorder %v1501, 0
    %vm1566 = vcmp.ge.s32.totalorder %v1502, 0
    %vm1567 = vcmp.ge.s32.totalorder %v1503, 0
    %vm1568 = vcmp.ge.s32.totalorder %v1504, 0
    %vm1569 = vcmp.ge.s32.totalorder %v1505, 0
    %vm1570 = vcmp.ge.s32.totalorder %v1506, 0
    %vm1571 = vcmp.ge.s32.totalorder %v1507, 0
    %vm1572 = vcmp.ge.s32.totalorder %v1508, 0
    %vm1573 = vcmp.ge.s32.totalorder %v1509, 0
    %vm1574 = vcmp.ge.s32.totalorder %v1510, 0
    %vm1575 = vcmp.ge.s32.totalorder %v1511, 0
    %vm1576 = vcmp.ge.s32.totalorder %v1512, 0
    %vm1577 = vcmp.ge.s32.totalorder %v1513, 0
    %vm1578 = vcmp.ge.s32.totalorder %v1514, 0
    %vm1579 = vcmp.ge.s32.totalorder %v1515, 0
    %vm1580 = vcmp.ge.s32.totalorder %v1516, 0
    %vm1581 = vcmp.ge.s32.totalorder %v1517, 0
    %vm1582 = vcmp.ge.s32.totalorder %v1518, 0
    %vm1583 = vcmp.ge.s32.totalorder %v1519, 0
    %vm1584 = vcmp.ge.s32.totalorder %v1520, 0
    %vm1585 = vcmp.ge.s32.totalorder %v1521, 0
    %vm1586 = vcmp.ge.s32.totalorder %v1522, 0
    %vm1587 = vcmp.ge.s32.totalorder %v1523, 0
    %vm1588 = vcmp.ge.s32.totalorder %v1524, 0
    %vm1589 = vcmp.ge.s32.totalorder %v1525, 0
    %vm1590 = vcmp.ge.s32.totalorder %v1526, 0
    %vm1591 = vcmp.ge.s32.totalorder %v1527, 0
    %vm1592 = vcmp.ge.s32.totalorder %v1528, 0
    %vm1593 = vcmp.ge.s32.totalorder %v1529, 0
    %vm1594 = vcmp.ge.s32.totalorder %v1530, 0
    %vm1595 = vcmp.ge.s32.totalorder %v1531, 0
    %vm1596 = vcmp.ge.s32.totalorder %v1532, 0
    %vm1597 = vcmp.ge.s32.totalorder %v1533, 0
    %vm1598 = vcmp.ge.s32.totalorder %v1534, 0
    %vm1599 = vcmp.ge.s32.totalorder %v1535, 0
    %vm1600 = vcmp.ge.s32.totalorder %v1536, 0
    %vm1601 = vcmp.ge.s32.totalorder %v1537, 0
    %vm1602 = vcmp.ge.s32.totalorder %v1538, 0
    %vm1603 = vcmp.ge.s32.totalorder %v1539, 0
    %vm1604 = vcmp.ge.s32.totalorder %v1540, 0
    %vm1605 = vcmp.ge.s32.totalorder %v1541, 0
    %vm1606 = vcmp.lt.s32.totalorder %v1478, 256
    %vm1607 = vcmp.lt.s32.totalorder %v1479, 256
    %vm1608 = vcmp.lt.s32.totalorder %v1480, 256
    %vm1609 = vcmp.lt.s32.totalorder %v1481, 256
    %vm1610 = vcmp.lt.s32.totalorder %v1482, 256
    %vm1611 = vcmp.lt.s32.totalorder %v1483, 256
    %vm1612 = vcmp.lt.s32.totalorder %v1484, 256
    %vm1613 = vcmp.lt.s32.totalorder %v1485, 256
    %vm1614 = vcmp.lt.s32.totalorder %v1486, 256
    %vm1615 = vcmp.lt.s32.totalorder %v1487, 256
    %vm1616 = vcmp.lt.s32.totalorder %v1488, 256
    %vm1617 = vcmp.lt.s32.totalorder %v1489, 256
    %vm1618 = vcmp.lt.s32.totalorder %v1490, 256
    %vm1619 = vcmp.lt.s32.totalorder %v1491, 256
    %vm1620 = vcmp.lt.s32.totalorder %v1492, 256
    %vm1621 = vcmp.lt.s32.totalorder %v1493, 256
    %vm1622 = vcmp.lt.s32.totalorder %v1494, 256
    %vm1623 = vcmp.lt.s32.totalorder %v1495, 256
    %vm1624 = vcmp.lt.s32.totalorder %v1496, 256
    %vm1625 = vcmp.lt.s32.totalorder %v1497, 256
    %vm1626 = vcmp.lt.s32.totalorder %v1498, 256
    %vm1627 = vcmp.lt.s32.totalorder %v1499, 256
    %vm1628 = vcmp.lt.s32.totalorder %v1500, 256
    %vm1629 = vcmp.lt.s32.totalorder %v1501, 256
    %vm1630 = vcmp.lt.s32.totalorder %v1502, 256
    %vm1631 = vcmp.lt.s32.totalorder %v1503, 256
    %vm1632 = vcmp.lt.s32.totalorder %v1504, 256
    %vm1633 = vcmp.lt.s32.totalorder %v1505, 256
    %vm1634 = vcmp.lt.s32.totalorder %v1506, 256
    %vm1635 = vcmp.lt.s32.totalorder %v1507, 256
    %vm1636 = vcmp.lt.s32.totalorder %v1508, 256
    %vm1637 = vcmp.lt.s32.totalorder %v1509, 256
    %vm1638 = vcmp.lt.s32.totalorder %v1510, 256
    %vm1639 = vcmp.lt.s32.totalorder %v1511, 256
    %vm1640 = vcmp.lt.s32.totalorder %v1512, 256
    %vm1641 = vcmp.lt.s32.totalorder %v1513, 256
    %vm1642 = vcmp.lt.s32.totalorder %v1514, 256
    %vm1643 = vcmp.lt.s32.totalorder %v1515, 256
    %vm1644 = vcmp.lt.s32.totalorder %v1516, 256
    %vm1645 = vcmp.lt.s32.totalorder %v1517, 256
    %vm1646 = vcmp.lt.s32.totalorder %v1518, 256
    %vm1647 = vcmp.lt.s32.totalorder %v1519, 256
    %vm1648 = vcmp.lt.s32.totalorder %v1520, 256
    %vm1649 = vcmp.lt.s32.totalorder %v1521, 256
    %vm1650 = vcmp.lt.s32.totalorder %v1522, 256
    %vm1651 = vcmp.lt.s32.totalorder %v1523, 256
    %vm1652 = vcmp.lt.s32.totalorder %v1524, 256
    %vm1653 = vcmp.lt.s32.totalorder %v1525, 256
    %vm1654 = vcmp.lt.s32.totalorder %v1526, 256
    %vm1655 = vcmp.lt.s32.totalorder %v1527, 256
    %vm1656 = vcmp.lt.s32.totalorder %v1528, 256
    %vm1657 = vcmp.lt.s32.totalorder %v1529, 256
    %vm1658 = vcmp.lt.s32.totalorder %v1530, 256
    %vm1659 = vcmp.lt.s32.totalorder %v1531, 256
    %vm1660 = vcmp.lt.s32.totalorder %v1532, 256
    %vm1661 = vcmp.lt.s32.totalorder %v1533, 256
    %vm1662 = vcmp.lt.s32.totalorder %v1534, 256
    %vm1663 = vcmp.lt.s32.totalorder %v1535, 256
    %vm1664 = vcmp.lt.s32.totalorder %v1536, 256
    %vm1665 = vcmp.lt.s32.totalorder %v1537, 256
    %vm1666 = vcmp.lt.s32.totalorder %v1538, 256
    %vm1667 = vcmp.lt.s32.totalorder %v1539, 256
    %vm1668 = vcmp.lt.s32.totalorder %v1540, 256
    %vm1669 = vcmp.lt.s32.totalorder %v1541, 256
    %vm1670 = vmand %vm1542, %vm1606
    %vm1671 = vmand %vm1543, %vm1607
    %vm1672 = vmand %vm1544, %vm1608
    %vm1673 = vmand %vm1545, %vm1609
    %vm1674 = vmand %vm1546, %vm1610
    %vm1675 = vmand %vm1547, %vm1611
    %vm1676 = vmand %vm1548, %vm1612
    %vm1677 = vmand %vm1549, %vm1613
    %vm1678 = vmand %vm1550, %vm1614
    %vm1679 = vmand %vm1551, %vm1615
    %vm1680 = vmand %vm1552, %vm1616
    %vm1681 = vmand %vm1553, %vm1617
    %vm1682 = vmand %vm1554, %vm1618
    %vm1683 = vmand %vm1555, %vm1619
    %vm1684 = vmand %vm1556, %vm1620
    %vm1685 = vmand %vm1557, %vm1621
    %vm1686 = vmand %vm1558, %vm1622
    %vm1687 = vmand %vm1559, %vm1623
    %vm1688 = vmand %vm1560, %vm1624
    %vm1689 = vmand %vm1561, %vm1625
    %vm1690 = vmand %vm1562, %vm1626
    %vm1691 = vmand %vm1563, %vm1627
    %vm1692 = vmand %vm1564, %vm1628
    %vm1693 = vmand %vm1565, %vm1629
    %vm1694 = vmand %vm1566, %vm1630
    %vm1695 = vmand %vm1567, %vm1631
    %vm1696 = vmand %vm1568, %vm1632
    %vm1697 = vmand %vm1569, %vm1633
    %vm1698 = vmand %vm1570, %vm1634
    %vm1699 = vmand %vm1571, %vm1635
    %vm1700 = vmand %vm1572, %vm1636
    %vm1701 = vmand %vm1573, %vm1637
    %vm1702 = vmand %vm1574, %vm1638
    %vm1703 = vmand %vm1575, %vm1639
    %vm1704 = vmand %vm1576, %vm1640
    %vm1705 = vmand %vm1577, %vm1641
    %vm1706 = vmand %vm1578, %vm1642
    %vm1707 = vmand %vm1579, %vm1643
    %vm1708 = vmand %vm1580, %vm1644
    %vm1709 = vmand %vm1581, %vm1645
    %vm1710 = vmand %vm1582, %vm1646
    %vm1711 = vmand %vm1583, %vm1647
    %vm1712 = vmand %vm1584, %vm1648
    %vm1713 = vmand %vm1585, %vm1649
    %vm1714 = vmand %vm1586, %vm1650
    %vm1715 = vmand %vm1587, %vm1651
    %vm1716 = vmand %vm1588, %vm1652
    %vm1717 = vmand %vm1589, %vm1653
    %vm1718 = vmand %vm1590, %vm1654
    %vm1719 = vmand %vm1591, %vm1655
    %vm1720 = vmand %vm1592, %vm1656
    %vm1721 = vmand %vm1593, %vm1657
    %vm1722 = vmand %vm1594, %vm1658
    %vm1723 = vmand %vm1595, %vm1659
    %vm1724 = vmand %vm1596, %vm1660
    %vm1725 = vmand %vm1597, %vm1661
    %vm1726 = vmand %vm1598, %vm1662
    %vm1727 = vmand %vm1599, %vm1663
    %vm1728 = vmand %vm1600, %vm1664
    %vm1729 = vmand %vm1601, %vm1665
    %vm1730 = vmand %vm1602, %vm1666
    %vm1731 = vmand %vm1603, %vm1667
    %vm1732 = vmand %vm1604, %vm1668
    %vm1733 = vmand %vm1605, %vm1669
    %vm1734 = vmand %vm1414, %vm1670
    %vm1735 = vmand %vm1415, %vm1671
    %vm1736 = vmand %vm1416, %vm1672
    %vm1737 = vmand %vm1417, %vm1673
    %vm1738 = vmand %vm1418, %vm1674
    %vm1739 = vmand %vm1419, %vm1675
    %vm1740 = vmand %vm1420, %vm1676
    %vm1741 = vmand %vm1421, %vm1677
    %vm1742 = vmand %vm1422, %vm1678
    %vm1743 = vmand %vm1423, %vm1679
    %vm1744 = vmand %vm1424, %vm1680
    %vm1745 = vmand %vm1425, %vm1681
    %vm1746 = vmand %vm1426, %vm1682
    %vm1747 = vmand %vm1427, %vm1683
    %vm1748 = vmand %vm1428, %vm1684
    %vm1749 = vmand %vm1429, %vm1685
    %vm1750 = vmand %vm1430, %vm1686
    %vm1751 = vmand %vm1431, %vm1687
    %vm1752 = vmand %vm1432, %vm1688
    %vm1753 = vmand %vm1433, %vm1689
    %vm1754 = vmand %vm1434, %vm1690
    %vm1755 = vmand %vm1435, %vm1691
    %vm1756 = vmand %vm1436, %vm1692
    %vm1757 = vmand %vm1437, %vm1693
    %vm1758 = vmand %vm1438, %vm1694
    %vm1759 = vmand %vm1439, %vm1695
    %vm1760 = vmand %vm1440, %vm1696
    %vm1761 = vmand %vm1441, %vm1697
    %vm1762 = vmand %vm1442, %vm1698
    %vm1763 = vmand %vm1443, %vm1699
    %vm1764 = vmand %vm1444, %vm1700
    %vm1765 = vmand %vm1445, %vm1701
    %vm1766 = vmand %vm1446, %vm1702
    %vm1767 = vmand %vm1447, %vm1703
    %vm1768 = vmand %vm1448, %vm1704
    %vm1769 = vmand %vm1449, %vm1705
    %vm1770 = vmand %vm1450, %vm1706
    %vm1771 = vmand %vm1451, %vm1707
    %vm1772 = vmand %vm1452, %vm1708
    %vm1773 = vmand %vm1453, %vm1709
    %vm1774 = vmand %vm1454, %vm1710
    %vm1775 = vmand %vm1455, %vm1711
    %vm1776 = vmand %vm1456, %vm1712
    %vm1777 = vmand %vm1457, %vm1713
    %vm1778 = vmand %vm1458, %vm1714
    %vm1779 = vmand %vm1459, %vm1715
    %vm1780 = vmand %vm1460, %vm1716
    %vm1781 = vmand %vm1461, %vm1717
    %vm1782 = vmand %vm1462, %vm1718
    %vm1783 = vmand %vm1463, %vm1719
    %vm1784 = vmand %vm1464, %vm1720
    %vm1785 = vmand %vm1465, %vm1721
    %vm1786 = vmand %vm1466, %vm1722
    %vm1787 = vmand %vm1467, %vm1723
    %vm1788 = vmand %vm1468, %vm1724
    %vm1789 = vmand %vm1469, %vm1725
    %vm1790 = vmand %vm1470, %vm1726
    %vm1791 = vmand %vm1471, %vm1727
    %vm1792 = vmand %vm1472, %vm1728
    %vm1793 = vmand %vm1473, %vm1729
    %vm1794 = vmand %vm1474, %vm1730
    %vm1795 = vmand %vm1475, %vm1731
    %vm1796 = vmand %vm1476, %vm1732
    %vm1797 = vmand %vm1477, %vm1733
    %v1798 = vsel %vm1734, 1, 0
    %v1799 = vsel %vm1735, 1, 0
    %v1800 = vsel %vm1736, 1, 0
    %v1801 = vsel %vm1737, 1, 0
    %v1802 = vsel %vm1738, 1, 0
    %v1803 = vsel %vm1739, 1, 0
    %v1804 = vsel %vm1740, 1, 0
    %v1805 = vsel %vm1741, 1, 0
    %v1806 = vsel %vm1742, 1, 0
    %v1807 = vsel %vm1743, 1, 0
    %v1808 = vsel %vm1744, 1, 0
    %v1809 = vsel %vm1745, 1, 0
    %v1810 = vsel %vm1746, 1, 0
    %v1811 = vsel %vm1747, 1, 0
    %v1812 = vsel %vm1748, 1, 0
    %v1813 = vsel %vm1749, 1, 0
    %v1814 = vsel %vm1750, 1, 0
    %v1815 = vsel %vm1751, 1, 0
    %v1816 = vsel %vm1752, 1, 0
    %v1817 = vsel %vm1753, 1, 0
    %v1818 = vsel %vm1754, 1, 0
    %v1819 = vsel %vm1755, 1, 0
    %v1820 = vsel %vm1756, 1, 0
    %v1821 = vsel %vm1757, 1, 0
    %v1822 = vsel %vm1758, 1, 0
    %v1823 = vsel %vm1759, 1, 0
    %v1824 = vsel %vm1760, 1, 0
    %v1825 = vsel %vm1761, 1, 0
    %v1826 = vsel %vm1762, 1, 0
    %v1827 = vsel %vm1763, 1, 0
    %v1828 = vsel %vm1764, 1, 0
    %v1829 = vsel %vm1765, 1, 0
    %v1830 = vsel %vm1766, 1, 0
    %v1831 = vsel %vm1767, 1, 0
    %v1832 = vsel %vm1768, 1, 0
    %v1833 = vsel %vm1769, 1, 0
    %v1834 = vsel %vm1770, 1, 0
    %v1835 = vsel %vm1771, 1, 0
    %v1836 = vsel %vm1772, 1, 0
    %v1837 = vsel %vm1773, 1, 0
    %v1838 = vsel %vm1774, 1, 0
    %v1839 = vsel %vm1775, 1, 0
    %v1840 = vsel %vm1776, 1, 0
    %v1841 = vsel %vm1777, 1, 0
    %v1842 = vsel %vm1778, 1, 0
    %v1843 = vsel %vm1779, 1, 0
    %v1844 = vsel %vm1780, 1, 0
    %v1845 = vsel %vm1781, 1, 0
    %v1846 = vsel %vm1782, 1, 0
    %v1847 = vsel %vm1783, 1, 0
    %v1848 = vsel %vm1784, 1, 0
    %v1849 = vsel %vm1785, 1, 0
    %v1850 = vsel %vm1786, 1, 0
    %v1851 = vsel %vm1787, 1, 0
    %v1852 = vsel %vm1788, 1, 0
    %v1853 = vsel %vm1789, 1, 0
    %v1854 = vsel %vm1790, 1, 0
    %v1855 = vsel %vm1791, 1, 0
    %v1856 = vsel %vm1792, 1, 0
    %v1857 = vsel %vm1793, 1, 0
    %v1858 = vsel %vm1794, 1, 0
    %v1859 = vsel %vm1795, 1, 0
    %v1860 = vsel %vm1796, 1, 0
    %v1861 = vsel %vm1797, 1, 0
    %vm1862 = vcmp.eq.s32.totalorder %v1798, 1
    %vm1863 = vcmp.eq.s32.totalorder %v1799, 1
    %vm1864 = vcmp.eq.s32.totalorder %v1800, 1
    %vm1865 = vcmp.eq.s32.totalorder %v1801, 1
    %vm1866 = vcmp.eq.s32.totalorder %v1802, 1
    %vm1867 = vcmp.eq.s32.totalorder %v1803, 1
    %vm1868 = vcmp.eq.s32.totalorder %v1804, 1
    %vm1869 = vcmp.eq.s32.totalorder %v1805, 1
    %vm1870 = vcmp.eq.s32.totalorder %v1806, 1
    %vm1871 = vcmp.eq.s32.totalorder %v1807, 1
    %vm1872 = vcmp.eq.s32.totalorder %v1808, 1
    %vm1873 = vcmp.eq.s32.totalorder %v1809, 1
    %vm1874 = vcmp.eq.s32.totalorder %v1810, 1
    %vm1875 = vcmp.eq.s32.totalorder %v1811, 1
    %vm1876 = vcmp.eq.s32.totalorder %v1812, 1
    %vm1877 = vcmp.eq.s32.totalorder %v1813, 1
    %vm1878 = vcmp.eq.s32.totalorder %v1814, 1
    %vm1879 = vcmp.eq.s32.totalorder %v1815, 1
    %vm1880 = vcmp.eq.s32.totalorder %v1816, 1
    %vm1881 = vcmp.eq.s32.totalorder %v1817, 1
    %vm1882 = vcmp.eq.s32.totalorder %v1818, 1
    %vm1883 = vcmp.eq.s32.totalorder %v1819, 1
    %vm1884 = vcmp.eq.s32.totalorder %v1820, 1
    %vm1885 = vcmp.eq.s32.totalorder %v1821, 1
    %vm1886 = vcmp.eq.s32.totalorder %v1822, 1
    %vm1887 = vcmp.eq.s32.totalorder %v1823, 1
    %vm1888 = vcmp.eq.s32.totalorder %v1824, 1
    %vm1889 = vcmp.eq.s32.totalorder %v1825, 1
    %vm1890 = vcmp.eq.s32.totalorder %v1826, 1
    %vm1891 = vcmp.eq.s32.totalorder %v1827, 1
    %vm1892 = vcmp.eq.s32.totalorder %v1828, 1
    %vm1893 = vcmp.eq.s32.totalorder %v1829, 1
    %vm1894 = vcmp.eq.s32.totalorder %v1830, 1
    %vm1895 = vcmp.eq.s32.totalorder %v1831, 1
    %vm1896 = vcmp.eq.s32.totalorder %v1832, 1
    %vm1897 = vcmp.eq.s32.totalorder %v1833, 1
    %vm1898 = vcmp.eq.s32.totalorder %v1834, 1
    %vm1899 = vcmp.eq.s32.totalorder %v1835, 1
    %vm1900 = vcmp.eq.s32.totalorder %v1836, 1
    %vm1901 = vcmp.eq.s32.totalorder %v1837, 1
    %vm1902 = vcmp.eq.s32.totalorder %v1838, 1
    %vm1903 = vcmp.eq.s32.totalorder %v1839, 1
    %vm1904 = vcmp.eq.s32.totalorder %v1840, 1
    %vm1905 = vcmp.eq.s32.totalorder %v1841, 1
    %vm1906 = vcmp.eq.s32.totalorder %v1842, 1
    %vm1907 = vcmp.eq.s32.totalorder %v1843, 1
    %vm1908 = vcmp.eq.s32.totalorder %v1844, 1
    %vm1909 = vcmp.eq.s32.totalorder %v1845, 1
    %vm1910 = vcmp.eq.s32.totalorder %v1846, 1
    %vm1911 = vcmp.eq.s32.totalorder %v1847, 1
    %vm1912 = vcmp.eq.s32.totalorder %v1848, 1
    %vm1913 = vcmp.eq.s32.totalorder %v1849, 1
    %vm1914 = vcmp.eq.s32.totalorder %v1850, 1
    %vm1915 = vcmp.eq.s32.totalorder %v1851, 1
    %vm1916 = vcmp.eq.s32.totalorder %v1852, 1
    %vm1917 = vcmp.eq.s32.totalorder %v1853, 1
    %vm1918 = vcmp.eq.s32.totalorder %v1854, 1
    %vm1919 = vcmp.eq.s32.totalorder %v1855, 1
    %vm1920 = vcmp.eq.s32.totalorder %v1856, 1
    %vm1921 = vcmp.eq.s32.totalorder %v1857, 1
    %vm1922 = vcmp.eq.s32.totalorder %v1858, 1
    %vm1923 = vcmp.eq.s32.totalorder %v1859, 1
    %vm1924 = vcmp.eq.s32.totalorder %v1860, 1
    %vm1925 = vcmp.eq.s32.totalorder %v1861, 1
    %v1926 = vsel %vm1862, %v1158, 0.0
    %v1927 = vsel %vm1863, %v1159, 0.0
    %v1928 = vsel %vm1864, %v1160, 0.0
    %v1929 = vsel %vm1865, %v1161, 0.0
    %v1930 = vsel %vm1866, %v1162, 0.0
    %v1931 = vsel %vm1867, %v1163, 0.0
    %v1932 = vsel %vm1868, %v1164, 0.0
    %v1933 = vsel %vm1869, %v1165, 0.0
    %v1934 = vsel %vm1870, %v1166, 0.0
    %v1935 = vsel %vm1871, %v1167, 0.0
    %v1936 = vsel %vm1872, %v1168, 0.0
    %v1937 = vsel %vm1873, %v1169, 0.0
    %v1938 = vsel %vm1874, %v1170, 0.0
    %v1939 = vsel %vm1875, %v1171, 0.0
    %v1940 = vsel %vm1876, %v1172, 0.0
    %v1941 = vsel %vm1877, %v1173, 0.0
    %v1942 = vsel %vm1878, %v1174, 0.0
    %v1943 = vsel %vm1879, %v1175, 0.0
    %v1944 = vsel %vm1880, %v1176, 0.0
    %v1945 = vsel %vm1881, %v1177, 0.0
    %v1946 = vsel %vm1882, %v1178, 0.0
    %v1947 = vsel %vm1883, %v1179, 0.0
    %v1948 = vsel %vm1884, %v1180, 0.0
    %v1949 = vsel %vm1885, %v1181, 0.0
    %v1950 = vsel %vm1886, %v1182, 0.0
    %v1951 = vsel %vm1887, %v1183, 0.0
    %v1952 = vsel %vm1888, %v1184, 0.0
    %v1953 = vsel %vm1889, %v1185, 0.0
    %v1954 = vsel %vm1890, %v1186, 0.0
    %v1955 = vsel %vm1891, %v1187, 0.0
    %v1956 = vsel %vm1892, %v1188, 0.0
    %v1957 = vsel %vm1893, %v1189, 0.0
    %v1958 = vsel %vm1894, %v1190, 0.0
    %v1959 = vsel %vm1895, %v1191, 0.0
    %v1960 = vsel %vm1896, %v1192, 0.0
    %v1961 = vsel %vm1897, %v1193, 0.0
    %v1962 = vsel %vm1898, %v1194, 0.0
    %v1963 = vsel %vm1899, %v1195, 0.0
    %v1964 = vsel %vm1900, %v1196, 0.0
    %v1965 = vsel %vm1901, %v1197, 0.0
    %v1966 = vsel %vm1902, %v1198, 0.0
    %v1967 = vsel %vm1903, %v1199, 0.0
    %v1968 = vsel %vm1904, %v1200, 0.0
    %v1969 = vsel %vm1905, %v1201, 0.0
    %v1970 = vsel %vm1906, %v1202, 0.0
    %v1971 = vsel %vm1907, %v1203, 0.0
    %v1972 = vsel %vm1908, %v1204, 0.0
    %v1973 = vsel %vm1909, %v1205, 0.0
    %v1974 = vsel %vm1910, %v1206, 0.0
    %v1975 = vsel %vm1911, %v1207, 0.0
    %v1976 = vsel %vm1912, %v1208, 0.0
    %v1977 = vsel %vm1913, %v1209, 0.0
    %v1978 = vsel %vm1914, %v1210, 0.0
    %v1979 = vsel %vm1915, %v1211, 0.0
    %v1980 = vsel %vm1916, %v1212, 0.0
    %v1981 = vsel %vm1917, %v1213, 0.0
    %v1982 = vsel %vm1918, %v1214, 0.0
    %v1983 = vsel %vm1919, %v1215, 0.0
    %v1984 = vsel %vm1920, %v1216, 0.0
    %v1985 = vsel %vm1921, %v1217, 0.0
    %v1986 = vsel %vm1922, %v1218, 0.0
    %v1987 = vsel %vm1923, %v1219, 0.0
    %v1988 = vsel %vm1924, %v1220, 0.0
    %v1989 = vsel %vm1925, %v1221, 0.0
    %v1990 = vld [vmem:[#allocation8] sm:$0xf]
    %v1991 = vld [vmem:[#allocation8 + $0x4] sm:$0xf]
    %v1992 = vld [vmem:[#allocation8 + $0x8] sm:$0xf]
    %v1993 = vld [vmem:[#allocation8 + $0xc] sm:$0xf]
    %v1994 = vld [vmem:[#allocation8 + $0x10] sm:$0xf]
    %v1995 = vld [vmem:[#allocation8 + $0x14] sm:$0xf]
    %v1996 = vld [vmem:[#allocation8 + $0x18] sm:$0xf]
    %v1997 = vld [vmem:[#allocation8 + $0x1c] sm:$0xf]
    %v1998 = vld [vmem:[#allocation8 + $0x20] sm:$0xf]
    %v1999 = vld [vmem:[#allocation8 + $0x24] sm:$0xf]
    %v2000 = vld [vmem:[#allocation8 + $0x28] sm:$0xf]
    %v2001 = vld [vmem:[#allocation8 + $0x2c] sm:$0xf]
    %v2002 = vld [vmem:[#allocation8 + $0x30] sm:$0xf]
    %v2003 = vld [vmem:[#allocation8 + $0x34] sm:$0xf]
    %v2004 = vld [vmem:[#allocation8 + $0x38] sm:$0xf]
    %v2005 = vld [vmem:[#allocation8 + $0x3c] sm:$0xf]
    %v2006 = vunpack.c.l.bf16 %v1990
    %v2007 = vunpack.c.l.bf16 %v1991
    %v2008 = vunpack.c.l.bf16 %v1992
    %v2009 = vunpack.c.l.bf16 %v1993
    %v2010 = vunpack.c.l.bf16 %v1994
    %v2011 = vunpack.c.l.bf16 %v1995
    %v2012 = vunpack.c.l.bf16 %v1996
    %v2013 = vunpack.c.l.bf16 %v1997
    %v2014 = vunpack.c.l.bf16 %v1998
    %v2015 = vunpack.c.l.bf16 %v1999
    %v2016 = vunpack.c.l.bf16 %v2000
    %v2017 = vunpack.c.l.bf16 %v2001
    %v2018 = vunpack.c.l.bf16 %v2002
    %v2019 = vunpack.c.l.bf16 %v2003
    %v2020 = vunpack.c.l.bf16 %v2004
    %v2021 = vunpack.c.l.bf16 %v2005
    %v2022 = vld [vmem:[#allocation2 + $0x8] sm:$0xff]
    %v2023 = vld [vmem:[#allocation2 + $0x10] sm:$0xff]
    %v2024 = vld [vmem:[#allocation2 + $0x18] sm:$0xff]
    %v2025 = vld [vmem:[#allocation2 + $0x20] sm:$0xff]
    %v2026 = vld [vmem:[#allocation2 + $0x28] sm:$0xff]
    %v2027 = vld [vmem:[#allocation2 + $0x30] sm:$0xff]
    %v2028 = vld [vmem:[#allocation2 + $0x38] sm:$0xff]
    %v2029 = vld [vmem:[#allocation2 + $0x40] sm:$0xff]
    %v2030 = vld [vmem:[#allocation2 + $0x48] sm:$0xff]
    %v2031 = vld [vmem:[#allocation2 + $0x50] sm:$0xff]
    %v2032 = vld [vmem:[#allocation2 + $0x58] sm:$0xff]
    %v2033 = vld [vmem:[#allocation2 + $0x60] sm:$0xff]
    %v2034 = vld [vmem:[#allocation2 + $0x68] sm:$0xff]
    %v2035 = vld [vmem:[#allocation2 + $0x70] sm:$0xff]
    %v2036 = vld [vmem:[#allocation2 + $0x78] sm:$0xff]
    %v2037 = vld [vmem:[#allocation2 + $0x80] sm:$0xff]
    %v2038 = vld [vmem:[#allocation2 + $0x88] sm:$0xff]
    %v2039 = vld [vmem:[#allocation2 + $0x90] sm:$0xff]
    %v2040 = vld [vmem:[#allocation2 + $0x98] sm:$0xff]
    %v2041 = vld [vmem:[#allocation2 + $0xa0] sm:$0xff]
    %v2042 = vld [vmem:[#allocation2 + $0xa8] sm:$0xff]
    %v2043 = vld [vmem:[#allocation2 + $0xb0] sm:$0xff]
    %v2044 = vld [vmem:[#allocation2 + $0xb8] sm:$0xff]
    %v2045 = vld [vmem:[#allocation2 + $0xc0] sm:$0xff]
    %v2046 = vld [vmem:[#allocation2 + $0xc8] sm:$0xff]
    %v2047 = vld [vmem:[#allocation2 + $0xd0] sm:$0xff]
    %v2048 = vld [vmem:[#allocation2 + $0xd8] sm:$0xff]
    %v2049 = vld [vmem:[#allocation2 + $0xe0] sm:$0xff]
    %v2050 = vld [vmem:[#allocation2 + $0xe8] sm:$0xff]
    %v2051 = vld [vmem:[#allocation2 + $0xf0] sm:$0xff]
    %v2052 = vld [vmem:[#allocation2 + $0xf8] sm:$0xff]
    %v2053 = vld [vmem:[#allocation2 + $0x100] sm:$0xff]
    %v2054 = vld [vmem:[#allocation2 + $0x108] sm:$0xff]
    %v2055 = vld [vmem:[#allocation2 + $0x110] sm:$0xff]
    %v2056 = vld [vmem:[#allocation2 + $0x118] sm:$0xff]
    %v2057 = vld [vmem:[#allocation2 + $0x120] sm:$0xff]
    %v2058 = vld [vmem:[#allocation2 + $0x128] sm:$0xff]
    %v2059 = vld [vmem:[#allocation2 + $0x130] sm:$0xff]
    %v2060 = vld [vmem:[#allocation2 + $0x138] sm:$0xff]
    %v2061 = vld [vmem:[#allocation2 + $0x140] sm:$0xff]
    %v2062 = vld [vmem:[#allocation2 + $0x148] sm:$0xff]
    %v2063 = vld [vmem:[#allocation2 + $0x150] sm:$0xff]
    %v2064 = vld [vmem:[#allocation2 + $0x158] sm:$0xff]
    %v2065 = vld [vmem:[#allocation2 + $0x160] sm:$0xff]
    %v2066 = vld [vmem:[#allocation2 + $0x168] sm:$0xff]
    %v2067 = vld [vmem:[#allocation2 + $0x170] sm:$0xff]
    %v2068 = vld [vmem:[#allocation2 + $0x178] sm:$0xff]
    %v2069 = vld [vmem:[#allocation2 + $0x180] sm:$0xff]
    %v2070 = vld [vmem:[#allocation2 + $0x188] sm:$0xff]
    %v2071 = vld [vmem:[#allocation2 + $0x190] sm:$0xff]
    %v2072 = vld [vmem:[#allocation2 + $0x198] sm:$0xff]
    %v2073 = vld [vmem:[#allocation2 + $0x1a0] sm:$0xff]
    %v2074 = vld [vmem:[#allocation2 + $0x1a8] sm:$0xff]
    %v2075 = vld [vmem:[#allocation2 + $0x1b0] sm:$0xff]
    %v2076 = vld [vmem:[#allocation2 + $0x1b8] sm:$0xff]
    %v2077 = vld [vmem:[#allocation2 + $0x1c0] sm:$0xff]
    %v2078 = vld [vmem:[#allocation2 + $0x1c8] sm:$0xff]
    %v2079 = vld [vmem:[#allocation2 + $0x1d0] sm:$0xff]
    %v2080 = vld [vmem:[#allocation2 + $0x1d8] sm:$0xff]
    %v2081 = vld [vmem:[#allocation2 + $0x1e0] sm:$0xff]
    %v2082 = vld [vmem:[#allocation2 + $0x1e8] sm:$0xff]
    %v2083 = vld [vmem:[#allocation2 + $0x1f0] sm:$0xff]
    %v2084 = vld [vmem:[#allocation2 + $0x1f8] sm:$0xff]
    %v2085 = vld [vmem:[#allocation2 + $0x200] sm:$0xff]
    %vm2086 = vcmp.ge.s32.totalorder %v1030, 0
    %vm2087 = vcmp.ge.s32.totalorder %v1031, 0
    %vm2088 = vcmp.ge.s32.totalorder %v1032, 0
    %vm2089 = vcmp.ge.s32.totalorder %v1033, 0
    %vm2090 = vcmp.ge.s32.totalorder %v1034, 0
    %vm2091 = vcmp.ge.s32.totalorder %v1035, 0
    %vm2092 = vcmp.ge.s32.totalorder %v1036, 0
    %vm2093 = vcmp.ge.s32.totalorder %v1037, 0
    %vm2094 = vcmp.ge.s32.totalorder %v1038, 0
    %vm2095 = vcmp.ge.s32.totalorder %v1039, 0
    %vm2096 = vcmp.ge.s32.totalorder %v1040, 0
    %vm2097 = vcmp.ge.s32.totalorder %v1041, 0
    %vm2098 = vcmp.ge.s32.totalorder %v1042, 0
    %vm2099 = vcmp.ge.s32.totalorder %v1043, 0
    %vm2100 = vcmp.ge.s32.totalorder %v1044, 0
    %vm2101 = vcmp.ge.s32.totalorder %v1045, 0
    %vm2102 = vcmp.ge.s32.totalorder %v1046, 0
    %vm2103 = vcmp.ge.s32.totalorder %v1047, 0
    %vm2104 = vcmp.ge.s32.totalorder %v1048, 0
    %vm2105 = vcmp.ge.s32.totalorder %v1049, 0
    %vm2106 = vcmp.ge.s32.totalorder %v1050, 0
    %vm2107 = vcmp.ge.s32.totalorder %v1051, 0
    %vm2108 = vcmp.ge.s32.totalorder %v1052, 0
    %vm2109 = vcmp.ge.s32.totalorder %v1053, 0
    %vm2110 = vcmp.ge.s32.totalorder %v1054, 0
    %vm2111 = vcmp.ge.s32.totalorder %v1055, 0
    %vm2112 = vcmp.ge.s32.totalorder %v1056, 0
    %vm2113 = vcmp.ge.s32.totalorder %v1057, 0
    %vm2114 = vcmp.ge.s32.totalorder %v1058, 0
    %vm2115 = vcmp.ge.s32.totalorder %v1059, 0
    %vm2116 = vcmp.ge.s32.totalorder %v1060, 0
    %vm2117 = vcmp.ge.s32.totalorder %v1061, 0
    %vm2118 = vcmp.ge.s32.totalorder %v1062, 0
    %vm2119 = vcmp.ge.s32.totalorder %v1063, 0
    %vm2120 = vcmp.ge.s32.totalorder %v1064, 0
    %vm2121 = vcmp.ge.s32.totalorder %v1065, 0
    %vm2122 = vcmp.ge.s32.totalorder %v1066, 0
    %vm2123 = vcmp.ge.s32.totalorder %v1067, 0
    %vm2124 = vcmp.ge.s32.totalorder %v1068, 0
    %vm2125 = vcmp.ge.s32.totalorder %v1069, 0
    %vm2126 = vcmp.ge.s32.totalorder %v1070, 0
    %vm2127 = vcmp.ge.s32.totalorder %v1071, 0
    %vm2128 = vcmp.ge.s32.totalorder %v1072, 0
    %vm2129 = vcmp.ge.s32.totalorder %v1073, 0
    %vm2130 = vcmp.ge.s32.totalorder %v1074, 0
    %vm2131 = vcmp.ge.s32.totalorder %v1075, 0
    %vm2132 = vcmp.ge.s32.totalorder %v1076, 0
    %vm2133 = vcmp.ge.s32.totalorder %v1077, 0
    %vm2134 = vcmp.ge.s32.totalorder %v1078, 0
    %vm2135 = vcmp.ge.s32.totalorder %v1079, 0
    %vm2136 = vcmp.ge.s32.totalorder %v1080, 0
    %vm2137 = vcmp.ge.s32.totalorder %v1081, 0
    %vm2138 = vcmp.ge.s32.totalorder %v1082, 0
    %vm2139 = vcmp.ge.s32.totalorder %v1083, 0
    %vm2140 = vcmp.ge.s32.totalorder %v1084, 0
    %vm2141 = vcmp.ge.s32.totalorder %v1085, 0
    %vm2142 = vcmp.ge.s32.totalorder %v1086, 0
    %vm2143 = vcmp.ge.s32.totalorder %v1087, 0
    %vm2144 = vcmp.ge.s32.totalorder %v1088, 0
    %vm2145 = vcmp.ge.s32.totalorder %v1089, 0
    %vm2146 = vcmp.ge.s32.totalorder %v1090, 0
    %vm2147 = vcmp.ge.s32.totalorder %v1091, 0
    %vm2148 = vcmp.ge.s32.totalorder %v1092, 0
    %vm2149 = vcmp.ge.s32.totalorder %v1093, 0
    %vm2150 = vcmp.lt.s32.totalorder %v1030, 16
    %vm2151 = vcmp.lt.s32.totalorder %v1031, 16
    %vm2152 = vcmp.lt.s32.totalorder %v1032, 16
    %vm2153 = vcmp.lt.s32.totalorder %v1033, 16
    %vm2154 = vcmp.lt.s32.totalorder %v1034, 16
    %vm2155 = vcmp.lt.s32.totalorder %v1035, 16
    %vm2156 = vcmp.lt.s32.totalorder %v1036, 16
    %vm2157 = vcmp.lt.s32.totalorder %v1037, 16
    %vm2158 = vcmp.lt.s32.totalorder %v1038, 16
    %vm2159 = vcmp.lt.s32.totalorder %v1039, 16
    %vm2160 = vcmp.lt.s32.totalorder %v1040, 16
    %vm2161 = vcmp.lt.s32.totalorder %v1041, 16
    %vm2162 = vcmp.lt.s32.totalorder %v1042, 16
    %vm2163 = vcmp.lt.s32.totalorder %v1043, 16
    %vm2164 = vcmp.lt.s32.totalorder %v1044, 16
    %vm2165 = vcmp.lt.s32.totalorder %v1045, 16
    %vm2166 = vcmp.lt.s32.totalorder %v1046, 16
    %vm2167 = vcmp.lt.s32.totalorder %v1047, 16
    %vm2168 = vcmp.lt.s32.totalorder %v1048, 16
    %vm2169 = vcmp.lt.s32.totalorder %v1049, 16
    %vm2170 = vcmp.lt.s32.totalorder %v1050, 16
    %vm2171 = vcmp.lt.s32.totalorder %v1051, 16
    %vm2172 = vcmp.lt.s32.totalorder %v1052, 16
    %vm2173 = vcmp.lt.s32.totalorder %v1053, 16
    %vm2174 = vcmp.lt.s32.totalorder %v1054, 16
    %vm2175 = vcmp.lt.s32.totalorder %v1055, 16
    %vm2176 = vcmp.lt.s32.totalorder %v1056, 16
    %vm2177 = vcmp.lt.s32.totalorder %v1057, 16
    %vm2178 = vcmp.lt.s32.totalorder %v1058, 16
    %vm2179 = vcmp.lt.s32.totalorder %v1059, 16
    %vm2180 = vcmp.lt.s32.totalorder %v1060, 16
    %vm2181 = vcmp.lt.s32.totalorder %v1061, 16
    %vm2182 = vcmp.lt.s32.totalorder %v1062, 16
    %vm2183 = vcmp.lt.s32.totalorder %v1063, 16
    %vm2184 = vcmp.lt.s32.totalorder %v1064, 16
    %vm2185 = vcmp.lt.s32.totalorder %v1065, 16
    %vm2186 = vcmp.lt.s32.totalorder %v1066, 16
    %vm2187 = vcmp.lt.s32.totalorder %v1067, 16
    %vm2188 = vcmp.lt.s32.totalorder %v1068, 16
    %vm2189 = vcmp.lt.s32.totalorder %v1069, 16
    %vm2190 = vcmp.lt.s32.totalorder %v1070, 16
    %vm2191 = vcmp.lt.s32.totalorder %v1071, 16
    %vm2192 = vcmp.lt.s32.totalorder %v1072, 16
    %vm2193 = vcmp.lt.s32.totalorder %v1073, 16
    %vm2194 = vcmp.lt.s32.totalorder %v1074, 16
    %vm2195 = vcmp.lt.s32.totalorder %v1075, 16
    %vm2196 = vcmp.lt.s32.totalorder %v1076, 16
    %vm2197 = vcmp.lt.s32.totalorder %v1077, 16
    %vm2198 = vcmp.lt.s32.totalorder %v1078, 16
    %vm2199 = vcmp.lt.s32.totalorder %v1079, 16
    %vm2200 = vcmp.lt.s32.totalorder %v1080, 16
    %vm2201 = vcmp.lt.s32.totalorder %v1081, 16
    %vm2202 = vcmp.lt.s32.totalorder %v1082, 16
    %vm2203 = vcmp.lt.s32.totalorder %v1083, 16
    %vm2204 = vcmp.lt.s32.totalorder %v1084, 16
    %vm2205 = vcmp.lt.s32.totalorder %v1085, 16
    %vm2206 = vcmp.lt.s32.totalorder %v1086, 16
    %vm2207 = vcmp.lt.s32.totalorder %v1087, 16
    %vm2208 = vcmp.lt.s32.totalorder %v1088, 16
    %vm2209 = vcmp.lt.s32.totalorder %v1089, 16
    %vm2210 = vcmp.lt.s32.totalorder %v1090, 16
    %vm2211 = vcmp.lt.s32.totalorder %v1091, 16
    %vm2212 = vcmp.lt.s32.totalorder %v1092, 16
    %vm2213 = vcmp.lt.s32.totalorder %v1093, 16
    %vm2214 = vmand %vm2086, %vm2150
    %vm2215 = vmand %vm2087, %vm2151
    %vm2216 = vmand %vm2088, %vm2152
    %vm2217 = vmand %vm2089, %vm2153
    %vm2218 = vmand %vm2090, %vm2154
    %vm2219 = vmand %vm2091, %vm2155
    %vm2220 = vmand %vm2092, %vm2156
    %vm2221 = vmand %vm2093, %vm2157
    %vm2222 = vmand %vm2094, %vm2158
    %vm2223 = vmand %vm2095, %vm2159
    %vm2224 = vmand %vm2096, %vm2160
    %vm2225 = vmand %vm2097, %vm2161
    %vm2226 = vmand %vm2098, %vm2162
    %vm2227 = vmand %vm2099, %vm2163
    %vm2228 = vmand %vm2100, %vm2164
    %vm2229 = vmand %vm2101, %vm2165
    %vm2230 = vmand %vm2102, %vm2166
    %vm2231 = vmand %vm2103, %vm2167
    %vm2232 = vmand %vm2104, %vm2168
    %vm2233 = vmand %vm2105, %vm2169
    %vm2234 = vmand %vm2106, %vm2170
    %vm2235 = vmand %vm2107, %vm2171
    %vm2236 = vmand %vm2108, %vm2172
    %vm2237 = vmand %vm2109, %vm2173
    %vm2238 = vmand %vm2110, %vm2174
    %vm2239 = vmand %vm2111, %vm2175
    %vm2240 = vmand %vm2112, %vm2176
    %vm2241 = vmand %vm2113, %vm2177
    %vm2242 = vmand %vm2114, %vm2178
    %vm2243 = vmand %vm2115, %vm2179
    %vm2244 = vmand %vm2116, %vm2180
    %vm2245 = vmand %vm2117, %vm2181
    %vm2246 = vmand %vm2118, %vm2182
    %vm2247 = vmand %vm2119, %vm2183
    %vm2248 = vmand %vm2120, %vm2184
    %vm2249 = vmand %vm2121, %vm2185
    %vm2250 = vmand %vm2122, %vm2186
    %vm2251 = vmand %vm2123, %vm2187
    %vm2252 = vmand %vm2124, %vm2188
    %vm2253 = vmand %vm2125, %vm2189
    %vm2254 = vmand %vm2126, %vm2190
    %vm2255 = vmand %vm2127, %vm2191
    %vm2256 = vmand %vm2128, %vm2192
    %vm2257 = vmand %vm2129, %vm2193
    %vm2258 = vmand %vm2130, %vm2194
    %vm2259 = vmand %vm2131, %vm2195
    %vm2260 = vmand %vm2132, %vm2196
    %vm2261 = vmand %vm2133, %vm2197
    %vm2262 = vmand %vm2134, %vm2198
    %vm2263 = vmand %vm2135, %vm2199
    %vm2264 = vmand %vm2136, %vm2200
    %vm2265 = vmand %vm2137, %vm2201
    %vm2266 = vmand %vm2138, %vm2202
    %vm2267 = vmand %vm2139, %vm2203
    %vm2268 = vmand %vm2140, %vm2204
    %vm2269 = vmand %vm2141, %vm2205
    %vm2270 = vmand %vm2142, %vm2206
    %vm2271 = vmand %vm2143, %vm2207
    %vm2272 = vmand %vm2144, %vm2208
    %vm2273 = vmand %vm2145, %vm2209
    %vm2274 = vmand %vm2146, %vm2210
    %vm2275 = vmand %vm2147, %vm2211
    %vm2276 = vmand %vm2148, %vm2212
    %vm2277 = vmand %vm2149, %vm2213
    %vm2278 = vmand %vm2214, %vm1670
    %vm2279 = vmand %vm2215, %vm1671
    %vm2280 = vmand %vm2216, %vm1672
    %vm2281 = vmand %vm2217, %vm1673
    %vm2282 = vmand %vm2218, %vm1674
    %vm2283 = vmand %vm2219, %vm1675
    %vm2284 = vmand %vm2220, %vm1676
    %vm2285 = vmand %vm2221, %vm1677
    %vm2286 = vmand %vm2222, %vm1678
    %vm2287 = vmand %vm2223, %vm1679
    %vm2288 = vmand %vm2224, %vm1680
    %vm2289 = vmand %vm2225, %vm1681
    %vm2290 = vmand %vm2226, %vm1682
    %vm2291 = vmand %vm2227, %vm1683
    %vm2292 = vmand %vm2228, %vm1684
    %vm2293 = vmand %vm2229, %vm1685
    %vm2294 = vmand %vm2230, %vm1686
    %vm2295 = vmand %vm2231, %vm1687
    %vm2296 = vmand %vm2232, %vm1688
    %vm2297 = vmand %vm2233, %vm1689
    %vm2298 = vmand %vm2234, %vm1690
    %vm2299 = vmand %vm2235, %vm1691
    %vm2300 = vmand %vm2236, %vm1692
    %vm2301 = vmand %vm2237, %vm1693
    %vm2302 = vmand %vm2238, %vm1694
    %vm2303 = vmand %vm2239, %vm1695
    %vm2304 = vmand %vm2240, %vm1696
    %vm2305 = vmand %vm2241, %vm1697
    %vm2306 = vmand %vm2242, %vm1698
    %vm2307 = vmand %vm2243, %vm1699
    %vm2308 = vmand %vm2244, %vm1700
    %vm2309 = vmand %vm2245, %vm1701
    %vm2310 = vmand %vm2246, %vm1702
    %vm2311 = vmand %vm2247, %vm1703
    %vm2312 = vmand %vm2248, %vm1704
    %vm2313 = vmand %vm2249, %vm1705
    %vm2314 = vmand %vm2250, %vm1706
    %vm2315 = vmand %vm2251, %vm1707
    %vm2316 = vmand %vm2252, %vm1708
    %vm2317 = vmand %vm2253, %vm1709
    %vm2318 = vmand %vm2254, %vm1710
    %vm2319 = vmand %vm2255, %vm1711
    %vm2320 = vmand %vm2256, %vm1712
    %vm2321 = vmand %vm2257, %vm1713
    %vm2322 = vmand %vm2258, %vm1714
    %vm2323 = vmand %vm2259, %vm1715
    %vm2324 = vmand %vm2260, %vm1716
    %vm2325 = vmand %vm2261, %vm1717
    %vm2326 = vmand %vm2262, %vm1718
    %vm2327 = vmand %vm2263, %vm1719
    %vm2328 = vmand %vm2264, %vm1720
    %vm2329 = vmand %vm2265, %vm1721
    %vm2330 = vmand %vm2266, %vm1722
    %vm2331 = vmand %vm2267, %vm1723
    %vm2332 = vmand %vm2268, %vm1724
    %vm2333 = vmand %vm2269, %vm1725
    %vm2334 = vmand %vm2270, %vm1726
    %vm2335 = vmand %vm2271, %vm1727
    %vm2336 = vmand %vm2272, %vm1728
    %vm2337 = vmand %vm2273, %vm1729
    %vm2338 = vmand %vm2274, %vm1730
    %vm2339 = vmand %vm2275, %vm1731
    %vm2340 = vmand %vm2276, %vm1732
    %vm2341 = vmand %vm2277, %vm1733
    %v2342 = vsel %vm2278, 1, 0
    %v2343 = vsel %vm2279, 1, 0
    %v2344 = vsel %vm2280, 1, 0
    %v2345 = vsel %vm2281, 1, 0
    %v2346 = vsel %vm2282, 1, 0
    %v2347 = vsel %vm2283, 1, 0
    %v2348 = vsel %vm2284, 1, 0
    %v2349 = vsel %vm2285, 1, 0
    %v2350 = vsel %vm2286, 1, 0
    %v2351 = vsel %vm2287, 1, 0
    %v2352 = vsel %vm2288, 1, 0
    %v2353 = vsel %vm2289, 1, 0
    %v2354 = vsel %vm2290, 1, 0
    %v2355 = vsel %vm2291, 1, 0
    %v2356 = vsel %vm2292, 1, 0
    %v2357 = vsel %vm2293, 1, 0
    %v2358 = vsel %vm2294, 1, 0
    %v2359 = vsel %vm2295, 1, 0
    %v2360 = vsel %vm2296, 1, 0
    %v2361 = vsel %vm2297, 1, 0
    %v2362 = vsel %vm2298, 1, 0
    %v2363 = vsel %vm2299, 1, 0
    %v2364 = vsel %vm2300, 1, 0
    %v2365 = vsel %vm2301, 1, 0
    %v2366 = vsel %vm2302, 1, 0
    %v2367 = vsel %vm2303, 1, 0
    %v2368 = vsel %vm2304, 1, 0
    %v2369 = vsel %vm2305, 1, 0
    %v2370 = vsel %vm2306, 1, 0
    %v2371 = vsel %vm2307, 1, 0
    %v2372 = vsel %vm2308, 1, 0
    %v2373 = vsel %vm2309, 1, 0
    %v2374 = vsel %vm2310, 1, 0
    %v2375 = vsel %vm2311, 1, 0
    %v2376 = vsel %vm2312, 1, 0
    %v2377 = vsel %vm2313, 1, 0
    %v2378 = vsel %vm2314, 1, 0
    %v2379 = vsel %vm2315, 1, 0
    %v2380 = vsel %vm2316, 1, 0
    %v2381 = vsel %vm2317, 1, 0
    %v2382 = vsel %vm2318, 1, 0
    %v2383 = vsel %vm2319, 1, 0
    %v2384 = vsel %vm2320, 1, 0
    %v2385 = vsel %vm2321, 1, 0
    %v2386 = vsel %vm2322, 1, 0
    %v2387 = vsel %vm2323, 1, 0
    %v2388 = vsel %vm2324, 1, 0
    %v2389 = vsel %vm2325, 1, 0
    %v2390 = vsel %vm2326, 1, 0
    %v2391 = vsel %vm2327, 1, 0
    %v2392 = vsel %vm2328, 1, 0
    %v2393 = vsel %vm2329, 1, 0
    %v2394 = vsel %vm2330, 1, 0
    %v2395 = vsel %vm2331, 1, 0
    %v2396 = vsel %vm2332, 1, 0
    %v2397 = vsel %vm2333, 1, 0
    %v2398 = vsel %vm2334, 1, 0
    %v2399 = vsel %vm2335, 1, 0
    %v2400 = vsel %vm2336, 1, 0
    %v2401 = vsel %vm2337, 1, 0
    %v2402 = vsel %vm2338, 1, 0
    %v2403 = vsel %vm2339, 1, 0
    %v2404 = vsel %vm2340, 1, 0
    %v2405 = vsel %vm2341, 1, 0
    %vm2406 = vcmp.eq.s32.totalorder %v2342, 1
    %vm2407 = vcmp.eq.s32.totalorder %v2343, 1
    %vm2408 = vcmp.eq.s32.totalorder %v2344, 1
    %vm2409 = vcmp.eq.s32.totalorder %v2345, 1
    %vm2410 = vcmp.eq.s32.totalorder %v2346, 1
    %vm2411 = vcmp.eq.s32.totalorder %v2347, 1
    %vm2412 = vcmp.eq.s32.totalorder %v2348, 1
    %vm2413 = vcmp.eq.s32.totalorder %v2349, 1
    %vm2414 = vcmp.eq.s32.totalorder %v2350, 1
    %vm2415 = vcmp.eq.s32.totalorder %v2351, 1
    %vm2416 = vcmp.eq.s32.totalorder %v2352, 1
    %vm2417 = vcmp.eq.s32.totalorder %v2353, 1
    %vm2418 = vcmp.eq.s32.totalorder %v2354, 1
    %vm2419 = vcmp.eq.s32.totalorder %v2355, 1
    %vm2420 = vcmp.eq.s32.totalorder %v2356, 1
    %vm2421 = vcmp.eq.s32.totalorder %v2357, 1
    %vm2422 = vcmp.eq.s32.totalorder %v2358, 1
    %vm2423 = vcmp.eq.s32.totalorder %v2359, 1
    %vm2424 = vcmp.eq.s32.totalorder %v2360, 1
    %vm2425 = vcmp.eq.s32.totalorder %v2361, 1
    %vm2426 = vcmp.eq.s32.totalorder %v2362, 1
    %vm2427 = vcmp.eq.s32.totalorder %v2363, 1
    %vm2428 = vcmp.eq.s32.totalorder %v2364, 1
    %vm2429 = vcmp.eq.s32.totalorder %v2365, 1
    %vm2430 = vcmp.eq.s32.totalorder %v2366, 1
    %vm2431 = vcmp.eq.s32.totalorder %v2367, 1
    %vm2432 = vcmp.eq.s32.totalorder %v2368, 1
    %vm2433 = vcmp.eq.s32.totalorder %v2369, 1
    %vm2434 = vcmp.eq.s32.totalorder %v2370, 1
    %vm2435 = vcmp.eq.s32.totalorder %v2371, 1
    %vm2436 = vcmp.eq.s32.totalorder %v2372, 1
    %vm2437 = vcmp.eq.s32.totalorder %v2373, 1
    %vm2438 = vcmp.eq.s32.totalorder %v2374, 1
    %vm2439 = vcmp.eq.s32.totalorder %v2375, 1
    %vm2440 = vcmp.eq.s32.totalorder %v2376, 1
    %vm2441 = vcmp.eq.s32.totalorder %v2377, 1
    %vm2442 = vcmp.eq.s32.totalorder %v2378, 1
    %vm2443 = vcmp.eq.s32.totalorder %v2379, 1
    %vm2444 = vcmp.eq.s32.totalorder %v2380, 1
    %vm2445 = vcmp.eq.s32.totalorder %v2381, 1
    %vm2446 = vcmp.eq.s32.totalorder %v2382, 1
    %vm2447 = vcmp.eq.s32.totalorder %v2383, 1
    %vm2448 = vcmp.eq.s32.totalorder %v2384, 1
    %vm2449 = vcmp.eq.s32.totalorder %v2385, 1
    %vm2450 = vcmp.eq.s32.totalorder %v2386, 1
    %vm2451 = vcmp.eq.s32.totalorder %v2387, 1
    %vm2452 = vcmp.eq.s32.totalorder %v2388, 1
    %vm2453 = vcmp.eq.s32.totalorder %v2389, 1
    %vm2454 = vcmp.eq.s32.totalorder %v2390, 1
    %vm2455 = vcmp.eq.s32.totalorder %v2391, 1
    %vm2456 = vcmp.eq.s32.totalorder %v2392, 1
    %vm2457 = vcmp.eq.s32.totalorder %v2393, 1
    %vm2458 = vcmp.eq.s32.totalorder %v2394, 1
    %vm2459 = vcmp.eq.s32.totalorder %v2395, 1
    %vm2460 = vcmp.eq.s32.totalorder %v2396, 1
    %vm2461 = vcmp.eq.s32.totalorder %v2397, 1
    %vm2462 = vcmp.eq.s32.totalorder %v2398, 1
    %vm2463 = vcmp.eq.s32.totalorder %v2399, 1
    %vm2464 = vcmp.eq.s32.totalorder %v2400, 1
    %vm2465 = vcmp.eq.s32.totalorder %v2401, 1
    %vm2466 = vcmp.eq.s32.totalorder %v2402, 1
    %vm2467 = vcmp.eq.s32.totalorder %v2403, 1
    %vm2468 = vcmp.eq.s32.totalorder %v2404, 1
    %vm2469 = vcmp.eq.s32.totalorder %v2405, 1
    %v2470 = vsel %vm2406, %v2022, 0.0
    %v2471 = vsel %vm2407, %v2023, 0.0
    %v2472 = vsel %vm2408, %v2024, 0.0
    %v2473 = vsel %vm2409, %v2025, 0.0
    %v2474 = vsel %vm2410, %v2026, 0.0
    %v2475 = vsel %vm2411, %v2027, 0.0
    %v2476 = vsel %vm2412, %v2028, 0.0
    %v2477 = vsel %vm2413, %v2029, 0.0
    %v2478 = vsel %vm2414, %v2030, 0.0
    %v2479 = vsel %vm2415, %v2031, 0.0
    %v2480 = vsel %vm2416, %v2032, 0.0
    %v2481 = vsel %vm2417, %v2033, 0.0
    %v2482 = vsel %vm2418, %v2034, 0.0
    %v2483 = vsel %vm2419, %v2035, 0.0
    %v2484 = vsel %vm2420, %v2036, 0.0
    %v2485 = vsel %vm2421, %v2037, 0.0
    %v2486 = vsel %vm2422, %v2038, 0.0
    %v2487 = vsel %vm2423, %v2039, 0.0
    %v2488 = vsel %vm2424, %v2040, 0.0
    %v2489 = vsel %vm2425, %v2041, 0.0
    %v2490 = vsel %vm2426, %v2042, 0.0
    %v2491 = vsel %vm2427, %v2043, 0.0
    %v2492 = vsel %vm2428, %v2044, 0.0
    %v2493 = vsel %vm2429, %v2045, 0.0
    %v2494 = vsel %vm2430, %v2046, 0.0
    %v2495 = vsel %vm2431, %v2047, 0.0
    %v2496 = vsel %vm2432, %v2048, 0.0
    %v2497 = vsel %vm2433, %v2049, 0.0
    %v2498 = vsel %vm2434, %v2050, 0.0
    %v2499 = vsel %vm2435, %v2051, 0.0
    %v2500 = vsel %vm2436, %v2052, 0.0
    %v2501 = vsel %vm2437, %v2053, 0.0
    %v2502 = vsel %vm2438, %v2054, 0.0
    %v2503 = vsel %vm2439, %v2055, 0.0
    %v2504 = vsel %vm2440, %v2056, 0.0
    %v2505 = vsel %vm2441, %v2057, 0.0
    %v2506 = vsel %vm2442, %v2058, 0.0
    %v2507 = vsel %vm2443, %v2059, 0.0
    %v2508 = vsel %vm2444, %v2060, 0.0
    %v2509 = vsel %vm2445, %v2061, 0.0
    %v2510 = vsel %vm2446, %v2062, 0.0
    %v2511 = vsel %vm2447, %v2063, 0.0
    %v2512 = vsel %vm2448, %v2064, 0.0
    %v2513 = vsel %vm2449, %v2065, 0.0
    %v2514 = vsel %vm2450, %v2066, 0.0
    %v2515 = vsel %vm2451, %v2067, 0.0
    %v2516 = vsel %vm2452, %v2068, 0.0
    %v2517 = vsel %vm2453, %v2069, 0.0
    %v2518 = vsel %vm2454, %v2070, 0.0
    %v2519 = vsel %vm2455, %v2071, 0.0
    %v2520 = vsel %vm2456, %v2072, 0.0
    %v2521 = vsel %vm2457, %v2073, 0.0
    %v2522 = vsel %vm2458, %v2074, 0.0
    %v2523 = vsel %vm2459, %v2075, 0.0
    %v2524 = vsel %vm2460, %v2076, 0.0
    %v2525 = vsel %vm2461, %v2077, 0.0
    %v2526 = vsel %vm2462, %v2078, 0.0
    %v2527 = vsel %vm2463, %v2079, 0.0
    %v2528 = vsel %vm2464, %v2080, 0.0
    %v2529 = vsel %vm2465, %v2081, 0.0
    %v2530 = vsel %vm2466, %v2082, 0.0
    %v2531 = vsel %vm2467, %v2083, 0.0
    %v2532 = vsel %vm2468, %v2084, 0.0
    %v2533 = vsel %vm2469, %v2085, 0.0
    %s2534 = scalar_lea.vmem [#allocation8], 64
    %v2535 = vld [vmem:[%s2534] sm:$0xf]
    %v2536 = vld [vmem:[%s2534 + $0x4] sm:$0xf]
    %v2537 = vld [vmem:[%s2534 + $0x8] sm:$0xf]
    %v2538 = vld [vmem:[%s2534 + $0xc] sm:$0xf]
    %v2539 = vld [vmem:[%s2534 + $0x10] sm:$0xf]
    %v2540 = vld [vmem:[%s2534 + $0x14] sm:$0xf]
    %v2541 = vld [vmem:[%s2534 + $0x18] sm:$0xf]
    %v2542 = vld [vmem:[%s2534 + $0x1c] sm:$0xf]
    %v2543 = vld [vmem:[%s2534 + $0x20] sm:$0xf]
    %v2544 = vld [vmem:[%s2534 + $0x24] sm:$0xf]
    %v2545 = vld [vmem:[%s2534 + $0x28] sm:$0xf]
    %v2546 = vld [vmem:[%s2534 + $0x2c] sm:$0xf]
    %v2547 = vld [vmem:[%s2534 + $0x30] sm:$0xf]
    %v2548 = vld [vmem:[%s2534 + $0x34] sm:$0xf]
    %v2549 = vld [vmem:[%s2534 + $0x38] sm:$0xf]
    %v2550 = vld [vmem:[%s2534 + $0x3c] sm:$0xf]
    %v2551 = vunpack.c.l.bf16 %v2535
    %v2552 = vunpack.c.l.bf16 %v2536
    %v2553 = vunpack.c.l.bf16 %v2537
    %v2554 = vunpack.c.l.bf16 %v2538
    %v2555 = vunpack.c.l.bf16 %v2539
    %v2556 = vunpack.c.l.bf16 %v2540
    %v2557 = vunpack.c.l.bf16 %v2541
    %v2558 = vunpack.c.l.bf16 %v2542
    %v2559 = vunpack.c.l.bf16 %v2543
    %v2560 = vunpack.c.l.bf16 %v2544
    %v2561 = vunpack.c.l.bf16 %v2545
    %v2562 = vunpack.c.l.bf16 %v2546
    %v2563 = vunpack.c.l.bf16 %v2547
    %v2564 = vunpack.c.l.bf16 %v2548
    %v2565 = vunpack.c.l.bf16 %v2549
    %v2566 = vunpack.c.l.bf16 %v2550
    %2567 = vmatpush.msra.mxu0 %v2566
    %2568 = vmatpush.msra.mxu0 %v2565
    %2569 = vmatpush.msra.mxu0 %v2564
    %2570 = vmatpush.msra.mxu0 %v2563
    %2571 = vmatpush.msra.mxu0 %v2562
    %2572 = vmatpush.msra.mxu0 %v2561
    %2573 = vmatpush.msra.mxu0 %v2560
    %2574 = vmatpush.msra.mxu0 %v2559
    %2575 = vmatpush.msra.mxu0 %v2558
    %2576 = vmatpush.msra.mxu0 %v2557
    %2577 = vmatpush.msra.mxu0 %v2556
    %2578 = vmatpush.msra.mxu0 %v2555
    %2579 = vmatpush.msra.mxu0 %v2554
    %2580 = vmatpush.msra.mxu0 %v2553
    %2581 = vmatpush.msra.mxu0 %v2552
    %2582 = vmatpush.msra.mxu0 %v2551
    %2583 = vmatmul.f32.gmra.mxu0 %v2470
    %v2584 = vpop.f32.mrf.mxu0
    %v2585 = vadd.f32 0.0, %v2584
    %2586 = vmatmul.f32.gmra.mxu0 %v2471
    %v2587 = vpop.f32.mrf.mxu0
    %v2588 = vadd.f32 0.0, %v2587
    %2589 = vmatmul.f32.gmra.mxu0 %v2472
    %v2590 = vpop.f32.mrf.mxu0
    %v2591 = vadd.f32 0.0, %v2590
    %2592 = vmatmul.f32.gmra.mxu0 %v2473
    %v2593 = vpop.f32.mrf.mxu0
    %v2594 = vadd.f32 0.0, %v2593
    %2595 = vmatmul.f32.gmra.mxu0 %v2474
    %v2596 = vpop.f32.mrf.mxu0
    %v2597 = vadd.f32 0.0, %v2596
    %2598 = vmatmul.f32.gmra.mxu0 %v2475
    %v2599 = vpop.f32.mrf.mxu0
    %v2600 = vadd.f32 0.0, %v2599
    %2601 = vmatmul.f32.gmra.mxu0 %v2476
    %v2602 = vpop.f32.mrf.mxu0
    %v2603 = vadd.f32 0.0, %v2602
    %2604 = vmatmul.f32.gmra.mxu0 %v2477
    %v2605 = vpop.f32.mrf.mxu0
    %v2606 = vadd.f32 0.0, %v2605
    %2607 = vmatmul.f32.gmra.mxu0 %v2478
    %v2608 = vpop.f32.mrf.mxu0
    %v2609 = vadd.f32 0.0, %v2608
    %2610 = vmatmul.f32.gmra.mxu0 %v2479
    %v2611 = vpop.f32.mrf.mxu0
    %v2612 = vadd.f32 0.0, %v2611
    %2613 = vmatmul.f32.gmra.mxu0 %v2480
    %v2614 = vpop.f32.mrf.mxu0
    %v2615 = vadd.f32 0.0, %v2614
    %2616 = vmatmul.f32.gmra.mxu0 %v2481
    %v2617 = vpop.f32.mrf.mxu0
    %v2618 = vadd.f32 0.0, %v2617
    %2619 = vmatmul.f32.gmra.mxu0 %v2482
    %v2620 = vpop.f32.mrf.mxu0
    %v2621 = vadd.f32 0.0, %v2620
    %2622 = vmatmul.f32.gmra.mxu0 %v2483
    %v2623 = vpop.f32.mrf.mxu0
    %v2624 = vadd.f32 0.0, %v2623
    %2625 = vmatmul.f32.gmra.mxu0 %v2484
    %v2626 = vpop.f32.mrf.mxu0
    %v2627 = vadd.f32 0.0, %v2626
    %2628 = vmatmul.f32.gmra.mxu0 %v2485
    %v2629 = vpop.f32.mrf.mxu0
    %v2630 = vadd.f32 0.0, %v2629
    %2631 = vmatmul.f32.gmra.mxu0 %v2486
    %v2632 = vpop.f32.mrf.mxu0
    %v2633 = vadd.f32 0.0, %v2632
    %2634 = vmatmul.f32.gmra.mxu0 %v2487
    %v2635 = vpop.f32.mrf.mxu0
    %v2636 = vadd.f32 0.0, %v2635
    %2637 = vmatmul.f32.gmra.mxu0 %v2488
    %v2638 = vpop.f32.mrf.mxu0
    %v2639 = vadd.f32 0.0, %v2638
    %2640 = vmatmul.f32.gmra.mxu0 %v2489
    %v2641 = vpop.f32.mrf.mxu0
    %v2642 = vadd.f32 0.0, %v2641
    %2643 = vmatmul.f32.gmra.mxu0 %v2490
    %v2644 = vpop.f32.mrf.mxu0
    %v2645 = vadd.f32 0.0, %v2644
    %2646 = vmatmul.f32.gmra.mxu0 %v2491
    %v2647 = vpop.f32.mrf.mxu0
    %v2648 = vadd.f32 0.0, %v2647
    %2649 = vmatmul.f32.gmra.mxu0 %v2492
    %v2650 = vpop.f32.mrf.mxu0
    %v2651 = vadd.f32 0.0, %v2650
    %2652 = vmatmul.f32.gmra.mxu0 %v2493
    %v2653 = vpop.f32.mrf.mxu0
    %v2654 = vadd.f32 0.0, %v2653
    %2655 = vmatmul.f32.gmra.mxu0 %v2494
    %v2656 = vpop.f32.mrf.mxu0
    %v2657 = vadd.f32 0.0, %v2656
    %2658 = vmatmul.f32.gmra.mxu0 %v2495
    %v2659 = vpop.f32.mrf.mxu0
    %v2660 = vadd.f32 0.0, %v2659
    %2661 = vmatmul.f32.gmra.mxu0 %v2496
    %v2662 = vpop.f32.mrf.mxu0
    %v2663 = vadd.f32 0.0, %v2662
    %2664 = vmatmul.f32.gmra.mxu0 %v2497
    %v2665 = vpop.f32.mrf.mxu0
    %v2666 = vadd.f32 0.0, %v2665
    %2667 = vmatmul.f32.gmra.mxu0 %v2498
    %v2668 = vpop.f32.mrf.mxu0
    %v2669 = vadd.f32 0.0, %v2668
    %2670 = vmatmul.f32.gmra.mxu0 %v2499
    %v2671 = vpop.f32.mrf.mxu0
    %v2672 = vadd.f32 0.0, %v2671
    %2673 = vmatmul.f32.gmra.mxu0 %v2500
    %v2674 = vpop.f32.mrf.mxu0
    %v2675 = vadd.f32 0.0, %v2674
    %2676 = vmatmul.f32.gmra.mxu0 %v2501
    %v2677 = vpop.f32.mrf.mxu0
    %v2678 = vadd.f32 0.0, %v2677
    %2679 = vmatmul.f32.gmra.mxu0 %v2502
    %v2680 = vpop.f32.mrf.mxu0
    %v2681 = vadd.f32 0.0, %v2680
    %2682 = vmatmul.f32.gmra.mxu0 %v2503
    %v2683 = vpop.f32.mrf.mxu0
    %v2684 = vadd.f32 0.0, %v2683
    %2685 = vmatmul.f32.gmra.mxu0 %v2504
    %v2686 = vpop.f32.mrf.mxu0
    %v2687 = vadd.f32 0.0, %v2686
    %2688 = vmatmul.f32.gmra.mxu0 %v2505
    %v2689 = vpop.f32.mrf.mxu0
    %v2690 = vadd.f32 0.0, %v2689
    %2691 = vmatmul.f32.gmra.mxu0 %v2506
    %v2692 = vpop.f32.mrf.mxu0
    %v2693 = vadd.f32 0.0, %v2692
    %2694 = vmatmul.f32.gmra.mxu0 %v2507
    %v2695 = vpop.f32.mrf.mxu0
    %v2696 = vadd.f32 0.0, %v2695
    %2697 = vmatmul.f32.gmra.mxu0 %v2508
    %v2698 = vpop.f32.mrf.mxu0
    %v2699 = vadd.f32 0.0, %v2698
    %2700 = vmatmul.f32.gmra.mxu0 %v2509
    %v2701 = vpop.f32.mrf.mxu0
    %v2702 = vadd.f32 0.0, %v2701
    %2703 = vmatmul.f32.gmra.mxu0 %v2510
    %v2704 = vpop.f32.mrf.mxu0
    %v2705 = vadd.f32 0.0, %v2704
    %2706 = vmatmul.f32.gmra.mxu0 %v2511
    %v2707 = vpop.f32.mrf.mxu0
    %v2708 = vadd.f32 0.0, %v2707
    %2709 = vmatmul.f32.gmra.mxu0 %v2512
    %v2710 = vpop.f32.mrf.mxu0
    %v2711 = vadd.f32 0.0, %v2710
    %2712 = vmatmul.f32.gmra.mxu0 %v2513
    %v2713 = vpop.f32.mrf.mxu0
    %v2714 = vadd.f32 0.0, %v2713
    %2715 = vmatmul.f32.gmra.mxu0 %v2514
    %v2716 = vpop.f32.mrf.mxu0
    %v2717 = vadd.f32 0.0, %v2716
    %2718 = vmatmul.f32.gmra.mxu0 %v2515
    %v2719 = vpop.f32.mrf.mxu0
    %v2720 = vadd.f32 0.0, %v2719
    %2721 = vmatmul.f32.gmra.mxu0 %v2516
    %v2722 = vpop.f32.mrf.mxu0
    %v2723 = vadd.f32 0.0, %v2722
    %2724 = vmatmul.f32.gmra.mxu0 %v2517
    %v2725 = vpop.f32.mrf.mxu0
    %v2726 = vadd.f32 0.0, %v2725
    %2727 = vmatmul.f32.gmra.mxu0 %v2518
    %v2728 = vpop.f32.mrf.mxu0
    %v2729 = vadd.f32 0.0, %v2728
    %2730 = vmatmul.f32.gmra.mxu0 %v2519
    %v2731 = vpop.f32.mrf.mxu0
    %v2732 = vadd.f32 0.0, %v2731
    %2733 = vmatmul.f32.gmra.mxu0 %v2520
    %v2734 = vpop.f32.mrf.mxu0
    %v2735 = vadd.f32 0.0, %v2734
    %2736 = vmatmul.f32.gmra.mxu0 %v2521
    %v2737 = vpop.f32.mrf.mxu0
    %v2738 = vadd.f32 0.0, %v2737
    %2739 = vmatmul.f32.gmra.mxu0 %v2522
    %v2740 = vpop.f32.mrf.mxu0
    %v2741 = vadd.f32 0.0, %v2740
    %2742 = vmatmul.f32.gmra.mxu0 %v2523
    %v2743 = vpop.f32.mrf.mxu0
    %v2744 = vadd.f32 0.0, %v2743
    %2745 = vmatmul.f32.gmra.mxu0 %v2524
    %v2746 = vpop.f32.mrf.mxu0
    %v2747 = vadd.f32 0.0, %v2746
    %2748 = vmatmul.f32.gmra.mxu0 %v2525
    %v2749 = vpop.f32.mrf.mxu0
    %v2750 = vadd.f32 0.0, %v2749
    %2751 = vmatmul.f32.gmra.mxu0 %v2526
    %v2752 = vpop.f32.mrf.mxu0
    %v2753 = vadd.f32 0.0, %v2752
    %2754 = vmatmul.f32.gmra.mxu0 %v2527
    %v2755 = vpop.f32.mrf.mxu0
    %v2756 = vadd.f32 0.0, %v2755
    %2757 = vmatmul.f32.gmra.mxu0 %v2528
    %v2758 = vpop.f32.mrf.mxu0
    %v2759 = vadd.f32 0.0, %v2758
    %2760 = vmatmul.f32.gmra.mxu0 %v2529
    %v2761 = vpop.f32.mrf.mxu0
    %v2762 = vadd.f32 0.0, %v2761
    %2763 = vmatmul.f32.gmra.mxu0 %v2530
    %v2764 = vpop.f32.mrf.mxu0
    %v2765 = vadd.f32 0.0, %v2764
    %2766 = vmatmul.f32.gmra.mxu0 %v2531
    %v2767 = vpop.f32.mrf.mxu0
    %v2768 = vadd.f32 0.0, %v2767
    %2769 = vmatmul.f32.gmra.mxu0 %v2532
    %v2770 = vpop.f32.mrf.mxu0
    %v2771 = vadd.f32 0.0, %v2770
    %2772 = vmatmul.f32.gmra.mxu0 %v2533
    %v2773 = vpop.f32.mrf.mxu0
    %v2774 = vadd.f32 0.0, %v2773
    %2775 = vdwg.mxu0
    %2776 = vmatpush.msra.mxu0 %v2021
    %2777 = vmatpush.msra.mxu0 %v2020
    %2778 = vmatpush.msra.mxu0 %v2019
    %2779 = vmatpush.msra.mxu0 %v2018
    %2780 = vmatpush.msra.mxu0 %v2017
    %2781 = vmatpush.msra.mxu0 %v2016
    %2782 = vmatpush.msra.mxu0 %v2015
    %2783 = vmatpush.msra.mxu0 %v2014
    %2784 = vmatpush.msra.mxu0 %v2013
    %2785 = vmatpush.msra.mxu0 %v2012
    %2786 = vmatpush.msra.mxu0 %v2011
    %2787 = vmatpush.msra.mxu0 %v2010
    %2788 = vmatpush.msra.mxu0 %v2009
    %2789 = vmatpush.msra.mxu0 %v2008
    %2790 = vmatpush.msra.mxu0 %v2007
    %2791 = vmatpush.msra.mxu0 %v2006
    %2792 = vmatmul.f32.gmra.mxu0 %v1926
    %v2793 = vpop.f32.mrf.mxu0
    %v2794 = vadd.f32 %v2585, %v2793
    %2795 = vmatmul.f32.gmra.mxu0 %v1927
    %v2796 = vpop.f32.mrf.mxu0
    %v2797 = vadd.f32 %v2588, %v2796
    %2798 = vmatmul.f32.gmra.mxu0 %v1928
    %v2799 = vpop.f32.mrf.mxu0
    %v2800 = vadd.f32 %v2591, %v2799
    %2801 = vmatmul.f32.gmra.mxu0 %v1929
    %v2802 = vpop.f32.mrf.mxu0
    %v2803 = vadd.f32 %v2594, %v2802
    %2804 = vmatmul.f32.gmra.mxu0 %v1930
    %v2805 = vpop.f32.mrf.mxu0
    %v2806 = vadd.f32 %v2597, %v2805
    %2807 = vmatmul.f32.gmra.mxu0 %v1931
    %v2808 = vpop.f32.mrf.mxu0
    %v2809 = vadd.f32 %v2600, %v2808
    %2810 = vmatmul.f32.gmra.mxu0 %v1932
    %v2811 = vpop.f32.mrf.mxu0
    %v2812 = vadd.f32 %v2603, %v2811
    %2813 = vmatmul.f32.gmra.mxu0 %v1933
    %v2814 = vpop.f32.mrf.mxu0
    %v2815 = vadd.f32 %v2606, %v2814
    %2816 = vmatmul.f32.gmra.mxu0 %v1934
    %v2817 = vpop.f32.mrf.mxu0
    %v2818 = vadd.f32 %v2609, %v2817
    %2819 = vmatmul.f32.gmra.mxu0 %v1935
    %v2820 = vpop.f32.mrf.mxu0
    %v2821 = vadd.f32 %v2612, %v2820
    %2822 = vmatmul.f32.gmra.mxu0 %v1936
    %v2823 = vpop.f32.mrf.mxu0
    %v2824 = vadd.f32 %v2615, %v2823
    %2825 = vmatmul.f32.gmra.mxu0 %v1937
    %v2826 = vpop.f32.mrf.mxu0
    %v2827 = vadd.f32 %v2618, %v2826
    %2828 = vmatmul.f32.gmra.mxu0 %v1938
    %v2829 = vpop.f32.mrf.mxu0
    %v2830 = vadd.f32 %v2621, %v2829
    %2831 = vmatmul.f32.gmra.mxu0 %v1939
    %v2832 = vpop.f32.mrf.mxu0
    %v2833 = vadd.f32 %v2624, %v2832
    %2834 = vmatmul.f32.gmra.mxu0 %v1940
    %v2835 = vpop.f32.mrf.mxu0
    %v2836 = vadd.f32 %v2627, %v2835
    %2837 = vmatmul.f32.gmra.mxu0 %v1941
    %v2838 = vpop.f32.mrf.mxu0
    %v2839 = vadd.f32 %v2630, %v2838
    %2840 = vmatmul.f32.gmra.mxu0 %v1942
    %v2841 = vpop.f32.mrf.mxu0
    %v2842 = vadd.f32 %v2633, %v2841
    %2843 = vmatmul.f32.gmra.mxu0 %v1943
    %v2844 = vpop.f32.mrf.mxu0
    %v2845 = vadd.f32 %v2636, %v2844
    %2846 = vmatmul.f32.gmra.mxu0 %v1944
    %v2847 = vpop.f32.mrf.mxu0
    %v2848 = vadd.f32 %v2639, %v2847
    %2849 = vmatmul.f32.gmra.mxu0 %v1945
    %v2850 = vpop.f32.mrf.mxu0
    %v2851 = vadd.f32 %v2642, %v2850
    %2852 = vmatmul.f32.gmra.mxu0 %v1946
    %v2853 = vpop.f32.mrf.mxu0
    %v2854 = vadd.f32 %v2645, %v2853
    %2855 = vmatmul.f32.gmra.mxu0 %v1947
    %v2856 = vpop.f32.mrf.mxu0
    %v2857 = vadd.f32 %v2648, %v2856
    %2858 = vmatmul.f32.gmra.mxu0 %v1948
    %v2859 = vpop.f32.mrf.mxu0
    %v2860 = vadd.f32 %v2651, %v2859
    %2861 = vmatmul.f32.gmra.mxu0 %v1949
    %v2862 = vpop.f32.mrf.mxu0
    %v2863 = vadd.f32 %v2654, %v2862
    %2864 = vmatmul.f32.gmra.mxu0 %v1950
    %v2865 = vpop.f32.mrf.mxu0
    %v2866 = vadd.f32 %v2657, %v2865
    %2867 = vmatmul.f32.gmra.mxu0 %v1951
    %v2868 = vpop.f32.mrf.mxu0
    %v2869 = vadd.f32 %v2660, %v2868
    %2870 = vmatmul.f32.gmra.mxu0 %v1952
    %v2871 = vpop.f32.mrf.mxu0
    %v2872 = vadd.f32 %v2663, %v2871
    %2873 = vmatmul.f32.gmra.mxu0 %v1953
    %v2874 = vpop.f32.mrf.mxu0
    %v2875 = vadd.f32 %v2666, %v2874
    %2876 = vmatmul.f32.gmra.mxu0 %v1954
    %v2877 = vpop.f32.mrf.mxu0
    %v2878 = vadd.f32 %v2669, %v2877
    %2879 = vmatmul.f32.gmra.mxu0 %v1955
    %v2880 = vpop.f32.mrf.mxu0
    %v2881 = vadd.f32 %v2672, %v2880
    %2882 = vmatmul.f32.gmra.mxu0 %v1956
    %v2883 = vpop.f32.mrf.mxu0
    %v2884 = vadd.f32 %v2675, %v2883
    %2885 = vmatmul.f32.gmra.mxu0 %v1957
    %v2886 = vpop.f32.mrf.mxu0
    %v2887 = vadd.f32 %v2678, %v2886
    %2888 = vmatmul.f32.gmra.mxu0 %v1958
    %v2889 = vpop.f32.mrf.mxu0
    %v2890 = vadd.f32 %v2681, %v2889
    %2891 = vmatmul.f32.gmra.mxu0 %v1959
    %v2892 = vpop.f32.mrf.mxu0
    %v2893 = vadd.f32 %v2684, %v2892
    %2894 = vmatmul.f32.gmra.mxu0 %v1960
    %v2895 = vpop.f32.mrf.mxu0
    %v2896 = vadd.f32 %v2687, %v2895
    %2897 = vmatmul.f32.gmra.mxu0 %v1961
    %v2898 = vpop.f32.mrf.mxu0
    %v2899 = vadd.f32 %v2690, %v2898
    %2900 = vmatmul.f32.gmra.mxu0 %v1962
    %v2901 = vpop.f32.mrf.mxu0
    %v2902 = vadd.f32 %v2693, %v2901
    %2903 = vmatmul.f32.gmra.mxu0 %v1963
    %v2904 = vpop.f32.mrf.mxu0
    %v2905 = vadd.f32 %v2696, %v2904
    %2906 = vmatmul.f32.gmra.mxu0 %v1964
    %v2907 = vpop.f32.mrf.mxu0
    %v2908 = vadd.f32 %v2699, %v2907
    %2909 = vmatmul.f32.gmra.mxu0 %v1965
    %v2910 = vpop.f32.mrf.mxu0
    %v2911 = vadd.f32 %v2702, %v2910
    %2912 = vmatmul.f32.gmra.mxu0 %v1966
    %v2913 = vpop.f32.mrf.mxu0
    %v2914 = vadd.f32 %v2705, %v2913
    %2915 = vmatmul.f32.gmra.mxu0 %v1967
    %v2916 = vpop.f32.mrf.mxu0
    %v2917 = vadd.f32 %v2708, %v2916
    %2918 = vmatmul.f32.gmra.mxu0 %v1968
    %v2919 = vpop.f32.mrf.mxu0
    %v2920 = vadd.f32 %v2711, %v2919
    %2921 = vmatmul.f32.gmra.mxu0 %v1969
    %v2922 = vpop.f32.mrf.mxu0
    %v2923 = vadd.f32 %v2714, %v2922
    %2924 = vmatmul.f32.gmra.mxu0 %v1970
    %v2925 = vpop.f32.mrf.mxu0
    %v2926 = vadd.f32 %v2717, %v2925
    %2927 = vmatmul.f32.gmra.mxu0 %v1971
    %v2928 = vpop.f32.mrf.mxu0
    %v2929 = vadd.f32 %v2720, %v2928
    %2930 = vmatmul.f32.gmra.mxu0 %v1972
    %v2931 = vpop.f32.mrf.mxu0
    %v2932 = vadd.f32 %v2723, %v2931
    %2933 = vmatmul.f32.gmra.mxu0 %v1973
    %v2934 = vpop.f32.mrf.mxu0
    %v2935 = vadd.f32 %v2726, %v2934
    %2936 = vmatmul.f32.gmra.mxu0 %v1974
    %v2937 = vpop.f32.mrf.mxu0
    %v2938 = vadd.f32 %v2729, %v2937
    %2939 = vmatmul.f32.gmra.mxu0 %v1975
    %v2940 = vpop.f32.mrf.mxu0
    %v2941 = vadd.f32 %v2732, %v2940
    %2942 = vmatmul.f32.gmra.mxu0 %v1976
    %v2943 = vpop.f32.mrf.mxu0
    %v2944 = vadd.f32 %v2735, %v2943
    %2945 = vmatmul.f32.gmra.mxu0 %v1977
    %v2946 = vpop.f32.mrf.mxu0
    %v2947 = vadd.f32 %v2738, %v2946
    %2948 = vmatmul.f32.gmra.mxu0 %v1978
    %v2949 = vpop.f32.mrf.mxu0
    %v2950 = vadd.f32 %v2741, %v2949
    %2951 = vmatmul.f32.gmra.mxu0 %v1979
    %v2952 = vpop.f32.mrf.mxu0
    %v2953 = vadd.f32 %v2744, %v2952
    %2954 = vmatmul.f32.gmra.mxu0 %v1980
    %v2955 = vpop.f32.mrf.mxu0
    %v2956 = vadd.f32 %v2747, %v2955
    %2957 = vmatmul.f32.gmra.mxu0 %v1981
    %v2958 = vpop.f32.mrf.mxu0
    %v2959 = vadd.f32 %v2750, %v2958
    %2960 = vmatmul.f32.gmra.mxu0 %v1982
    %v2961 = vpop.f32.mrf.mxu0
    %v2962 = vadd.f32 %v2753, %v2961
    %2963 = vmatmul.f32.gmra.mxu0 %v1983
    %v2964 = vpop.f32.mrf.mxu0
    %v2965 = vadd.f32 %v2756, %v2964
    %2966 = vmatmul.f32.gmra.mxu0 %v1984
    %v2967 = vpop.f32.mrf.mxu0
    %v2968 = vadd.f32 %v2759, %v2967
    %2969 = vmatmul.f32.gmra.mxu0 %v1985
    %v2970 = vpop.f32.mrf.mxu0
    %v2971 = vadd.f32 %v2762, %v2970
    %2972 = vmatmul.f32.gmra.mxu0 %v1986
    %v2973 = vpop.f32.mrf.mxu0
    %v2974 = vadd.f32 %v2765, %v2973
    %2975 = vmatmul.f32.gmra.mxu0 %v1987
    %v2976 = vpop.f32.mrf.mxu0
    %v2977 = vadd.f32 %v2768, %v2976
    %2978 = vmatmul.f32.gmra.mxu0 %v1988
    %v2979 = vpop.f32.mrf.mxu0
    %v2980 = vadd.f32 %v2771, %v2979
    %2981 = vmatmul.f32.gmra.mxu0 %v1989
    %v2982 = vpop.f32.mrf.mxu0
    %v2983 = vadd.f32 %v2774, %v2982
    %2984 = vdwg.mxu0
    %v2985 = vld [vmem:[#allocation2 + $0x9] sm:$0xff]
    %v2986 = vld [vmem:[#allocation2 + $0x11] sm:$0xff]
    %v2987 = vld [vmem:[#allocation2 + $0x19] sm:$0xff]
    %v2988 = vld [vmem:[#allocation2 + $0x21] sm:$0xff]
    %v2989 = vld [vmem:[#allocation2 + $0x29] sm:$0xff]
    %v2990 = vld [vmem:[#allocation2 + $0x31] sm:$0xff]
    %v2991 = vld [vmem:[#allocation2 + $0x39] sm:$0xff]
    %v2992 = vld [vmem:[#allocation2 + $0x41] sm:$0xff]
    %v2993 = vld [vmem:[#allocation2 + $0x49] sm:$0xff]
    %v2994 = vld [vmem:[#allocation2 + $0x51] sm:$0xff]
    %v2995 = vld [vmem:[#allocation2 + $0x59] sm:$0xff]
    %v2996 = vld [vmem:[#allocation2 + $0x61] sm:$0xff]
    %v2997 = vld [vmem:[#allocation2 + $0x69] sm:$0xff]
    %v2998 = vld [vmem:[#allocation2 + $0x71] sm:$0xff]
    %v2999 = vld [vmem:[#allocation2 + $0x79] sm:$0xff]
    %v3000 = vld [vmem:[#allocation2 + $0x81] sm:$0xff]
    %v3001 = vld [vmem:[#allocation2 + $0x89] sm:$0xff]
    %v3002 = vld [vmem:[#allocation2 + $0x91] sm:$0xff]
    %v3003 = vld [vmem:[#allocation2 + $0x99] sm:$0xff]
    %v3004 = vld [vmem:[#allocation2 + $0xa1] sm:$0xff]
    %v3005 = vld [vmem:[#allocation2 + $0xa9] sm:$0xff]
    %v3006 = vld [vmem:[#allocation2 + $0xb1] sm:$0xff]
    %v3007 = vld [vmem:[#allocation2 + $0xb9] sm:$0xff]
    %v3008 = vld [vmem:[#allocation2 + $0xc1] sm:$0xff]
    %v3009 = vld [vmem:[#allocation2 + $0xc9] sm:$0xff]
    %v3010 = vld [vmem:[#allocation2 + $0xd1] sm:$0xff]
    %v3011 = vld [vmem:[#allocation2 + $0xd9] sm:$0xff]
    %v3012 = vld [vmem:[#allocation2 + $0xe1] sm:$0xff]
    %v3013 = vld [vmem:[#allocation2 + $0xe9] sm:$0xff]
    %v3014 = vld [vmem:[#allocation2 + $0xf1] sm:$0xff]
    %v3015 = vld [vmem:[#allocation2 + $0xf9] sm:$0xff]
    %v3016 = vld [vmem:[#allocation2 + $0x101] sm:$0xff]
    %v3017 = vld [vmem:[#allocation2 + $0x109] sm:$0xff]
    %v3018 = vld [vmem:[#allocation2 + $0x111] sm:$0xff]
    %v3019 = vld [vmem:[#allocation2 + $0x119] sm:$0xff]
    %v3020 = vld [vmem:[#allocation2 + $0x121] sm:$0xff]
    %v3021 = vld [vmem:[#allocation2 + $0x129] sm:$0xff]
    %v3022 = vld [vmem:[#allocation2 + $0x131] sm:$0xff]
    %v3023 = vld [vmem:[#allocation2 + $0x139] sm:$0xff]
    %v3024 = vld [vmem:[#allocation2 + $0x141] sm:$0xff]
    %v3025 = vld [vmem:[#allocation2 + $0x149] sm:$0xff]
    %v3026 = vld [vmem:[#allocation2 + $0x151] sm:$0xff]
    %v3027 = vld [vmem:[#allocation2 + $0x159] sm:$0xff]
    %v3028 = vld [vmem:[#allocation2 + $0x161] sm:$0xff]
    %v3029 = vld [vmem:[#allocation2 + $0x169] sm:$0xff]
    %v3030 = vld [vmem:[#allocation2 + $0x171] sm:$0xff]
    %v3031 = vld [vmem:[#allocation2 + $0x179] sm:$0xff]
    %v3032 = vld [vmem:[#allocation2 + $0x181] sm:$0xff]
    %v3033 = vld [vmem:[#allocation2 + $0x189] sm:$0xff]
    %v3034 = vld [vmem:[#allocation2 + $0x191] sm:$0xff]
    %v3035 = vld [vmem:[#allocation2 + $0x199] sm:$0xff]
    %v3036 = vld [vmem:[#allocation2 + $0x1a1] sm:$0xff]
    %v3037 = vld [vmem:[#allocation2 + $0x1a9] sm:$0xff]
    %v3038 = vld [vmem:[#allocation2 + $0x1b1] sm:$0xff]
    %v3039 = vld [vmem:[#allocation2 + $0x1b9] sm:$0xff]
    %v3040 = vld [vmem:[#allocation2 + $0x1c1] sm:$0xff]
    %v3041 = vld [vmem:[#allocation2 + $0x1c9] sm:$0xff]
    %v3042 = vld [vmem:[#allocation2 + $0x1d1] sm:$0xff]
    %v3043 = vld [vmem:[#allocation2 + $0x1d9] sm:$0xff]
    %v3044 = vld [vmem:[#allocation2 + $0x1e1] sm:$0xff]
    %v3045 = vld [vmem:[#allocation2 + $0x1e9] sm:$0xff]
    %v3046 = vld [vmem:[#allocation2 + $0x1f1] sm:$0xff]
    %v3047 = vld [vmem:[#allocation2 + $0x1f9] sm:$0xff]
    %v3048 = vld [vmem:[#allocation2 + $0x201] sm:$0xff]
    %v3049 = vadd.s32 %v1030, 1
    %v3050 = vadd.s32 %v1031, 1
    %v3051 = vadd.s32 %v1032, 1
    %v3052 = vadd.s32 %v1033, 1
    %v3053 = vadd.s32 %v1034, 1
    %v3054 = vadd.s32 %v1035, 1
    %v3055 = vadd.s32 %v1036, 1
    %v3056 = vadd.s32 %v1037, 1
    %v3057 = vadd.s32 %v1038, 1
    %v3058 = vadd.s32 %v1039, 1
    %v3059 = vadd.s32 %v1040, 1
    %v3060 = vadd.s32 %v1041, 1
    %v3061 = vadd.s32 %v1042, 1
    %v3062 = vadd.s32 %v1043, 1
    %v3063 = vadd.s32 %v1044, 1
    %v3064 = vadd.s32 %v1045, 1
    %v3065 = vadd.s32 %v1046, 1
    %v3066 = vadd.s32 %v1047, 1
    %v3067 = vadd.s32 %v1048, 1
    %v3068 = vadd.s32 %v1049, 1
    %v3069 = vadd.s32 %v1050, 1
    %v3070 = vadd.s32 %v1051, 1
    %v3071 = vadd.s32 %v1052, 1
    %v3072 = vadd.s32 %v1053, 1
    %v3073 = vadd.s32 %v1054, 1
    %v3074 = vadd.s32 %v1055, 1
    %v3075 = vadd.s32 %v1056, 1
    %v3076 = vadd.s32 %v1057, 1
    %v3077 = vadd.s32 %v1058, 1
    %v3078 = vadd.s32 %v1059, 1
    %v3079 = vadd.s32 %v1060, 1
    %v3080 = vadd.s32 %v1061, 1
    %v3081 = vadd.s32 %v1062, 1
    %v3082 = vadd.s32 %v1063, 1
    %v3083 = vadd.s32 %v1064, 1
    %v3084 = vadd.s32 %v1065, 1
    %v3085 = vadd.s32 %v1066, 1
    %v3086 = vadd.s32 %v1067, 1
    %v3087 = vadd.s32 %v1068, 1
    %v3088 = vadd.s32 %v1069, 1
    %v3089 = vadd.s32 %v1070, 1
    %v3090 = vadd.s32 %v1071, 1
    %v3091 = vadd.s32 %v1072, 1
    %v3092 = vadd.s32 %v1073, 1
    %v3093 = vadd.s32 %v1074, 1
    %v3094 = vadd.s32 %v1075, 1
    %v3095 = vadd.s32 %v1076, 1
    %v3096 = vadd.s32 %v1077, 1
    %v3097 = vadd.s32 %v1078, 1
    %v3098 = vadd.s32 %v1079, 1
    %v3099 = vadd.s32 %v1080, 1
    %v3100 = vadd.s32 %v1081, 1
    %v3101 = vadd.s32 %v1082, 1
    %v3102 = vadd.s32 %v1083, 1
    %v3103 = vadd.s32 %v1084, 1
    %v3104 = vadd.s32 %v1085, 1
    %v3105 = vadd.s32 %v1086, 1
    %v3106 = vadd.s32 %v1087, 1
    %v3107 = vadd.s32 %v1088, 1
    %v3108 = vadd.s32 %v1089, 1
    %v3109 = vadd.s32 %v1090, 1
    %v3110 = vadd.s32 %v1091, 1
    %v3111 = vadd.s32 %v1092, 1
    %v3112 = vadd.s32 %v1093, 1
    %vm3113 = vcmp.ge.s32.totalorder %v3049, 0
    %vm3114 = vcmp.ge.s32.totalorder %v3050, 0
    %vm3115 = vcmp.ge.s32.totalorder %v3051, 0
    %vm3116 = vcmp.ge.s32.totalorder %v3052, 0
    %vm3117 = vcmp.ge.s32.totalorder %v3053, 0
    %vm3118 = vcmp.ge.s32.totalorder %v3054, 0
    %vm3119 = vcmp.ge.s32.totalorder %v3055, 0
    %vm3120 = vcmp.ge.s32.totalorder %v3056, 0
    %vm3121 = vcmp.ge.s32.totalorder %v3057, 0
    %vm3122 = vcmp.ge.s32.totalorder %v3058, 0
    %vm3123 = vcmp.ge.s32.totalorder %v3059, 0
    %vm3124 = vcmp.ge.s32.totalorder %v3060, 0
    %vm3125 = vcmp.ge.s32.totalorder %v3061, 0
    %vm3126 = vcmp.ge.s32.totalorder %v3062, 0
    %vm3127 = vcmp.ge.s32.totalorder %v3063, 0
    %vm3128 = vcmp.ge.s32.totalorder %v3064, 0
    %vm3129 = vcmp.ge.s32.totalorder %v3065, 0
    %vm3130 = vcmp.ge.s32.totalorder %v3066, 0
    %vm3131 = vcmp.ge.s32.totalorder %v3067, 0
    %vm3132 = vcmp.ge.s32.totalorder %v3068, 0
    %vm3133 = vcmp.ge.s32.totalorder %v3069, 0
    %vm3134 = vcmp.ge.s32.totalorder %v3070, 0
    %vm3135 = vcmp.ge.s32.totalorder %v3071, 0
    %vm3136 = vcmp.ge.s32.totalorder %v3072, 0
    %vm3137 = vcmp.ge.s32.totalorder %v3073, 0
    %vm3138 = vcmp.ge.s32.totalorder %v3074, 0
    %vm3139 = vcmp.ge.s32.totalorder %v3075, 0
    %vm3140 = vcmp.ge.s32.totalorder %v3076, 0
    %vm3141 = vcmp.ge.s32.totalorder %v3077, 0
    %vm3142 = vcmp.ge.s32.totalorder %v3078, 0
    %vm3143 = vcmp.ge.s32.totalorder %v3079, 0
    %vm3144 = vcmp.ge.s32.totalorder %v3080, 0
    %vm3145 = vcmp.ge.s32.totalorder %v3081, 0
    %vm3146 = vcmp.ge.s32.totalorder %v3082, 0
    %vm3147 = vcmp.ge.s32.totalorder %v3083, 0
    %vm3148 = vcmp.ge.s32.totalorder %v3084, 0
    %vm3149 = vcmp.ge.s32.totalorder %v3085, 0
    %vm3150 = vcmp.ge.s32.totalorder %v3086, 0
    %vm3151 = vcmp.ge.s32.totalorder %v3087, 0
    %vm3152 = vcmp.ge.s32.totalorder %v3088, 0
    %vm3153 = vcmp.ge.s32.totalorder %v3089, 0
    %vm3154 = vcmp.ge.s32.totalorder %v3090, 0
    %vm3155 = vcmp.ge.s32.totalorder %v3091, 0
    %vm3156 = vcmp.ge.s32.totalorder %v3092, 0
    %vm3157 = vcmp.ge.s32.totalorder %v3093, 0
    %vm3158 = vcmp.ge.s32.totalorder %v3094, 0
    %vm3159 = vcmp.ge.s32.totalorder %v3095, 0
    %vm3160 = vcmp.ge.s32.totalorder %v3096, 0
    %vm3161 = vcmp.ge.s32.totalorder %v3097, 0
    %vm3162 = vcmp.ge.s32.totalorder %v3098, 0
    %vm3163 = vcmp.ge.s32.totalorder %v3099, 0
    %vm3164 = vcmp.ge.s32.totalorder %v3100, 0
    %vm3165 = vcmp.ge.s32.totalorder %v3101, 0
    %vm3166 = vcmp.ge.s32.totalorder %v3102, 0
    %vm3167 = vcmp.ge.s32.totalorder %v3103, 0
    %vm3168 = vcmp.ge.s32.totalorder %v3104, 0
    %vm3169 = vcmp.ge.s32.totalorder %v3105, 0
    %vm3170 = vcmp.ge.s32.totalorder %v3106, 0
    %vm3171 = vcmp.ge.s32.totalorder %v3107, 0
    %vm3172 = vcmp.ge.s32.totalorder %v3108, 0
    %vm3173 = vcmp.ge.s32.totalorder %v3109, 0
    %vm3174 = vcmp.ge.s32.totalorder %v3110, 0
    %vm3175 = vcmp.ge.s32.totalorder %v3111, 0
    %vm3176 = vcmp.ge.s32.totalorder %v3112, 0
    %vm3177 = vcmp.lt.s32.totalorder %v3049, 16
    %vm3178 = vcmp.lt.s32.totalorder %v3050, 16
    %vm3179 = vcmp.lt.s32.totalorder %v3051, 16
    %vm3180 = vcmp.lt.s32.totalorder %v3052, 16
    %vm3181 = vcmp.lt.s32.totalorder %v3053, 16
    %vm3182 = vcmp.lt.s32.totalorder %v3054, 16
    %vm3183 = vcmp.lt.s32.totalorder %v3055, 16
    %vm3184 = vcmp.lt.s32.totalorder %v3056, 16
    %vm3185 = vcmp.lt.s32.totalorder %v3057, 16
    %vm3186 = vcmp.lt.s32.totalorder %v3058, 16
    %vm3187 = vcmp.lt.s32.totalorder %v3059, 16
    %vm3188 = vcmp.lt.s32.totalorder %v3060, 16
    %vm3189 = vcmp.lt.s32.totalorder %v3061, 16
    %vm3190 = vcmp.lt.s32.totalorder %v3062, 16
    %vm3191 = vcmp.lt.s32.totalorder %v3063, 16
    %vm3192 = vcmp.lt.s32.totalorder %v3064, 16
    %vm3193 = vcmp.lt.s32.totalorder %v3065, 16
    %vm3194 = vcmp.lt.s32.totalorder %v3066, 16
    %vm3195 = vcmp.lt.s32.totalorder %v3067, 16
    %vm3196 = vcmp.lt.s32.totalorder %v3068, 16
    %vm3197 = vcmp.lt.s32.totalorder %v3069, 16
    %vm3198 = vcmp.lt.s32.totalorder %v3070, 16
    %vm3199 = vcmp.lt.s32.totalorder %v3071, 16
    %vm3200 = vcmp.lt.s32.totalorder %v3072, 16
    %vm3201 = vcmp.lt.s32.totalorder %v3073, 16
    %vm3202 = vcmp.lt.s32.totalorder %v3074, 16
    %vm3203 = vcmp.lt.s32.totalorder %v3075, 16
    %vm3204 = vcmp.lt.s32.totalorder %v3076, 16
    %vm3205 = vcmp.lt.s32.totalorder %v3077, 16
    %vm3206 = vcmp.lt.s32.totalorder %v3078, 16
    %vm3207 = vcmp.lt.s32.totalorder %v3079, 16
    %vm3208 = vcmp.lt.s32.totalorder %v3080, 16
    %vm3209 = vcmp.lt.s32.totalorder %v3081, 16
    %vm3210 = vcmp.lt.s32.totalorder %v3082, 16
    %vm3211 = vcmp.lt.s32.totalorder %v3083, 16
    %vm3212 = vcmp.lt.s32.totalorder %v3084, 16
    %vm3213 = vcmp.lt.s32.totalorder %v3085, 16
    %vm3214 = vcmp.lt.s32.totalorder %v3086, 16
    %vm3215 = vcmp.lt.s32.totalorder %v3087, 16
    %vm3216 = vcmp.lt.s32.totalorder %v3088, 16
    %vm3217 = vcmp.lt.s32.totalorder %v3089, 16
    %vm3218 = vcmp.lt.s32.totalorder %v3090, 16
    %vm3219 = vcmp.lt.s32.totalorder %v3091, 16
    %vm3220 = vcmp.lt.s32.totalorder %v3092, 16
    %vm3221 = vcmp.lt.s32.totalorder %v3093, 16
    %vm3222 = vcmp.lt.s32.totalorder %v3094, 16
    %vm3223 = vcmp.lt.s32.totalorder %v3095, 16
    %vm3224 = vcmp.lt.s32.totalorder %v3096, 16
    %vm3225 = vcmp.lt.s32.totalorder %v3097, 16
    %vm3226 = vcmp.lt.s32.totalorder %v3098, 16
    %vm3227 = vcmp.lt.s32.totalorder %v3099, 16
    %vm3228 = vcmp.lt.s32.totalorder %v3100, 16
    %vm3229 = vcmp.lt.s32.totalorder %v3101, 16
    %vm3230 = vcmp.lt.s32.totalorder %v3102, 16
    %vm3231 = vcmp.lt.s32.totalorder %v3103, 16
    %vm3232 = vcmp.lt.s32.totalorder %v3104, 16
    %vm3233 = vcmp.lt.s32.totalorder %v3105, 16
    %vm3234 = vcmp.lt.s32.totalorder %v3106, 16
    %vm3235 = vcmp.lt.s32.totalorder %v3107, 16
    %vm3236 = vcmp.lt.s32.totalorder %v3108, 16
    %vm3237 = vcmp.lt.s32.totalorder %v3109, 16
    %vm3238 = vcmp.lt.s32.totalorder %v3110, 16
    %vm3239 = vcmp.lt.s32.totalorder %v3111, 16
    %vm3240 = vcmp.lt.s32.totalorder %v3112, 16
    %vm3241 = vmand %vm3113, %vm3177
    %vm3242 = vmand %vm3114, %vm3178
    %vm3243 = vmand %vm3115, %vm3179
    %vm3244 = vmand %vm3116, %vm3180
    %vm3245 = vmand %vm3117, %vm3181
    %vm3246 = vmand %vm3118, %vm3182
    %vm3247 = vmand %vm3119, %vm3183
    %vm3248 = vmand %vm3120, %vm3184
    %vm3249 = vmand %vm3121, %vm3185
    %vm3250 = vmand %vm3122, %vm3186
    %vm3251 = vmand %vm3123, %vm3187
    %vm3252 = vmand %vm3124, %vm3188
    %vm3253 = vmand %vm3125, %vm3189
    %vm3254 = vmand %vm3126, %vm3190
    %vm3255 = vmand %vm3127, %vm3191
    %vm3256 = vmand %vm3128, %vm3192
    %vm3257 = vmand %vm3129, %vm3193
    %vm3258 = vmand %vm3130, %vm3194
    %vm3259 = vmand %vm3131, %vm3195
    %vm3260 = vmand %vm3132, %vm3196
    %vm3261 = vmand %vm3133, %vm3197
    %vm3262 = vmand %vm3134, %vm3198
    %vm3263 = vmand %vm3135, %vm3199
    %vm3264 = vmand %vm3136, %vm3200
    %vm3265 = vmand %vm3137, %vm3201
    %vm3266 = vmand %vm3138, %vm3202
    %vm3267 = vmand %vm3139, %vm3203
    %vm3268 = vmand %vm3140, %vm3204
    %vm3269 = vmand %vm3141, %vm3205
    %vm3270 = vmand %vm3142, %vm3206
    %vm3271 = vmand %vm3143, %vm3207
    %vm3272 = vmand %vm3144, %vm3208
    %vm3273 = vmand %vm3145, %vm3209
    %vm3274 = vmand %vm3146, %vm3210
    %vm3275 = vmand %vm3147, %vm3211
    %vm3276 = vmand %vm3148, %vm3212
    %vm3277 = vmand %vm3149, %vm3213
    %vm3278 = vmand %vm3150, %vm3214
    %vm3279 = vmand %vm3151, %vm3215
    %vm3280 = vmand %vm3152, %vm3216
    %vm3281 = vmand %vm3153, %vm3217
    %vm3282 = vmand %vm3154, %vm3218
    %vm3283 = vmand %vm3155, %vm3219
    %vm3284 = vmand %vm3156, %vm3220
    %vm3285 = vmand %vm3157, %vm3221
    %vm3286 = vmand %vm3158, %vm3222
    %vm3287 = vmand %vm3159, %vm3223
    %vm3288 = vmand %vm3160, %vm3224
    %vm3289 = vmand %vm3161, %vm3225
    %vm3290 = vmand %vm3162, %vm3226
    %vm3291 = vmand %vm3163, %vm3227
    %vm3292 = vmand %vm3164, %vm3228
    %vm3293 = vmand %vm3165, %vm3229
    %vm3294 = vmand %vm3166, %vm3230
    %vm3295 = vmand %vm3167, %vm3231
    %vm3296 = vmand %vm3168, %vm3232
    %vm3297 = vmand %vm3169, %vm3233
    %vm3298 = vmand %vm3170, %vm3234
    %vm3299 = vmand %vm3171, %vm3235
    %vm3300 = vmand %vm3172, %vm3236
    %vm3301 = vmand %vm3173, %vm3237
    %vm3302 = vmand %vm3174, %vm3238
    %vm3303 = vmand %vm3175, %vm3239
    %vm3304 = vmand %vm3176, %vm3240
    %vm3305 = vmand %vm3241, %vm1670
    %vm3306 = vmand %vm3242, %vm1671
    %vm3307 = vmand %vm3243, %vm1672
    %vm3308 = vmand %vm3244, %vm1673
    %vm3309 = vmand %vm3245, %vm1674
    %vm3310 = vmand %vm3246, %vm1675
    %vm3311 = vmand %vm3247, %vm1676
    %vm3312 = vmand %vm3248, %vm1677
    %vm3313 = vmand %vm3249, %vm1678
    %vm3314 = vmand %vm3250, %vm1679
    %vm3315 = vmand %vm3251, %vm1680
    %vm3316 = vmand %vm3252, %vm1681
    %vm3317 = vmand %vm3253, %vm1682
    %vm3318 = vmand %vm3254, %vm1683
    %vm3319 = vmand %vm3255, %vm1684
    %vm3320 = vmand %vm3256, %vm1685
    %vm3321 = vmand %vm3257, %vm1686
    %vm3322 = vmand %vm3258, %vm1687
    %vm3323 = vmand %vm3259, %vm1688
    %vm3324 = vmand %vm3260, %vm1689
    %vm3325 = vmand %vm3261, %vm1690
    %vm3326 = vmand %vm3262, %vm1691
    %vm3327 = vmand %vm3263, %vm1692
    %vm3328 = vmand %vm3264, %vm1693
    %vm3329 = vmand %vm3265, %vm1694
    %vm3330 = vmand %vm3266, %vm1695
    %vm3331 = vmand %vm3267, %vm1696
    %vm3332 = vmand %vm3268, %vm1697
    %vm3333 = vmand %vm3269, %vm1698
    %vm3334 = vmand %vm3270, %vm1699
    %vm3335 = vmand %vm3271, %vm1700
    %vm3336 = vmand %vm3272, %vm1701
    %vm3337 = vmand %vm3273, %vm1702
    %vm3338 = vmand %vm3274, %vm1703
    %vm3339 = vmand %vm3275, %vm1704
    %vm3340 = vmand %vm3276, %vm1705
    %vm3341 = vmand %vm3277, %vm1706
    %vm3342 = vmand %vm3278, %vm1707
    %vm3343 = vmand %vm3279, %vm1708
    %vm3344 = vmand %vm3280, %vm1709
    %vm3345 = vmand %vm3281, %vm1710
    %vm3346 = vmand %vm3282, %vm1711
    %vm3347 = vmand %vm3283, %vm1712
    %vm3348 = vmand %vm3284, %vm1713
    %vm3349 = vmand %vm3285, %vm1714
    %vm3350 = vmand %vm3286, %vm1715
    %vm3351 = vmand %vm3287, %vm1716
    %vm3352 = vmand %vm3288, %vm1717
    %vm3353 = vmand %vm3289, %vm1718
    %vm3354 = vmand %vm3290, %vm1719
    %vm3355 = vmand %vm3291, %vm1720
    %vm3356 = vmand %vm3292, %vm1721
    %vm3357 = vmand %vm3293, %vm1722
    %vm3358 = vmand %vm3294, %vm1723
    %vm3359 = vmand %vm3295, %vm1724
    %vm3360 = vmand %vm3296, %vm1725
    %vm3361 = vmand %vm3297, %vm1726
    %vm3362 = vmand %vm3298, %vm1727
    %vm3363 = vmand %vm3299, %vm1728
    %vm3364 = vmand %vm3300, %vm1729
    %vm3365 = vmand %vm3301, %vm1730
    %vm3366 = vmand %vm3302, %vm1731
    %vm3367 = vmand %vm3303, %vm1732
    %vm3368 = vmand %vm3304, %vm1733
    %v3369 = vsel %vm3305, 1, 0
    %v3370 = vsel %vm3306, 1, 0
    %v3371 = vsel %vm3307, 1, 0
    %v3372 = vsel %vm3308, 1, 0
    %v3373 = vsel %vm3309, 1, 0
    %v3374 = vsel %vm3310, 1, 0
    %v3375 = vsel %vm3311, 1, 0
    %v3376 = vsel %vm3312, 1, 0
    %v3377 = vsel %vm3313, 1, 0
    %v3378 = vsel %vm3314, 1, 0
    %v3379 = vsel %vm3315, 1, 0
    %v3380 = vsel %vm3316, 1, 0
    %v3381 = vsel %vm3317, 1, 0
    %v3382 = vsel %vm3318, 1, 0
    %v3383 = vsel %vm3319, 1, 0
    %v3384 = vsel %vm3320, 1, 0
    %v3385 = vsel %vm3321, 1, 0
    %v3386 = vsel %vm3322, 1, 0
    %v3387 = vsel %vm3323, 1, 0
    %v3388 = vsel %vm3324, 1, 0
    %v3389 = vsel %vm3325, 1, 0
    %v3390 = vsel %vm3326, 1, 0
    %v3391 = vsel %vm3327, 1, 0
    %v3392 = vsel %vm3328, 1, 0
    %v3393 = vsel %vm3329, 1, 0
    %v3394 = vsel %vm3330, 1, 0
    %v3395 = vsel %vm3331, 1, 0
    %v3396 = vsel %vm3332, 1, 0
    %v3397 = vsel %vm3333, 1, 0
    %v3398 = vsel %vm3334, 1, 0
    %v3399 = vsel %vm3335, 1, 0
    %v3400 = vsel %vm3336, 1, 0
    %v3401 = vsel %vm3337, 1, 0
    %v3402 = vsel %vm3338, 1, 0
    %v3403 = vsel %vm3339, 1, 0
    %v3404 = vsel %vm3340, 1, 0
    %v3405 = vsel %vm3341, 1, 0
    %v3406 = vsel %vm3342, 1, 0
    %v3407 = vsel %vm3343, 1, 0
    %v3408 = vsel %vm3344, 1, 0
    %v3409 = vsel %vm3345, 1, 0
    %v3410 = vsel %vm3346, 1, 0
    %v3411 = vsel %vm3347, 1, 0
    %v3412 = vsel %vm3348, 1, 0
    %v3413 = vsel %vm3349, 1, 0
    %v3414 = vsel %vm3350, 1, 0
    %v3415 = vsel %vm3351, 1, 0
    %v3416 = vsel %vm3352, 1, 0
    %v3417 = vsel %vm3353, 1, 0
    %v3418 = vsel %vm3354, 1, 0
    %v3419 = vsel %vm3355, 1, 0
    %v3420 = vsel %vm3356, 1, 0
    %v3421 = vsel %vm3357, 1, 0
    %v3422 = vsel %vm3358, 1, 0
    %v3423 = vsel %vm3359, 1, 0
    %v3424 = vsel %vm3360, 1, 0
    %v3425 = vsel %vm3361, 1, 0
    %v3426 = vsel %vm3362, 1, 0
    %v3427 = vsel %vm3363, 1, 0
    %v3428 = vsel %vm3364, 1, 0
    %v3429 = vsel %vm3365, 1, 0
    %v3430 = vsel %vm3366, 1, 0
    %v3431 = vsel %vm3367, 1, 0
    %v3432 = vsel %vm3368, 1, 0
    %vm3433 = vcmp.eq.s32.totalorder %v3369, 1
    %vm3434 = vcmp.eq.s32.totalorder %v3370, 1
    %vm3435 = vcmp.eq.s32.totalorder %v3371, 1
    %vm3436 = vcmp.eq.s32.totalorder %v3372, 1
    %vm3437 = vcmp.eq.s32.totalorder %v3373, 1
    %vm3438 = vcmp.eq.s32.totalorder %v3374, 1
    %vm3439 = vcmp.eq.s32.totalorder %v3375, 1
    %vm3440 = vcmp.eq.s32.totalorder %v3376, 1
    %vm3441 = vcmp.eq.s32.totalorder %v3377, 1
    %vm3442 = vcmp.eq.s32.totalorder %v3378, 1
    %vm3443 = vcmp.eq.s32.totalorder %v3379, 1
    %vm3444 = vcmp.eq.s32.totalorder %v3380, 1
    %vm3445 = vcmp.eq.s32.totalorder %v3381, 1
    %vm3446 = vcmp.eq.s32.totalorder %v3382, 1
    %vm3447 = vcmp.eq.s32.totalorder %v3383, 1
    %vm3448 = vcmp.eq.s32.totalorder %v3384, 1
    %vm3449 = vcmp.eq.s32.totalorder %v3385, 1
    %vm3450 = vcmp.eq.s32.totalorder %v3386, 1
    %vm3451 = vcmp.eq.s32.totalorder %v3387, 1
    %vm3452 = vcmp.eq.s32.totalorder %v3388, 1
    %vm3453 = vcmp.eq.s32.totalorder %v3389, 1
    %vm3454 = vcmp.eq.s32.totalorder %v3390, 1
    %vm3455 = vcmp.eq.s32.totalorder %v3391, 1
    %vm3456 = vcmp.eq.s32.totalorder %v3392, 1
    %vm3457 = vcmp.eq.s32.totalorder %v3393, 1
    %vm3458 = vcmp.eq.s32.totalorder %v3394, 1
    %vm3459 = vcmp.eq.s32.totalorder %v3395, 1
    %vm3460 = vcmp.eq.s32.totalorder %v3396, 1
    %vm3461 = vcmp.eq.s32.totalorder %v3397, 1
    %vm3462 = vcmp.eq.s32.totalorder %v3398, 1
    %vm3463 = vcmp.eq.s32.totalorder %v3399, 1
    %vm3464 = vcmp.eq.s32.totalorder %v3400, 1
    %vm3465 = vcmp.eq.s32.totalorder %v3401, 1
    %vm3466 = vcmp.eq.s32.totalorder %v3402, 1
    %vm3467 = vcmp.eq.s32.totalorder %v3403, 1
    %vm3468 = vcmp.eq.s32.totalorder %v3404, 1
    %vm3469 = vcmp.eq.s32.totalorder %v3405, 1
    %vm3470 = vcmp.eq.s32.totalorder %v3406, 1
    %vm3471 = vcmp.eq.s32.totalorder %v3407, 1
    %vm3472 = vcmp.eq.s32.totalorder %v3408, 1
    %vm3473 = vcmp.eq.s32.totalorder %v3409, 1
    %vm3474 = vcmp.eq.s32.totalorder %v3410, 1
    %vm3475 = vcmp.eq.s32.totalorder %v3411, 1
    %vm3476 = vcmp.eq.s32.totalorder %v3412, 1
    %vm3477 = vcmp.eq.s32.totalorder %v3413, 1
    %vm3478 = vcmp.eq.s32.totalorder %v3414, 1
    %vm3479 = vcmp.eq.s32.totalorder %v3415, 1
    %vm3480 = vcmp.eq.s32.totalorder %v3416, 1
    %vm3481 = vcmp.eq.s32.totalorder %v3417, 1
    %vm3482 = vcmp.eq.s32.totalorder %v3418, 1
    %vm3483 = vcmp.eq.s32.totalorder %v3419, 1
    %vm3484 = vcmp.eq.s32.totalorder %v3420, 1
    %vm3485 = vcmp.eq.s32.totalorder %v3421, 1
    %vm3486 = vcmp.eq.s32.totalorder %v3422, 1
    %vm3487 = vcmp.eq.s32.totalorder %v3423, 1
    %vm3488 = vcmp.eq.s32.totalorder %v3424, 1
    %vm3489 = vcmp.eq.s32.totalorder %v3425, 1
    %vm3490 = vcmp.eq.s32.totalorder %v3426, 1
    %vm3491 = vcmp.eq.s32.totalorder %v3427, 1
    %vm3492 = vcmp.eq.s32.totalorder %v3428, 1
    %vm3493 = vcmp.eq.s32.totalorder %v3429, 1
    %vm3494 = vcmp.eq.s32.totalorder %v3430, 1
    %vm3495 = vcmp.eq.s32.totalorder %v3431, 1
    %vm3496 = vcmp.eq.s32.totalorder %v3432, 1
    %v3497 = vsel %vm3433, %v2985, 0.0
    %v3498 = vsel %vm3434, %v2986, 0.0
    %v3499 = vsel %vm3435, %v2987, 0.0
    %v3500 = vsel %vm3436, %v2988, 0.0
    %v3501 = vsel %vm3437, %v2989, 0.0
    %v3502 = vsel %vm3438, %v2990, 0.0
    %v3503 = vsel %vm3439, %v2991, 0.0
    %v3504 = vsel %vm3440, %v2992, 0.0
    %v3505 = vsel %vm3441, %v2993, 0.0
    %v3506 = vsel %vm3442, %v2994, 0.0
    %v3507 = vsel %vm3443, %v2995, 0.0
    %v3508 = vsel %vm3444, %v2996, 0.0
    %v3509 = vsel %vm3445, %v2997, 0.0
    %v3510 = vsel %vm3446, %v2998, 0.0
    %v3511 = vsel %vm3447, %v2999, 0.0
    %v3512 = vsel %vm3448, %v3000, 0.0
    %v3513 = vsel %vm3449, %v3001, 0.0
    %v3514 = vsel %vm3450, %v3002, 0.0
    %v3515 = vsel %vm3451, %v3003, 0.0
    %v3516 = vsel %vm3452, %v3004, 0.0
    %v3517 = vsel %vm3453, %v3005, 0.0
    %v3518 = vsel %vm3454, %v3006, 0.0
    %v3519 = vsel %vm3455, %v3007, 0.0
    %v3520 = vsel %vm3456, %v3008, 0.0
    %v3521 = vsel %vm3457, %v3009, 0.0
    %v3522 = vsel %vm3458, %v3010, 0.0
    %v3523 = vsel %vm3459, %v3011, 0.0
    %v3524 = vsel %vm3460, %v3012, 0.0
    %v3525 = vsel %vm3461, %v3013, 0.0
    %v3526 = vsel %vm3462, %v3014, 0.0
    %v3527 = vsel %vm3463, %v3015, 0.0
    %v3528 = vsel %vm3464, %v3016, 0.0
    %v3529 = vsel %vm3465, %v3017, 0.0
    %v3530 = vsel %vm3466, %v3018, 0.0
    %v3531 = vsel %vm3467, %v3019, 0.0
    %v3532 = vsel %vm3468, %v3020, 0.0
    %v3533 = vsel %vm3469, %v3021, 0.0
    %v3534 = vsel %vm3470, %v3022, 0.0
    %v3535 = vsel %vm3471, %v3023, 0.0
    %v3536 = vsel %vm3472, %v3024, 0.0
    %v3537 = vsel %vm3473, %v3025, 0.0
    %v3538 = vsel %vm3474, %v3026, 0.0
    %v3539 = vsel %vm3475, %v3027, 0.0
    %v3540 = vsel %vm3476, %v3028, 0.0
    %v3541 = vsel %vm3477, %v3029, 0.0
    %v3542 = vsel %vm3478, %v3030, 0.0
    %v3543 = vsel %vm3479, %v3031, 0.0
    %v3544 = vsel %vm3480, %v3032, 0.0
    %v3545 = vsel %vm3481, %v3033, 0.0
    %v3546 = vsel %vm3482, %v3034, 0.0
    %v3547 = vsel %vm3483, %v3035, 0.0
    %v3548 = vsel %vm3484, %v3036, 0.0
    %v3549 = vsel %vm3485, %v3037, 0.0
    %v3550 = vsel %vm3486, %v3038, 0.0
    %v3551 = vsel %vm3487, %v3039, 0.0
    %v3552 = vsel %vm3488, %v3040, 0.0
    %v3553 = vsel %vm3489, %v3041, 0.0
    %v3554 = vsel %vm3490, %v3042, 0.0
    %v3555 = vsel %vm3491, %v3043, 0.0
    %v3556 = vsel %vm3492, %v3044, 0.0
    %v3557 = vsel %vm3493, %v3045, 0.0
    %v3558 = vsel %vm3494, %v3046, 0.0
    %v3559 = vsel %vm3495, %v3047, 0.0
    %v3560 = vsel %vm3496, %v3048, 0.0
    %s3561 = scalar_lea.vmem [#allocation8], 128
    %v3562 = vld [vmem:[%s3561] sm:$0xf]
    %v3563 = vld [vmem:[%s3561 + $0x4] sm:$0xf]
    %v3564 = vld [vmem:[%s3561 + $0x8] sm:$0xf]
    %v3565 = vld [vmem:[%s3561 + $0xc] sm:$0xf]
    %v3566 = vld [vmem:[%s3561 + $0x10] sm:$0xf]
    %v3567 = vld [vmem:[%s3561 + $0x14] sm:$0xf]
    %v3568 = vld [vmem:[%s3561 + $0x18] sm:$0xf]
    %v3569 = vld [vmem:[%s3561 + $0x1c] sm:$0xf]
    %v3570 = vld [vmem:[%s3561 + $0x20] sm:$0xf]
    %v3571 = vld [vmem:[%s3561 + $0x24] sm:$0xf]
    %v3572 = vld [vmem:[%s3561 + $0x28] sm:$0xf]
    %v3573 = vld [vmem:[%s3561 + $0x2c] sm:$0xf]
    %v3574 = vld [vmem:[%s3561 + $0x30] sm:$0xf]
    %v3575 = vld [vmem:[%s3561 + $0x34] sm:$0xf]
    %v3576 = vld [vmem:[%s3561 + $0x38] sm:$0xf]
    %v3577 = vld [vmem:[%s3561 + $0x3c] sm:$0xf]
    %v3578 = vunpack.c.l.bf16 %v3562
    %v3579 = vunpack.c.l.bf16 %v3563
    %v3580 = vunpack.c.l.bf16 %v3564
    %v3581 = vunpack.c.l.bf16 %v3565
    %v3582 = vunpack.c.l.bf16 %v3566
    %v3583 = vunpack.c.l.bf16 %v3567
    %v3584 = vunpack.c.l.bf16 %v3568
    %v3585 = vunpack.c.l.bf16 %v3569
    %v3586 = vunpack.c.l.bf16 %v3570
    %v3587 = vunpack.c.l.bf16 %v3571
    %v3588 = vunpack.c.l.bf16 %v3572
    %v3589 = vunpack.c.l.bf16 %v3573
    %v3590 = vunpack.c.l.bf16 %v3574
    %v3591 = vunpack.c.l.bf16 %v3575
    %v3592 = vunpack.c.l.bf16 %v3576
    %v3593 = vunpack.c.l.bf16 %v3577
    %3594 = vmatpush.msra.mxu0 %v3593
    %3595 = vmatpush.msra.mxu0 %v3592
    %3596 = vmatpush.msra.mxu0 %v3591
    %3597 = vmatpush.msra.mxu0 %v3590
    %3598 = vmatpush.msra.mxu0 %v3589
    %3599 = vmatpush.msra.mxu0 %v3588
    %3600 = vmatpush.msra.mxu0 %v3587
    %3601 = vmatpush.msra.mxu0 %v3586
    %3602 = vmatpush.msra.mxu0 %v3585
    %3603 = vmatpush.msra.mxu0 %v3584
    %3604 = vmatpush.msra.mxu0 %v3583
    %3605 = vmatpush.msra.mxu0 %v3582
    %3606 = vmatpush.msra.mxu0 %v3581
    %3607 = vmatpush.msra.mxu0 %v3580
    %3608 = vmatpush.msra.mxu0 %v3579
    %3609 = vmatpush.msra.mxu0 %v3578
    %3610 = vmatmul.f32.gmra.mxu0 %v3497
    %v3611 = vpop.f32.mrf.mxu0
    %v3612 = vadd.f32 0.0, %v3611
    %3613 = vmatmul.f32.gmra.mxu0 %v3498
    %v3614 = vpop.f32.mrf.mxu0
    %v3615 = vadd.f32 0.0, %v3614
    %3616 = vmatmul.f32.gmra.mxu0 %v3499
    %v3617 = vpop.f32.mrf.mxu0
    %v3618 = vadd.f32 0.0, %v3617
    %3619 = vmatmul.f32.gmra.mxu0 %v3500
    %v3620 = vpop.f32.mrf.mxu0
    %v3621 = vadd.f32 0.0, %v3620
    %3622 = vmatmul.f32.gmra.mxu0 %v3501
    %v3623 = vpop.f32.mrf.mxu0
    %v3624 = vadd.f32 0.0, %v3623
    %3625 = vmatmul.f32.gmra.mxu0 %v3502
    %v3626 = vpop.f32.mrf.mxu0
    %v3627 = vadd.f32 0.0, %v3626
    %3628 = vmatmul.f32.gmra.mxu0 %v3503
    %v3629 = vpop.f32.mrf.mxu0
    %v3630 = vadd.f32 0.0, %v3629
    %3631 = vmatmul.f32.gmra.mxu0 %v3504
    %v3632 = vpop.f32.mrf.mxu0
    %v3633 = vadd.f32 0.0, %v3632
    %3634 = vmatmul.f32.gmra.mxu0 %v3505
    %v3635 = vpop.f32.mrf.mxu0
    %v3636 = vadd.f32 0.0, %v3635
    %3637 = vmatmul.f32.gmra.mxu0 %v3506
    %v3638 = vpop.f32.mrf.mxu0
    %v3639 = vadd.f32 0.0, %v3638
    %3640 = vmatmul.f32.gmra.mxu0 %v3507
    %v3641 = vpop.f32.mrf.mxu0
    %v3642 = vadd.f32 0.0, %v3641
    %3643 = vmatmul.f32.gmra.mxu0 %v3508
    %v3644 = vpop.f32.mrf.mxu0
    %v3645 = vadd.f32 0.0, %v3644
    %3646 = vmatmul.f32.gmra.mxu0 %v3509
    %v3647 = vpop.f32.mrf.mxu0
    %v3648 = vadd.f32 0.0, %v3647
    %3649 = vmatmul.f32.gmra.mxu0 %v3510
    %v3650 = vpop.f32.mrf.mxu0
    %v3651 = vadd.f32 0.0, %v3650
    %3652 = vmatmul.f32.gmra.mxu0 %v3511
    %v3653 = vpop.f32.mrf.mxu0
    %v3654 = vadd.f32 0.0, %v3653
    %3655 = vmatmul.f32.gmra.mxu0 %v3512
    %v3656 = vpop.f32.mrf.mxu0
    %v3657 = vadd.f32 0.0, %v3656
    %3658 = vmatmul.f32.gmra.mxu0 %v3513
    %v3659 = vpop.f32.mrf.mxu0
    %v3660 = vadd.f32 0.0, %v3659
    %3661 = vmatmul.f32.gmra.mxu0 %v3514
    %v3662 = vpop.f32.mrf.mxu0
    %v3663 = vadd.f32 0.0, %v3662
    %3664 = vmatmul.f32.gmra.mxu0 %v3515
    %v3665 = vpop.f32.mrf.mxu0
    %v3666 = vadd.f32 0.0, %v3665
    %3667 = vmatmul.f32.gmra.mxu0 %v3516
    %v3668 = vpop.f32.mrf.mxu0
    %v3669 = vadd.f32 0.0, %v3668
    %3670 = vmatmul.f32.gmra.mxu0 %v3517
    %v3671 = vpop.f32.mrf.mxu0
    %v3672 = vadd.f32 0.0, %v3671
    %3673 = vmatmul.f32.gmra.mxu0 %v3518
    %v3674 = vpop.f32.mrf.mxu0
    %v3675 = vadd.f32 0.0, %v3674
    %3676 = vmatmul.f32.gmra.mxu0 %v3519
    %v3677 = vpop.f32.mrf.mxu0
    %v3678 = vadd.f32 0.0, %v3677
    %3679 = vmatmul.f32.gmra.mxu0 %v3520
    %v3680 = vpop.f32.mrf.mxu0
    %v3681 = vadd.f32 0.0, %v3680
    %3682 = vmatmul.f32.gmra.mxu0 %v3521
    %v3683 = vpop.f32.mrf.mxu0
    %v3684 = vadd.f32 0.0, %v3683
    %3685 = vmatmul.f32.gmra.mxu0 %v3522
    %v3686 = vpop.f32.mrf.mxu0
    %v3687 = vadd.f32 0.0, %v3686
    %3688 = vmatmul.f32.gmra.mxu0 %v3523
    %v3689 = vpop.f32.mrf.mxu0
    %v3690 = vadd.f32 0.0, %v3689
    %3691 = vmatmul.f32.gmra.mxu0 %v3524
    %v3692 = vpop.f32.mrf.mxu0
    %v3693 = vadd.f32 0.0, %v3692
    %3694 = vmatmul.f32.gmra.mxu0 %v3525
    %v3695 = vpop.f32.mrf.mxu0
    %v3696 = vadd.f32 0.0, %v3695
    %3697 = vmatmul.f32.gmra.mxu0 %v3526
    %v3698 = vpop.f32.mrf.mxu0
    %v3699 = vadd.f32 0.0, %v3698
    %3700 = vmatmul.f32.gmra.mxu0 %v3527
    %v3701 = vpop.f32.mrf.mxu0
    %v3702 = vadd.f32 0.0, %v3701
    %3703 = vmatmul.f32.gmra.mxu0 %v3528
    %v3704 = vpop.f32.mrf.mxu0
    %v3705 = vadd.f32 0.0, %v3704
    %3706 = vmatmul.f32.gmra.mxu0 %v3529
    %v3707 = vpop.f32.mrf.mxu0
    %v3708 = vadd.f32 0.0, %v3707
    %3709 = vmatmul.f32.gmra.mxu0 %v3530
    %v3710 = vpop.f32.mrf.mxu0
    %v3711 = vadd.f32 0.0, %v3710
    %3712 = vmatmul.f32.gmra.mxu0 %v3531
    %v3713 = vpop.f32.mrf.mxu0
    %v3714 = vadd.f32 0.0, %v3713
    %3715 = vmatmul.f32.gmra.mxu0 %v3532
    %v3716 = vpop.f32.mrf.mxu0
    %v3717 = vadd.f32 0.0, %v3716
    %3718 = vmatmul.f32.gmra.mxu0 %v3533
    %v3719 = vpop.f32.mrf.mxu0
    %v3720 = vadd.f32 0.0, %v3719
    %3721 = vmatmul.f32.gmra.mxu0 %v3534
    %v3722 = vpop.f32.mrf.mxu0
    %v3723 = vadd.f32 0.0, %v3722
    %3724 = vmatmul.f32.gmra.mxu0 %v3535
    %v3725 = vpop.f32.mrf.mxu0
    %v3726 = vadd.f32 0.0, %v3725
    %3727 = vmatmul.f32.gmra.mxu0 %v3536
    %v3728 = vpop.f32.mrf.mxu0
    %v3729 = vadd.f32 0.0, %v3728
    %3730 = vmatmul.f32.gmra.mxu0 %v3537
    %v3731 = vpop.f32.mrf.mxu0
    %v3732 = vadd.f32 0.0, %v3731
    %3733 = vmatmul.f32.gmra.mxu0 %v3538
    %v3734 = vpop.f32.mrf.mxu0
    %v3735 = vadd.f32 0.0, %v3734
    %3736 = vmatmul.f32.gmra.mxu0 %v3539
    %v3737 = vpop.f32.mrf.mxu0
    %v3738 = vadd.f32 0.0, %v3737
    %3739 = vmatmul.f32.gmra.mxu0 %v3540
    %v3740 = vpop.f32.mrf.mxu0
    %v3741 = vadd.f32 0.0, %v3740
    %3742 = vmatmul.f32.gmra.mxu0 %v3541
    %v3743 = vpop.f32.mrf.mxu0
    %v3744 = vadd.f32 0.0, %v3743
    %3745 = vmatmul.f32.gmra.mxu0 %v3542
    %v3746 = vpop.f32.mrf.mxu0
    %v3747 = vadd.f32 0.0, %v3746
    %3748 = vmatmul.f32.gmra.mxu0 %v3543
    %v3749 = vpop.f32.mrf.mxu0
    %v3750 = vadd.f32 0.0, %v3749
    %3751 = vmatmul.f32.gmra.mxu0 %v3544
    %v3752 = vpop.f32.mrf.mxu0
    %v3753 = vadd.f32 0.0, %v3752
    %3754 = vmatmul.f32.gmra.mxu0 %v3545
    %v3755 = vpop.f32.mrf.mxu0
    %v3756 = vadd.f32 0.0, %v3755
    %3757 = vmatmul.f32.gmra.mxu0 %v3546
    %v3758 = vpop.f32.mrf.mxu0
    %v3759 = vadd.f32 0.0, %v3758
    %3760 = vmatmul.f32.gmra.mxu0 %v3547
    %v3761 = vpop.f32.mrf.mxu0
    %v3762 = vadd.f32 0.0, %v3761
    %3763 = vmatmul.f32.gmra.mxu0 %v3548
    %v3764 = vpop.f32.mrf.mxu0
    %v3765 = vadd.f32 0.0, %v3764
    %3766 = vmatmul.f32.gmra.mxu0 %v3549
    %v3767 = vpop.f32.mrf.mxu0
    %v3768 = vadd.f32 0.0, %v3767
    %3769 = vmatmul.f32.gmra.mxu0 %v3550
    %v3770 = vpop.f32.mrf.mxu0
    %v3771 = vadd.f32 0.0, %v3770
    %3772 = vmatmul.f32.gmra.mxu0 %v3551
    %v3773 = vpop.f32.mrf.mxu0
    %v3774 = vadd.f32 0.0, %v3773
    %3775 = vmatmul.f32.gmra.mxu0 %v3552
    %v3776 = vpop.f32.mrf.mxu0
    %v3777 = vadd.f32 0.0, %v3776
    %3778 = vmatmul.f32.gmra.mxu0 %v3553
    %v3779 = vpop.f32.mrf.mxu0
    %v3780 = vadd.f32 0.0, %v3779
    %3781 = vmatmul.f32.gmra.mxu0 %v3554
    %v3782 = vpop.f32.mrf.mxu0
    %v3783 = vadd.f32 0.0, %v3782
    %3784 = vmatmul.f32.gmra.mxu0 %v3555
    %v3785 = vpop.f32.mrf.mxu0
    %v3786 = vadd.f32 0.0, %v3785
    %3787 = vmatmul.f32.gmra.mxu0 %v3556
    %v3788 = vpop.f32.mrf.mxu0
    %v3789 = vadd.f32 0.0, %v3788
    %3790 = vmatmul.f32.gmra.mxu0 %v3557
    %v3791 = vpop.f32.mrf.mxu0
    %v3792 = vadd.f32 0.0, %v3791
    %3793 = vmatmul.f32.gmra.mxu0 %v3558
    %v3794 = vpop.f32.mrf.mxu0
    %v3795 = vadd.f32 0.0, %v3794
    %3796 = vmatmul.f32.gmra.mxu0 %v3559
    %v3797 = vpop.f32.mrf.mxu0
    %v3798 = vadd.f32 0.0, %v3797
    %3799 = vmatmul.f32.gmra.mxu0 %v3560
    %v3800 = vpop.f32.mrf.mxu0
    %v3801 = vadd.f32 0.0, %v3800
    %3802 = vdwg.mxu0
    %v3803 = vadd.f32 %v2794, %v3612
    %v3804 = vadd.f32 %v2797, %v3615
    %v3805 = vadd.f32 %v2800, %v3618
    %v3806 = vadd.f32 %v2803, %v3621
    %v3807 = vadd.f32 %v2806, %v3624
    %v3808 = vadd.f32 %v2809, %v3627
    %v3809 = vadd.f32 %v2812, %v3630
    %v3810 = vadd.f32 %v2815, %v3633
    %v3811 = vadd.f32 %v2818, %v3636
    %v3812 = vadd.f32 %v2821, %v3639
    %v3813 = vadd.f32 %v2824, %v3642
    %v3814 = vadd.f32 %v2827, %v3645
    %v3815 = vadd.f32 %v2830, %v3648
    %v3816 = vadd.f32 %v2833, %v3651
    %v3817 = vadd.f32 %v2836, %v3654
    %v3818 = vadd.f32 %v2839, %v3657
    %v3819 = vadd.f32 %v2842, %v3660
    %v3820 = vadd.f32 %v2845, %v3663
    %v3821 = vadd.f32 %v2848, %v3666
    %v3822 = vadd.f32 %v2851, %v3669
    %v3823 = vadd.f32 %v2854, %v3672
    %v3824 = vadd.f32 %v2857, %v3675
    %v3825 = vadd.f32 %v2860, %v3678
    %v3826 = vadd.f32 %v2863, %v3681
    %v3827 = vadd.f32 %v2866, %v3684
    %v3828 = vadd.f32 %v2869, %v3687
    %v3829 = vadd.f32 %v2872, %v3690
    %v3830 = vadd.f32 %v2875, %v3693
    %v3831 = vadd.f32 %v2878, %v3696
    %v3832 = vadd.f32 %v2881, %v3699
    %v3833 = vadd.f32 %v2884, %v3702
    %v3834 = vadd.f32 %v2887, %v3705
    %v3835 = vadd.f32 %v2890, %v3708
    %v3836 = vadd.f32 %v2893, %v3711
    %v3837 = vadd.f32 %v2896, %v3714
    %v3838 = vadd.f32 %v2899, %v3717
    %v3839 = vadd.f32 %v2902, %v3720
    %v3840 = vadd.f32 %v2905, %v3723
    %v3841 = vadd.f32 %v2908, %v3726
    %v3842 = vadd.f32 %v2911, %v3729
    %v3843 = vadd.f32 %v2914, %v3732
    %v3844 = vadd.f32 %v2917, %v3735
    %v3845 = vadd.f32 %v2920, %v3738
    %v3846 = vadd.f32 %v2923, %v3741
    %v3847 = vadd.f32 %v2926, %v3744
    %v3848 = vadd.f32 %v2929, %v3747
    %v3849 = vadd.f32 %v2932, %v3750
    %v3850 = vadd.f32 %v2935, %v3753
    %v3851 = vadd.f32 %v2938, %v3756
    %v3852 = vadd.f32 %v2941, %v3759
    %v3853 = vadd.f32 %v2944, %v3762
    %v3854 = vadd.f32 %v2947, %v3765
    %v3855 = vadd.f32 %v2950, %v3768
    %v3856 = vadd.f32 %v2953, %v3771
    %v3857 = vadd.f32 %v2956, %v3774
    %v3858 = vadd.f32 %v2959, %v3777
    %v3859 = vadd.f32 %v2962, %v3780
    %v3860 = vadd.f32 %v2965, %v3783
    %v3861 = vadd.f32 %v2968, %v3786
    %v3862 = vadd.f32 %v2971, %v3789
    %v3863 = vadd.f32 %v2974, %v3792
    %v3864 = vadd.f32 %v2977, %v3795
    %v3865 = vadd.f32 %v2980, %v3798
    %v3866 = vadd.f32 %v2983, %v3801
    %v3867 = vld [vmem:[#allocation2 + $0x17] sm:$0xff]
    %v3868 = vld [vmem:[#allocation2 + $0x1f] sm:$0xff]
    %v3869 = vld [vmem:[#allocation2 + $0x27] sm:$0xff]
    %v3870 = vld [vmem:[#allocation2 + $0x2f] sm:$0xff]
    %v3871 = vld [vmem:[#allocation2 + $0x37] sm:$0xff]
    %v3872 = vld [vmem:[#allocation2 + $0x3f] sm:$0xff]
    %v3873 = vld [vmem:[#allocation2 + $0x47] sm:$0xff]
    %v3874 = vld [vmem:[#allocation2 + $0x4f] sm:$0xff]
    %v3875 = vld [vmem:[#allocation2 + $0x57] sm:$0xff]
    %v3876 = vld [vmem:[#allocation2 + $0x5f] sm:$0xff]
    %v3877 = vld [vmem:[#allocation2 + $0x67] sm:$0xff]
    %v3878 = vld [vmem:[#allocation2 + $0x6f] sm:$0xff]
    %v3879 = vld [vmem:[#allocation2 + $0x77] sm:$0xff]
    %v3880 = vld [vmem:[#allocation2 + $0x7f] sm:$0xff]
    %v3881 = vld [vmem:[#allocation2 + $0x87] sm:$0xff]
    %v3882 = vld [vmem:[#allocation2 + $0x8f] sm:$0xff]
    %v3883 = vld [vmem:[#allocation2 + $0x97] sm:$0xff]
    %v3884 = vld [vmem:[#allocation2 + $0x9f] sm:$0xff]
    %v3885 = vld [vmem:[#allocation2 + $0xa7] sm:$0xff]
    %v3886 = vld [vmem:[#allocation2 + $0xaf] sm:$0xff]
    %v3887 = vld [vmem:[#allocation2 + $0xb7] sm:$0xff]
    %v3888 = vld [vmem:[#allocation2 + $0xbf] sm:$0xff]
    %v3889 = vld [vmem:[#allocation2 + $0xc7] sm:$0xff]
    %v3890 = vld [vmem:[#allocation2 + $0xcf] sm:$0xff]
    %v3891 = vld [vmem:[#allocation2 + $0xd7] sm:$0xff]
    %v3892 = vld [vmem:[#allocation2 + $0xdf] sm:$0xff]
    %v3893 = vld [vmem:[#allocation2 + $0xe7] sm:$0xff]
    %v3894 = vld [vmem:[#allocation2 + $0xef] sm:$0xff]
    %v3895 = vld [vmem:[#allocation2 + $0xf7] sm:$0xff]
    %v3896 = vld [vmem:[#allocation2 + $0xff] sm:$0xff]
    %v3897 = vld [vmem:[#allocation2 + $0x107] sm:$0xff]
    %v3898 = vld [vmem:[#allocation2 + $0x10f] sm:$0xff]
    %v3899 = vld [vmem:[#allocation2 + $0x117] sm:$0xff]
    %v3900 = vld [vmem:[#allocation2 + $0x11f] sm:$0xff]
    %v3901 = vld [vmem:[#allocation2 + $0x127] sm:$0xff]
    %v3902 = vld [vmem:[#allocation2 + $0x12f] sm:$0xff]
    %v3903 = vld [vmem:[#allocation2 + $0x137] sm:$0xff]
    %v3904 = vld [vmem:[#allocation2 + $0x13f] sm:$0xff]
    %v3905 = vld [vmem:[#allocation2 + $0x147] sm:$0xff]
    %v3906 = vld [vmem:[#allocation2 + $0x14f] sm:$0xff]
    %v3907 = vld [vmem:[#allocation2 + $0x157] sm:$0xff]
    %v3908 = vld [vmem:[#allocation2 + $0x15f] sm:$0xff]
    %v3909 = vld [vmem:[#allocation2 + $0x167] sm:$0xff]
    %v3910 = vld [vmem:[#allocation2 + $0x16f] sm:$0xff]
    %v3911 = vld [vmem:[#allocation2 + $0x177] sm:$0xff]
    %v3912 = vld [vmem:[#allocation2 + $0x17f] sm:$0xff]
    %v3913 = vld [vmem:[#allocation2 + $0x187] sm:$0xff]
    %v3914 = vld [vmem:[#allocation2 + $0x18f] sm:$0xff]
    %v3915 = vld [vmem:[#allocation2 + $0x197] sm:$0xff]
    %v3916 = vld [vmem:[#allocation2 + $0x19f] sm:$0xff]
    %v3917 = vld [vmem:[#allocation2 + $0x1a7] sm:$0xff]
    %v3918 = vld [vmem:[#allocation2 + $0x1af] sm:$0xff]
    %v3919 = vld [vmem:[#allocation2 + $0x1b7] sm:$0xff]
    %v3920 = vld [vmem:[#allocation2 + $0x1bf] sm:$0xff]
    %v3921 = vld [vmem:[#allocation2 + $0x1c7] sm:$0xff]
    %v3922 = vld [vmem:[#allocation2 + $0x1cf] sm:$0xff]
    %v3923 = vld [vmem:[#allocation2 + $0x1d7] sm:$0xff]
    %v3924 = vld [vmem:[#allocation2 + $0x1df] sm:$0xff]
    %v3925 = vld [vmem:[#allocation2 + $0x1e7] sm:$0xff]
    %v3926 = vld [vmem:[#allocation2 + $0x1ef] sm:$0xff]
    %v3927 = vld [vmem:[#allocation2 + $0x1f7] sm:$0xff]
    %v3928 = vld [vmem:[#allocation2 + $0x1ff] sm:$0xff]
    %v3929 = vld [vmem:[#allocation2 + $0x207] sm:$0xff]
    %v3930 = vld [vmem:[#allocation2 + $0x20f] sm:$0xff]
    %vm3931 = vcmp.ge.s32.totalorder %v1094, 0
    %vm3932 = vcmp.ge.s32.totalorder %v1095, 0
    %vm3933 = vcmp.ge.s32.totalorder %v1096, 0
    %vm3934 = vcmp.ge.s32.totalorder %v1097, 0
    %vm3935 = vcmp.ge.s32.totalorder %v1098, 0
    %vm3936 = vcmp.ge.s32.totalorder %v1099, 0
    %vm3937 = vcmp.ge.s32.totalorder %v1100, 0
    %vm3938 = vcmp.ge.s32.totalorder %v1101, 0
    %vm3939 = vcmp.ge.s32.totalorder %v1102, 0
    %vm3940 = vcmp.ge.s32.totalorder %v1103, 0
    %vm3941 = vcmp.ge.s32.totalorder %v1104, 0
    %vm3942 = vcmp.ge.s32.totalorder %v1105, 0
    %vm3943 = vcmp.ge.s32.totalorder %v1106, 0
    %vm3944 = vcmp.ge.s32.totalorder %v1107, 0
    %vm3945 = vcmp.ge.s32.totalorder %v1108, 0
    %vm3946 = vcmp.ge.s32.totalorder %v1109, 0
    %vm3947 = vcmp.ge.s32.totalorder %v1110, 0
    %vm3948 = vcmp.ge.s32.totalorder %v1111, 0
    %vm3949 = vcmp.ge.s32.totalorder %v1112, 0
    %vm3950 = vcmp.ge.s32.totalorder %v1113, 0
    %vm3951 = vcmp.ge.s32.totalorder %v1114, 0
    %vm3952 = vcmp.ge.s32.totalorder %v1115, 0
    %vm3953 = vcmp.ge.s32.totalorder %v1116, 0
    %vm3954 = vcmp.ge.s32.totalorder %v1117, 0
    %vm3955 = vcmp.ge.s32.totalorder %v1118, 0
    %vm3956 = vcmp.ge.s32.totalorder %v1119, 0
    %vm3957 = vcmp.ge.s32.totalorder %v1120, 0
    %vm3958 = vcmp.ge.s32.totalorder %v1121, 0
    %vm3959 = vcmp.ge.s32.totalorder %v1122, 0
    %vm3960 = vcmp.ge.s32.totalorder %v1123, 0
    %vm3961 = vcmp.ge.s32.totalorder %v1124, 0
    %vm3962 = vcmp.ge.s32.totalorder %v1125, 0
    %vm3963 = vcmp.ge.s32.totalorder %v1126, 0
    %vm3964 = vcmp.ge.s32.totalorder %v1127, 0
    %vm3965 = vcmp.ge.s32.totalorder %v1128, 0
    %vm3966 = vcmp.ge.s32.totalorder %v1129, 0
    %vm3967 = vcmp.ge.s32.totalorder %v1130, 0
    %vm3968 = vcmp.ge.s32.totalorder %v1131, 0
    %vm3969 = vcmp.ge.s32.totalorder %v1132, 0
    %vm3970 = vcmp.ge.s32.totalorder %v1133, 0
    %vm3971 = vcmp.ge.s32.totalorder %v1134, 0
    %vm3972 = vcmp.ge.s32.totalorder %v1135, 0
    %vm3973 = vcmp.ge.s32.totalorder %v1136, 0
    %vm3974 = vcmp.ge.s32.totalorder %v1137, 0
    %vm3975 = vcmp.ge.s32.totalorder %v1138, 0
    %vm3976 = vcmp.ge.s32.totalorder %v1139, 0
    %vm3977 = vcmp.ge.s32.totalorder %v1140, 0
    %vm3978 = vcmp.ge.s32.totalorder %v1141, 0
    %vm3979 = vcmp.ge.s32.totalorder %v1142, 0
    %vm3980 = vcmp.ge.s32.totalorder %v1143, 0
    %vm3981 = vcmp.ge.s32.totalorder %v1144, 0
    %vm3982 = vcmp.ge.s32.totalorder %v1145, 0
    %vm3983 = vcmp.ge.s32.totalorder %v1146, 0
    %vm3984 = vcmp.ge.s32.totalorder %v1147, 0
    %vm3985 = vcmp.ge.s32.totalorder %v1148, 0
    %vm3986 = vcmp.ge.s32.totalorder %v1149, 0
    %vm3987 = vcmp.ge.s32.totalorder %v1150, 0
    %vm3988 = vcmp.ge.s32.totalorder %v1151, 0
    %vm3989 = vcmp.ge.s32.totalorder %v1152, 0
    %vm3990 = vcmp.ge.s32.totalorder %v1153, 0
    %vm3991 = vcmp.ge.s32.totalorder %v1154, 0
    %vm3992 = vcmp.ge.s32.totalorder %v1155, 0
    %vm3993 = vcmp.ge.s32.totalorder %v1156, 0
    %vm3994 = vcmp.ge.s32.totalorder %v1157, 0
    %vm3995 = vcmp.lt.s32.totalorder %v1094, 256
    %vm3996 = vcmp.lt.s32.totalorder %v1095, 256
    %vm3997 = vcmp.lt.s32.totalorder %v1096, 256
    %vm3998 = vcmp.lt.s32.totalorder %v1097, 256
    %vm3999 = vcmp.lt.s32.totalorder %v1098, 256
    %vm4000 = vcmp.lt.s32.totalorder %v1099, 256
    %vm4001 = vcmp.lt.s32.totalorder %v1100, 256
    %vm4002 = vcmp.lt.s32.totalorder %v1101, 256
    %vm4003 = vcmp.lt.s32.totalorder %v1102, 256
    %vm4004 = vcmp.lt.s32.totalorder %v1103, 256
    %vm4005 = vcmp.lt.s32.totalorder %v1104, 256
    %vm4006 = vcmp.lt.s32.totalorder %v1105, 256
    %vm4007 = vcmp.lt.s32.totalorder %v1106, 256
    %vm4008 = vcmp.lt.s32.totalorder %v1107, 256
    %vm4009 = vcmp.lt.s32.totalorder %v1108, 256
    %vm4010 = vcmp.lt.s32.totalorder %v1109, 256
    %vm4011 = vcmp.lt.s32.totalorder %v1110, 256
    %vm4012 = vcmp.lt.s32.totalorder %v1111, 256
    %vm4013 = vcmp.lt.s32.totalorder %v1112, 256
    %vm4014 = vcmp.lt.s32.totalorder %v1113, 256
    %vm4015 = vcmp.lt.s32.totalorder %v1114, 256
    %vm4016 = vcmp.lt.s32.totalorder %v1115, 256
    %vm4017 = vcmp.lt.s32.totalorder %v1116, 256
    %vm4018 = vcmp.lt.s32.totalorder %v1117, 256
    %vm4019 = vcmp.lt.s32.totalorder %v1118, 256
    %vm4020 = vcmp.lt.s32.totalorder %v1119, 256
    %vm4021 = vcmp.lt.s32.totalorder %v1120, 256
    %vm4022 = vcmp.lt.s32.totalorder %v1121, 256
    %vm4023 = vcmp.lt.s32.totalorder %v1122, 256
    %vm4024 = vcmp.lt.s32.totalorder %v1123, 256
    %vm4025 = vcmp.lt.s32.totalorder %v1124, 256
    %vm4026 = vcmp.lt.s32.totalorder %v1125, 256
    %vm4027 = vcmp.lt.s32.totalorder %v1126, 256
    %vm4028 = vcmp.lt.s32.totalorder %v1127, 256
    %vm4029 = vcmp.lt.s32.totalorder %v1128, 256
    %vm4030 = vcmp.lt.s32.totalorder %v1129, 256
    %vm4031 = vcmp.lt.s32.totalorder %v1130, 256
    %vm4032 = vcmp.lt.s32.totalorder %v1131, 256
    %vm4033 = vcmp.lt.s32.totalorder %v1132, 256
    %vm4034 = vcmp.lt.s32.totalorder %v1133, 256
    %vm4035 = vcmp.lt.s32.totalorder %v1134, 256
    %vm4036 = vcmp.lt.s32.totalorder %v1135, 256
    %vm4037 = vcmp.lt.s32.totalorder %v1136, 256
    %vm4038 = vcmp.lt.s32.totalorder %v1137, 256
    %vm4039 = vcmp.lt.s32.totalorder %v1138, 256
    %vm4040 = vcmp.lt.s32.totalorder %v1139, 256
    %vm4041 = vcmp.lt.s32.totalorder %v1140, 256
    %vm4042 = vcmp.lt.s32.totalorder %v1141, 256
    %vm4043 = vcmp.lt.s32.totalorder %v1142, 256
    %vm4044 = vcmp.lt.s32.totalorder %v1143, 256
    %vm4045 = vcmp.lt.s32.totalorder %v1144, 256
    %vm4046 = vcmp.lt.s32.totalorder %v1145, 256
    %vm4047 = vcmp.lt.s32.totalorder %v1146, 256
    %vm4048 = vcmp.lt.s32.totalorder %v1147, 256
    %vm4049 = vcmp.lt.s32.totalorder %v1148, 256
    %vm4050 = vcmp.lt.s32.totalorder %v1149, 256
    %vm4051 = vcmp.lt.s32.totalorder %v1150, 256
    %vm4052 = vcmp.lt.s32.totalorder %v1151, 256
    %vm4053 = vcmp.lt.s32.totalorder %v1152, 256
    %vm4054 = vcmp.lt.s32.totalorder %v1153, 256
    %vm4055 = vcmp.lt.s32.totalorder %v1154, 256
    %vm4056 = vcmp.lt.s32.totalorder %v1155, 256
    %vm4057 = vcmp.lt.s32.totalorder %v1156, 256
    %vm4058 = vcmp.lt.s32.totalorder %v1157, 256
    %vm4059 = vmand %vm3931, %vm3995
    %vm4060 = vmand %vm3932, %vm3996
    %vm4061 = vmand %vm3933, %vm3997
    %vm4062 = vmand %vm3934, %vm3998
    %vm4063 = vmand %vm3935, %vm3999
    %vm4064 = vmand %vm3936, %vm4000
    %vm4065 = vmand %vm3937, %vm4001
    %vm4066 = vmand %vm3938, %vm4002
    %vm4067 = vmand %vm3939, %vm4003
    %vm4068 = vmand %vm3940, %vm4004
    %vm4069 = vmand %vm3941, %vm4005
    %vm4070 = vmand %vm3942, %vm4006
    %vm4071 = vmand %vm3943, %vm4007
    %vm4072 = vmand %vm3944, %vm4008
    %vm4073 = vmand %vm3945, %vm4009
    %vm4074 = vmand %vm3946, %vm4010
    %vm4075 = vmand %vm3947, %vm4011
    %vm4076 = vmand %vm3948, %vm4012
    %vm4077 = vmand %vm3949, %vm4013
    %vm4078 = vmand %vm3950, %vm4014
    %vm4079 = vmand %vm3951, %vm4015
    %vm4080 = vmand %vm3952, %vm4016
    %vm4081 = vmand %vm3953, %vm4017
    %vm4082 = vmand %vm3954, %vm4018
    %vm4083 = vmand %vm3955, %vm4019
    %vm4084 = vmand %vm3956, %vm4020
    %vm4085 = vmand %vm3957, %vm4021
    %vm4086 = vmand %vm3958, %vm4022
    %vm4087 = vmand %vm3959, %vm4023
    %vm4088 = vmand %vm3960, %vm4024
    %vm4089 = vmand %vm3961, %vm4025
    %vm4090 = vmand %vm3962, %vm4026
    %vm4091 = vmand %vm3963, %vm4027
    %vm4092 = vmand %vm3964, %vm4028
    %vm4093 = vmand %vm3965, %vm4029
    %vm4094 = vmand %vm3966, %vm4030
    %vm4095 = vmand %vm3967, %vm4031
    %vm4096 = vmand %vm3968, %vm4032
    %vm4097 = vmand %vm3969, %vm4033
    %vm4098 = vmand %vm3970, %vm4034
    %vm4099 = vmand %vm3971, %vm4035
    %vm4100 = vmand %vm3972, %vm4036
    %vm4101 = vmand %vm3973, %vm4037
    %vm4102 = vmand %vm3974, %vm4038
    %vm4103 = vmand %vm3975, %vm4039
    %vm4104 = vmand %vm3976, %vm4040
    %vm4105 = vmand %vm3977, %vm4041
    %vm4106 = vmand %vm3978, %vm4042
    %vm4107 = vmand %vm3979, %vm4043
    %vm4108 = vmand %vm3980, %vm4044
    %vm4109 = vmand %vm3981, %vm4045
    %vm4110 = vmand %vm3982, %vm4046
    %vm4111 = vmand %vm3983, %vm4047
    %vm4112 = vmand %vm3984, %vm4048
    %vm4113 = vmand %vm3985, %vm4049
    %vm4114 = vmand %vm3986, %vm4050
    %vm4115 = vmand %vm3987, %vm4051
    %vm4116 = vmand %vm3988, %vm4052
    %vm4117 = vmand %vm3989, %vm4053
    %vm4118 = vmand %vm3990, %vm4054
    %vm4119 = vmand %vm3991, %vm4055
    %vm4120 = vmand %vm3992, %vm4056
    %vm4121 = vmand %vm3993, %vm4057
    %vm4122 = vmand %vm3994, %vm4058
    %vm4123 = vmand %vm1414, %vm4059
    %vm4124 = vmand %vm1415, %vm4060
    %vm4125 = vmand %vm1416, %vm4061
    %vm4126 = vmand %vm1417, %vm4062
    %vm4127 = vmand %vm1418, %vm4063
    %vm4128 = vmand %vm1419, %vm4064
    %vm4129 = vmand %vm1420, %vm4065
    %vm4130 = vmand %vm1421, %vm4066
    %vm4131 = vmand %vm1422, %vm4067
    %vm4132 = vmand %vm1423, %vm4068
    %vm4133 = vmand %vm1424, %vm4069
    %vm4134 = vmand %vm1425, %vm4070
    %vm4135 = vmand %vm1426, %vm4071
    %vm4136 = vmand %vm1427, %vm4072
    %vm4137 = vmand %vm1428, %vm4073
    %vm4138 = vmand %vm1429, %vm4074
    %vm4139 = vmand %vm1430, %vm4075
    %vm4140 = vmand %vm1431, %vm4076
    %vm4141 = vmand %vm1432, %vm4077
    %vm4142 = vmand %vm1433, %vm4078
    %vm4143 = vmand %vm1434, %vm4079
    %vm4144 = vmand %vm1435, %vm4080
    %vm4145 = vmand %vm1436, %vm4081
    %vm4146 = vmand %vm1437, %vm4082
    %vm4147 = vmand %vm1438, %vm4083
    %vm4148 = vmand %vm1439, %vm4084
    %vm4149 = vmand %vm1440, %vm4085
    %vm4150 = vmand %vm1441, %vm4086
    %vm4151 = vmand %vm1442, %vm4087
    %vm4152 = vmand %vm1443, %vm4088
    %vm4153 = vmand %vm1444, %vm4089
    %vm4154 = vmand %vm1445, %vm4090
    %vm4155 = vmand %vm1446, %vm4091
    %vm4156 = vmand %vm1447, %vm4092
    %vm4157 = vmand %vm1448, %vm4093
    %vm4158 = vmand %vm1449, %vm4094
    %vm4159 = vmand %vm1450, %vm4095
    %vm4160 = vmand %vm1451, %vm4096
    %vm4161 = vmand %vm1452, %vm4097
    %vm4162 = vmand %vm1453, %vm4098
    %vm4163 = vmand %vm1454, %vm4099
    %vm4164 = vmand %vm1455, %vm4100
    %vm4165 = vmand %vm1456, %vm4101
    %vm4166 = vmand %vm1457, %vm4102
    %vm4167 = vmand %vm1458, %vm4103
    %vm4168 = vmand %vm1459, %vm4104
    %vm4169 = vmand %vm1460, %vm4105
    %vm4170 = vmand %vm1461, %vm4106
    %vm4171 = vmand %vm1462, %vm4107
    %vm4172 = vmand %vm1463, %vm4108
    %vm4173 = vmand %vm1464, %vm4109
    %vm4174 = vmand %vm1465, %vm4110
    %vm4175 = vmand %vm1466, %vm4111
    %vm4176 = vmand %vm1467, %vm4112
    %vm4177 = vmand %vm1468, %vm4113
    %vm4178 = vmand %vm1469, %vm4114
    %vm4179 = vmand %vm1470, %vm4115
    %vm4180 = vmand %vm1471, %vm4116
    %vm4181 = vmand %vm1472, %vm4117
    %vm4182 = vmand %vm1473, %vm4118
    %vm4183 = vmand %vm1474, %vm4119
    %vm4184 = vmand %vm1475, %vm4120
    %vm4185 = vmand %vm1476, %vm4121
    %vm4186 = vmand %vm1477, %vm4122
    %v4187 = vsel %vm4123, 1, 0
    %v4188 = vsel %vm4124, 1, 0
    %v4189 = vsel %vm4125, 1, 0
    %v4190 = vsel %vm4126, 1, 0
    %v4191 = vsel %vm4127, 1, 0
    %v4192 = vsel %vm4128, 1, 0
    %v4193 = vsel %vm4129, 1, 0
    %v4194 = vsel %vm4130, 1, 0
    %v4195 = vsel %vm4131, 1, 0
    %v4196 = vsel %vm4132, 1, 0
    %v4197 = vsel %vm4133, 1, 0
    %v4198 = vsel %vm4134, 1, 0
    %v4199 = vsel %vm4135, 1, 0
    %v4200 = vsel %vm4136, 1, 0
    %v4201 = vsel %vm4137, 1, 0
    %v4202 = vsel %vm4138, 1, 0
    %v4203 = vsel %vm4139, 1, 0
    %v4204 = vsel %vm4140, 1, 0
    %v4205 = vsel %vm4141, 1, 0
    %v4206 = vsel %vm4142, 1, 0
    %v4207 = vsel %vm4143, 1, 0
    %v4208 = vsel %vm4144, 1, 0
    %v4209 = vsel %vm4145, 1, 0
    %v4210 = vsel %vm4146, 1, 0
    %v4211 = vsel %vm4147, 1, 0
    %v4212 = vsel %vm4148, 1, 0
    %v4213 = vsel %vm4149, 1, 0
    %v4214 = vsel %vm4150, 1, 0
    %v4215 = vsel %vm4151, 1, 0
    %v4216 = vsel %vm4152, 1, 0
    %v4217 = vsel %vm4153, 1, 0
    %v4218 = vsel %vm4154, 1, 0
    %v4219 = vsel %vm4155, 1, 0
    %v4220 = vsel %vm4156, 1, 0
    %v4221 = vsel %vm4157, 1, 0
    %v4222 = vsel %vm4158, 1, 0
    %v4223 = vsel %vm4159, 1, 0
    %v4224 = vsel %vm4160, 1, 0
    %v4225 = vsel %vm4161, 1, 0
    %v4226 = vsel %vm4162, 1, 0
    %v4227 = vsel %vm4163, 1, 0
    %v4228 = vsel %vm4164, 1, 0
    %v4229 = vsel %vm4165, 1, 0
    %v4230 = vsel %vm4166, 1, 0
    %v4231 = vsel %vm4167, 1, 0
    %v4232 = vsel %vm4168, 1, 0
    %v4233 = vsel %vm4169, 1, 0
    %v4234 = vsel %vm4170, 1, 0
    %v4235 = vsel %vm4171, 1, 0
    %v4236 = vsel %vm4172, 1, 0
    %v4237 = vsel %vm4173, 1, 0
    %v4238 = vsel %vm4174, 1, 0
    %v4239 = vsel %vm4175, 1, 0
    %v4240 = vsel %vm4176, 1, 0
    %v4241 = vsel %vm4177, 1, 0
    %v4242 = vsel %vm4178, 1, 0
    %v4243 = vsel %vm4179, 1, 0
    %v4244 = vsel %vm4180, 1, 0
    %v4245 = vsel %vm4181, 1, 0
    %v4246 = vsel %vm4182, 1, 0
    %v4247 = vsel %vm4183, 1, 0
    %v4248 = vsel %vm4184, 1, 0
    %v4249 = vsel %vm4185, 1, 0
    %v4250 = vsel %vm4186, 1, 0
    %vm4251 = vcmp.eq.s32.totalorder %v4187, 1
    %vm4252 = vcmp.eq.s32.totalorder %v4188, 1
    %vm4253 = vcmp.eq.s32.totalorder %v4189, 1
    %vm4254 = vcmp.eq.s32.totalorder %v4190, 1
    %vm4255 = vcmp.eq.s32.totalorder %v4191, 1
    %vm4256 = vcmp.eq.s32.totalorder %v4192, 1
    %vm4257 = vcmp.eq.s32.totalorder %v4193, 1
    %vm4258 = vcmp.eq.s32.totalorder %v4194, 1
    %vm4259 = vcmp.eq.s32.totalorder %v4195, 1
    %vm4260 = vcmp.eq.s32.totalorder %v4196, 1
    %vm4261 = vcmp.eq.s32.totalorder %v4197, 1
    %vm4262 = vcmp.eq.s32.totalorder %v4198, 1
    %vm4263 = vcmp.eq.s32.totalorder %v4199, 1
    %vm4264 = vcmp.eq.s32.totalorder %v4200, 1
    %vm4265 = vcmp.eq.s32.totalorder %v4201, 1
    %vm4266 = vcmp.eq.s32.totalorder %v4202, 1
    %vm4267 = vcmp.eq.s32.totalorder %v4203, 1
    %vm4268 = vcmp.eq.s32.totalorder %v4204, 1
    %vm4269 = vcmp.eq.s32.totalorder %v4205, 1
    %vm4270 = vcmp.eq.s32.totalorder %v4206, 1
    %vm4271 = vcmp.eq.s32.totalorder %v4207, 1
    %vm4272 = vcmp.eq.s32.totalorder %v4208, 1
    %vm4273 = vcmp.eq.s32.totalorder %v4209, 1
    %vm4274 = vcmp.eq.s32.totalorder %v4210, 1
    %vm4275 = vcmp.eq.s32.totalorder %v4211, 1
    %vm4276 = vcmp.eq.s32.totalorder %v4212, 1
    %vm4277 = vcmp.eq.s32.totalorder %v4213, 1
    %vm4278 = vcmp.eq.s32.totalorder %v4214, 1
    %vm4279 = vcmp.eq.s32.totalorder %v4215, 1
    %vm4280 = vcmp.eq.s32.totalorder %v4216, 1
    %vm4281 = vcmp.eq.s32.totalorder %v4217, 1
    %vm4282 = vcmp.eq.s32.totalorder %v4218, 1
    %vm4283 = vcmp.eq.s32.totalorder %v4219, 1
    %vm4284 = vcmp.eq.s32.totalorder %v4220, 1
    %vm4285 = vcmp.eq.s32.totalorder %v4221, 1
    %vm4286 = vcmp.eq.s32.totalorder %v4222, 1
    %vm4287 = vcmp.eq.s32.totalorder %v4223, 1
    %vm4288 = vcmp.eq.s32.totalorder %v4224, 1
    %vm4289 = vcmp.eq.s32.totalorder %v4225, 1
    %vm4290 = vcmp.eq.s32.totalorder %v4226, 1
    %vm4291 = vcmp.eq.s32.totalorder %v4227, 1
    %vm4292 = vcmp.eq.s32.totalorder %v4228, 1
    %vm4293 = vcmp.eq.s32.totalorder %v4229, 1
    %vm4294 = vcmp.eq.s32.totalorder %v4230, 1
    %vm4295 = vcmp.eq.s32.totalorder %v4231, 1
    %vm4296 = vcmp.eq.s32.totalorder %v4232, 1
    %vm4297 = vcmp.eq.s32.totalorder %v4233, 1
    %vm4298 = vcmp.eq.s32.totalorder %v4234, 1
    %vm4299 = vcmp.eq.s32.totalorder %v4235, 1
    %vm4300 = vcmp.eq.s32.totalorder %v4236, 1
    %vm4301 = vcmp.eq.s32.totalorder %v4237, 1
    %vm4302 = vcmp.eq.s32.totalorder %v4238, 1
    %vm4303 = vcmp.eq.s32.totalorder %v4239, 1
    %vm4304 = vcmp.eq.s32.totalorder %v4240, 1
    %vm4305 = vcmp.eq.s32.totalorder %v4241, 1
    %vm4306 = vcmp.eq.s32.totalorder %v4242, 1
    %vm4307 = vcmp.eq.s32.totalorder %v4243, 1
    %vm4308 = vcmp.eq.s32.totalorder %v4244, 1
    %vm4309 = vcmp.eq.s32.totalorder %v4245, 1
    %vm4310 = vcmp.eq.s32.totalorder %v4246, 1
    %vm4311 = vcmp.eq.s32.totalorder %v4247, 1
    %vm4312 = vcmp.eq.s32.totalorder %v4248, 1
    %vm4313 = vcmp.eq.s32.totalorder %v4249, 1
    %vm4314 = vcmp.eq.s32.totalorder %v4250, 1
    %v4315 = vsel %vm4251, %v3867, 0.0
    %v4316 = vsel %vm4252, %v3868, 0.0
    %v4317 = vsel %vm4253, %v3869, 0.0
    %v4318 = vsel %vm4254, %v3870, 0.0
    %v4319 = vsel %vm4255, %v3871, 0.0
    %v4320 = vsel %vm4256, %v3872, 0.0
    %v4321 = vsel %vm4257, %v3873, 0.0
    %v4322 = vsel %vm4258, %v3874, 0.0
    %v4323 = vsel %vm4259, %v3875, 0.0
    %v4324 = vsel %vm4260, %v3876, 0.0
    %v4325 = vsel %vm4261, %v3877, 0.0
    %v4326 = vsel %vm4262, %v3878, 0.0
    %v4327 = vsel %vm4263, %v3879, 0.0
    %v4328 = vsel %vm4264, %v3880, 0.0
    %v4329 = vsel %vm4265, %v3881, 0.0
    %v4330 = vsel %vm4266, %v3882, 0.0
    %v4331 = vsel %vm4267, %v3883, 0.0
    %v4332 = vsel %vm4268, %v3884, 0.0
    %v4333 = vsel %vm4269, %v3885, 0.0
    %v4334 = vsel %vm4270, %v3886, 0.0
    %v4335 = vsel %vm4271, %v3887, 0.0
    %v4336 = vsel %vm4272, %v3888, 0.0
    %v4337 = vsel %vm4273, %v3889, 0.0
    %v4338 = vsel %vm4274, %v3890, 0.0
    %v4339 = vsel %vm4275, %v3891, 0.0
    %v4340 = vsel %vm4276, %v3892, 0.0
    %v4341 = vsel %vm4277, %v3893, 0.0
    %v4342 = vsel %vm4278, %v3894, 0.0
    %v4343 = vsel %vm4279, %v3895, 0.0
    %v4344 = vsel %vm4280, %v3896, 0.0
    %v4345 = vsel %vm4281, %v3897, 0.0
    %v4346 = vsel %vm4282, %v3898, 0.0
    %v4347 = vsel %vm4283, %v3899, 0.0
    %v4348 = vsel %vm4284, %v3900, 0.0
    %v4349 = vsel %vm4285, %v3901, 0.0
    %v4350 = vsel %vm4286, %v3902, 0.0
    %v4351 = vsel %vm4287, %v3903, 0.0
    %v4352 = vsel %vm4288, %v3904, 0.0
    %v4353 = vsel %vm4289, %v3905, 0.0
    %v4354 = vsel %vm4290, %v3906, 0.0
    %v4355 = vsel %vm4291, %v3907, 0.0
    %v4356 = vsel %vm4292, %v3908, 0.0
    %v4357 = vsel %vm4293, %v3909, 0.0
    %v4358 = vsel %vm4294, %v3910, 0.0
    %v4359 = vsel %vm4295, %v3911, 0.0
    %v4360 = vsel %vm4296, %v3912, 0.0
    %v4361 = vsel %vm4297, %v3913, 0.0
    %v4362 = vsel %vm4298, %v3914, 0.0
    %v4363 = vsel %vm4299, %v3915, 0.0
    %v4364 = vsel %vm4300, %v3916, 0.0
    %v4365 = vsel %vm4301, %v3917, 0.0
    %v4366 = vsel %vm4302, %v3918, 0.0
    %v4367 = vsel %vm4303, %v3919, 0.0
    %v4368 = vsel %vm4304, %v3920, 0.0
    %v4369 = vsel %vm4305, %v3921, 0.0
    %v4370 = vsel %vm4306, %v3922, 0.0
    %v4371 = vsel %vm4307, %v3923, 0.0
    %v4372 = vsel %vm4308, %v3924, 0.0
    %v4373 = vsel %vm4309, %v3925, 0.0
    %v4374 = vsel %vm4310, %v3926, 0.0
    %v4375 = vsel %vm4311, %v3927, 0.0
    %v4376 = vsel %vm4312, %v3928, 0.0
    %v4377 = vsel %vm4313, %v3929, 0.0
    %v4378 = vsel %vm4314, %v3930, 0.0
    %s4379 = scalar_lea.vmem [#allocation8], 192
    %v4380 = vld [vmem:[%s4379] sm:$0xf]
    %v4381 = vld [vmem:[%s4379 + $0x4] sm:$0xf]
    %v4382 = vld [vmem:[%s4379 + $0x8] sm:$0xf]
    %v4383 = vld [vmem:[%s4379 + $0xc] sm:$0xf]
    %v4384 = vld [vmem:[%s4379 + $0x10] sm:$0xf]
    %v4385 = vld [vmem:[%s4379 + $0x14] sm:$0xf]
    %v4386 = vld [vmem:[%s4379 + $0x18] sm:$0xf]
    %v4387 = vld [vmem:[%s4379 + $0x1c] sm:$0xf]
    %v4388 = vld [vmem:[%s4379 + $0x20] sm:$0xf]
    %v4389 = vld [vmem:[%s4379 + $0x24] sm:$0xf]
    %v4390 = vld [vmem:[%s4379 + $0x28] sm:$0xf]
    %v4391 = vld [vmem:[%s4379 + $0x2c] sm:$0xf]
    %v4392 = vld [vmem:[%s4379 + $0x30] sm:$0xf]
    %v4393 = vld [vmem:[%s4379 + $0x34] sm:$0xf]
    %v4394 = vld [vmem:[%s4379 + $0x38] sm:$0xf]
    %v4395 = vld [vmem:[%s4379 + $0x3c] sm:$0xf]
    %v4396 = vunpack.c.l.bf16 %v4380
    %v4397 = vunpack.c.l.bf16 %v4381
    %v4398 = vunpack.c.l.bf16 %v4382
    %v4399 = vunpack.c.l.bf16 %v4383
    %v4400 = vunpack.c.l.bf16 %v4384
    %v4401 = vunpack.c.l.bf16 %v4385
    %v4402 = vunpack.c.l.bf16 %v4386
    %v4403 = vunpack.c.l.bf16 %v4387
    %v4404 = vunpack.c.l.bf16 %v4388
    %v4405 = vunpack.c.l.bf16 %v4389
    %v4406 = vunpack.c.l.bf16 %v4390
    %v4407 = vunpack.c.l.bf16 %v4391
    %v4408 = vunpack.c.l.bf16 %v4392
    %v4409 = vunpack.c.l.bf16 %v4393
    %v4410 = vunpack.c.l.bf16 %v4394
    %v4411 = vunpack.c.l.bf16 %v4395
    %4412 = vmatpush.msra.mxu0 %v4411
    %4413 = vmatpush.msra.mxu0 %v4410
    %4414 = vmatpush.msra.mxu0 %v4409
    %4415 = vmatpush.msra.mxu0 %v4408
    %4416 = vmatpush.msra.mxu0 %v4407
    %4417 = vmatpush.msra.mxu0 %v4406
    %4418 = vmatpush.msra.mxu0 %v4405
    %4419 = vmatpush.msra.mxu0 %v4404
    %4420 = vmatpush.msra.mxu0 %v4403
    %4421 = vmatpush.msra.mxu0 %v4402
    %4422 = vmatpush.msra.mxu0 %v4401
    %4423 = vmatpush.msra.mxu0 %v4400
    %4424 = vmatpush.msra.mxu0 %v4399
    %4425 = vmatpush.msra.mxu0 %v4398
    %4426 = vmatpush.msra.mxu0 %v4397
    %4427 = vmatpush.msra.mxu0 %v4396
    %4428 = vmatmul.f32.gmra.mxu0 %v4315
    %v4429 = vpop.f32.mrf.mxu0
    %v4430 = vadd.f32 0.0, %v4429
    %4431 = vmatmul.f32.gmra.mxu0 %v4316
    %v4432 = vpop.f32.mrf.mxu0
    %v4433 = vadd.f32 0.0, %v4432
    %4434 = vmatmul.f32.gmra.mxu0 %v4317
    %v4435 = vpop.f32.mrf.mxu0
    %v4436 = vadd.f32 0.0, %v4435
    %4437 = vmatmul.f32.gmra.mxu0 %v4318
    %v4438 = vpop.f32.mrf.mxu0
    %v4439 = vadd.f32 0.0, %v4438
    %4440 = vmatmul.f32.gmra.mxu0 %v4319
    %v4441 = vpop.f32.mrf.mxu0
    %v4442 = vadd.f32 0.0, %v4441
    %4443 = vmatmul.f32.gmra.mxu0 %v4320
    %v4444 = vpop.f32.mrf.mxu0
    %v4445 = vadd.f32 0.0, %v4444
    %4446 = vmatmul.f32.gmra.mxu0 %v4321
    %v4447 = vpop.f32.mrf.mxu0
    %v4448 = vadd.f32 0.0, %v4447
    %4449 = vmatmul.f32.gmra.mxu0 %v4322
    %v4450 = vpop.f32.mrf.mxu0
    %v4451 = vadd.f32 0.0, %v4450
    %4452 = vmatmul.f32.gmra.mxu0 %v4323
    %v4453 = vpop.f32.mrf.mxu0
    %v4454 = vadd.f32 0.0, %v4453
    %4455 = vmatmul.f32.gmra.mxu0 %v4324
    %v4456 = vpop.f32.mrf.mxu0
    %v4457 = vadd.f32 0.0, %v4456
    %4458 = vmatmul.f32.gmra.mxu0 %v4325
    %v4459 = vpop.f32.mrf.mxu0
    %v4460 = vadd.f32 0.0, %v4459
    %4461 = vmatmul.f32.gmra.mxu0 %v4326
    %v4462 = vpop.f32.mrf.mxu0
    %v4463 = vadd.f32 0.0, %v4462
    %4464 = vmatmul.f32.gmra.mxu0 %v4327
    %v4465 = vpop.f32.mrf.mxu0
    %v4466 = vadd.f32 0.0, %v4465
    %4467 = vmatmul.f32.gmra.mxu0 %v4328
    %v4468 = vpop.f32.mrf.mxu0
    %v4469 = vadd.f32 0.0, %v4468
    %4470 = vmatmul.f32.gmra.mxu0 %v4329
    %v4471 = vpop.f32.mrf.mxu0
    %v4472 = vadd.f32 0.0, %v4471
    %4473 = vmatmul.f32.gmra.mxu0 %v4330
    %v4474 = vpop.f32.mrf.mxu0
    %v4475 = vadd.f32 0.0, %v4474
    %4476 = vmatmul.f32.gmra.mxu0 %v4331
    %v4477 = vpop.f32.mrf.mxu0
    %v4478 = vadd.f32 0.0, %v4477
    %4479 = vmatmul.f32.gmra.mxu0 %v4332
    %v4480 = vpop.f32.mrf.mxu0
    %v4481 = vadd.f32 0.0, %v4480
    %4482 = vmatmul.f32.gmra.mxu0 %v4333
    %v4483 = vpop.f32.mrf.mxu0
    %v4484 = vadd.f32 0.0, %v4483
    %4485 = vmatmul.f32.gmra.mxu0 %v4334
    %v4486 = vpop.f32.mrf.mxu0
    %v4487 = vadd.f32 0.0, %v4486
    %4488 = vmatmul.f32.gmra.mxu0 %v4335
    %v4489 = vpop.f32.mrf.mxu0
    %v4490 = vadd.f32 0.0, %v4489
    %4491 = vmatmul.f32.gmra.mxu0 %v4336
    %v4492 = vpop.f32.mrf.mxu0
    %v4493 = vadd.f32 0.0, %v4492
    %4494 = vmatmul.f32.gmra.mxu0 %v4337
    %v4495 = vpop.f32.mrf.mxu0
    %v4496 = vadd.f32 0.0, %v4495
    %4497 = vmatmul.f32.gmra.mxu0 %v4338
    %v4498 = vpop.f32.mrf.mxu0
    %v4499 = vadd.f32 0.0, %v4498
    %4500 = vmatmul.f32.gmra.mxu0 %v4339
    %v4501 = vpop.f32.mrf.mxu0
    %v4502 = vadd.f32 0.0, %v4501
    %4503 = vmatmul.f32.gmra.mxu0 %v4340
    %v4504 = vpop.f32.mrf.mxu0
    %v4505 = vadd.f32 0.0, %v4504
    %4506 = vmatmul.f32.gmra.mxu0 %v4341
    %v4507 = vpop.f32.mrf.mxu0
    %v4508 = vadd.f32 0.0, %v4507
    %4509 = vmatmul.f32.gmra.mxu0 %v4342
    %v4510 = vpop.f32.mrf.mxu0
    %v4511 = vadd.f32 0.0, %v4510
    %4512 = vmatmul.f32.gmra.mxu0 %v4343
    %v4513 = vpop.f32.mrf.mxu0
    %v4514 = vadd.f32 0.0, %v4513
    %4515 = vmatmul.f32.gmra.mxu0 %v4344
    %v4516 = vpop.f32.mrf.mxu0
    %v4517 = vadd.f32 0.0, %v4516
    %4518 = vmatmul.f32.gmra.mxu0 %v4345
    %v4519 = vpop.f32.mrf.mxu0
    %v4520 = vadd.f32 0.0, %v4519
    %4521 = vmatmul.f32.gmra.mxu0 %v4346
    %v4522 = vpop.f32.mrf.mxu0
    %v4523 = vadd.f32 0.0, %v4522
    %4524 = vmatmul.f32.gmra.mxu0 %v4347
    %v4525 = vpop.f32.mrf.mxu0
    %v4526 = vadd.f32 0.0, %v4525
    %4527 = vmatmul.f32.gmra.mxu0 %v4348
    %v4528 = vpop.f32.mrf.mxu0
    %v4529 = vadd.f32 0.0, %v4528
    %4530 = vmatmul.f32.gmra.mxu0 %v4349
    %v4531 = vpop.f32.mrf.mxu0
    %v4532 = vadd.f32 0.0, %v4531
    %4533 = vmatmul.f32.gmra.mxu0 %v4350
    %v4534 = vpop.f32.mrf.mxu0
    %v4535 = vadd.f32 0.0, %v4534
    %4536 = vmatmul.f32.gmra.mxu0 %v4351
    %v4537 = vpop.f32.mrf.mxu0
    %v4538 = vadd.f32 0.0, %v4537
    %4539 = vmatmul.f32.gmra.mxu0 %v4352
    %v4540 = vpop.f32.mrf.mxu0
    %v4541 = vadd.f32 0.0, %v4540
    %4542 = vmatmul.f32.gmra.mxu0 %v4353
    %v4543 = vpop.f32.mrf.mxu0
    %v4544 = vadd.f32 0.0, %v4543
    %4545 = vmatmul.f32.gmra.mxu0 %v4354
    %v4546 = vpop.f32.mrf.mxu0
    %v4547 = vadd.f32 0.0, %v4546
    %4548 = vmatmul.f32.gmra.mxu0 %v4355
    %v4549 = vpop.f32.mrf.mxu0
    %v4550 = vadd.f32 0.0, %v4549
    %4551 = vmatmul.f32.gmra.mxu0 %v4356
    %v4552 = vpop.f32.mrf.mxu0
    %v4553 = vadd.f32 0.0, %v4552
    %4554 = vmatmul.f32.gmra.mxu0 %v4357
    %v4555 = vpop.f32.mrf.mxu0
    %v4556 = vadd.f32 0.0, %v4555
    %4557 = vmatmul.f32.gmra.mxu0 %v4358
    %v4558 = vpop.f32.mrf.mxu0
    %v4559 = vadd.f32 0.0, %v4558
    %4560 = vmatmul.f32.gmra.mxu0 %v4359
    %v4561 = vpop.f32.mrf.mxu0
    %v4562 = vadd.f32 0.0, %v4561
    %4563 = vmatmul.f32.gmra.mxu0 %v4360
    %v4564 = vpop.f32.mrf.mxu0
    %v4565 = vadd.f32 0.0, %v4564
    %4566 = vmatmul.f32.gmra.mxu0 %v4361
    %v4567 = vpop.f32.mrf.mxu0
    %v4568 = vadd.f32 0.0, %v4567
    %4569 = vmatmul.f32.gmra.mxu0 %v4362
    %v4570 = vpop.f32.mrf.mxu0
    %v4571 = vadd.f32 0.0, %v4570
    %4572 = vmatmul.f32.gmra.mxu0 %v4363
    %v4573 = vpop.f32.mrf.mxu0
    %v4574 = vadd.f32 0.0, %v4573
    %4575 = vmatmul.f32.gmra.mxu0 %v4364
    %v4576 = vpop.f32.mrf.mxu0
    %v4577 = vadd.f32 0.0, %v4576
    %4578 = vmatmul.f32.gmra.mxu0 %v4365
    %v4579 = vpop.f32.mrf.mxu0
    %v4580 = vadd.f32 0.0, %v4579
    %4581 = vmatmul.f32.gmra.mxu0 %v4366
    %v4582 = vpop.f32.mrf.mxu0
    %v4583 = vadd.f32 0.0, %v4582
    %4584 = vmatmul.f32.gmra.mxu0 %v4367
    %v4585 = vpop.f32.mrf.mxu0
    %v4586 = vadd.f32 0.0, %v4585
    %4587 = vmatmul.f32.gmra.mxu0 %v4368
    %v4588 = vpop.f32.mrf.mxu0
    %v4589 = vadd.f32 0.0, %v4588
    %4590 = vmatmul.f32.gmra.mxu0 %v4369
    %v4591 = vpop.f32.mrf.mxu0
    %v4592 = vadd.f32 0.0, %v4591
    %4593 = vmatmul.f32.gmra.mxu0 %v4370
    %v4594 = vpop.f32.mrf.mxu0
    %v4595 = vadd.f32 0.0, %v4594
    %4596 = vmatmul.f32.gmra.mxu0 %v4371
    %v4597 = vpop.f32.mrf.mxu0
    %v4598 = vadd.f32 0.0, %v4597
    %4599 = vmatmul.f32.gmra.mxu0 %v4372
    %v4600 = vpop.f32.mrf.mxu0
    %v4601 = vadd.f32 0.0, %v4600
    %4602 = vmatmul.f32.gmra.mxu0 %v4373
    %v4603 = vpop.f32.mrf.mxu0
    %v4604 = vadd.f32 0.0, %v4603
    %4605 = vmatmul.f32.gmra.mxu0 %v4374
    %v4606 = vpop.f32.mrf.mxu0
    %v4607 = vadd.f32 0.0, %v4606
    %4608 = vmatmul.f32.gmra.mxu0 %v4375
    %v4609 = vpop.f32.mrf.mxu0
    %v4610 = vadd.f32 0.0, %v4609
    %4611 = vmatmul.f32.gmra.mxu0 %v4376
    %v4612 = vpop.f32.mrf.mxu0
    %v4613 = vadd.f32 0.0, %v4612
    %4614 = vmatmul.f32.gmra.mxu0 %v4377
    %v4615 = vpop.f32.mrf.mxu0
    %v4616 = vadd.f32 0.0, %v4615
    %4617 = vmatmul.f32.gmra.mxu0 %v4378
    %v4618 = vpop.f32.mrf.mxu0
    %v4619 = vadd.f32 0.0, %v4618
    %4620 = vdwg.mxu0
    %v4621 = vadd.f32 %v3803, %v4430
    %v4622 = vadd.f32 %v3804, %v4433
    %v4623 = vadd.f32 %v3805, %v4436
    %v4624 = vadd.f32 %v3806, %v4439
    %v4625 = vadd.f32 %v3807, %v4442
    %v4626 = vadd.f32 %v3808, %v4445
    %v4627 = vadd.f32 %v3809, %v4448
    %v4628 = vadd.f32 %v3810, %v4451
    %v4629 = vadd.f32 %v3811, %v4454
    %v4630 = vadd.f32 %v3812, %v4457
    %v4631 = vadd.f32 %v3813, %v4460
    %v4632 = vadd.f32 %v3814, %v4463
    %v4633 = vadd.f32 %v3815, %v4466
    %v4634 = vadd.f32 %v3816, %v4469
    %v4635 = vadd.f32 %v3817, %v4472
    %v4636 = vadd.f32 %v3818, %v4475
    %v4637 = vadd.f32 %v3819, %v4478
    %v4638 = vadd.f32 %v3820, %v4481
    %v4639 = vadd.f32 %v3821, %v4484
    %v4640 = vadd.f32 %v3822, %v4487
    %v4641 = vadd.f32 %v3823, %v4490
    %v4642 = vadd.f32 %v3824, %v4493
    %v4643 = vadd.f32 %v3825, %v4496
    %v4644 = vadd.f32 %v3826, %v4499
    %v4645 = vadd.f32 %v3827, %v4502
    %v4646 = vadd.f32 %v3828, %v4505
    %v4647 = vadd.f32 %v3829, %v4508
    %v4648 = vadd.f32 %v3830, %v4511
    %v4649 = vadd.f32 %v3831, %v4514
    %v4650 = vadd.f32 %v3832, %v4517
    %v4651 = vadd.f32 %v3833, %v4520
    %v4652 = vadd.f32 %v3834, %v4523
    %v4653 = vadd.f32 %v3835, %v4526
    %v4654 = vadd.f32 %v3836, %v4529
    %v4655 = vadd.f32 %v3837, %v4532
    %v4656 = vadd.f32 %v3838, %v4535
    %v4657 = vadd.f32 %v3839, %v4538
    %v4658 = vadd.f32 %v3840, %v4541
    %v4659 = vadd.f32 %v3841, %v4544
    %v4660 = vadd.f32 %v3842, %v4547
    %v4661 = vadd.f32 %v3843, %v4550
    %v4662 = vadd.f32 %v3844, %v4553
    %v4663 = vadd.f32 %v3845, %v4556
    %v4664 = vadd.f32 %v3846, %v4559
    %v4665 = vadd.f32 %v3847, %v4562
    %v4666 = vadd.f32 %v3848, %v4565
    %v4667 = vadd.f32 %v3849, %v4568
    %v4668 = vadd.f32 %v3850, %v4571
    %v4669 = vadd.f32 %v3851, %v4574
    %v4670 = vadd.f32 %v3852, %v4577
    %v4671 = vadd.f32 %v3853, %v4580
    %v4672 = vadd.f32 %v3854, %v4583
    %v4673 = vadd.f32 %v3855, %v4586
    %v4674 = vadd.f32 %v3856, %v4589
    %v4675 = vadd.f32 %v3857, %v4592
    %v4676 = vadd.f32 %v3858, %v4595
    %v4677 = vadd.f32 %v3859, %v4598
    %v4678 = vadd.f32 %v3860, %v4601
    %v4679 = vadd.f32 %v3861, %v4604
    %v4680 = vadd.f32 %v3862, %v4607
    %v4681 = vadd.f32 %v3863, %v4610
    %v4682 = vadd.f32 %v3864, %v4613
    %v4683 = vadd.f32 %v3865, %v4616
    %v4684 = vadd.f32 %v3866, %v4619
    %v4685 = vld [vmem:[#allocation2 + $0x18] sm:$0xff]
    %v4686 = vld [vmem:[#allocation2 + $0x20] sm:$0xff]
    %v4687 = vld [vmem:[#allocation2 + $0x28] sm:$0xff]
    %v4688 = vld [vmem:[#allocation2 + $0x30] sm:$0xff]
    %v4689 = vld [vmem:[#allocation2 + $0x38] sm:$0xff]
    %v4690 = vld [vmem:[#allocation2 + $0x40] sm:$0xff]
    %v4691 = vld [vmem:[#allocation2 + $0x48] sm:$0xff]
    %v4692 = vld [vmem:[#allocation2 + $0x50] sm:$0xff]
    %v4693 = vld [vmem:[#allocation2 + $0x58] sm:$0xff]
    %v4694 = vld [vmem:[#allocation2 + $0x60] sm:$0xff]
    %v4695 = vld [vmem:[#allocation2 + $0x68] sm:$0xff]
    %v4696 = vld [vmem:[#allocation2 + $0x70] sm:$0xff]
    %v4697 = vld [vmem:[#allocation2 + $0x78] sm:$0xff]
    %v4698 = vld [vmem:[#allocation2 + $0x80] sm:$0xff]
    %v4699 = vld [vmem:[#allocation2 + $0x88] sm:$0xff]
    %v4700 = vld [vmem:[#allocation2 + $0x90] sm:$0xff]
    %v4701 = vld [vmem:[#allocation2 + $0x98] sm:$0xff]
    %v4702 = vld [vmem:[#allocation2 + $0xa0] sm:$0xff]
    %v4703 = vld [vmem:[#allocation2 + $0xa8] sm:$0xff]
    %v4704 = vld [vmem:[#allocation2 + $0xb0] sm:$0xff]
    %v4705 = vld [vmem:[#allocation2 + $0xb8] sm:$0xff]
    %v4706 = vld [vmem:[#allocation2 + $0xc0] sm:$0xff]
    %v4707 = vld [vmem:[#allocation2 + $0xc8] sm:$0xff]
    %v4708 = vld [vmem:[#allocation2 + $0xd0] sm:$0xff]
    %v4709 = vld [vmem:[#allocation2 + $0xd8] sm:$0xff]
    %v4710 = vld [vmem:[#allocation2 + $0xe0] sm:$0xff]
    %v4711 = vld [vmem:[#allocation2 + $0xe8] sm:$0xff]
    %v4712 = vld [vmem:[#allocation2 + $0xf0] sm:$0xff]
    %v4713 = vld [vmem:[#allocation2 + $0xf8] sm:$0xff]
    %v4714 = vld [vmem:[#allocation2 + $0x100] sm:$0xff]
    %v4715 = vld [vmem:[#allocation2 + $0x108] sm:$0xff]
    %v4716 = vld [vmem:[#allocation2 + $0x110] sm:$0xff]
    %v4717 = vld [vmem:[#allocation2 + $0x118] sm:$0xff]
    %v4718 = vld [vmem:[#allocation2 + $0x120] sm:$0xff]
    %v4719 = vld [vmem:[#allocation2 + $0x128] sm:$0xff]
    %v4720 = vld [vmem:[#allocation2 + $0x130] sm:$0xff]
    %v4721 = vld [vmem:[#allocation2 + $0x138] sm:$0xff]
    %v4722 = vld [vmem:[#allocation2 + $0x140] sm:$0xff]
    %v4723 = vld [vmem:[#allocation2 + $0x148] sm:$0xff]
    %v4724 = vld [vmem:[#allocation2 + $0x150] sm:$0xff]
    %v4725 = vld [vmem:[#allocation2 + $0x158] sm:$0xff]
    %v4726 = vld [vmem:[#allocation2 + $0x160] sm:$0xff]
    %v4727 = vld [vmem:[#allocation2 + $0x168] sm:$0xff]
    %v4728 = vld [vmem:[#allocation2 + $0x170] sm:$0xff]
    %v4729 = vld [vmem:[#allocation2 + $0x178] sm:$0xff]
    %v4730 = vld [vmem:[#allocation2 + $0x180] sm:$0xff]
    %v4731 = vld [vmem:[#allocation2 + $0x188] sm:$0xff]
    %v4732 = vld [vmem:[#allocation2 + $0x190] sm:$0xff]
    %v4733 = vld [vmem:[#allocation2 + $0x198] sm:$0xff]
    %v4734 = vld [vmem:[#allocation2 + $0x1a0] sm:$0xff]
    %v4735 = vld [vmem:[#allocation2 + $0x1a8] sm:$0xff]
    %v4736 = vld [vmem:[#allocation2 + $0x1b0] sm:$0xff]
    %v4737 = vld [vmem:[#allocation2 + $0x1b8] sm:$0xff]
    %v4738 = vld [vmem:[#allocation2 + $0x1c0] sm:$0xff]
    %v4739 = vld [vmem:[#allocation2 + $0x1c8] sm:$0xff]
    %v4740 = vld [vmem:[#allocation2 + $0x1d0] sm:$0xff]
    %v4741 = vld [vmem:[#allocation2 + $0x1d8] sm:$0xff]
    %v4742 = vld [vmem:[#allocation2 + $0x1e0] sm:$0xff]
    %v4743 = vld [vmem:[#allocation2 + $0x1e8] sm:$0xff]
    %v4744 = vld [vmem:[#allocation2 + $0x1f0] sm:$0xff]
    %v4745 = vld [vmem:[#allocation2 + $0x1f8] sm:$0xff]
    %v4746 = vld [vmem:[#allocation2 + $0x200] sm:$0xff]
    %v4747 = vld [vmem:[#allocation2 + $0x208] sm:$0xff]
    %v4748 = vld [vmem:[#allocation2 + $0x210] sm:$0xff]
    %s4749 = scalar_lea.vmem [#allocation8], 256
    %v4750 = vld [vmem:[%s4749] sm:$0xf]
    %v4751 = vld [vmem:[%s4749 + $0x4] sm:$0xf]
    %v4752 = vld [vmem:[%s4749 + $0x8] sm:$0xf]
    %v4753 = vld [vmem:[%s4749 + $0xc] sm:$0xf]
    %v4754 = vld [vmem:[%s4749 + $0x10] sm:$0xf]
    %v4755 = vld [vmem:[%s4749 + $0x14] sm:$0xf]
    %v4756 = vld [vmem:[%s4749 + $0x18] sm:$0xf]
    %v4757 = vld [vmem:[%s4749 + $0x1c] sm:$0xf]
    %v4758 = vld [vmem:[%s4749 + $0x20] sm:$0xf]
    %v4759 = vld [vmem:[%s4749 + $0x24] sm:$0xf]
    %v4760 = vld [vmem:[%s4749 + $0x28] sm:$0xf]
    %v4761 = vld [vmem:[%s4749 + $0x2c] sm:$0xf]
    %v4762 = vld [vmem:[%s4749 + $0x30] sm:$0xf]
    %v4763 = vld [vmem:[%s4749 + $0x34] sm:$0xf]
    %v4764 = vld [vmem:[%s4749 + $0x38] sm:$0xf]
    %v4765 = vld [vmem:[%s4749 + $0x3c] sm:$0xf]
    %v4766 = vunpack.c.l.bf16 %v4750
    %v4767 = vunpack.c.l.bf16 %v4751
    %v4768 = vunpack.c.l.bf16 %v4752
    %v4769 = vunpack.c.l.bf16 %v4753
    %v4770 = vunpack.c.l.bf16 %v4754
    %v4771 = vunpack.c.l.bf16 %v4755
    %v4772 = vunpack.c.l.bf16 %v4756
    %v4773 = vunpack.c.l.bf16 %v4757
    %v4774 = vunpack.c.l.bf16 %v4758
    %v4775 = vunpack.c.l.bf16 %v4759
    %v4776 = vunpack.c.l.bf16 %v4760
    %v4777 = vunpack.c.l.bf16 %v4761
    %v4778 = vunpack.c.l.bf16 %v4762
    %v4779 = vunpack.c.l.bf16 %v4763
    %v4780 = vunpack.c.l.bf16 %v4764
    %v4781 = vunpack.c.l.bf16 %v4765
    %4782 = vmatpush.msra.mxu0 %v4781
    %4783 = vmatpush.msra.mxu0 %v4780
    %4784 = vmatpush.msra.mxu0 %v4779
    %4785 = vmatpush.msra.mxu0 %v4778
    %4786 = vmatpush.msra.mxu0 %v4777
    %4787 = vmatpush.msra.mxu0 %v4776
    %4788 = vmatpush.msra.mxu0 %v4775
    %4789 = vmatpush.msra.mxu0 %v4774
    %4790 = vmatpush.msra.mxu0 %v4773
    %4791 = vmatpush.msra.mxu0 %v4772
    %4792 = vmatpush.msra.mxu0 %v4771
    %4793 = vmatpush.msra.mxu0 %v4770
    %4794 = vmatpush.msra.mxu0 %v4769
    %4795 = vmatpush.msra.mxu0 %v4768
    %4796 = vmatpush.msra.mxu0 %v4767
    %4797 = vmatpush.msra.mxu0 %v4766
    %4798 = vmatmul.f32.gmra.mxu0 %v4685
    %v4799 = vpop.f32.mrf.mxu0
    %v4800 = vadd.f32 0.0, %v4799
    %4801 = vmatmul.f32.gmra.mxu0 %v4686
    %v4802 = vpop.f32.mrf.mxu0
    %v4803 = vadd.f32 0.0, %v4802
    %4804 = vmatmul.f32.gmra.mxu0 %v4687
    %v4805 = vpop.f32.mrf.mxu0
    %v4806 = vadd.f32 0.0, %v4805
    %4807 = vmatmul.f32.gmra.mxu0 %v4688
    %v4808 = vpop.f32.mrf.mxu0
    %v4809 = vadd.f32 0.0, %v4808
    %4810 = vmatmul.f32.gmra.mxu0 %v4689
    %v4811 = vpop.f32.mrf.mxu0
    %v4812 = vadd.f32 0.0, %v4811
    %4813 = vmatmul.f32.gmra.mxu0 %v4690
    %v4814 = vpop.f32.mrf.mxu0
    %v4815 = vadd.f32 0.0, %v4814
    %4816 = vmatmul.f32.gmra.mxu0 %v4691
    %v4817 = vpop.f32.mrf.mxu0
    %v4818 = vadd.f32 0.0, %v4817
    %4819 = vmatmul.f32.gmra.mxu0 %v4692
    %v4820 = vpop.f32.mrf.mxu0
    %v4821 = vadd.f32 0.0, %v4820
    %4822 = vmatmul.f32.gmra.mxu0 %v4693
    %v4823 = vpop.f32.mrf.mxu0
    %v4824 = vadd.f32 0.0, %v4823
    %4825 = vmatmul.f32.gmra.mxu0 %v4694
    %v4826 = vpop.f32.mrf.mxu0
    %v4827 = vadd.f32 0.0, %v4826
    %4828 = vmatmul.f32.gmra.mxu0 %v4695
    %v4829 = vpop.f32.mrf.mxu0
    %v4830 = vadd.f32 0.0, %v4829
    %4831 = vmatmul.f32.gmra.mxu0 %v4696
    %v4832 = vpop.f32.mrf.mxu0
    %v4833 = vadd.f32 0.0, %v4832
    %4834 = vmatmul.f32.gmra.mxu0 %v4697
    %v4835 = vpop.f32.mrf.mxu0
    %v4836 = vadd.f32 0.0, %v4835
    %4837 = vmatmul.f32.gmra.mxu0 %v4698
    %v4838 = vpop.f32.mrf.mxu0
    %v4839 = vadd.f32 0.0, %v4838
    %4840 = vmatmul.f32.gmra.mxu0 %v4699
    %v4841 = vpop.f32.mrf.mxu0
    %v4842 = vadd.f32 0.0, %v4841
    %4843 = vmatmul.f32.gmra.mxu0 %v4700
    %v4844 = vpop.f32.mrf.mxu0
    %v4845 = vadd.f32 0.0, %v4844
    %4846 = vmatmul.f32.gmra.mxu0 %v4701
    %v4847 = vpop.f32.mrf.mxu0
    %v4848 = vadd.f32 0.0, %v4847
    %4849 = vmatmul.f32.gmra.mxu0 %v4702
    %v4850 = vpop.f32.mrf.mxu0
    %v4851 = vadd.f32 0.0, %v4850
    %4852 = vmatmul.f32.gmra.mxu0 %v4703
    %v4853 = vpop.f32.mrf.mxu0
    %v4854 = vadd.f32 0.0, %v4853
    %4855 = vmatmul.f32.gmra.mxu0 %v4704
    %v4856 = vpop.f32.mrf.mxu0
    %v4857 = vadd.f32 0.0, %v4856
    %4858 = vmatmul.f32.gmra.mxu0 %v4705
    %v4859 = vpop.f32.mrf.mxu0
    %v4860 = vadd.f32 0.0, %v4859
    %4861 = vmatmul.f32.gmra.mxu0 %v4706
    %v4862 = vpop.f32.mrf.mxu0
    %v4863 = vadd.f32 0.0, %v4862
    %4864 = vmatmul.f32.gmra.mxu0 %v4707
    %v4865 = vpop.f32.mrf.mxu0
    %v4866 = vadd.f32 0.0, %v4865
    %4867 = vmatmul.f32.gmra.mxu0 %v4708
    %v4868 = vpop.f32.mrf.mxu0
    %v4869 = vadd.f32 0.0, %v4868
    %4870 = vmatmul.f32.gmra.mxu0 %v4709
    %v4871 = vpop.f32.mrf.mxu0
    %v4872 = vadd.f32 0.0, %v4871
    %4873 = vmatmul.f32.gmra.mxu0 %v4710
    %v4874 = vpop.f32.mrf.mxu0
    %v4875 = vadd.f32 0.0, %v4874
    %4876 = vmatmul.f32.gmra.mxu0 %v4711
    %v4877 = vpop.f32.mrf.mxu0
    %v4878 = vadd.f32 0.0, %v4877
    %4879 = vmatmul.f32.gmra.mxu0 %v4712
    %v4880 = vpop.f32.mrf.mxu0
    %v4881 = vadd.f32 0.0, %v4880
    %4882 = vmatmul.f32.gmra.mxu0 %v4713
    %v4883 = vpop.f32.mrf.mxu0
    %v4884 = vadd.f32 0.0, %v4883
    %4885 = vmatmul.f32.gmra.mxu0 %v4714
    %v4886 = vpop.f32.mrf.mxu0
    %v4887 = vadd.f32 0.0, %v4886
    %4888 = vmatmul.f32.gmra.mxu0 %v4715
    %v4889 = vpop.f32.mrf.mxu0
    %v4890 = vadd.f32 0.0, %v4889
    %4891 = vmatmul.f32.gmra.mxu0 %v4716
    %v4892 = vpop.f32.mrf.mxu0
    %v4893 = vadd.f32 0.0, %v4892
    %4894 = vmatmul.f32.gmra.mxu0 %v4717
    %v4895 = vpop.f32.mrf.mxu0
    %v4896 = vadd.f32 0.0, %v4895
    %4897 = vmatmul.f32.gmra.mxu0 %v4718
    %v4898 = vpop.f32.mrf.mxu0
    %v4899 = vadd.f32 0.0, %v4898
    %4900 = vmatmul.f32.gmra.mxu0 %v4719
    %v4901 = vpop.f32.mrf.mxu0
    %v4902 = vadd.f32 0.0, %v4901
    %4903 = vmatmul.f32.gmra.mxu0 %v4720
    %v4904 = vpop.f32.mrf.mxu0
    %v4905 = vadd.f32 0.0, %v4904
    %4906 = vmatmul.f32.gmra.mxu0 %v4721
    %v4907 = vpop.f32.mrf.mxu0
    %v4908 = vadd.f32 0.0, %v4907
    %4909 = vmatmul.f32.gmra.mxu0 %v4722
    %v4910 = vpop.f32.mrf.mxu0
    %v4911 = vadd.f32 0.0, %v4910
    %4912 = vmatmul.f32.gmra.mxu0 %v4723
    %v4913 = vpop.f32.mrf.mxu0
    %v4914 = vadd.f32 0.0, %v4913
    %4915 = vmatmul.f32.gmra.mxu0 %v4724
    %v4916 = vpop.f32.mrf.mxu0
    %v4917 = vadd.f32 0.0, %v4916
    %4918 = vmatmul.f32.gmra.mxu0 %v4725
    %v4919 = vpop.f32.mrf.mxu0
    %v4920 = vadd.f32 0.0, %v4919
    %4921 = vmatmul.f32.gmra.mxu0 %v4726
    %v4922 = vpop.f32.mrf.mxu0
    %v4923 = vadd.f32 0.0, %v4922
    %4924 = vmatmul.f32.gmra.mxu0 %v4727
    %v4925 = vpop.f32.mrf.mxu0
    %v4926 = vadd.f32 0.0, %v4925
    %4927 = vmatmul.f32.gmra.mxu0 %v4728
    %v4928 = vpop.f32.mrf.mxu0
    %v4929 = vadd.f32 0.0, %v4928
    %4930 = vmatmul.f32.gmra.mxu0 %v4729
    %v4931 = vpop.f32.mrf.mxu0
    %v4932 = vadd.f32 0.0, %v4931
    %4933 = vmatmul.f32.gmra.mxu0 %v4730
    %v4934 = vpop.f32.mrf.mxu0
    %v4935 = vadd.f32 0.0, %v4934
    %4936 = vmatmul.f32.gmra.mxu0 %v4731
    %v4937 = vpop.f32.mrf.mxu0
    %v4938 = vadd.f32 0.0, %v4937
    %4939 = vmatmul.f32.gmra.mxu0 %v4732
    %v4940 = vpop.f32.mrf.mxu0
    %v4941 = vadd.f32 0.0, %v4940
    %4942 = vmatmul.f32.gmra.mxu0 %v4733
    %v4943 = vpop.f32.mrf.mxu0
    %v4944 = vadd.f32 0.0, %v4943
    %4945 = vmatmul.f32.gmra.mxu0 %v4734
    %v4946 = vpop.f32.mrf.mxu0
    %v4947 = vadd.f32 0.0, %v4946
    %4948 = vmatmul.f32.gmra.mxu0 %v4735
    %v4949 = vpop.f32.mrf.mxu0
    %v4950 = vadd.f32 0.0, %v4949
    %4951 = vmatmul.f32.gmra.mxu0 %v4736
    %v4952 = vpop.f32.mrf.mxu0
    %v4953 = vadd.f32 0.0, %v4952
    %4954 = vmatmul.f32.gmra.mxu0 %v4737
    %v4955 = vpop.f32.mrf.mxu0
    %v4956 = vadd.f32 0.0, %v4955
    %4957 = vmatmul.f32.gmra.mxu0 %v4738
    %v4958 = vpop.f32.mrf.mxu0
    %v4959 = vadd.f32 0.0, %v4958
    %4960 = vmatmul.f32.gmra.mxu0 %v4739
    %v4961 = vpop.f32.mrf.mxu0
    %v4962 = vadd.f32 0.0, %v4961
    %4963 = vmatmul.f32.gmra.mxu0 %v4740
    %v4964 = vpop.f32.mrf.mxu0
    %v4965 = vadd.f32 0.0, %v4964
    %4966 = vmatmul.f32.gmra.mxu0 %v4741
    %v4967 = vpop.f32.mrf.mxu0
    %v4968 = vadd.f32 0.0, %v4967
    %4969 = vmatmul.f32.gmra.mxu0 %v4742
    %v4970 = vpop.f32.mrf.mxu0
    %v4971 = vadd.f32 0.0, %v4970
    %4972 = vmatmul.f32.gmra.mxu0 %v4743
    %v4973 = vpop.f32.mrf.mxu0
    %v4974 = vadd.f32 0.0, %v4973
    %4975 = vmatmul.f32.gmra.mxu0 %v4744
    %v4976 = vpop.f32.mrf.mxu0
    %v4977 = vadd.f32 0.0, %v4976
    %4978 = vmatmul.f32.gmra.mxu0 %v4745
    %v4979 = vpop.f32.mrf.mxu0
    %v4980 = vadd.f32 0.0, %v4979
    %4981 = vmatmul.f32.gmra.mxu0 %v4746
    %v4982 = vpop.f32.mrf.mxu0
    %v4983 = vadd.f32 0.0, %v4982
    %4984 = vmatmul.f32.gmra.mxu0 %v4747
    %v4985 = vpop.f32.mrf.mxu0
    %v4986 = vadd.f32 0.0, %v4985
    %4987 = vmatmul.f32.gmra.mxu0 %v4748
    %v4988 = vpop.f32.mrf.mxu0
    %v4989 = vadd.f32 0.0, %v4988
    %4990 = vdwg.mxu0
    %v4991 = vadd.f32 %v4621, %v4800
    %v4992 = vadd.f32 %v4622, %v4803
    %v4993 = vadd.f32 %v4623, %v4806
    %v4994 = vadd.f32 %v4624, %v4809
    %v4995 = vadd.f32 %v4625, %v4812
    %v4996 = vadd.f32 %v4626, %v4815
    %v4997 = vadd.f32 %v4627, %v4818
    %v4998 = vadd.f32 %v4628, %v4821
    %v4999 = vadd.f32 %v4629, %v4824
    %v5000 = vadd.f32 %v4630, %v4827
    %v5001 = vadd.f32 %v4631, %v4830
    %v5002 = vadd.f32 %v4632, %v4833
    %v5003 = vadd.f32 %v4633, %v4836
    %v5004 = vadd.f32 %v4634, %v4839
    %v5005 = vadd.f32 %v4635, %v4842
    %v5006 = vadd.f32 %v4636, %v4845
    %v5007 = vadd.f32 %v4637, %v4848
    %v5008 = vadd.f32 %v4638, %v4851
    %v5009 = vadd.f32 %v4639, %v4854
    %v5010 = vadd.f32 %v4640, %v4857
    %v5011 = vadd.f32 %v4641, %v4860
    %v5012 = vadd.f32 %v4642, %v4863
    %v5013 = vadd.f32 %v4643, %v4866
    %v5014 = vadd.f32 %v4644, %v4869
    %v5015 = vadd.f32 %v4645, %v4872
    %v5016 = vadd.f32 %v4646, %v4875
    %v5017 = vadd.f32 %v4647, %v4878
    %v5018 = vadd.f32 %v4648, %v4881
    %v5019 = vadd.f32 %v4649, %v4884
    %v5020 = vadd.f32 %v4650, %v4887
    %v5021 = vadd.f32 %v4651, %v4890
    %v5022 = vadd.f32 %v4652, %v4893
    %v5023 = vadd.f32 %v4653, %v4896
    %v5024 = vadd.f32 %v4654, %v4899
    %v5025 = vadd.f32 %v4655, %v4902
    %v5026 = vadd.f32 %v4656, %v4905
    %v5027 = vadd.f32 %v4657, %v4908
    %v5028 = vadd.f32 %v4658, %v4911
    %v5029 = vadd.f32 %v4659, %v4914
    %v5030 = vadd.f32 %v4660, %v4917
    %v5031 = vadd.f32 %v4661, %v4920
    %v5032 = vadd.f32 %v4662, %v4923
    %v5033 = vadd.f32 %v4663, %v4926
    %v5034 = vadd.f32 %v4664, %v4929
    %v5035 = vadd.f32 %v4665, %v4932
    %v5036 = vadd.f32 %v4666, %v4935
    %v5037 = vadd.f32 %v4667, %v4938
    %v5038 = vadd.f32 %v4668, %v4941
    %v5039 = vadd.f32 %v4669, %v4944
    %v5040 = vadd.f32 %v4670, %v4947
    %v5041 = vadd.f32 %v4671, %v4950
    %v5042 = vadd.f32 %v4672, %v4953
    %v5043 = vadd.f32 %v4673, %v4956
    %v5044 = vadd.f32 %v4674, %v4959
    %v5045 = vadd.f32 %v4675, %v4962
    %v5046 = vadd.f32 %v4676, %v4965
    %v5047 = vadd.f32 %v4677, %v4968
    %v5048 = vadd.f32 %v4678, %v4971
    %v5049 = vadd.f32 %v4679, %v4974
    %v5050 = vadd.f32 %v4680, %v4977
    %v5051 = vadd.f32 %v4681, %v4980
    %v5052 = vadd.f32 %v4682, %v4983
    %v5053 = vadd.f32 %v4683, %v4986
    %v5054 = vadd.f32 %v4684, %v4989
    %v5055 = vld [vmem:[#allocation2 + $0x19] sm:$0xff]
    %v5056 = vld [vmem:[#allocation2 + $0x21] sm:$0xff]
    %v5057 = vld [vmem:[#allocation2 + $0x29] sm:$0xff]
    %v5058 = vld [vmem:[#allocation2 + $0x31] sm:$0xff]
    %v5059 = vld [vmem:[#allocation2 + $0x39] sm:$0xff]
    %v5060 = vld [vmem:[#allocation2 + $0x41] sm:$0xff]
    %v5061 = vld [vmem:[#allocation2 + $0x49] sm:$0xff]
    %v5062 = vld [vmem:[#allocation2 + $0x51] sm:$0xff]
    %v5063 = vld [vmem:[#allocation2 + $0x59] sm:$0xff]
    %v5064 = vld [vmem:[#allocation2 + $0x61] sm:$0xff]
    %v5065 = vld [vmem:[#allocation2 + $0x69] sm:$0xff]
    %v5066 = vld [vmem:[#allocation2 + $0x71] sm:$0xff]
    %v5067 = vld [vmem:[#allocation2 + $0x79] sm:$0xff]
    %v5068 = vld [vmem:[#allocation2 + $0x81] sm:$0xff]
    %v5069 = vld [vmem:[#allocation2 + $0x89] sm:$0xff]
    %v5070 = vld [vmem:[#allocation2 + $0x91] sm:$0xff]
    %v5071 = vld [vmem:[#allocation2 + $0x99] sm:$0xff]
    %v5072 = vld [vmem:[#allocation2 + $0xa1] sm:$0xff]
    %v5073 = vld [vmem:[#allocation2 + $0xa9] sm:$0xff]
    %v5074 = vld [vmem:[#allocation2 + $0xb1] sm:$0xff]
    %v5075 = vld [vmem:[#allocation2 + $0xb9] sm:$0xff]
    %v5076 = vld [vmem:[#allocation2 + $0xc1] sm:$0xff]
    %v5077 = vld [vmem:[#allocation2 + $0xc9] sm:$0xff]
    %v5078 = vld [vmem:[#allocation2 + $0xd1] sm:$0xff]
    %v5079 = vld [vmem:[#allocation2 + $0xd9] sm:$0xff]
    %v5080 = vld [vmem:[#allocation2 + $0xe1] sm:$0xff]
    %v5081 = vld [vmem:[#allocation2 + $0xe9] sm:$0xff]
    %v5082 = vld [vmem:[#allocation2 + $0xf1] sm:$0xff]
    %v5083 = vld [vmem:[#allocation2 + $0xf9] sm:$0xff]
    %v5084 = vld [vmem:[#allocation2 + $0x101] sm:$0xff]
    %v5085 = vld [vmem:[#allocation2 + $0x109] sm:$0xff]
    %v5086 = vld [vmem:[#allocation2 + $0x111] sm:$0xff]
    %v5087 = vld [vmem:[#allocation2 + $0x119] sm:$0xff]
    %v5088 = vld [vmem:[#allocation2 + $0x121] sm:$0xff]
    %v5089 = vld [vmem:[#allocation2 + $0x129] sm:$0xff]
    %v5090 = vld [vmem:[#allocation2 + $0x131] sm:$0xff]
    %v5091 = vld [vmem:[#allocation2 + $0x139] sm:$0xff]
    %v5092 = vld [vmem:[#allocation2 + $0x141] sm:$0xff]
    %v5093 = vld [vmem:[#allocation2 + $0x149] sm:$0xff]
    %v5094 = vld [vmem:[#allocation2 + $0x151] sm:$0xff]
    %v5095 = vld [vmem:[#allocation2 + $0x159] sm:$0xff]
    %v5096 = vld [vmem:[#allocation2 + $0x161] sm:$0xff]
    %v5097 = vld [vmem:[#allocation2 + $0x169] sm:$0xff]
    %v5098 = vld [vmem:[#allocation2 + $0x171] sm:$0xff]
    %v5099 = vld [vmem:[#allocation2 + $0x179] sm:$0xff]
    %v5100 = vld [vmem:[#allocation2 + $0x181] sm:$0xff]
    %v5101 = vld [vmem:[#allocation2 + $0x189] sm:$0xff]
    %v5102 = vld [vmem:[#allocation2 + $0x191] sm:$0xff]
    %v5103 = vld [vmem:[#allocation2 + $0x199] sm:$0xff]
    %v5104 = vld [vmem:[#allocation2 + $0x1a1] sm:$0xff]
    %v5105 = vld [vmem:[#allocation2 + $0x1a9] sm:$0xff]
    %v5106 = vld [vmem:[#allocation2 + $0x1b1] sm:$0xff]
    %v5107 = vld [vmem:[#allocation2 + $0x1b9] sm:$0xff]
    %v5108 = vld [vmem:[#allocation2 + $0x1c1] sm:$0xff]
    %v5109 = vld [vmem:[#allocation2 + $0x1c9] sm:$0xff]
    %v5110 = vld [vmem:[#allocation2 + $0x1d1] sm:$0xff]
    %v5111 = vld [vmem:[#allocation2 + $0x1d9] sm:$0xff]
    %v5112 = vld [vmem:[#allocation2 + $0x1e1] sm:$0xff]
    %v5113 = vld [vmem:[#allocation2 + $0x1e9] sm:$0xff]
    %v5114 = vld [vmem:[#allocation2 + $0x1f1] sm:$0xff]
    %v5115 = vld [vmem:[#allocation2 + $0x1f9] sm:$0xff]
    %v5116 = vld [vmem:[#allocation2 + $0x201] sm:$0xff]
    %v5117 = vld [vmem:[#allocation2 + $0x209] sm:$0xff]
    %v5118 = vld [vmem:[#allocation2 + $0x211] sm:$0xff]
    %vm5119 = vmand %vm3241, %vm4059
    %vm5120 = vmand %vm3242, %vm4060
    %vm5121 = vmand %vm3243, %vm4061
    %vm5122 = vmand %vm3244, %vm4062
    %vm5123 = vmand %vm3245, %vm4063
    %vm5124 = vmand %vm3246, %vm4064
    %vm5125 = vmand %vm3247, %vm4065
    %vm5126 = vmand %vm3248, %vm4066
    %vm5127 = vmand %vm3249, %vm4067
    %vm5128 = vmand %vm3250, %vm4068
    %vm5129 = vmand %vm3251, %vm4069
    %vm5130 = vmand %vm3252, %vm4070
    %vm5131 = vmand %vm3253, %vm4071
    %vm5132 = vmand %vm3254, %vm4072
    %vm5133 = vmand %vm3255, %vm4073
    %vm5134 = vmand %vm3256, %vm4074
    %vm5135 = vmand %vm3257, %vm4075
    %vm5136 = vmand %vm3258, %vm4076
    %vm5137 = vmand %vm3259, %vm4077
    %vm5138 = vmand %vm3260, %vm4078
    %vm5139 = vmand %vm3261, %vm4079
    %vm5140 = vmand %vm3262, %vm4080
    %vm5141 = vmand %vm3263, %vm4081
    %vm5142 = vmand %vm3264, %vm4082
    %vm5143 = vmand %vm3265, %vm4083
    %vm5144 = vmand %vm3266, %vm4084
    %vm5145 = vmand %vm3267, %vm4085
    %vm5146 = vmand %vm3268, %vm4086
    %vm5147 = vmand %vm3269, %vm4087
    %vm5148 = vmand %vm3270, %vm4088
    %vm5149 = vmand %vm3271, %vm4089
    %vm5150 = vmand %vm3272, %vm4090
    %vm5151 = vmand %vm3273, %vm4091
    %vm5152 = vmand %vm3274, %vm4092
    %vm5153 = vmand %vm3275, %vm4093
    %vm5154 = vmand %vm3276, %vm4094
    %vm5155 = vmand %vm3277, %vm4095
    %vm5156 = vmand %vm3278, %vm4096
    %vm5157 = vmand %vm3279, %vm4097
    %vm5158 = vmand %vm3280, %vm4098
    %vm5159 = vmand %vm3281, %vm4099
    %vm5160 = vmand %vm3282, %vm4100
    %vm5161 = vmand %vm3283, %vm4101
    %vm5162 = vmand %vm3284, %vm4102
    %vm5163 = vmand %vm3285, %vm4103
    %vm5164 = vmand %vm3286, %vm4104
    %vm5165 = vmand %vm3287, %vm4105
    %vm5166 = vmand %vm3288, %vm4106
    %vm5167 = vmand %vm3289, %vm4107
    %vm5168 = vmand %vm3290, %vm4108
    %vm5169 = vmand %vm3291, %vm4109
    %vm5170 = vmand %vm3292, %vm4110
    %vm5171 = vmand %vm3293, %vm4111
    %vm5172 = vmand %vm3294, %vm4112
    %vm5173 = vmand %vm3295, %vm4113
    %vm5174 = vmand %vm3296, %vm4114
    %vm5175 = vmand %vm3297, %vm4115
    %vm5176 = vmand %vm3298, %vm4116
    %vm5177 = vmand %vm3299, %vm4117
    %vm5178 = vmand %vm3300, %vm4118
    %vm5179 = vmand %vm3301, %vm4119
    %vm5180 = vmand %vm3302, %vm4120
    %vm5181 = vmand %vm3303, %vm4121
    %vm5182 = vmand %vm3304, %vm4122
    %v5183 = vsel %vm5119, 1, 0
    %v5184 = vsel %vm5120, 1, 0
    %v5185 = vsel %vm5121, 1, 0
    %v5186 = vsel %vm5122, 1, 0
    %v5187 = vsel %vm5123, 1, 0
    %v5188 = vsel %vm5124, 1, 0
    %v5189 = vsel %vm5125, 1, 0
    %v5190 = vsel %vm5126, 1, 0
    %v5191 = vsel %vm5127, 1, 0
    %v5192 = vsel %vm5128, 1, 0
    %v5193 = vsel %vm5129, 1, 0
    %v5194 = vsel %vm5130, 1, 0
    %v5195 = vsel %vm5131, 1, 0
    %v5196 = vsel %vm5132, 1, 0
    %v5197 = vsel %vm5133, 1, 0
    %v5198 = vsel %vm5134, 1, 0
    %v5199 = vsel %vm5135, 1, 0
    %v5200 = vsel %vm5136, 1, 0
    %v5201 = vsel %vm5137, 1, 0
    %v5202 = vsel %vm5138, 1, 0
    %v5203 = vsel %vm5139, 1, 0
    %v5204 = vsel %vm5140, 1, 0
    %v5205 = vsel %vm5141, 1, 0
    %v5206 = vsel %vm5142, 1, 0
    %v5207 = vsel %vm5143, 1, 0
    %v5208 = vsel %vm5144, 1, 0
    %v5209 = vsel %vm5145, 1, 0
    %v5210 = vsel %vm5146, 1, 0
    %v5211 = vsel %vm5147, 1, 0
    %v5212 = vsel %vm5148, 1, 0
    %v5213 = vsel %vm5149, 1, 0
    %v5214 = vsel %vm5150, 1, 0
    %v5215 = vsel %vm5151, 1, 0
    %v5216 = vsel %vm5152, 1, 0
    %v5217 = vsel %vm5153, 1, 0
    %v5218 = vsel %vm5154, 1, 0
    %v5219 = vsel %vm5155, 1, 0
    %v5220 = vsel %vm5156, 1, 0
    %v5221 = vsel %vm5157, 1, 0
    %v5222 = vsel %vm5158, 1, 0
    %v5223 = vsel %vm5159, 1, 0
    %v5224 = vsel %vm5160, 1, 0
    %v5225 = vsel %vm5161, 1, 0
    %v5226 = vsel %vm5162, 1, 0
    %v5227 = vsel %vm5163, 1, 0
    %v5228 = vsel %vm5164, 1, 0
    %v5229 = vsel %vm5165, 1, 0
    %v5230 = vsel %vm5166, 1, 0
    %v5231 = vsel %vm5167, 1, 0
    %v5232 = vsel %vm5168, 1, 0
    %v5233 = vsel %vm5169, 1, 0
    %v5234 = vsel %vm5170, 1, 0
    %v5235 = vsel %vm5171, 1, 0
    %v5236 = vsel %vm5172, 1, 0
    %v5237 = vsel %vm5173, 1, 0
    %v5238 = vsel %vm5174, 1, 0
    %v5239 = vsel %vm5175, 1, 0
    %v5240 = vsel %vm5176, 1, 0
    %v5241 = vsel %vm5177, 1, 0
    %v5242 = vsel %vm5178, 1, 0
    %v5243 = vsel %vm5179, 1, 0
    %v5244 = vsel %vm5180, 1, 0
    %v5245 = vsel %vm5181, 1, 0
    %v5246 = vsel %vm5182, 1, 0
    %vm5247 = vcmp.eq.s32.totalorder %v5183, 1
    %vm5248 = vcmp.eq.s32.totalorder %v5184, 1
    %vm5249 = vcmp.eq.s32.totalorder %v5185, 1
    %vm5250 = vcmp.eq.s32.totalorder %v5186, 1
    %vm5251 = vcmp.eq.s32.totalorder %v5187, 1
    %vm5252 = vcmp.eq.s32.totalorder %v5188, 1
    %vm5253 = vcmp.eq.s32.totalorder %v5189, 1
    %vm5254 = vcmp.eq.s32.totalorder %v5190, 1
    %vm5255 = vcmp.eq.s32.totalorder %v5191, 1
    %vm5256 = vcmp.eq.s32.totalorder %v5192, 1
    %vm5257 = vcmp.eq.s32.totalorder %v5193, 1
    %vm5258 = vcmp.eq.s32.totalorder %v5194, 1
    %vm5259 = vcmp.eq.s32.totalorder %v5195, 1
    %vm5260 = vcmp.eq.s32.totalorder %v5196, 1
    %vm5261 = vcmp.eq.s32.totalorder %v5197, 1
    %vm5262 = vcmp.eq.s32.totalorder %v5198, 1
    %vm5263 = vcmp.eq.s32.totalorder %v5199, 1
    %vm5264 = vcmp.eq.s32.totalorder %v5200, 1
    %vm5265 = vcmp.eq.s32.totalorder %v5201, 1
    %vm5266 = vcmp.eq.s32.totalorder %v5202, 1
    %vm5267 = vcmp.eq.s32.totalorder %v5203, 1
    %vm5268 = vcmp.eq.s32.totalorder %v5204, 1
    %vm5269 = vcmp.eq.s32.totalorder %v5205, 1
    %vm5270 = vcmp.eq.s32.totalorder %v5206, 1
    %vm5271 = vcmp.eq.s32.totalorder %v5207, 1
    %vm5272 = vcmp.eq.s32.totalorder %v5208, 1
    %vm5273 = vcmp.eq.s32.totalorder %v5209, 1
    %vm5274 = vcmp.eq.s32.totalorder %v5210, 1
    %vm5275 = vcmp.eq.s32.totalorder %v5211, 1
    %vm5276 = vcmp.eq.s32.totalorder %v5212, 1
    %vm5277 = vcmp.eq.s32.totalorder %v5213, 1
    %vm5278 = vcmp.eq.s32.totalorder %v5214, 1
    %vm5279 = vcmp.eq.s32.totalorder %v5215, 1
    %vm5280 = vcmp.eq.s32.totalorder %v5216, 1
    %vm5281 = vcmp.eq.s32.totalorder %v5217, 1
    %vm5282 = vcmp.eq.s32.totalorder %v5218, 1
    %vm5283 = vcmp.eq.s32.totalorder %v5219, 1
    %vm5284 = vcmp.eq.s32.totalorder %v5220, 1
    %vm5285 = vcmp.eq.s32.totalorder %v5221, 1
    %vm5286 = vcmp.eq.s32.totalorder %v5222, 1
    %vm5287 = vcmp.eq.s32.totalorder %v5223, 1
    %vm5288 = vcmp.eq.s32.totalorder %v5224, 1
    %vm5289 = vcmp.eq.s32.totalorder %v5225, 1
    %vm5290 = vcmp.eq.s32.totalorder %v5226, 1
    %vm5291 = vcmp.eq.s32.totalorder %v5227, 1
    %vm5292 = vcmp.eq.s32.totalorder %v5228, 1
    %vm5293 = vcmp.eq.s32.totalorder %v5229, 1
    %vm5294 = vcmp.eq.s32.totalorder %v5230, 1
    %vm5295 = vcmp.eq.s32.totalorder %v5231, 1
    %vm5296 = vcmp.eq.s32.totalorder %v5232, 1
    %vm5297 = vcmp.eq.s32.totalorder %v5233, 1
    %vm5298 = vcmp.eq.s32.totalorder %v5234, 1
    %vm5299 = vcmp.eq.s32.totalorder %v5235, 1
    %vm5300 = vcmp.eq.s32.totalorder %v5236, 1
    %vm5301 = vcmp.eq.s32.totalorder %v5237, 1
    %vm5302 = vcmp.eq.s32.totalorder %v5238, 1
    %vm5303 = vcmp.eq.s32.totalorder %v5239, 1
    %vm5304 = vcmp.eq.s32.totalorder %v5240, 1
    %vm5305 = vcmp.eq.s32.totalorder %v5241, 1
    %vm5306 = vcmp.eq.s32.totalorder %v5242, 1
    %vm5307 = vcmp.eq.s32.totalorder %v5243, 1
    %vm5308 = vcmp.eq.s32.totalorder %v5244, 1
    %vm5309 = vcmp.eq.s32.totalorder %v5245, 1
    %vm5310 = vcmp.eq.s32.totalorder %v5246, 1
    %v5311 = vsel %vm5247, %v5055, 0.0
    %v5312 = vsel %vm5248, %v5056, 0.0
    %v5313 = vsel %vm5249, %v5057, 0.0
    %v5314 = vsel %vm5250, %v5058, 0.0
    %v5315 = vsel %vm5251, %v5059, 0.0
    %v5316 = vsel %vm5252, %v5060, 0.0
    %v5317 = vsel %vm5253, %v5061, 0.0
    %v5318 = vsel %vm5254, %v5062, 0.0
    %v5319 = vsel %vm5255, %v5063, 0.0
    %v5320 = vsel %vm5256, %v5064, 0.0
    %v5321 = vsel %vm5257, %v5065, 0.0
    %v5322 = vsel %vm5258, %v5066, 0.0
    %v5323 = vsel %vm5259, %v5067, 0.0
    %v5324 = vsel %vm5260, %v5068, 0.0
    %v5325 = vsel %vm5261, %v5069, 0.0
    %v5326 = vsel %vm5262, %v5070, 0.0
    %v5327 = vsel %vm5263, %v5071, 0.0
    %v5328 = vsel %vm5264, %v5072, 0.0
    %v5329 = vsel %vm5265, %v5073, 0.0
    %v5330 = vsel %vm5266, %v5074, 0.0
    %v5331 = vsel %vm5267, %v5075, 0.0
    %v5332 = vsel %vm5268, %v5076, 0.0
    %v5333 = vsel %vm5269, %v5077, 0.0
    %v5334 = vsel %vm5270, %v5078, 0.0
    %v5335 = vsel %vm5271, %v5079, 0.0
    %v5336 = vsel %vm5272, %v5080, 0.0
    %v5337 = vsel %vm5273, %v5081, 0.0
    %v5338 = vsel %vm5274, %v5082, 0.0
    %v5339 = vsel %vm5275, %v5083, 0.0
    %v5340 = vsel %vm5276, %v5084, 0.0
    %v5341 = vsel %vm5277, %v5085, 0.0
    %v5342 = vsel %vm5278, %v5086, 0.0
    %v5343 = vsel %vm5279, %v5087, 0.0
    %v5344 = vsel %vm5280, %v5088, 0.0
    %v5345 = vsel %vm5281, %v5089, 0.0
    %v5346 = vsel %vm5282, %v5090, 0.0
    %v5347 = vsel %vm5283, %v5091, 0.0
    %v5348 = vsel %vm5284, %v5092, 0.0
    %v5349 = vsel %vm5285, %v5093, 0.0
    %v5350 = vsel %vm5286, %v5094, 0.0
    %v5351 = vsel %vm5287, %v5095, 0.0
    %v5352 = vsel %vm5288, %v5096, 0.0
    %v5353 = vsel %vm5289, %v5097, 0.0
    %v5354 = vsel %vm5290, %v5098, 0.0
    %v5355 = vsel %vm5291, %v5099, 0.0
    %v5356 = vsel %vm5292, %v5100, 0.0
    %v5357 = vsel %vm5293, %v5101, 0.0
    %v5358 = vsel %vm5294, %v5102, 0.0
    %v5359 = vsel %vm5295, %v5103, 0.0
    %v5360 = vsel %vm5296, %v5104, 0.0
    %v5361 = vsel %vm5297, %v5105, 0.0
    %v5362 = vsel %vm5298, %v5106, 0.0
    %v5363 = vsel %vm5299, %v5107, 0.0
    %v5364 = vsel %vm5300, %v5108, 0.0
    %v5365 = vsel %vm5301, %v5109, 0.0
    %v5366 = vsel %vm5302, %v5110, 0.0
    %v5367 = vsel %vm5303, %v5111, 0.0
    %v5368 = vsel %vm5304, %v5112, 0.0
    %v5369 = vsel %vm5305, %v5113, 0.0
    %v5370 = vsel %vm5306, %v5114, 0.0
    %v5371 = vsel %vm5307, %v5115, 0.0
    %v5372 = vsel %vm5308, %v5116, 0.0
    %v5373 = vsel %vm5309, %v5117, 0.0
    %v5374 = vsel %vm5310, %v5118, 0.0
    %s5375 = scalar_lea.vmem [#allocation8], 320
    %v5376 = vld [vmem:[%s5375] sm:$0xf]
    %v5377 = vld [vmem:[%s5375 + $0x4] sm:$0xf]
    %v5378 = vld [vmem:[%s5375 + $0x8] sm:$0xf]
    %v5379 = vld [vmem:[%s5375 + $0xc] sm:$0xf]
    %v5380 = vld [vmem:[%s5375 + $0x10] sm:$0xf]
    %v5381 = vld [vmem:[%s5375 + $0x14] sm:$0xf]
    %v5382 = vld [vmem:[%s5375 + $0x18] sm:$0xf]
    %v5383 = vld [vmem:[%s5375 + $0x1c] sm:$0xf]
    %v5384 = vld [vmem:[%s5375 + $0x20] sm:$0xf]
    %v5385 = vld [vmem:[%s5375 + $0x24] sm:$0xf]
    %v5386 = vld [vmem:[%s5375 + $0x28] sm:$0xf]
    %v5387 = vld [vmem:[%s5375 + $0x2c] sm:$0xf]
    %v5388 = vld [vmem:[%s5375 + $0x30] sm:$0xf]
    %v5389 = vld [vmem:[%s5375 + $0x34] sm:$0xf]
    %v5390 = vld [vmem:[%s5375 + $0x38] sm:$0xf]
    %v5391 = vld [vmem:[%s5375 + $0x3c] sm:$0xf]
    %v5392 = vunpack.c.l.bf16 %v5376
    %v5393 = vunpack.c.l.bf16 %v5377
    %v5394 = vunpack.c.l.bf16 %v5378
    %v5395 = vunpack.c.l.bf16 %v5379
    %v5396 = vunpack.c.l.bf16 %v5380
    %v5397 = vunpack.c.l.bf16 %v5381
    %v5398 = vunpack.c.l.bf16 %v5382
    %v5399 = vunpack.c.l.bf16 %v5383
    %v5400 = vunpack.c.l.bf16 %v5384
    %v5401 = vunpack.c.l.bf16 %v5385
    %v5402 = vunpack.c.l.bf16 %v5386
    %v5403 = vunpack.c.l.bf16 %v5387
    %v5404 = vunpack.c.l.bf16 %v5388
    %v5405 = vunpack.c.l.bf16 %v5389
    %v5406 = vunpack.c.l.bf16 %v5390
    %v5407 = vunpack.c.l.bf16 %v5391
    %5408 = vmatpush.msra.mxu0 %v5407
    %5409 = vmatpush.msra.mxu0 %v5406
    %5410 = vmatpush.msra.mxu0 %v5405
    %5411 = vmatpush.msra.mxu0 %v5404
    %5412 = vmatpush.msra.mxu0 %v5403
    %5413 = vmatpush.msra.mxu0 %v5402
    %5414 = vmatpush.msra.mxu0 %v5401
    %5415 = vmatpush.msra.mxu0 %v5400
    %5416 = vmatpush.msra.mxu0 %v5399
    %5417 = vmatpush.msra.mxu0 %v5398
    %5418 = vmatpush.msra.mxu0 %v5397
    %5419 = vmatpush.msra.mxu0 %v5396
    %5420 = vmatpush.msra.mxu0 %v5395
    %5421 = vmatpush.msra.mxu0 %v5394
    %5422 = vmatpush.msra.mxu0 %v5393
    %5423 = vmatpush.msra.mxu0 %v5392
    %5424 = vmatmul.f32.gmra.mxu0 %v5311
    %v5425 = vpop.f32.mrf.mxu0
    %v5426 = vadd.f32 0.0, %v5425
    %5427 = vmatmul.f32.gmra.mxu0 %v5312
    %v5428 = vpop.f32.mrf.mxu0
    %v5429 = vadd.f32 0.0, %v5428
    %5430 = vmatmul.f32.gmra.mxu0 %v5313
    %v5431 = vpop.f32.mrf.mxu0
    %v5432 = vadd.f32 0.0, %v5431
    %5433 = vmatmul.f32.gmra.mxu0 %v5314
    %v5434 = vpop.f32.mrf.mxu0
    %v5435 = vadd.f32 0.0, %v5434
    %5436 = vmatmul.f32.gmra.mxu0 %v5315
    %v5437 = vpop.f32.mrf.mxu0
    %v5438 = vadd.f32 0.0, %v5437
    %5439 = vmatmul.f32.gmra.mxu0 %v5316
    %v5440 = vpop.f32.mrf.mxu0
    %v5441 = vadd.f32 0.0, %v5440
    %5442 = vmatmul.f32.gmra.mxu0 %v5317
    %v5443 = vpop.f32.mrf.mxu0
    %v5444 = vadd.f32 0.0, %v5443
    %5445 = vmatmul.f32.gmra.mxu0 %v5318
    %v5446 = vpop.f32.mrf.mxu0
    %v5447 = vadd.f32 0.0, %v5446
    %5448 = vmatmul.f32.gmra.mxu0 %v5319
    %v5449 = vpop.f32.mrf.mxu0
    %v5450 = vadd.f32 0.0, %v5449
    %5451 = vmatmul.f32.gmra.mxu0 %v5320
    %v5452 = vpop.f32.mrf.mxu0
    %v5453 = vadd.f32 0.0, %v5452
    %5454 = vmatmul.f32.gmra.mxu0 %v5321
    %v5455 = vpop.f32.mrf.mxu0
    %v5456 = vadd.f32 0.0, %v5455
    %5457 = vmatmul.f32.gmra.mxu0 %v5322
    %v5458 = vpop.f32.mrf.mxu0
    %v5459 = vadd.f32 0.0, %v5458
    %5460 = vmatmul.f32.gmra.mxu0 %v5323
    %v5461 = vpop.f32.mrf.mxu0
    %v5462 = vadd.f32 0.0, %v5461
    %5463 = vmatmul.f32.gmra.mxu0 %v5324
    %v5464 = vpop.f32.mrf.mxu0
    %v5465 = vadd.f32 0.0, %v5464
    %5466 = vmatmul.f32.gmra.mxu0 %v5325
    %v5467 = vpop.f32.mrf.mxu0
    %v5468 = vadd.f32 0.0, %v5467
    %5469 = vmatmul.f32.gmra.mxu0 %v5326
    %v5470 = vpop.f32.mrf.mxu0
    %v5471 = vadd.f32 0.0, %v5470
    %5472 = vmatmul.f32.gmra.mxu0 %v5327
    %v5473 = vpop.f32.mrf.mxu0
    %v5474 = vadd.f32 0.0, %v5473
    %5475 = vmatmul.f32.gmra.mxu0 %v5328
    %v5476 = vpop.f32.mrf.mxu0
    %v5477 = vadd.f32 0.0, %v5476
    %5478 = vmatmul.f32.gmra.mxu0 %v5329
    %v5479 = vpop.f32.mrf.mxu0
    %v5480 = vadd.f32 0.0, %v5479
    %5481 = vmatmul.f32.gmra.mxu0 %v5330
    %v5482 = vpop.f32.mrf.mxu0
    %v5483 = vadd.f32 0.0, %v5482
    %5484 = vmatmul.f32.gmra.mxu0 %v5331
    %v5485 = vpop.f32.mrf.mxu0
    %v5486 = vadd.f32 0.0, %v5485
    %5487 = vmatmul.f32.gmra.mxu0 %v5332
    %v5488 = vpop.f32.mrf.mxu0
    %v5489 = vadd.f32 0.0, %v5488
    %5490 = vmatmul.f32.gmra.mxu0 %v5333
    %v5491 = vpop.f32.mrf.mxu0
    %v5492 = vadd.f32 0.0, %v5491
    %5493 = vmatmul.f32.gmra.mxu0 %v5334
    %v5494 = vpop.f32.mrf.mxu0
    %v5495 = vadd.f32 0.0, %v5494
    %5496 = vmatmul.f32.gmra.mxu0 %v5335
    %v5497 = vpop.f32.mrf.mxu0
    %v5498 = vadd.f32 0.0, %v5497
    %5499 = vmatmul.f32.gmra.mxu0 %v5336
    %v5500 = vpop.f32.mrf.mxu0
    %v5501 = vadd.f32 0.0, %v5500
    %5502 = vmatmul.f32.gmra.mxu0 %v5337
    %v5503 = vpop.f32.mrf.mxu0
    %v5504 = vadd.f32 0.0, %v5503
    %5505 = vmatmul.f32.gmra.mxu0 %v5338
    %v5506 = vpop.f32.mrf.mxu0
    %v5507 = vadd.f32 0.0, %v5506
    %5508 = vmatmul.f32.gmra.mxu0 %v5339
    %v5509 = vpop.f32.mrf.mxu0
    %v5510 = vadd.f32 0.0, %v5509
    %5511 = vmatmul.f32.gmra.mxu0 %v5340
    %v5512 = vpop.f32.mrf.mxu0
    %v5513 = vadd.f32 0.0, %v5512
    %5514 = vmatmul.f32.gmra.mxu0 %v5341
    %v5515 = vpop.f32.mrf.mxu0
    %v5516 = vadd.f32 0.0, %v5515
    %5517 = vmatmul.f32.gmra.mxu0 %v5342
    %v5518 = vpop.f32.mrf.mxu0
    %v5519 = vadd.f32 0.0, %v5518
    %5520 = vmatmul.f32.gmra.mxu0 %v5343
    %v5521 = vpop.f32.mrf.mxu0
    %v5522 = vadd.f32 0.0, %v5521
    %5523 = vmatmul.f32.gmra.mxu0 %v5344
    %v5524 = vpop.f32.mrf.mxu0
    %v5525 = vadd.f32 0.0, %v5524
    %5526 = vmatmul.f32.gmra.mxu0 %v5345
    %v5527 = vpop.f32.mrf.mxu0
    %v5528 = vadd.f32 0.0, %v5527
    %5529 = vmatmul.f32.gmra.mxu0 %v5346
    %v5530 = vpop.f32.mrf.mxu0
    %v5531 = vadd.f32 0.0, %v5530
    %5532 = vmatmul.f32.gmra.mxu0 %v5347
    %v5533 = vpop.f32.mrf.mxu0
    %v5534 = vadd.f32 0.0, %v5533
    %5535 = vmatmul.f32.gmra.mxu0 %v5348
    %v5536 = vpop.f32.mrf.mxu0
    %v5537 = vadd.f32 0.0, %v5536
    %5538 = vmatmul.f32.gmra.mxu0 %v5349
    %v5539 = vpop.f32.mrf.mxu0
    %v5540 = vadd.f32 0.0, %v5539
    %5541 = vmatmul.f32.gmra.mxu0 %v5350
    %v5542 = vpop.f32.mrf.mxu0
    %v5543 = vadd.f32 0.0, %v5542
    %5544 = vmatmul.f32.gmra.mxu0 %v5351
    %v5545 = vpop.f32.mrf.mxu0
    %v5546 = vadd.f32 0.0, %v5545
    %5547 = vmatmul.f32.gmra.mxu0 %v5352
    %v5548 = vpop.f32.mrf.mxu0
    %v5549 = vadd.f32 0.0, %v5548
    %5550 = vmatmul.f32.gmra.mxu0 %v5353
    %v5551 = vpop.f32.mrf.mxu0
    %v5552 = vadd.f32 0.0, %v5551
    %5553 = vmatmul.f32.gmra.mxu0 %v5354
    %v5554 = vpop.f32.mrf.mxu0
    %v5555 = vadd.f32 0.0, %v5554
    %5556 = vmatmul.f32.gmra.mxu0 %v5355
    %v5557 = vpop.f32.mrf.mxu0
    %v5558 = vadd.f32 0.0, %v5557
    %5559 = vmatmul.f32.gmra.mxu0 %v5356
    %v5560 = vpop.f32.mrf.mxu0
    %v5561 = vadd.f32 0.0, %v5560
    %5562 = vmatmul.f32.gmra.mxu0 %v5357
    %v5563 = vpop.f32.mrf.mxu0
    %v5564 = vadd.f32 0.0, %v5563
    %5565 = vmatmul.f32.gmra.mxu0 %v5358
    %v5566 = vpop.f32.mrf.mxu0
    %v5567 = vadd.f32 0.0, %v5566
    %5568 = vmatmul.f32.gmra.mxu0 %v5359
    %v5569 = vpop.f32.mrf.mxu0
    %v5570 = vadd.f32 0.0, %v5569
    %5571 = vmatmul.f32.gmra.mxu0 %v5360
    %v5572 = vpop.f32.mrf.mxu0
    %v5573 = vadd.f32 0.0, %v5572
    %5574 = vmatmul.f32.gmra.mxu0 %v5361
    %v5575 = vpop.f32.mrf.mxu0
    %v5576 = vadd.f32 0.0, %v5575
    %5577 = vmatmul.f32.gmra.mxu0 %v5362
    %v5578 = vpop.f32.mrf.mxu0
    %v5579 = vadd.f32 0.0, %v5578
    %5580 = vmatmul.f32.gmra.mxu0 %v5363
    %v5581 = vpop.f32.mrf.mxu0
    %v5582 = vadd.f32 0.0, %v5581
    %5583 = vmatmul.f32.gmra.mxu0 %v5364
    %v5584 = vpop.f32.mrf.mxu0
    %v5585 = vadd.f32 0.0, %v5584
    %5586 = vmatmul.f32.gmra.mxu0 %v5365
    %v5587 = vpop.f32.mrf.mxu0
    %v5588 = vadd.f32 0.0, %v5587
    %5589 = vmatmul.f32.gmra.mxu0 %v5366
    %v5590 = vpop.f32.mrf.mxu0
    %v5591 = vadd.f32 0.0, %v5590
    %5592 = vmatmul.f32.gmra.mxu0 %v5367
    %v5593 = vpop.f32.mrf.mxu0
    %v5594 = vadd.f32 0.0, %v5593
    %5595 = vmatmul.f32.gmra.mxu0 %v5368
    %v5596 = vpop.f32.mrf.mxu0
    %v5597 = vadd.f32 0.0, %v5596
    %5598 = vmatmul.f32.gmra.mxu0 %v5369
    %v5599 = vpop.f32.mrf.mxu0
    %v5600 = vadd.f32 0.0, %v5599
    %5601 = vmatmul.f32.gmra.mxu0 %v5370
    %v5602 = vpop.f32.mrf.mxu0
    %v5603 = vadd.f32 0.0, %v5602
    %5604 = vmatmul.f32.gmra.mxu0 %v5371
    %v5605 = vpop.f32.mrf.mxu0
    %v5606 = vadd.f32 0.0, %v5605
    %5607 = vmatmul.f32.gmra.mxu0 %v5372
    %v5608 = vpop.f32.mrf.mxu0
    %v5609 = vadd.f32 0.0, %v5608
    %5610 = vmatmul.f32.gmra.mxu0 %v5373
    %v5611 = vpop.f32.mrf.mxu0
    %v5612 = vadd.f32 0.0, %v5611
    %5613 = vmatmul.f32.gmra.mxu0 %v5374
    %v5614 = vpop.f32.mrf.mxu0
    %v5615 = vadd.f32 0.0, %v5614
    %5616 = vdwg.mxu0
    %v5617 = vadd.f32 %v4991, %v5426
    %v5618 = vadd.f32 %v4992, %v5429
    %v5619 = vadd.f32 %v4993, %v5432
    %v5620 = vadd.f32 %v4994, %v5435
    %v5621 = vadd.f32 %v4995, %v5438
    %v5622 = vadd.f32 %v4996, %v5441
    %v5623 = vadd.f32 %v4997, %v5444
    %v5624 = vadd.f32 %v4998, %v5447
    %v5625 = vadd.f32 %v4999, %v5450
    %v5626 = vadd.f32 %v5000, %v5453
    %v5627 = vadd.f32 %v5001, %v5456
    %v5628 = vadd.f32 %v5002, %v5459
    %v5629 = vadd.f32 %v5003, %v5462
    %v5630 = vadd.f32 %v5004, %v5465
    %v5631 = vadd.f32 %v5005, %v5468
    %v5632 = vadd.f32 %v5006, %v5471
    %v5633 = vadd.f32 %v5007, %v5474
    %v5634 = vadd.f32 %v5008, %v5477
    %v5635 = vadd.f32 %v5009, %v5480
    %v5636 = vadd.f32 %v5010, %v5483
    %v5637 = vadd.f32 %v5011, %v5486
    %v5638 = vadd.f32 %v5012, %v5489
    %v5639 = vadd.f32 %v5013, %v5492
    %v5640 = vadd.f32 %v5014, %v5495
    %v5641 = vadd.f32 %v5015, %v5498
    %v5642 = vadd.f32 %v5016, %v5501
    %v5643 = vadd.f32 %v5017, %v5504
    %v5644 = vadd.f32 %v5018, %v5507
    %v5645 = vadd.f32 %v5019, %v5510
    %v5646 = vadd.f32 %v5020, %v5513
    %v5647 = vadd.f32 %v5021, %v5516
    %v5648 = vadd.f32 %v5022, %v5519
    %v5649 = vadd.f32 %v5023, %v5522
    %v5650 = vadd.f32 %v5024, %v5525
    %v5651 = vadd.f32 %v5025, %v5528
    %v5652 = vadd.f32 %v5026, %v5531
    %v5653 = vadd.f32 %v5027, %v5534
    %v5654 = vadd.f32 %v5028, %v5537
    %v5655 = vadd.f32 %v5029, %v5540
    %v5656 = vadd.f32 %v5030, %v5543
    %v5657 = vadd.f32 %v5031, %v5546
    %v5658 = vadd.f32 %v5032, %v5549
    %v5659 = vadd.f32 %v5033, %v5552
    %v5660 = vadd.f32 %v5034, %v5555
    %v5661 = vadd.f32 %v5035, %v5558
    %v5662 = vadd.f32 %v5036, %v5561
    %v5663 = vadd.f32 %v5037, %v5564
    %v5664 = vadd.f32 %v5038, %v5567
    %v5665 = vadd.f32 %v5039, %v5570
    %v5666 = vadd.f32 %v5040, %v5573
    %v5667 = vadd.f32 %v5041, %v5576
    %v5668 = vadd.f32 %v5042, %v5579
    %v5669 = vadd.f32 %v5043, %v5582
    %v5670 = vadd.f32 %v5044, %v5585
    %v5671 = vadd.f32 %v5045, %v5588
    %v5672 = vadd.f32 %v5046, %v5591
    %v5673 = vadd.f32 %v5047, %v5594
    %v5674 = vadd.f32 %v5048, %v5597
    %v5675 = vadd.f32 %v5049, %v5600
    %v5676 = vadd.f32 %v5050, %v5603
    %v5677 = vadd.f32 %v5051, %v5606
    %v5678 = vadd.f32 %v5052, %v5609
    %v5679 = vadd.f32 %v5053, %v5612
    %v5680 = vadd.f32 %v5054, %v5615
    %v5681 = vld [vmem:[#allocation2 + $0x27] sm:$0xff]
    %v5682 = vld [vmem:[#allocation2 + $0x2f] sm:$0xff]
    %v5683 = vld [vmem:[#allocation2 + $0x37] sm:$0xff]
    %v5684 = vld [vmem:[#allocation2 + $0x3f] sm:$0xff]
    %v5685 = vld [vmem:[#allocation2 + $0x47] sm:$0xff]
    %v5686 = vld [vmem:[#allocation2 + $0x4f] sm:$0xff]
    %v5687 = vld [vmem:[#allocation2 + $0x57] sm:$0xff]
    %v5688 = vld [vmem:[#allocation2 + $0x5f] sm:$0xff]
    %v5689 = vld [vmem:[#allocation2 + $0x67] sm:$0xff]
    %v5690 = vld [vmem:[#allocation2 + $0x6f] sm:$0xff]
    %v5691 = vld [vmem:[#allocation2 + $0x77] sm:$0xff]
    %v5692 = vld [vmem:[#allocation2 + $0x7f] sm:$0xff]
    %v5693 = vld [vmem:[#allocation2 + $0x87] sm:$0xff]
    %v5694 = vld [vmem:[#allocation2 + $0x8f] sm:$0xff]
    %v5695 = vld [vmem:[#allocation2 + $0x97] sm:$0xff]
    %v5696 = vld [vmem:[#allocation2 + $0x9f] sm:$0xff]
    %v5697 = vld [vmem:[#allocation2 + $0xa7] sm:$0xff]
    %v5698 = vld [vmem:[#allocation2 + $0xaf] sm:$0xff]
    %v5699 = vld [vmem:[#allocation2 + $0xb7] sm:$0xff]
    %v5700 = vld [vmem:[#allocation2 + $0xbf] sm:$0xff]
    %v5701 = vld [vmem:[#allocation2 + $0xc7] sm:$0xff]
    %v5702 = vld [vmem:[#allocation2 + $0xcf] sm:$0xff]
    %v5703 = vld [vmem:[#allocation2 + $0xd7] sm:$0xff]
    %v5704 = vld [vmem:[#allocation2 + $0xdf] sm:$0xff]
    %v5705 = vld [vmem:[#allocation2 + $0xe7] sm:$0xff]
    %v5706 = vld [vmem:[#allocation2 + $0xef] sm:$0xff]
    %v5707 = vld [vmem:[#allocation2 + $0xf7] sm:$0xff]
    %v5708 = vld [vmem:[#allocation2 + $0xff] sm:$0xff]
    %v5709 = vld [vmem:[#allocation2 + $0x107] sm:$0xff]
    %v5710 = vld [vmem:[#allocation2 + $0x10f] sm:$0xff]
    %v5711 = vld [vmem:[#allocation2 + $0x117] sm:$0xff]
    %v5712 = vld [vmem:[#allocation2 + $0x11f] sm:$0xff]
    %v5713 = vld [vmem:[#allocation2 + $0x127] sm:$0xff]
    %v5714 = vld [vmem:[#allocation2 + $0x12f] sm:$0xff]
    %v5715 = vld [vmem:[#allocation2 + $0x137] sm:$0xff]
    %v5716 = vld [vmem:[#allocation2 + $0x13f] sm:$0xff]
    %v5717 = vld [vmem:[#allocation2 + $0x147] sm:$0xff]
    %v5718 = vld [vmem:[#allocation2 + $0x14f] sm:$0xff]
    %v5719 = vld [vmem:[#allocation2 + $0x157] sm:$0xff]
    %v5720 = vld [vmem:[#allocation2 + $0x15f] sm:$0xff]
    %v5721 = vld [vmem:[#allocation2 + $0x167] sm:$0xff]
    %v5722 = vld [vmem:[#allocation2 + $0x16f] sm:$0xff]
    %v5723 = vld [vmem:[#allocation2 + $0x177] sm:$0xff]
    %v5724 = vld [vmem:[#allocation2 + $0x17f] sm:$0xff]
    %v5725 = vld [vmem:[#allocation2 + $0x187] sm:$0xff]
    %v5726 = vld [vmem:[#allocation2 + $0x18f] sm:$0xff]
    %v5727 = vld [vmem:[#allocation2 + $0x197] sm:$0xff]
    %v5728 = vld [vmem:[#allocation2 + $0x19f] sm:$0xff]
    %v5729 = vld [vmem:[#allocation2 + $0x1a7] sm:$0xff]
    %v5730 = vld [vmem:[#allocation2 + $0x1af] sm:$0xff]
    %v5731 = vld [vmem:[#allocation2 + $0x1b7] sm:$0xff]
    %v5732 = vld [vmem:[#allocation2 + $0x1bf] sm:$0xff]
    %v5733 = vld [vmem:[#allocation2 + $0x1c7] sm:$0xff]
    %v5734 = vld [vmem:[#allocation2 + $0x1cf] sm:$0xff]
    %v5735 = vld [vmem:[#allocation2 + $0x1d7] sm:$0xff]
    %v5736 = vld [vmem:[#allocation2 + $0x1df] sm:$0xff]
    %v5737 = vld [vmem:[#allocation2 + $0x1e7] sm:$0xff]
    %v5738 = vld [vmem:[#allocation2 + $0x1ef] sm:$0xff]
    %v5739 = vld [vmem:[#allocation2 + $0x1f7] sm:$0xff]
    %v5740 = vld [vmem:[#allocation2 + $0x1ff] sm:$0xff]
    %v5741 = vld [vmem:[#allocation2 + $0x207] sm:$0xff]
    %v5742 = vld [vmem:[#allocation2 + $0x20f] sm:$0xff]
    %v5743 = vld [vmem:[#allocation2 + $0x217] sm:$0xff]
    %v5744 = vld [vmem:[#allocation2 + $0x21f] sm:$0xff]
    %v5745 = vadd.s32 %v1094, 16
    %v5746 = vadd.s32 %v1095, 16
    %v5747 = vadd.s32 %v1096, 16
    %v5748 = vadd.s32 %v1097, 16
    %v5749 = vadd.s32 %v1098, 16
    %v5750 = vadd.s32 %v1099, 16
    %v5751 = vadd.s32 %v1100, 16
    %v5752 = vadd.s32 %v1101, 16
    %v5753 = vadd.s32 %v1102, 16
    %v5754 = vadd.s32 %v1103, 16
    %v5755 = vadd.s32 %v1104, 16
    %v5756 = vadd.s32 %v1105, 16
    %v5757 = vadd.s32 %v1106, 16
    %v5758 = vadd.s32 %v1107, 16
    %v5759 = vadd.s32 %v1108, 16
    %v5760 = vadd.s32 %v1109, 16
    %v5761 = vadd.s32 %v1110, 16
    %v5762 = vadd.s32 %v1111, 16
    %v5763 = vadd.s32 %v1112, 16
    %v5764 = vadd.s32 %v1113, 16
    %v5765 = vadd.s32 %v1114, 16
    %v5766 = vadd.s32 %v1115, 16
    %v5767 = vadd.s32 %v1116, 16
    %v5768 = vadd.s32 %v1117, 16
    %v5769 = vadd.s32 %v1118, 16
    %v5770 = vadd.s32 %v1119, 16
    %v5771 = vadd.s32 %v1120, 16
    %v5772 = vadd.s32 %v1121, 16
    %v5773 = vadd.s32 %v1122, 16
    %v5774 = vadd.s32 %v1123, 16
    %v5775 = vadd.s32 %v1124, 16
    %v5776 = vadd.s32 %v1125, 16
    %v5777 = vadd.s32 %v1126, 16
    %v5778 = vadd.s32 %v1127, 16
    %v5779 = vadd.s32 %v1128, 16
    %v5780 = vadd.s32 %v1129, 16
    %v5781 = vadd.s32 %v1130, 16
    %v5782 = vadd.s32 %v1131, 16
    %v5783 = vadd.s32 %v1132, 16
    %v5784 = vadd.s32 %v1133, 16
    %v5785 = vadd.s32 %v1134, 16
    %v5786 = vadd.s32 %v1135, 16
    %v5787 = vadd.s32 %v1136, 16
    %v5788 = vadd.s32 %v1137, 16
    %v5789 = vadd.s32 %v1138, 16
    %v5790 = vadd.s32 %v1139, 16
    %v5791 = vadd.s32 %v1140, 16
    %v5792 = vadd.s32 %v1141, 16
    %v5793 = vadd.s32 %v1142, 16
    %v5794 = vadd.s32 %v1143, 16
    %v5795 = vadd.s32 %v1144, 16
    %v5796 = vadd.s32 %v1145, 16
    %v5797 = vadd.s32 %v1146, 16
    %v5798 = vadd.s32 %v1147, 16
    %v5799 = vadd.s32 %v1148, 16
    %v5800 = vadd.s32 %v1149, 16
    %v5801 = vadd.s32 %v1150, 16
    %v5802 = vadd.s32 %v1151, 16
    %v5803 = vadd.s32 %v1152, 16
    %v5804 = vadd.s32 %v1153, 16
    %v5805 = vadd.s32 %v1154, 16
    %v5806 = vadd.s32 %v1155, 16
    %v5807 = vadd.s32 %v1156, 16
    %v5808 = vadd.s32 %v1157, 16
    %vm5809 = vcmp.ge.s32.totalorder %v5745, 0
    %vm5810 = vcmp.ge.s32.totalorder %v5746, 0
    %vm5811 = vcmp.ge.s32.totalorder %v5747, 0
    %vm5812 = vcmp.ge.s32.totalorder %v5748, 0
    %vm5813 = vcmp.ge.s32.totalorder %v5749, 0
    %vm5814 = vcmp.ge.s32.totalorder %v5750, 0
    %vm5815 = vcmp.ge.s32.totalorder %v5751, 0
    %vm5816 = vcmp.ge.s32.totalorder %v5752, 0
    %vm5817 = vcmp.ge.s32.totalorder %v5753, 0
    %vm5818 = vcmp.ge.s32.totalorder %v5754, 0
    %vm5819 = vcmp.ge.s32.totalorder %v5755, 0
    %vm5820 = vcmp.ge.s32.totalorder %v5756, 0
    %vm5821 = vcmp.ge.s32.totalorder %v5757, 0
    %vm5822 = vcmp.ge.s32.totalorder %v5758, 0
    %vm5823 = vcmp.ge.s32.totalorder %v5759, 0
    %vm5824 = vcmp.ge.s32.totalorder %v5760, 0
    %vm5825 = vcmp.ge.s32.totalorder %v5761, 0
    %vm5826 = vcmp.ge.s32.totalorder %v5762, 0
    %vm5827 = vcmp.ge.s32.totalorder %v5763, 0
    %vm5828 = vcmp.ge.s32.totalorder %v5764, 0
    %vm5829 = vcmp.ge.s32.totalorder %v5765, 0
    %vm5830 = vcmp.ge.s32.totalorder %v5766, 0
    %vm5831 = vcmp.ge.s32.totalorder %v5767, 0
    %vm5832 = vcmp.ge.s32.totalorder %v5768, 0
    %vm5833 = vcmp.ge.s32.totalorder %v5769, 0
    %vm5834 = vcmp.ge.s32.totalorder %v5770, 0
    %vm5835 = vcmp.ge.s32.totalorder %v5771, 0
    %vm5836 = vcmp.ge.s32.totalorder %v5772, 0
    %vm5837 = vcmp.ge.s32.totalorder %v5773, 0
    %vm5838 = vcmp.ge.s32.totalorder %v5774, 0
    %vm5839 = vcmp.ge.s32.totalorder %v5775, 0
    %vm5840 = vcmp.ge.s32.totalorder %v5776, 0
    %vm5841 = vcmp.ge.s32.totalorder %v5777, 0
    %vm5842 = vcmp.ge.s32.totalorder %v5778, 0
    %vm5843 = vcmp.ge.s32.totalorder %v5779, 0
    %vm5844 = vcmp.ge.s32.totalorder %v5780, 0
    %vm5845 = vcmp.ge.s32.totalorder %v5781, 0
    %vm5846 = vcmp.ge.s32.totalorder %v5782, 0
    %vm5847 = vcmp.ge.s32.totalorder %v5783, 0
    %vm5848 = vcmp.ge.s32.totalorder %v5784, 0
    %vm5849 = vcmp.ge.s32.totalorder %v5785, 0
    %vm5850 = vcmp.ge.s32.totalorder %v5786, 0
    %vm5851 = vcmp.ge.s32.totalorder %v5787, 0
    %vm5852 = vcmp.ge.s32.totalorder %v5788, 0
    %vm5853 = vcmp.ge.s32.totalorder %v5789, 0
    %vm5854 = vcmp.ge.s32.totalorder %v5790, 0
    %vm5855 = vcmp.ge.s32.totalorder %v5791, 0
    %vm5856 = vcmp.ge.s32.totalorder %v5792, 0
    %vm5857 = vcmp.ge.s32.totalorder %v5793, 0
    %vm5858 = vcmp.ge.s32.totalorder %v5794, 0
    %vm5859 = vcmp.ge.s32.totalorder %v5795, 0
    %vm5860 = vcmp.ge.s32.totalorder %v5796, 0
    %vm5861 = vcmp.ge.s32.totalorder %v5797, 0
    %vm5862 = vcmp.ge.s32.totalorder %v5798, 0
    %vm5863 = vcmp.ge.s32.totalorder %v5799, 0
    %vm5864 = vcmp.ge.s32.totalorder %v5800, 0
    %vm5865 = vcmp.ge.s32.totalorder %v5801, 0
    %vm5866 = vcmp.ge.s32.totalorder %v5802, 0
    %vm5867 = vcmp.ge.s32.totalorder %v5803, 0
    %vm5868 = vcmp.ge.s32.totalorder %v5804, 0
    %vm5869 = vcmp.ge.s32.totalorder %v5805, 0
    %vm5870 = vcmp.ge.s32.totalorder %v5806, 0
    %vm5871 = vcmp.ge.s32.totalorder %v5807, 0
    %vm5872 = vcmp.ge.s32.totalorder %v5808, 0
    %vm5873 = vcmp.lt.s32.totalorder %v5745, 256
    %vm5874 = vcmp.lt.s32.totalorder %v5746, 256
    %vm5875 = vcmp.lt.s32.totalorder %v5747, 256
    %vm5876 = vcmp.lt.s32.totalorder %v5748, 256
    %vm5877 = vcmp.lt.s32.totalorder %v5749, 256
    %vm5878 = vcmp.lt.s32.totalorder %v5750, 256
    %vm5879 = vcmp.lt.s32.totalorder %v5751, 256
    %vm5880 = vcmp.lt.s32.totalorder %v5752, 256
    %vm5881 = vcmp.lt.s32.totalorder %v5753, 256
    %vm5882 = vcmp.lt.s32.totalorder %v5754, 256
    %vm5883 = vcmp.lt.s32.totalorder %v5755, 256
    %vm5884 = vcmp.lt.s32.totalorder %v5756, 256
    %vm5885 = vcmp.lt.s32.totalorder %v5757, 256
    %vm5886 = vcmp.lt.s32.totalorder %v5758, 256
    %vm5887 = vcmp.lt.s32.totalorder %v5759, 256
    %vm5888 = vcmp.lt.s32.totalorder %v5760, 256
    %vm5889 = vcmp.lt.s32.totalorder %v5761, 256
    %vm5890 = vcmp.lt.s32.totalorder %v5762, 256
    %vm5891 = vcmp.lt.s32.totalorder %v5763, 256
    %vm5892 = vcmp.lt.s32.totalorder %v5764, 256
    %vm5893 = vcmp.lt.s32.totalorder %v5765, 256
    %vm5894 = vcmp.lt.s32.totalorder %v5766, 256
    %vm5895 = vcmp.lt.s32.totalorder %v5767, 256
    %vm5896 = vcmp.lt.s32.totalorder %v5768, 256
    %vm5897 = vcmp.lt.s32.totalorder %v5769, 256
    %vm5898 = vcmp.lt.s32.totalorder %v5770, 256
    %vm5899 = vcmp.lt.s32.totalorder %v5771, 256
    %vm5900 = vcmp.lt.s32.totalorder %v5772, 256
    %vm5901 = vcmp.lt.s32.totalorder %v5773, 256
    %vm5902 = vcmp.lt.s32.totalorder %v5774, 256
    %vm5903 = vcmp.lt.s32.totalorder %v5775, 256
    %vm5904 = vcmp.lt.s32.totalorder %v5776, 256
    %vm5905 = vcmp.lt.s32.totalorder %v5777, 256
    %vm5906 = vcmp.lt.s32.totalorder %v5778, 256
    %vm5907 = vcmp.lt.s32.totalorder %v5779, 256
    %vm5908 = vcmp.lt.s32.totalorder %v5780, 256
    %vm5909 = vcmp.lt.s32.totalorder %v5781, 256
    %vm5910 = vcmp.lt.s32.totalorder %v5782, 256
    %vm5911 = vcmp.lt.s32.totalorder %v5783, 256
    %vm5912 = vcmp.lt.s32.totalorder %v5784, 256
    %vm5913 = vcmp.lt.s32.totalorder %v5785, 256
    %vm5914 = vcmp.lt.s32.totalorder %v5786, 256
    %vm5915 = vcmp.lt.s32.totalorder %v5787, 256
    %vm5916 = vcmp.lt.s32.totalorder %v5788, 256
    %vm5917 = vcmp.lt.s32.totalorder %v5789, 256
    %vm5918 = vcmp.lt.s32.totalorder %v5790, 256
    %vm5919 = vcmp.lt.s32.totalorder %v5791, 256
    %vm5920 = vcmp.lt.s32.totalorder %v5792, 256
    %vm5921 = vcmp.lt.s32.totalorder %v5793, 256
    %vm5922 = vcmp.lt.s32.totalorder %v5794, 256
    %vm5923 = vcmp.lt.s32.totalorder %v5795, 256
    %vm5924 = vcmp.lt.s32.totalorder %v5796, 256
    %vm5925 = vcmp.lt.s32.totalorder %v5797, 256
    %vm5926 = vcmp.lt.s32.totalorder %v5798, 256
    %vm5927 = vcmp.lt.s32.totalorder %v5799, 256
    %vm5928 = vcmp.lt.s32.totalorder %v5800, 256
    %vm5929 = vcmp.lt.s32.totalorder %v5801, 256
    %vm5930 = vcmp.lt.s32.totalorder %v5802, 256
    %vm5931 = vcmp.lt.s32.totalorder %v5803, 256
    %vm5932 = vcmp.lt.s32.totalorder %v5804, 256
    %vm5933 = vcmp.lt.s32.totalorder %v5805, 256
    %vm5934 = vcmp.lt.s32.totalorder %v5806, 256
    %vm5935 = vcmp.lt.s32.totalorder %v5807, 256
    %vm5936 = vcmp.lt.s32.totalorder %v5808, 256
    %vm5937 = vmand %vm5809, %vm5873
    %vm5938 = vmand %vm5810, %vm5874
    %vm5939 = vmand %vm5811, %vm5875
    %vm5940 = vmand %vm5812, %vm5876
    %vm5941 = vmand %vm5813, %vm5877
    %vm5942 = vmand %vm5814, %vm5878
    %vm5943 = vmand %vm5815, %vm5879
    %vm5944 = vmand %vm5816, %vm5880
    %vm5945 = vmand %vm5817, %vm5881
    %vm5946 = vmand %vm5818, %vm5882
    %vm5947 = vmand %vm5819, %vm5883
    %vm5948 = vmand %vm5820, %vm5884
    %vm5949 = vmand %vm5821, %vm5885
    %vm5950 = vmand %vm5822, %vm5886
    %vm5951 = vmand %vm5823, %vm5887
    %vm5952 = vmand %vm5824, %vm5888
    %vm5953 = vmand %vm5825, %vm5889
    %vm5954 = vmand %vm5826, %vm5890
    %vm5955 = vmand %vm5827, %vm5891
    %vm5956 = vmand %vm5828, %vm5892
    %vm5957 = vmand %vm5829, %vm5893
    %vm5958 = vmand %vm5830, %vm5894
    %vm5959 = vmand %vm5831, %vm5895
    %vm5960 = vmand %vm5832, %vm5896
    %vm5961 = vmand %vm5833, %vm5897
    %vm5962 = vmand %vm5834, %vm5898
    %vm5963 = vmand %vm5835, %vm5899
    %vm5964 = vmand %vm5836, %vm5900
    %vm5965 = vmand %vm5837, %vm5901
    %vm5966 = vmand %vm5838, %vm5902
    %vm5967 = vmand %vm5839, %vm5903
    %vm5968 = vmand %vm5840, %vm5904
    %vm5969 = vmand %vm5841, %vm5905
    %vm5970 = vmand %vm5842, %vm5906
    %vm5971 = vmand %vm5843, %vm5907
    %vm5972 = vmand %vm5844, %vm5908
    %vm5973 = vmand %vm5845, %vm5909
    %vm5974 = vmand %vm5846, %vm5910
    %vm5975 = vmand %vm5847, %vm5911
    %vm5976 = vmand %vm5848, %vm5912
    %vm5977 = vmand %vm5849, %vm5913
    %vm5978 = vmand %vm5850, %vm5914
    %vm5979 = vmand %vm5851, %vm5915
    %vm5980 = vmand %vm5852, %vm5916
    %vm5981 = vmand %vm5853, %vm5917
    %vm5982 = vmand %vm5854, %vm5918
    %vm5983 = vmand %vm5855, %vm5919
    %vm5984 = vmand %vm5856, %vm5920
    %vm5985 = vmand %vm5857, %vm5921
    %vm5986 = vmand %vm5858, %vm5922
    %vm5987 = vmand %vm5859, %vm5923
    %vm5988 = vmand %vm5860, %vm5924
    %vm5989 = vmand %vm5861, %vm5925
    %vm5990 = vmand %vm5862, %vm5926
    %vm5991 = vmand %vm5863, %vm5927
    %vm5992 = vmand %vm5864, %vm5928
    %vm5993 = vmand %vm5865, %vm5929
    %vm5994 = vmand %vm5866, %vm5930
    %vm5995 = vmand %vm5867, %vm5931
    %vm5996 = vmand %vm5868, %vm5932
    %vm5997 = vmand %vm5869, %vm5933
    %vm5998 = vmand %vm5870, %vm5934
    %vm5999 = vmand %vm5871, %vm5935
    %vm6000 = vmand %vm5872, %vm5936
    %vm6001 = vmand %vm1414, %vm5937
    %vm6002 = vmand %vm1415, %vm5938
    %vm6003 = vmand %vm1416, %vm5939
    %vm6004 = vmand %vm1417, %vm5940
    %vm6005 = vmand %vm1418, %vm5941
    %vm6006 = vmand %vm1419, %vm5942
    %vm6007 = vmand %vm1420, %vm5943
    %vm6008 = vmand %vm1421, %vm5944
    %vm6009 = vmand %vm1422, %vm5945
    %vm6010 = vmand %vm1423, %vm5946
    %vm6011 = vmand %vm1424, %vm5947
    %vm6012 = vmand %vm1425, %vm5948
    %vm6013 = vmand %vm1426, %vm5949
    %vm6014 = vmand %vm1427, %vm5950
    %vm6015 = vmand %vm1428, %vm5951
    %vm6016 = vmand %vm1429, %vm5952
    %vm6017 = vmand %vm1430, %vm5953
    %vm6018 = vmand %vm1431, %vm5954
    %vm6019 = vmand %vm1432, %vm5955
    %vm6020 = vmand %vm1433, %vm5956
    %vm6021 = vmand %vm1434, %vm5957
    %vm6022 = vmand %vm1435, %vm5958
    %vm6023 = vmand %vm1436, %vm5959
    %vm6024 = vmand %vm1437, %vm5960
    %vm6025 = vmand %vm1438, %vm5961
    %vm6026 = vmand %vm1439, %vm5962
    %vm6027 = vmand %vm1440, %vm5963
    %vm6028 = vmand %vm1441, %vm5964
    %vm6029 = vmand %vm1442, %vm5965
    %vm6030 = vmand %vm1443, %vm5966
    %vm6031 = vmand %vm1444, %vm5967
    %vm6032 = vmand %vm1445, %vm5968
    %vm6033 = vmand %vm1446, %vm5969
    %vm6034 = vmand %vm1447, %vm5970
    %vm6035 = vmand %vm1448, %vm5971
    %vm6036 = vmand %vm1449, %vm5972
    %vm6037 = vmand %vm1450, %vm5973
    %vm6038 = vmand %vm1451, %vm5974
    %vm6039 = vmand %vm1452, %vm5975
    %vm6040 = vmand %vm1453, %vm5976
    %vm6041 = vmand %vm1454, %vm5977
    %vm6042 = vmand %vm1455, %vm5978
    %vm6043 = vmand %vm1456, %vm5979
    %vm6044 = vmand %vm1457, %vm5980
    %vm6045 = vmand %vm1458, %vm5981
    %vm6046 = vmand %vm1459, %vm5982
    %vm6047 = vmand %vm1460, %vm5983
    %vm6048 = vmand %vm1461, %vm5984
    %vm6049 = vmand %vm1462, %vm5985
    %vm6050 = vmand %vm1463, %vm5986
    %vm6051 = vmand %vm1464, %vm5987
    %vm6052 = vmand %vm1465, %vm5988
    %vm6053 = vmand %vm1466, %vm5989
    %vm6054 = vmand %vm1467, %vm5990
    %vm6055 = vmand %vm1468, %vm5991
    %vm6056 = vmand %vm1469, %vm5992
    %vm6057 = vmand %vm1470, %vm5993
    %vm6058 = vmand %vm1471, %vm5994
    %vm6059 = vmand %vm1472, %vm5995
    %vm6060 = vmand %vm1473, %vm5996
    %vm6061 = vmand %vm1474, %vm5997
    %vm6062 = vmand %vm1475, %vm5998
    %vm6063 = vmand %vm1476, %vm5999
    %vm6064 = vmand %vm1477, %vm6000
    %v6065 = vsel %vm6001, 1, 0
    %v6066 = vsel %vm6002, 1, 0
    %v6067 = vsel %vm6003, 1, 0
    %v6068 = vsel %vm6004, 1, 0
    %v6069 = vsel %vm6005, 1, 0
    %v6070 = vsel %vm6006, 1, 0
    %v6071 = vsel %vm6007, 1, 0
    %v6072 = vsel %vm6008, 1, 0
    %v6073 = vsel %vm6009, 1, 0
    %v6074 = vsel %vm6010, 1, 0
    %v6075 = vsel %vm6011, 1, 0
    %v6076 = vsel %vm6012, 1, 0
    %v6077 = vsel %vm6013, 1, 0
    %v6078 = vsel %vm6014, 1, 0
    %v6079 = vsel %vm6015, 1, 0
    %v6080 = vsel %vm6016, 1, 0
    %v6081 = vsel %vm6017, 1, 0
    %v6082 = vsel %vm6018, 1, 0
    %v6083 = vsel %vm6019, 1, 0
    %v6084 = vsel %vm6020, 1, 0
    %v6085 = vsel %vm6021, 1, 0
    %v6086 = vsel %vm6022, 1, 0
    %v6087 = vsel %vm6023, 1, 0
    %v6088 = vsel %vm6024, 1, 0
    %v6089 = vsel %vm6025, 1, 0
    %v6090 = vsel %vm6026, 1, 0
    %v6091 = vsel %vm6027, 1, 0
    %v6092 = vsel %vm6028, 1, 0
    %v6093 = vsel %vm6029, 1, 0
    %v6094 = vsel %vm6030, 1, 0
    %v6095 = vsel %vm6031, 1, 0
    %v6096 = vsel %vm6032, 1, 0
    %v6097 = vsel %vm6033, 1, 0
    %v6098 = vsel %vm6034, 1, 0
    %v6099 = vsel %vm6035, 1, 0
    %v6100 = vsel %vm6036, 1, 0
    %v6101 = vsel %vm6037, 1, 0
    %v6102 = vsel %vm6038, 1, 0
    %v6103 = vsel %vm6039, 1, 0
    %v6104 = vsel %vm6040, 1, 0
    %v6105 = vsel %vm6041, 1, 0
    %v6106 = vsel %vm6042, 1, 0
    %v6107 = vsel %vm6043, 1, 0
    %v6108 = vsel %vm6044, 1, 0
    %v6109 = vsel %vm6045, 1, 0
    %v6110 = vsel %vm6046, 1, 0
    %v6111 = vsel %vm6047, 1, 0
    %v6112 = vsel %vm6048, 1, 0
    %v6113 = vsel %vm6049, 1, 0
    %v6114 = vsel %vm6050, 1, 0
    %v6115 = vsel %vm6051, 1, 0
    %v6116 = vsel %vm6052, 1, 0
    %v6117 = vsel %vm6053, 1, 0
    %v6118 = vsel %vm6054, 1, 0
    %v6119 = vsel %vm6055, 1, 0
    %v6120 = vsel %vm6056, 1, 0
    %v6121 = vsel %vm6057, 1, 0
    %v6122 = vsel %vm6058, 1, 0
    %v6123 = vsel %vm6059, 1, 0
    %v6124 = vsel %vm6060, 1, 0
    %v6125 = vsel %vm6061, 1, 0
    %v6126 = vsel %vm6062, 1, 0
    %v6127 = vsel %vm6063, 1, 0
    %v6128 = vsel %vm6064, 1, 0
    %vm6129 = vcmp.eq.s32.totalorder %v6065, 1
    %vm6130 = vcmp.eq.s32.totalorder %v6066, 1
    %vm6131 = vcmp.eq.s32.totalorder %v6067, 1
    %vm6132 = vcmp.eq.s32.totalorder %v6068, 1
    %vm6133 = vcmp.eq.s32.totalorder %v6069, 1
    %vm6134 = vcmp.eq.s32.totalorder %v6070, 1
    %vm6135 = vcmp.eq.s32.totalorder %v6071, 1
    %vm6136 = vcmp.eq.s32.totalorder %v6072, 1
    %vm6137 = vcmp.eq.s32.totalorder %v6073, 1
    %vm6138 = vcmp.eq.s32.totalorder %v6074, 1
    %vm6139 = vcmp.eq.s32.totalorder %v6075, 1
    %vm6140 = vcmp.eq.s32.totalorder %v6076, 1
    %vm6141 = vcmp.eq.s32.totalorder %v6077, 1
    %vm6142 = vcmp.eq.s32.totalorder %v6078, 1
    %vm6143 = vcmp.eq.s32.totalorder %v6079, 1
    %vm6144 = vcmp.eq.s32.totalorder %v6080, 1
    %vm6145 = vcmp.eq.s32.totalorder %v6081, 1
    %vm6146 = vcmp.eq.s32.totalorder %v6082, 1
    %vm6147 = vcmp.eq.s32.totalorder %v6083, 1
    %vm6148 = vcmp.eq.s32.totalorder %v6084, 1
    %vm6149 = vcmp.eq.s32.totalorder %v6085, 1
    %vm6150 = vcmp.eq.s32.totalorder %v6086, 1
    %vm6151 = vcmp.eq.s32.totalorder %v6087, 1
    %vm6152 = vcmp.eq.s32.totalorder %v6088, 1
    %vm6153 = vcmp.eq.s32.totalorder %v6089, 1
    %vm6154 = vcmp.eq.s32.totalorder %v6090, 1
    %vm6155 = vcmp.eq.s32.totalorder %v6091, 1
    %vm6156 = vcmp.eq.s32.totalorder %v6092, 1
    %vm6157 = vcmp.eq.s32.totalorder %v6093, 1
    %vm6158 = vcmp.eq.s32.totalorder %v6094, 1
    %vm6159 = vcmp.eq.s32.totalorder %v6095, 1
    %vm6160 = vcmp.eq.s32.totalorder %v6096, 1
    %vm6161 = vcmp.eq.s32.totalorder %v6097, 1
    %vm6162 = vcmp.eq.s32.totalorder %v6098, 1
    %vm6163 = vcmp.eq.s32.totalorder %v6099, 1
    %vm6164 = vcmp.eq.s32.totalorder %v6100, 1
    %vm6165 = vcmp.eq.s32.totalorder %v6101, 1
    %vm6166 = vcmp.eq.s32.totalorder %v6102, 1
    %vm6167 = vcmp.eq.s32.totalorder %v6103, 1
    %vm6168 = vcmp.eq.s32.totalorder %v6104, 1
    %vm6169 = vcmp.eq.s32.totalorder %v6105, 1
    %vm6170 = vcmp.eq.s32.totalorder %v6106, 1
    %vm6171 = vcmp.eq.s32.totalorder %v6107, 1
    %vm6172 = vcmp.eq.s32.totalorder %v6108, 1
    %vm6173 = vcmp.eq.s32.totalorder %v6109, 1
    %vm6174 = vcmp.eq.s32.totalorder %v6110, 1
    %vm6175 = vcmp.eq.s32.totalorder %v6111, 1
    %vm6176 = vcmp.eq.s32.totalorder %v6112, 1
    %vm6177 = vcmp.eq.s32.totalorder %v6113, 1
    %vm6178 = vcmp.eq.s32.totalorder %v6114, 1
    %vm6179 = vcmp.eq.s32.totalorder %v6115, 1
    %vm6180 = vcmp.eq.s32.totalorder %v6116, 1
    %vm6181 = vcmp.eq.s32.totalorder %v6117, 1
    %vm6182 = vcmp.eq.s32.totalorder %v6118, 1
    %vm6183 = vcmp.eq.s32.totalorder %v6119, 1
    %vm6184 = vcmp.eq.s32.totalorder %v6120, 1
    %vm6185 = vcmp.eq.s32.totalorder %v6121, 1
    %vm6186 = vcmp.eq.s32.totalorder %v6122, 1
    %vm6187 = vcmp.eq.s32.totalorder %v6123, 1
    %vm6188 = vcmp.eq.s32.totalorder %v6124, 1
    %vm6189 = vcmp.eq.s32.totalorder %v6125, 1
    %vm6190 = vcmp.eq.s32.totalorder %v6126, 1
    %vm6191 = vcmp.eq.s32.totalorder %v6127, 1
    %vm6192 = vcmp.eq.s32.totalorder %v6128, 1
    %v6193 = vsel %vm6129, %v5681, 0.0
    %v6194 = vsel %vm6130, %v5682, 0.0
    %v6195 = vsel %vm6131, %v5683, 0.0
    %v6196 = vsel %vm6132, %v5684, 0.0
    %v6197 = vsel %vm6133, %v5685, 0.0
    %v6198 = vsel %vm6134, %v5686, 0.0
    %v6199 = vsel %vm6135, %v5687, 0.0
    %v6200 = vsel %vm6136, %v5688, 0.0
    %v6201 = vsel %vm6137, %v5689, 0.0
    %v6202 = vsel %vm6138, %v5690, 0.0
    %v6203 = vsel %vm6139, %v5691, 0.0
    %v6204 = vsel %vm6140, %v5692, 0.0
    %v6205 = vsel %vm6141, %v5693, 0.0
    %v6206 = vsel %vm6142, %v5694, 0.0
    %v6207 = vsel %vm6143, %v5695, 0.0
    %v6208 = vsel %vm6144, %v5696, 0.0
    %v6209 = vsel %vm6145, %v5697, 0.0
    %v6210 = vsel %vm6146, %v5698, 0.0
    %v6211 = vsel %vm6147, %v5699, 0.0
    %v6212 = vsel %vm6148, %v5700, 0.0
    %v6213 = vsel %vm6149, %v5701, 0.0
    %v6214 = vsel %vm6150, %v5702, 0.0
    %v6215 = vsel %vm6151, %v5703, 0.0
    %v6216 = vsel %vm6152, %v5704, 0.0
    %v6217 = vsel %vm6153, %v5705, 0.0
    %v6218 = vsel %vm6154, %v5706, 0.0
    %v6219 = vsel %vm6155, %v5707, 0.0
    %v6220 = vsel %vm6156, %v5708, 0.0
    %v6221 = vsel %vm6157, %v5709, 0.0
    %v6222 = vsel %vm6158, %v5710, 0.0
    %v6223 = vsel %vm6159, %v5711, 0.0
    %v6224 = vsel %vm6160, %v5712, 0.0
    %v6225 = vsel %vm6161, %v5713, 0.0
    %v6226 = vsel %vm6162, %v5714, 0.0
    %v6227 = vsel %vm6163, %v5715, 0.0
    %v6228 = vsel %vm6164, %v5716, 0.0
    %v6229 = vsel %vm6165, %v5717, 0.0
    %v6230 = vsel %vm6166, %v5718, 0.0
    %v6231 = vsel %vm6167, %v5719, 0.0
    %v6232 = vsel %vm6168, %v5720, 0.0
    %v6233 = vsel %vm6169, %v5721, 0.0
    %v6234 = vsel %vm6170, %v5722, 0.0
    %v6235 = vsel %vm6171, %v5723, 0.0
    %v6236 = vsel %vm6172, %v5724, 0.0
    %v6237 = vsel %vm6173, %v5725, 0.0
    %v6238 = vsel %vm6174, %v5726, 0.0
    %v6239 = vsel %vm6175, %v5727, 0.0
    %v6240 = vsel %vm6176, %v5728, 0.0
    %v6241 = vsel %vm6177, %v5729, 0.0
    %v6242 = vsel %vm6178, %v5730, 0.0
    %v6243 = vsel %vm6179, %v5731, 0.0
    %v6244 = vsel %vm6180, %v5732, 0.0
    %v6245 = vsel %vm6181, %v5733, 0.0
    %v6246 = vsel %vm6182, %v5734, 0.0
    %v6247 = vsel %vm6183, %v5735, 0.0
    %v6248 = vsel %vm6184, %v5736, 0.0
    %v6249 = vsel %vm6185, %v5737, 0.0
    %v6250 = vsel %vm6186, %v5738, 0.0
    %v6251 = vsel %vm6187, %v5739, 0.0
    %v6252 = vsel %vm6188, %v5740, 0.0
    %v6253 = vsel %vm6189, %v5741, 0.0
    %v6254 = vsel %vm6190, %v5742, 0.0
    %v6255 = vsel %vm6191, %v5743, 0.0
    %v6256 = vsel %vm6192, %v5744, 0.0
    %s6257 = scalar_lea.vmem [#allocation8], 384
    %v6258 = vld [vmem:[%s6257] sm:$0xf]
    %v6259 = vld [vmem:[%s6257 + $0x4] sm:$0xf]
    %v6260 = vld [vmem:[%s6257 + $0x8] sm:$0xf]
    %v6261 = vld [vmem:[%s6257 + $0xc] sm:$0xf]
    %v6262 = vld [vmem:[%s6257 + $0x10] sm:$0xf]
    %v6263 = vld [vmem:[%s6257 + $0x14] sm:$0xf]
    %v6264 = vld [vmem:[%s6257 + $0x18] sm:$0xf]
    %v6265 = vld [vmem:[%s6257 + $0x1c] sm:$0xf]
    %v6266 = vld [vmem:[%s6257 + $0x20] sm:$0xf]
    %v6267 = vld [vmem:[%s6257 + $0x24] sm:$0xf]
    %v6268 = vld [vmem:[%s6257 + $0x28] sm:$0xf]
    %v6269 = vld [vmem:[%s6257 + $0x2c] sm:$0xf]
    %v6270 = vld [vmem:[%s6257 + $0x30] sm:$0xf]
    %v6271 = vld [vmem:[%s6257 + $0x34] sm:$0xf]
    %v6272 = vld [vmem:[%s6257 + $0x38] sm:$0xf]
    %v6273 = vld [vmem:[%s6257 + $0x3c] sm:$0xf]
    %v6274 = vunpack.c.l.bf16 %v6258
    %v6275 = vunpack.c.l.bf16 %v6259
    %v6276 = vunpack.c.l.bf16 %v6260
    %v6277 = vunpack.c.l.bf16 %v6261
    %v6278 = vunpack.c.l.bf16 %v6262
    %v6279 = vunpack.c.l.bf16 %v6263
    %v6280 = vunpack.c.l.bf16 %v6264
    %v6281 = vunpack.c.l.bf16 %v6265
    %v6282 = vunpack.c.l.bf16 %v6266
    %v6283 = vunpack.c.l.bf16 %v6267
    %v6284 = vunpack.c.l.bf16 %v6268
    %v6285 = vunpack.c.l.bf16 %v6269
    %v6286 = vunpack.c.l.bf16 %v6270
    %v6287 = vunpack.c.l.bf16 %v6271
    %v6288 = vunpack.c.l.bf16 %v6272
    %v6289 = vunpack.c.l.bf16 %v6273
    %6290 = vmatpush.msra.mxu0 %v6289
    %6291 = vmatpush.msra.mxu0 %v6288
    %6292 = vmatpush.msra.mxu0 %v6287
    %6293 = vmatpush.msra.mxu0 %v6286
    %6294 = vmatpush.msra.mxu0 %v6285
    %6295 = vmatpush.msra.mxu0 %v6284
    %6296 = vmatpush.msra.mxu0 %v6283
    %6297 = vmatpush.msra.mxu0 %v6282
    %6298 = vmatpush.msra.mxu0 %v6281
    %6299 = vmatpush.msra.mxu0 %v6280
    %6300 = vmatpush.msra.mxu0 %v6279
    %6301 = vmatpush.msra.mxu0 %v6278
    %6302 = vmatpush.msra.mxu0 %v6277
    %6303 = vmatpush.msra.mxu0 %v6276
    %6304 = vmatpush.msra.mxu0 %v6275
    %6305 = vmatpush.msra.mxu0 %v6274
    %6306 = vmatmul.f32.gmra.mxu0 %v6193
    %v6307 = vpop.f32.mrf.mxu0
    %v6308 = vadd.f32 0.0, %v6307
    %6309 = vmatmul.f32.gmra.mxu0 %v6194
    %v6310 = vpop.f32.mrf.mxu0
    %v6311 = vadd.f32 0.0, %v6310
    %6312 = vmatmul.f32.gmra.mxu0 %v6195
    %v6313 = vpop.f32.mrf.mxu0
    %v6314 = vadd.f32 0.0, %v6313
    %6315 = vmatmul.f32.gmra.mxu0 %v6196
    %v6316 = vpop.f32.mrf.mxu0
    %v6317 = vadd.f32 0.0, %v6316
    %6318 = vmatmul.f32.gmra.mxu0 %v6197
    %v6319 = vpop.f32.mrf.mxu0
    %v6320 = vadd.f32 0.0, %v6319
    %6321 = vmatmul.f32.gmra.mxu0 %v6198
    %v6322 = vpop.f32.mrf.mxu0
    %v6323 = vadd.f32 0.0, %v6322
    %6324 = vmatmul.f32.gmra.mxu0 %v6199
    %v6325 = vpop.f32.mrf.mxu0
    %v6326 = vadd.f32 0.0, %v6325
    %6327 = vmatmul.f32.gmra.mxu0 %v6200
    %v6328 = vpop.f32.mrf.mxu0
    %v6329 = vadd.f32 0.0, %v6328
    %6330 = vmatmul.f32.gmra.mxu0 %v6201
    %v6331 = vpop.f32.mrf.mxu0
    %v6332 = vadd.f32 0.0, %v6331
    %6333 = vmatmul.f32.gmra.mxu0 %v6202
    %v6334 = vpop.f32.mrf.mxu0
    %v6335 = vadd.f32 0.0, %v6334
    %6336 = vmatmul.f32.gmra.mxu0 %v6203
    %v6337 = vpop.f32.mrf.mxu0
    %v6338 = vadd.f32 0.0, %v6337
    %6339 = vmatmul.f32.gmra.mxu0 %v6204
    %v6340 = vpop.f32.mrf.mxu0
    %v6341 = vadd.f32 0.0, %v6340
    %6342 = vmatmul.f32.gmra.mxu0 %v6205
    %v6343 = vpop.f32.mrf.mxu0
    %v6344 = vadd.f32 0.0, %v6343
    %6345 = vmatmul.f32.gmra.mxu0 %v6206
    %v6346 = vpop.f32.mrf.mxu0
    %v6347 = vadd.f32 0.0, %v6346
    %6348 = vmatmul.f32.gmra.mxu0 %v6207
    %v6349 = vpop.f32.mrf.mxu0
    %v6350 = vadd.f32 0.0, %v6349
    %6351 = vmatmul.f32.gmra.mxu0 %v6208
    %v6352 = vpop.f32.mrf.mxu0
    %v6353 = vadd.f32 0.0, %v6352
    %6354 = vmatmul.f32.gmra.mxu0 %v6209
    %v6355 = vpop.f32.mrf.mxu0
    %v6356 = vadd.f32 0.0, %v6355
    %6357 = vmatmul.f32.gmra.mxu0 %v6210
    %v6358 = vpop.f32.mrf.mxu0
    %v6359 = vadd.f32 0.0, %v6358
    %6360 = vmatmul.f32.gmra.mxu0 %v6211
    %v6361 = vpop.f32.mrf.mxu0
    %v6362 = vadd.f32 0.0, %v6361
    %6363 = vmatmul.f32.gmra.mxu0 %v6212
    %v6364 = vpop.f32.mrf.mxu0
    %v6365 = vadd.f32 0.0, %v6364
    %6366 = vmatmul.f32.gmra.mxu0 %v6213
    %v6367 = vpop.f32.mrf.mxu0
    %v6368 = vadd.f32 0.0, %v6367
    %6369 = vmatmul.f32.gmra.mxu0 %v6214
    %v6370 = vpop.f32.mrf.mxu0
    %v6371 = vadd.f32 0.0, %v6370
    %6372 = vmatmul.f32.gmra.mxu0 %v6215
    %v6373 = vpop.f32.mrf.mxu0
    %v6374 = vadd.f32 0.0, %v6373
    %6375 = vmatmul.f32.gmra.mxu0 %v6216
    %v6376 = vpop.f32.mrf.mxu0
    %v6377 = vadd.f32 0.0, %v6376
    %6378 = vmatmul.f32.gmra.mxu0 %v6217
    %v6379 = vpop.f32.mrf.mxu0
    %v6380 = vadd.f32 0.0, %v6379
    %6381 = vmatmul.f32.gmra.mxu0 %v6218
    %v6382 = vpop.f32.mrf.mxu0
    %v6383 = vadd.f32 0.0, %v6382
    %6384 = vmatmul.f32.gmra.mxu0 %v6219
    %v6385 = vpop.f32.mrf.mxu0
    %v6386 = vadd.f32 0.0, %v6385
    %6387 = vmatmul.f32.gmra.mxu0 %v6220
    %v6388 = vpop.f32.mrf.mxu0
    %v6389 = vadd.f32 0.0, %v6388
    %6390 = vmatmul.f32.gmra.mxu0 %v6221
    %v6391 = vpop.f32.mrf.mxu0
    %v6392 = vadd.f32 0.0, %v6391
    %6393 = vmatmul.f32.gmra.mxu0 %v6222
    %v6394 = vpop.f32.mrf.mxu0
    %v6395 = vadd.f32 0.0, %v6394
    %6396 = vmatmul.f32.gmra.mxu0 %v6223
    %v6397 = vpop.f32.mrf.mxu0
    %v6398 = vadd.f32 0.0, %v6397
    %6399 = vmatmul.f32.gmra.mxu0 %v6224
    %v6400 = vpop.f32.mrf.mxu0
    %v6401 = vadd.f32 0.0, %v6400
    %6402 = vmatmul.f32.gmra.mxu0 %v6225
    %v6403 = vpop.f32.mrf.mxu0
    %v6404 = vadd.f32 0.0, %v6403
    %6405 = vmatmul.f32.gmra.mxu0 %v6226
    %v6406 = vpop.f32.mrf.mxu0
    %v6407 = vadd.f32 0.0, %v6406
    %6408 = vmatmul.f32.gmra.mxu0 %v6227
    %v6409 = vpop.f32.mrf.mxu0
    %v6410 = vadd.f32 0.0, %v6409
    %6411 = vmatmul.f32.gmra.mxu0 %v6228
    %v6412 = vpop.f32.mrf.mxu0
    %v6413 = vadd.f32 0.0, %v6412
    %6414 = vmatmul.f32.gmra.mxu0 %v6229
    %v6415 = vpop.f32.mrf.mxu0
    %v6416 = vadd.f32 0.0, %v6415
    %6417 = vmatmul.f32.gmra.mxu0 %v6230
    %v6418 = vpop.f32.mrf.mxu0
    %v6419 = vadd.f32 0.0, %v6418
    %6420 = vmatmul.f32.gmra.mxu0 %v6231
    %v6421 = vpop.f32.mrf.mxu0
    %v6422 = vadd.f32 0.0, %v6421
    %6423 = vmatmul.f32.gmra.mxu0 %v6232
    %v6424 = vpop.f32.mrf.mxu0
    %v6425 = vadd.f32 0.0, %v6424
    %6426 = vmatmul.f32.gmra.mxu0 %v6233
    %v6427 = vpop.f32.mrf.mxu0
    %v6428 = vadd.f32 0.0, %v6427
    %6429 = vmatmul.f32.gmra.mxu0 %v6234
    %v6430 = vpop.f32.mrf.mxu0
    %v6431 = vadd.f32 0.0, %v6430
    %6432 = vmatmul.f32.gmra.mxu0 %v6235
    %v6433 = vpop.f32.mrf.mxu0
    %v6434 = vadd.f32 0.0, %v6433
    %6435 = vmatmul.f32.gmra.mxu0 %v6236
    %v6436 = vpop.f32.mrf.mxu0
    %v6437 = vadd.f32 0.0, %v6436
    %6438 = vmatmul.f32.gmra.mxu0 %v6237
    %v6439 = vpop.f32.mrf.mxu0
    %v6440 = vadd.f32 0.0, %v6439
    %6441 = vmatmul.f32.gmra.mxu0 %v6238
    %v6442 = vpop.f32.mrf.mxu0
    %v6443 = vadd.f32 0.0, %v6442
    %6444 = vmatmul.f32.gmra.mxu0 %v6239
    %v6445 = vpop.f32.mrf.mxu0
    %v6446 = vadd.f32 0.0, %v6445
    %6447 = vmatmul.f32.gmra.mxu0 %v6240
    %v6448 = vpop.f32.mrf.mxu0
    %v6449 = vadd.f32 0.0, %v6448
    %6450 = vmatmul.f32.gmra.mxu0 %v6241
    %v6451 = vpop.f32.mrf.mxu0
    %v6452 = vadd.f32 0.0, %v6451
    %6453 = vmatmul.f32.gmra.mxu0 %v6242
    %v6454 = vpop.f32.mrf.mxu0
    %v6455 = vadd.f32 0.0, %v6454
    %6456 = vmatmul.f32.gmra.mxu0 %v6243
    %v6457 = vpop.f32.mrf.mxu0
    %v6458 = vadd.f32 0.0, %v6457
    %6459 = vmatmul.f32.gmra.mxu0 %v6244
    %v6460 = vpop.f32.mrf.mxu0
    %v6461 = vadd.f32 0.0, %v6460
    %6462 = vmatmul.f32.gmra.mxu0 %v6245
    %v6463 = vpop.f32.mrf.mxu0
    %v6464 = vadd.f32 0.0, %v6463
    %6465 = vmatmul.f32.gmra.mxu0 %v6246
    %v6466 = vpop.f32.mrf.mxu0
    %v6467 = vadd.f32 0.0, %v6466
    %6468 = vmatmul.f32.gmra.mxu0 %v6247
    %v6469 = vpop.f32.mrf.mxu0
    %v6470 = vadd.f32 0.0, %v6469
    %6471 = vmatmul.f32.gmra.mxu0 %v6248
    %v6472 = vpop.f32.mrf.mxu0
    %v6473 = vadd.f32 0.0, %v6472
    %6474 = vmatmul.f32.gmra.mxu0 %v6249
    %v6475 = vpop.f32.mrf.mxu0
    %v6476 = vadd.f32 0.0, %v6475
    %6477 = vmatmul.f32.gmra.mxu0 %v6250
    %v6478 = vpop.f32.mrf.mxu0
    %v6479 = vadd.f32 0.0, %v6478
    %6480 = vmatmul.f32.gmra.mxu0 %v6251
    %v6481 = vpop.f32.mrf.mxu0
    %v6482 = vadd.f32 0.0, %v6481
    %6483 = vmatmul.f32.gmra.mxu0 %v6252
    %v6484 = vpop.f32.mrf.mxu0
    %v6485 = vadd.f32 0.0, %v6484
    %6486 = vmatmul.f32.gmra.mxu0 %v6253
    %v6487 = vpop.f32.mrf.mxu0
    %v6488 = vadd.f32 0.0, %v6487
    %6489 = vmatmul.f32.gmra.mxu0 %v6254
    %v6490 = vpop.f32.mrf.mxu0
    %v6491 = vadd.f32 0.0, %v6490
    %6492 = vmatmul.f32.gmra.mxu0 %v6255
    %v6493 = vpop.f32.mrf.mxu0
    %v6494 = vadd.f32 0.0, %v6493
    %6495 = vmatmul.f32.gmra.mxu0 %v6256
    %v6496 = vpop.f32.mrf.mxu0
    %v6497 = vadd.f32 0.0, %v6496
    %6498 = vdwg.mxu0
    %v6499 = vadd.f32 %v5617, %v6308
    %v6500 = vadd.f32 %v5618, %v6311
    %v6501 = vadd.f32 %v5619, %v6314
    %v6502 = vadd.f32 %v5620, %v6317
    %v6503 = vadd.f32 %v5621, %v6320
    %v6504 = vadd.f32 %v5622, %v6323
    %v6505 = vadd.f32 %v5623, %v6326
    %v6506 = vadd.f32 %v5624, %v6329
    %v6507 = vadd.f32 %v5625, %v6332
    %v6508 = vadd.f32 %v5626, %v6335
    %v6509 = vadd.f32 %v5627, %v6338
    %v6510 = vadd.f32 %v5628, %v6341
    %v6511 = vadd.f32 %v5629, %v6344
    %v6512 = vadd.f32 %v5630, %v6347
    %v6513 = vadd.f32 %v5631, %v6350
    %v6514 = vadd.f32 %v5632, %v6353
    %v6515 = vadd.f32 %v5633, %v6356
    %v6516 = vadd.f32 %v5634, %v6359
    %v6517 = vadd.f32 %v5635, %v6362
    %v6518 = vadd.f32 %v5636, %v6365
    %v6519 = vadd.f32 %v5637, %v6368
    %v6520 = vadd.f32 %v5638, %v6371
    %v6521 = vadd.f32 %v5639, %v6374
    %v6522 = vadd.f32 %v5640, %v6377
    %v6523 = vadd.f32 %v5641, %v6380
    %v6524 = vadd.f32 %v5642, %v6383
    %v6525 = vadd.f32 %v5643, %v6386
    %v6526 = vadd.f32 %v5644, %v6389
    %v6527 = vadd.f32 %v5645, %v6392
    %v6528 = vadd.f32 %v5646, %v6395
    %v6529 = vadd.f32 %v5647, %v6398
    %v6530 = vadd.f32 %v5648, %v6401
    %v6531 = vadd.f32 %v5649, %v6404
    %v6532 = vadd.f32 %v5650, %v6407
    %v6533 = vadd.f32 %v5651, %v6410
    %v6534 = vadd.f32 %v5652, %v6413
    %v6535 = vadd.f32 %v5653, %v6416
    %v6536 = vadd.f32 %v5654, %v6419
    %v6537 = vadd.f32 %v5655, %v6422
    %v6538 = vadd.f32 %v5656, %v6425
    %v6539 = vadd.f32 %v5657, %v6428
    %v6540 = vadd.f32 %v5658, %v6431
    %v6541 = vadd.f32 %v5659, %v6434
    %v6542 = vadd.f32 %v5660, %v6437
    %v6543 = vadd.f32 %v5661, %v6440
    %v6544 = vadd.f32 %v5662, %v6443
    %v6545 = vadd.f32 %v5663, %v6446
    %v6546 = vadd.f32 %v5664, %v6449
    %v6547 = vadd.f32 %v5665, %v6452
    %v6548 = vadd.f32 %v5666, %v6455
    %v6549 = vadd.f32 %v5667, %v6458
    %v6550 = vadd.f32 %v5668, %v6461
    %v6551 = vadd.f32 %v5669, %v6464
    %v6552 = vadd.f32 %v5670, %v6467
    %v6553 = vadd.f32 %v5671, %v6470
    %v6554 = vadd.f32 %v5672, %v6473
    %v6555 = vadd.f32 %v5673, %v6476
    %v6556 = vadd.f32 %v5674, %v6479
    %v6557 = vadd.f32 %v5675, %v6482
    %v6558 = vadd.f32 %v5676, %v6485
    %v6559 = vadd.f32 %v5677, %v6488
    %v6560 = vadd.f32 %v5678, %v6491
    %v6561 = vadd.f32 %v5679, %v6494
    %v6562 = vadd.f32 %v5680, %v6497
    %v6563 = vld [vmem:[#allocation2 + $0x28] sm:$0xff]
    %v6564 = vld [vmem:[#allocation2 + $0x30] sm:$0xff]
    %v6565 = vld [vmem:[#allocation2 + $0x38] sm:$0xff]
    %v6566 = vld [vmem:[#allocation2 + $0x40] sm:$0xff]
    %v6567 = vld [vmem:[#allocation2 + $0x48] sm:$0xff]
    %v6568 = vld [vmem:[#allocation2 + $0x50] sm:$0xff]
    %v6569 = vld [vmem:[#allocation2 + $0x58] sm:$0xff]
    %v6570 = vld [vmem:[#allocation2 + $0x60] sm:$0xff]
    %v6571 = vld [vmem:[#allocation2 + $0x68] sm:$0xff]
    %v6572 = vld [vmem:[#allocation2 + $0x70] sm:$0xff]
    %v6573 = vld [vmem:[#allocation2 + $0x78] sm:$0xff]
    %v6574 = vld [vmem:[#allocation2 + $0x80] sm:$0xff]
    %v6575 = vld [vmem:[#allocation2 + $0x88] sm:$0xff]
    %v6576 = vld [vmem:[#allocation2 + $0x90] sm:$0xff]
    %v6577 = vld [vmem:[#allocation2 + $0x98] sm:$0xff]
    %v6578 = vld [vmem:[#allocation2 + $0xa0] sm:$0xff]
    %v6579 = vld [vmem:[#allocation2 + $0xa8] sm:$0xff]
    %v6580 = vld [vmem:[#allocation2 + $0xb0] sm:$0xff]
    %v6581 = vld [vmem:[#allocation2 + $0xb8] sm:$0xff]
    %v6582 = vld [vmem:[#allocation2 + $0xc0] sm:$0xff]
    %v6583 = vld [vmem:[#allocation2 + $0xc8] sm:$0xff]
    %v6584 = vld [vmem:[#allocation2 + $0xd0] sm:$0xff]
    %v6585 = vld [vmem:[#allocation2 + $0xd8] sm:$0xff]
    %v6586 = vld [vmem:[#allocation2 + $0xe0] sm:$0xff]
    %v6587 = vld [vmem:[#allocation2 + $0xe8] sm:$0xff]
    %v6588 = vld [vmem:[#allocation2 + $0xf0] sm:$0xff]
    %v6589 = vld [vmem:[#allocation2 + $0xf8] sm:$0xff]
    %v6590 = vld [vmem:[#allocation2 + $0x100] sm:$0xff]
    %v6591 = vld [vmem:[#allocation2 + $0x108] sm:$0xff]
    %v6592 = vld [vmem:[#allocation2 + $0x110] sm:$0xff]
    %v6593 = vld [vmem:[#allocation2 + $0x118] sm:$0xff]
    %v6594 = vld [vmem:[#allocation2 + $0x120] sm:$0xff]
    %v6595 = vld [vmem:[#allocation2 + $0x128] sm:$0xff]
    %v6596 = vld [vmem:[#allocation2 + $0x130] sm:$0xff]
    %v6597 = vld [vmem:[#allocation2 + $0x138] sm:$0xff]
    %v6598 = vld [vmem:[#allocation2 + $0x140] sm:$0xff]
    %v6599 = vld [vmem:[#allocation2 + $0x148] sm:$0xff]
    %v6600 = vld [vmem:[#allocation2 + $0x150] sm:$0xff]
    %v6601 = vld [vmem:[#allocation2 + $0x158] sm:$0xff]
    %v6602 = vld [vmem:[#allocation2 + $0x160] sm:$0xff]
    %v6603 = vld [vmem:[#allocation2 + $0x168] sm:$0xff]
    %v6604 = vld [vmem:[#allocation2 + $0x170] sm:$0xff]
    %v6605 = vld [vmem:[#allocation2 + $0x178] sm:$0xff]
    %v6606 = vld [vmem:[#allocation2 + $0x180] sm:$0xff]
    %v6607 = vld [vmem:[#allocation2 + $0x188] sm:$0xff]
    %v6608 = vld [vmem:[#allocation2 + $0x190] sm:$0xff]
    %v6609 = vld [vmem:[#allocation2 + $0x198] sm:$0xff]
    %v6610 = vld [vmem:[#allocation2 + $0x1a0] sm:$0xff]
    %v6611 = vld [vmem:[#allocation2 + $0x1a8] sm:$0xff]
    %v6612 = vld [vmem:[#allocation2 + $0x1b0] sm:$0xff]
    %v6613 = vld [vmem:[#allocation2 + $0x1b8] sm:$0xff]
    %v6614 = vld [vmem:[#allocation2 + $0x1c0] sm:$0xff]
    %v6615 = vld [vmem:[#allocation2 + $0x1c8] sm:$0xff]
    %v6616 = vld [vmem:[#allocation2 + $0x1d0] sm:$0xff]
    %v6617 = vld [vmem:[#allocation2 + $0x1d8] sm:$0xff]
    %v6618 = vld [vmem:[#allocation2 + $0x1e0] sm:$0xff]
    %v6619 = vld [vmem:[#allocation2 + $0x1e8] sm:$0xff]
    %v6620 = vld [vmem:[#allocation2 + $0x1f0] sm:$0xff]
    %v6621 = vld [vmem:[#allocation2 + $0x1f8] sm:$0xff]
    %v6622 = vld [vmem:[#allocation2 + $0x200] sm:$0xff]
    %v6623 = vld [vmem:[#allocation2 + $0x208] sm:$0xff]
    %v6624 = vld [vmem:[#allocation2 + $0x210] sm:$0xff]
    %v6625 = vld [vmem:[#allocation2 + $0x218] sm:$0xff]
    %v6626 = vld [vmem:[#allocation2 + $0x220] sm:$0xff]
    %vm6627 = vmand %vm2214, %vm5937
    %vm6628 = vmand %vm2215, %vm5938
    %vm6629 = vmand %vm2216, %vm5939
    %vm6630 = vmand %vm2217, %vm5940
    %vm6631 = vmand %vm2218, %vm5941
    %vm6632 = vmand %vm2219, %vm5942
    %vm6633 = vmand %vm2220, %vm5943
    %vm6634 = vmand %vm2221, %vm5944
    %vm6635 = vmand %vm2222, %vm5945
    %vm6636 = vmand %vm2223, %vm5946
    %vm6637 = vmand %vm2224, %vm5947
    %vm6638 = vmand %vm2225, %vm5948
    %vm6639 = vmand %vm2226, %vm5949
    %vm6640 = vmand %vm2227, %vm5950
    %vm6641 = vmand %vm2228, %vm5951
    %vm6642 = vmand %vm2229, %vm5952
    %vm6643 = vmand %vm2230, %vm5953
    %vm6644 = vmand %vm2231, %vm5954
    %vm6645 = vmand %vm2232, %vm5955
    %vm6646 = vmand %vm2233, %vm5956
    %vm6647 = vmand %vm2234, %vm5957
    %vm6648 = vmand %vm2235, %vm5958
    %vm6649 = vmand %vm2236, %vm5959
    %vm6650 = vmand %vm2237, %vm5960
    %vm6651 = vmand %vm2238, %vm5961
    %vm6652 = vmand %vm2239, %vm5962
    %vm6653 = vmand %vm2240, %vm5963
    %vm6654 = vmand %vm2241, %vm5964
    %vm6655 = vmand %vm2242, %vm5965
    %vm6656 = vmand %vm2243, %vm5966
    %vm6657 = vmand %vm2244, %vm5967
    %vm6658 = vmand %vm2245, %vm5968
    %vm6659 = vmand %vm2246, %vm5969
    %vm6660 = vmand %vm2247, %vm5970
    %vm6661 = vmand %vm2248, %vm5971
    %vm6662 = vmand %vm2249, %vm5972
    %vm6663 = vmand %vm2250, %vm5973
    %vm6664 = vmand %vm2251, %vm5974
    %vm6665 = vmand %vm2252, %vm5975
    %vm6666 = vmand %vm2253, %vm5976
    %vm6667 = vmand %vm2254, %vm5977
    %vm6668 = vmand %vm2255, %vm5978
    %vm6669 = vmand %vm2256, %vm5979
    %vm6670 = vmand %vm2257, %vm5980
    %vm6671 = vmand %vm2258, %vm5981
    %vm6672 = vmand %vm2259, %vm5982
    %vm6673 = vmand %vm2260, %vm5983
    %vm6674 = vmand %vm2261, %vm5984
    %vm6675 = vmand %vm2262, %vm5985
    %vm6676 = vmand %vm2263, %vm5986
    %vm6677 = vmand %vm2264, %vm5987
    %vm6678 = vmand %vm2265, %vm5988
    %vm6679 = vmand %vm2266, %vm5989
    %vm6680 = vmand %vm2267, %vm5990
    %vm6681 = vmand %vm2268, %vm5991
    %vm6682 = vmand %vm2269, %vm5992
    %vm6683 = vmand %vm2270, %vm5993
    %vm6684 = vmand %vm2271, %vm5994
    %vm6685 = vmand %vm2272, %vm5995
    %vm6686 = vmand %vm2273, %vm5996
    %vm6687 = vmand %vm2274, %vm5997
    %vm6688 = vmand %vm2275, %vm5998
    %vm6689 = vmand %vm2276, %vm5999
    %vm6690 = vmand %vm2277, %vm6000
    %v6691 = vsel %vm6627, 1, 0
    %v6692 = vsel %vm6628, 1, 0
    %v6693 = vsel %vm6629, 1, 0
    %v6694 = vsel %vm6630, 1, 0
    %v6695 = vsel %vm6631, 1, 0
    %v6696 = vsel %vm6632, 1, 0
    %v6697 = vsel %vm6633, 1, 0
    %v6698 = vsel %vm6634, 1, 0
    %v6699 = vsel %vm6635, 1, 0
    %v6700 = vsel %vm6636, 1, 0
    %v6701 = vsel %vm6637, 1, 0
    %v6702 = vsel %vm6638, 1, 0
    %v6703 = vsel %vm6639, 1, 0
    %v6704 = vsel %vm6640, 1, 0
    %v6705 = vsel %vm6641, 1, 0
    %v6706 = vsel %vm6642, 1, 0
    %v6707 = vsel %vm6643, 1, 0
    %v6708 = vsel %vm6644, 1, 0
    %v6709 = vsel %vm6645, 1, 0
    %v6710 = vsel %vm6646, 1, 0
    %v6711 = vsel %vm6647, 1, 0
    %v6712 = vsel %vm6648, 1, 0
    %v6713 = vsel %vm6649, 1, 0
    %v6714 = vsel %vm6650, 1, 0
    %v6715 = vsel %vm6651, 1, 0
    %v6716 = vsel %vm6652, 1, 0
    %v6717 = vsel %vm6653, 1, 0
    %v6718 = vsel %vm6654, 1, 0
    %v6719 = vsel %vm6655, 1, 0
    %v6720 = vsel %vm6656, 1, 0
    %v6721 = vsel %vm6657, 1, 0
    %v6722 = vsel %vm6658, 1, 0
    %v6723 = vsel %vm6659, 1, 0
    %v6724 = vsel %vm6660, 1, 0
    %v6725 = vsel %vm6661, 1, 0
    %v6726 = vsel %vm6662, 1, 0
    %v6727 = vsel %vm6663, 1, 0
    %v6728 = vsel %vm6664, 1, 0
    %v6729 = vsel %vm6665, 1, 0
    %v6730 = vsel %vm6666, 1, 0
    %v6731 = vsel %vm6667, 1, 0
    %v6732 = vsel %vm6668, 1, 0
    %v6733 = vsel %vm6669, 1, 0
    %v6734 = vsel %vm6670, 1, 0
    %v6735 = vsel %vm6671, 1, 0
    %v6736 = vsel %vm6672, 1, 0
    %v6737 = vsel %vm6673, 1, 0
    %v6738 = vsel %vm6674, 1, 0
    %v6739 = vsel %vm6675, 1, 0
    %v6740 = vsel %vm6676, 1, 0
    %v6741 = vsel %vm6677, 1, 0
    %v6742 = vsel %vm6678, 1, 0
    %v6743 = vsel %vm6679, 1, 0
    %v6744 = vsel %vm6680, 1, 0
    %v6745 = vsel %vm6681, 1, 0
    %v6746 = vsel %vm6682, 1, 0
    %v6747 = vsel %vm6683, 1, 0
    %v6748 = vsel %vm6684, 1, 0
    %v6749 = vsel %vm6685, 1, 0
    %v6750 = vsel %vm6686, 1, 0
    %v6751 = vsel %vm6687, 1, 0
    %v6752 = vsel %vm6688, 1, 0
    %v6753 = vsel %vm6689, 1, 0
    %v6754 = vsel %vm6690, 1, 0
    %vm6755 = vcmp.eq.s32.totalorder %v6691, 1
    %vm6756 = vcmp.eq.s32.totalorder %v6692, 1
    %vm6757 = vcmp.eq.s32.totalorder %v6693, 1
    %vm6758 = vcmp.eq.s32.totalorder %v6694, 1
    %vm6759 = vcmp.eq.s32.totalorder %v6695, 1
    %vm6760 = vcmp.eq.s32.totalorder %v6696, 1
    %vm6761 = vcmp.eq.s32.totalorder %v6697, 1
    %vm6762 = vcmp.eq.s32.totalorder %v6698, 1
    %vm6763 = vcmp.eq.s32.totalorder %v6699, 1
    %vm6764 = vcmp.eq.s32.totalorder %v6700, 1
    %vm6765 = vcmp.eq.s32.totalorder %v6701, 1
    %vm6766 = vcmp.eq.s32.totalorder %v6702, 1
    %vm6767 = vcmp.eq.s32.totalorder %v6703, 1
    %vm6768 = vcmp.eq.s32.totalorder %v6704, 1
    %vm6769 = vcmp.eq.s32.totalorder %v6705, 1
    %vm6770 = vcmp.eq.s32.totalorder %v6706, 1
    %vm6771 = vcmp.eq.s32.totalorder %v6707, 1
    %vm6772 = vcmp.eq.s32.totalorder %v6708, 1
    %vm6773 = vcmp.eq.s32.totalorder %v6709, 1
    %vm6774 = vcmp.eq.s32.totalorder %v6710, 1
    %vm6775 = vcmp.eq.s32.totalorder %v6711, 1
    %vm6776 = vcmp.eq.s32.totalorder %v6712, 1
    %vm6777 = vcmp.eq.s32.totalorder %v6713, 1
    %vm6778 = vcmp.eq.s32.totalorder %v6714, 1
    %vm6779 = vcmp.eq.s32.totalorder %v6715, 1
    %vm6780 = vcmp.eq.s32.totalorder %v6716, 1
    %vm6781 = vcmp.eq.s32.totalorder %v6717, 1
    %vm6782 = vcmp.eq.s32.totalorder %v6718, 1
    %vm6783 = vcmp.eq.s32.totalorder %v6719, 1
    %vm6784 = vcmp.eq.s32.totalorder %v6720, 1
    %vm6785 = vcmp.eq.s32.totalorder %v6721, 1
    %vm6786 = vcmp.eq.s32.totalorder %v6722, 1
    %vm6787 = vcmp.eq.s32.totalorder %v6723, 1
    %vm6788 = vcmp.eq.s32.totalorder %v6724, 1
    %vm6789 = vcmp.eq.s32.totalorder %v6725, 1
    %vm6790 = vcmp.eq.s32.totalorder %v6726, 1
    %vm6791 = vcmp.eq.s32.totalorder %v6727, 1
    %vm6792 = vcmp.eq.s32.totalorder %v6728, 1
    %vm6793 = vcmp.eq.s32.totalorder %v6729, 1
    %vm6794 = vcmp.eq.s32.totalorder %v6730, 1
    %vm6795 = vcmp.eq.s32.totalorder %v6731, 1
    %vm6796 = vcmp.eq.s32.totalorder %v6732, 1
    %vm6797 = vcmp.eq.s32.totalorder %v6733, 1
    %vm6798 = vcmp.eq.s32.totalorder %v6734, 1
    %vm6799 = vcmp.eq.s32.totalorder %v6735, 1
    %vm6800 = vcmp.eq.s32.totalorder %v6736, 1
    %vm6801 = vcmp.eq.s32.totalorder %v6737, 1
    %vm6802 = vcmp.eq.s32.totalorder %v6738, 1
    %vm6803 = vcmp.eq.s32.totalorder %v6739, 1
    %vm6804 = vcmp.eq.s32.totalorder %v6740, 1
    %vm6805 = vcmp.eq.s32.totalorder %v6741, 1
    %vm6806 = vcmp.eq.s32.totalorder %v6742, 1
    %vm6807 = vcmp.eq.s32.totalorder %v6743, 1
    %vm6808 = vcmp.eq.s32.totalorder %v6744, 1
    %vm6809 = vcmp.eq.s32.totalorder %v6745, 1
    %vm6810 = vcmp.eq.s32.totalorder %v6746, 1
    %vm6811 = vcmp.eq.s32.totalorder %v6747, 1
    %vm6812 = vcmp.eq.s32.totalorder %v6748, 1
    %vm6813 = vcmp.eq.s32.totalorder %v6749, 1
    %vm6814 = vcmp.eq.s32.totalorder %v6750, 1
    %vm6815 = vcmp.eq.s32.totalorder %v6751, 1
    %vm6816 = vcmp.eq.s32.totalorder %v6752, 1
    %vm6817 = vcmp.eq.s32.totalorder %v6753, 1
    %vm6818 = vcmp.eq.s32.totalorder %v6754, 1
    %v6819 = vsel %vm6755, %v6563, 0.0
    %v6820 = vsel %vm6756, %v6564, 0.0
    %v6821 = vsel %vm6757, %v6565, 0.0
    %v6822 = vsel %vm6758, %v6566, 0.0
    %v6823 = vsel %vm6759, %v6567, 0.0
    %v6824 = vsel %vm6760, %v6568, 0.0
    %v6825 = vsel %vm6761, %v6569, 0.0
    %v6826 = vsel %vm6762, %v6570, 0.0
    %v6827 = vsel %vm6763, %v6571, 0.0
    %v6828 = vsel %vm6764, %v6572, 0.0
    %v6829 = vsel %vm6765, %v6573, 0.0
    %v6830 = vsel %vm6766, %v6574, 0.0
    %v6831 = vsel %vm6767, %v6575, 0.0
    %v6832 = vsel %vm6768, %v6576, 0.0
    %v6833 = vsel %vm6769, %v6577, 0.0
    %v6834 = vsel %vm6770, %v6578, 0.0
    %v6835 = vsel %vm6771, %v6579, 0.0
    %v6836 = vsel %vm6772, %v6580, 0.0
    %v6837 = vsel %vm6773, %v6581, 0.0
    %v6838 = vsel %vm6774, %v6582, 0.0
    %v6839 = vsel %vm6775, %v6583, 0.0
    %v6840 = vsel %vm6776, %v6584, 0.0
    %v6841 = vsel %vm6777, %v6585, 0.0
    %v6842 = vsel %vm6778, %v6586, 0.0
    %v6843 = vsel %vm6779, %v6587, 0.0
    %v6844 = vsel %vm6780, %v6588, 0.0
    %v6845 = vsel %vm6781, %v6589, 0.0
    %v6846 = vsel %vm6782, %v6590, 0.0
    %v6847 = vsel %vm6783, %v6591, 0.0
    %v6848 = vsel %vm6784, %v6592, 0.0
    %v6849 = vsel %vm6785, %v6593, 0.0
    %v6850 = vsel %vm6786, %v6594, 0.0
    %v6851 = vsel %vm6787, %v6595, 0.0
    %v6852 = vsel %vm6788, %v6596, 0.0
    %v6853 = vsel %vm6789, %v6597, 0.0
    %v6854 = vsel %vm6790, %v6598, 0.0
    %v6855 = vsel %vm6791, %v6599, 0.0
    %v6856 = vsel %vm6792, %v6600, 0.0
    %v6857 = vsel %vm6793, %v6601, 0.0
    %v6858 = vsel %vm6794, %v6602, 0.0
    %v6859 = vsel %vm6795, %v6603, 0.0
    %v6860 = vsel %vm6796, %v6604, 0.0
    %v6861 = vsel %vm6797, %v6605, 0.0
    %v6862 = vsel %vm6798, %v6606, 0.0
    %v6863 = vsel %vm6799, %v6607, 0.0
    %v6864 = vsel %vm6800, %v6608, 0.0
    %v6865 = vsel %vm6801, %v6609, 0.0
    %v6866 = vsel %vm6802, %v6610, 0.0
    %v6867 = vsel %vm6803, %v6611, 0.0
    %v6868 = vsel %vm6804, %v6612, 0.0
    %v6869 = vsel %vm6805, %v6613, 0.0
    %v6870 = vsel %vm6806, %v6614, 0.0
    %v6871 = vsel %vm6807, %v6615, 0.0
    %v6872 = vsel %vm6808, %v6616, 0.0
    %v6873 = vsel %vm6809, %v6617, 0.0
    %v6874 = vsel %vm6810, %v6618, 0.0
    %v6875 = vsel %vm6811, %v6619, 0.0
    %v6876 = vsel %vm6812, %v6620, 0.0
    %v6877 = vsel %vm6813, %v6621, 0.0
    %v6878 = vsel %vm6814, %v6622, 0.0
    %v6879 = vsel %vm6815, %v6623, 0.0
    %v6880 = vsel %vm6816, %v6624, 0.0
    %v6881 = vsel %vm6817, %v6625, 0.0
    %v6882 = vsel %vm6818, %v6626, 0.0
    %s6883 = scalar_lea.vmem [#allocation8], 448
    %v6884 = vld [vmem:[%s6883] sm:$0xf]
    %v6885 = vld [vmem:[%s6883 + $0x4] sm:$0xf]
    %v6886 = vld [vmem:[%s6883 + $0x8] sm:$0xf]
    %v6887 = vld [vmem:[%s6883 + $0xc] sm:$0xf]
    %v6888 = vld [vmem:[%s6883 + $0x10] sm:$0xf]
    %v6889 = vld [vmem:[%s6883 + $0x14] sm:$0xf]
    %v6890 = vld [vmem:[%s6883 + $0x18] sm:$0xf]
    %v6891 = vld [vmem:[%s6883 + $0x1c] sm:$0xf]
    %v6892 = vld [vmem:[%s6883 + $0x20] sm:$0xf]
    %v6893 = vld [vmem:[%s6883 + $0x24] sm:$0xf]
    %v6894 = vld [vmem:[%s6883 + $0x28] sm:$0xf]
    %v6895 = vld [vmem:[%s6883 + $0x2c] sm:$0xf]
    %v6896 = vld [vmem:[%s6883 + $0x30] sm:$0xf]
    %v6897 = vld [vmem:[%s6883 + $0x34] sm:$0xf]
    %v6898 = vld [vmem:[%s6883 + $0x38] sm:$0xf]
    %v6899 = vld [vmem:[%s6883 + $0x3c] sm:$0xf]
    %v6900 = vunpack.c.l.bf16 %v6884
    %v6901 = vunpack.c.l.bf16 %v6885
    %v6902 = vunpack.c.l.bf16 %v6886
    %v6903 = vunpack.c.l.bf16 %v6887
    %v6904 = vunpack.c.l.bf16 %v6888
    %v6905 = vunpack.c.l.bf16 %v6889
    %v6906 = vunpack.c.l.bf16 %v6890
    %v6907 = vunpack.c.l.bf16 %v6891
    %v6908 = vunpack.c.l.bf16 %v6892
    %v6909 = vunpack.c.l.bf16 %v6893
    %v6910 = vunpack.c.l.bf16 %v6894
    %v6911 = vunpack.c.l.bf16 %v6895
    %v6912 = vunpack.c.l.bf16 %v6896
    %v6913 = vunpack.c.l.bf16 %v6897
    %v6914 = vunpack.c.l.bf16 %v6898
    %v6915 = vunpack.c.l.bf16 %v6899
    %6916 = vmatpush.msra.mxu0 %v6915
    %6917 = vmatpush.msra.mxu0 %v6914
    %6918 = vmatpush.msra.mxu0 %v6913
    %6919 = vmatpush.msra.mxu0 %v6912
    %6920 = vmatpush.msra.mxu0 %v6911
    %6921 = vmatpush.msra.mxu0 %v6910
    %6922 = vmatpush.msra.mxu0 %v6909
    %6923 = vmatpush.msra.mxu0 %v6908
    %6924 = vmatpush.msra.mxu0 %v6907
    %6925 = vmatpush.msra.mxu0 %v6906
    %6926 = vmatpush.msra.mxu0 %v6905
    %6927 = vmatpush.msra.mxu0 %v6904
    %6928 = vmatpush.msra.mxu0 %v6903
    %6929 = vmatpush.msra.mxu0 %v6902
    %6930 = vmatpush.msra.mxu0 %v6901
    %6931 = vmatpush.msra.mxu0 %v6900
    %6932 = vmatmul.f32.gmra.mxu0 %v6819
    %v6933 = vpop.f32.mrf.mxu0
    %v6934 = vadd.f32 0.0, %v6933
    %6935 = vmatmul.f32.gmra.mxu0 %v6820
    %v6936 = vpop.f32.mrf.mxu0
    %v6937 = vadd.f32 0.0, %v6936
    %6938 = vmatmul.f32.gmra.mxu0 %v6821
    %v6939 = vpop.f32.mrf.mxu0
    %v6940 = vadd.f32 0.0, %v6939
    %6941 = vmatmul.f32.gmra.mxu0 %v6822
    %v6942 = vpop.f32.mrf.mxu0
    %v6943 = vadd.f32 0.0, %v6942
    %6944 = vmatmul.f32.gmra.mxu0 %v6823
    %v6945 = vpop.f32.mrf.mxu0
    %v6946 = vadd.f32 0.0, %v6945
    %6947 = vmatmul.f32.gmra.mxu0 %v6824
    %v6948 = vpop.f32.mrf.mxu0
    %v6949 = vadd.f32 0.0, %v6948
    %6950 = vmatmul.f32.gmra.mxu0 %v6825
    %v6951 = vpop.f32.mrf.mxu0
    %v6952 = vadd.f32 0.0, %v6951
    %6953 = vmatmul.f32.gmra.mxu0 %v6826
    %v6954 = vpop.f32.mrf.mxu0
    %v6955 = vadd.f32 0.0, %v6954
    %6956 = vmatmul.f32.gmra.mxu0 %v6827
    %v6957 = vpop.f32.mrf.mxu0
    %v6958 = vadd.f32 0.0, %v6957
    %6959 = vmatmul.f32.gmra.mxu0 %v6828
    %v6960 = vpop.f32.mrf.mxu0
    %v6961 = vadd.f32 0.0, %v6960
    %6962 = vmatmul.f32.gmra.mxu0 %v6829
    %v6963 = vpop.f32.mrf.mxu0
    %v6964 = vadd.f32 0.0, %v6963
    %6965 = vmatmul.f32.gmra.mxu0 %v6830
    %v6966 = vpop.f32.mrf.mxu0
    %v6967 = vadd.f32 0.0, %v6966
    %6968 = vmatmul.f32.gmra.mxu0 %v6831
    %v6969 = vpop.f32.mrf.mxu0
    %v6970 = vadd.f32 0.0, %v6969
    %6971 = vmatmul.f32.gmra.mxu0 %v6832
    %v6972 = vpop.f32.mrf.mxu0
    %v6973 = vadd.f32 0.0, %v6972
    %6974 = vmatmul.f32.gmra.mxu0 %v6833
    %v6975 = vpop.f32.mrf.mxu0
    %v6976 = vadd.f32 0.0, %v6975
    %6977 = vmatmul.f32.gmra.mxu0 %v6834
    %v6978 = vpop.f32.mrf.mxu0
    %v6979 = vadd.f32 0.0, %v6978
    %6980 = vmatmul.f32.gmra.mxu0 %v6835
    %v6981 = vpop.f32.mrf.mxu0
    %v6982 = vadd.f32 0.0, %v6981
    %6983 = vmatmul.f32.gmra.mxu0 %v6836
    %v6984 = vpop.f32.mrf.mxu0
    %v6985 = vadd.f32 0.0, %v6984
    %6986 = vmatmul.f32.gmra.mxu0 %v6837
    %v6987 = vpop.f32.mrf.mxu0
    %v6988 = vadd.f32 0.0, %v6987
    %6989 = vmatmul.f32.gmra.mxu0 %v6838
    %v6990 = vpop.f32.mrf.mxu0
    %v6991 = vadd.f32 0.0, %v6990
    %6992 = vmatmul.f32.gmra.mxu0 %v6839
    %v6993 = vpop.f32.mrf.mxu0
    %v6994 = vadd.f32 0.0, %v6993
    %6995 = vmatmul.f32.gmra.mxu0 %v6840
    %v6996 = vpop.f32.mrf.mxu0
    %v6997 = vadd.f32 0.0, %v6996
    %6998 = vmatmul.f32.gmra.mxu0 %v6841
    %v6999 = vpop.f32.mrf.mxu0
    %v7000 = vadd.f32 0.0, %v6999
    %7001 = vmatmul.f32.gmra.mxu0 %v6842
    %v7002 = vpop.f32.mrf.mxu0
    %v7003 = vadd.f32 0.0, %v7002
    %7004 = vmatmul.f32.gmra.mxu0 %v6843
    %v7005 = vpop.f32.mrf.mxu0
    %v7006 = vadd.f32 0.0, %v7005
    %7007 = vmatmul.f32.gmra.mxu0 %v6844
    %v7008 = vpop.f32.mrf.mxu0
    %v7009 = vadd.f32 0.0, %v7008
    %7010 = vmatmul.f32.gmra.mxu0 %v6845
    %v7011 = vpop.f32.mrf.mxu0
    %v7012 = vadd.f32 0.0, %v7011
    %7013 = vmatmul.f32.gmra.mxu0 %v6846
    %v7014 = vpop.f32.mrf.mxu0
    %v7015 = vadd.f32 0.0, %v7014
    %7016 = vmatmul.f32.gmra.mxu0 %v6847
    %v7017 = vpop.f32.mrf.mxu0
    %v7018 = vadd.f32 0.0, %v7017
    %7019 = vmatmul.f32.gmra.mxu0 %v6848
    %v7020 = vpop.f32.mrf.mxu0
    %v7021 = vadd.f32 0.0, %v7020
    %7022 = vmatmul.f32.gmra.mxu0 %v6849
    %v7023 = vpop.f32.mrf.mxu0
    %v7024 = vadd.f32 0.0, %v7023
    %7025 = vmatmul.f32.gmra.mxu0 %v6850
    %v7026 = vpop.f32.mrf.mxu0
    %v7027 = vadd.f32 0.0, %v7026
    %7028 = vmatmul.f32.gmra.mxu0 %v6851
    %v7029 = vpop.f32.mrf.mxu0
    %v7030 = vadd.f32 0.0, %v7029
    %7031 = vmatmul.f32.gmra.mxu0 %v6852
    %v7032 = vpop.f32.mrf.mxu0
    %v7033 = vadd.f32 0.0, %v7032
    %7034 = vmatmul.f32.gmra.mxu0 %v6853
    %v7035 = vpop.f32.mrf.mxu0
    %v7036 = vadd.f32 0.0, %v7035
    %7037 = vmatmul.f32.gmra.mxu0 %v6854
    %v7038 = vpop.f32.mrf.mxu0
    %v7039 = vadd.f32 0.0, %v7038
    %7040 = vmatmul.f32.gmra.mxu0 %v6855
    %v7041 = vpop.f32.mrf.mxu0
    %v7042 = vadd.f32 0.0, %v7041
    %7043 = vmatmul.f32.gmra.mxu0 %v6856
    %v7044 = vpop.f32.mrf.mxu0
    %v7045 = vadd.f32 0.0, %v7044
    %7046 = vmatmul.f32.gmra.mxu0 %v6857
    %v7047 = vpop.f32.mrf.mxu0
    %v7048 = vadd.f32 0.0, %v7047
    %7049 = vmatmul.f32.gmra.mxu0 %v6858
    %v7050 = vpop.f32.mrf.mxu0
    %v7051 = vadd.f32 0.0, %v7050
    %7052 = vmatmul.f32.gmra.mxu0 %v6859
    %v7053 = vpop.f32.mrf.mxu0
    %v7054 = vadd.f32 0.0, %v7053
    %7055 = vmatmul.f32.gmra.mxu0 %v6860
    %v7056 = vpop.f32.mrf.mxu0
    %v7057 = vadd.f32 0.0, %v7056
    %7058 = vmatmul.f32.gmra.mxu0 %v6861
    %v7059 = vpop.f32.mrf.mxu0
    %v7060 = vadd.f32 0.0, %v7059
    %7061 = vmatmul.f32.gmra.mxu0 %v6862
    %v7062 = vpop.f32.mrf.mxu0
    %v7063 = vadd.f32 0.0, %v7062
    %7064 = vmatmul.f32.gmra.mxu0 %v6863
    %v7065 = vpop.f32.mrf.mxu0
    %v7066 = vadd.f32 0.0, %v7065
    %7067 = vmatmul.f32.gmra.mxu0 %v6864
    %v7068 = vpop.f32.mrf.mxu0
    %v7069 = vadd.f32 0.0, %v7068
    %7070 = vmatmul.f32.gmra.mxu0 %v6865
    %v7071 = vpop.f32.mrf.mxu0
    %v7072 = vadd.f32 0.0, %v7071
    %7073 = vmatmul.f32.gmra.mxu0 %v6866
    %v7074 = vpop.f32.mrf.mxu0
    %v7075 = vadd.f32 0.0, %v7074
    %7076 = vmatmul.f32.gmra.mxu0 %v6867
    %v7077 = vpop.f32.mrf.mxu0
    %v7078 = vadd.f32 0.0, %v7077
    %7079 = vmatmul.f32.gmra.mxu0 %v6868
    %v7080 = vpop.f32.mrf.mxu0
    %v7081 = vadd.f32 0.0, %v7080
    %7082 = vmatmul.f32.gmra.mxu0 %v6869
    %v7083 = vpop.f32.mrf.mxu0
    %v7084 = vadd.f32 0.0, %v7083
    %7085 = vmatmul.f32.gmra.mxu0 %v6870
    %v7086 = vpop.f32.mrf.mxu0
    %v7087 = vadd.f32 0.0, %v7086
    %7088 = vmatmul.f32.gmra.mxu0 %v6871
    %v7089 = vpop.f32.mrf.mxu0
    %v7090 = vadd.f32 0.0, %v7089
    %7091 = vmatmul.f32.gmra.mxu0 %v6872
    %v7092 = vpop.f32.mrf.mxu0
    %v7093 = vadd.f32 0.0, %v7092
    %7094 = vmatmul.f32.gmra.mxu0 %v6873
    %v7095 = vpop.f32.mrf.mxu0
    %v7096 = vadd.f32 0.0, %v7095
    %7097 = vmatmul.f32.gmra.mxu0 %v6874
    %v7098 = vpop.f32.mrf.mxu0
    %v7099 = vadd.f32 0.0, %v7098
    %7100 = vmatmul.f32.gmra.mxu0 %v6875
    %v7101 = vpop.f32.mrf.mxu0
    %v7102 = vadd.f32 0.0, %v7101
    %7103 = vmatmul.f32.gmra.mxu0 %v6876
    %v7104 = vpop.f32.mrf.mxu0
    %v7105 = vadd.f32 0.0, %v7104
    %7106 = vmatmul.f32.gmra.mxu0 %v6877
    %v7107 = vpop.f32.mrf.mxu0
    %v7108 = vadd.f32 0.0, %v7107
    %7109 = vmatmul.f32.gmra.mxu0 %v6878
    %v7110 = vpop.f32.mrf.mxu0
    %v7111 = vadd.f32 0.0, %v7110
    %7112 = vmatmul.f32.gmra.mxu0 %v6879
    %v7113 = vpop.f32.mrf.mxu0
    %v7114 = vadd.f32 0.0, %v7113
    %7115 = vmatmul.f32.gmra.mxu0 %v6880
    %v7116 = vpop.f32.mrf.mxu0
    %v7117 = vadd.f32 0.0, %v7116
    %7118 = vmatmul.f32.gmra.mxu0 %v6881
    %v7119 = vpop.f32.mrf.mxu0
    %v7120 = vadd.f32 0.0, %v7119
    %7121 = vmatmul.f32.gmra.mxu0 %v6882
    %v7122 = vpop.f32.mrf.mxu0
    %v7123 = vadd.f32 0.0, %v7122
    %7124 = vdwg.mxu0
    %v7125 = vadd.f32 %v6499, %v6934
    %v7126 = vadd.f32 %v6500, %v6937
    %v7127 = vadd.f32 %v6501, %v6940
    %v7128 = vadd.f32 %v6502, %v6943
    %v7129 = vadd.f32 %v6503, %v6946
    %v7130 = vadd.f32 %v6504, %v6949
    %v7131 = vadd.f32 %v6505, %v6952
    %v7132 = vadd.f32 %v6506, %v6955
    %v7133 = vadd.f32 %v6507, %v6958
    %v7134 = vadd.f32 %v6508, %v6961
    %v7135 = vadd.f32 %v6509, %v6964
    %v7136 = vadd.f32 %v6510, %v6967
    %v7137 = vadd.f32 %v6511, %v6970
    %v7138 = vadd.f32 %v6512, %v6973
    %v7139 = vadd.f32 %v6513, %v6976
    %v7140 = vadd.f32 %v6514, %v6979
    %v7141 = vadd.f32 %v6515, %v6982
    %v7142 = vadd.f32 %v6516, %v6985
    %v7143 = vadd.f32 %v6517, %v6988
    %v7144 = vadd.f32 %v6518, %v6991
    %v7145 = vadd.f32 %v6519, %v6994
    %v7146 = vadd.f32 %v6520, %v6997
    %v7147 = vadd.f32 %v6521, %v7000
    %v7148 = vadd.f32 %v6522, %v7003
    %v7149 = vadd.f32 %v6523, %v7006
    %v7150 = vadd.f32 %v6524, %v7009
    %v7151 = vadd.f32 %v6525, %v7012
    %v7152 = vadd.f32 %v6526, %v7015
    %v7153 = vadd.f32 %v6527, %v7018
    %v7154 = vadd.f32 %v6528, %v7021
    %v7155 = vadd.f32 %v6529, %v7024
    %v7156 = vadd.f32 %v6530, %v7027
    %v7157 = vadd.f32 %v6531, %v7030
    %v7158 = vadd.f32 %v6532, %v7033
    %v7159 = vadd.f32 %v6533, %v7036
    %v7160 = vadd.f32 %v6534, %v7039
    %v7161 = vadd.f32 %v6535, %v7042
    %v7162 = vadd.f32 %v6536, %v7045
    %v7163 = vadd.f32 %v6537, %v7048
    %v7164 = vadd.f32 %v6538, %v7051
    %v7165 = vadd.f32 %v6539, %v7054
    %v7166 = vadd.f32 %v6540, %v7057
    %v7167 = vadd.f32 %v6541, %v7060
    %v7168 = vadd.f32 %v6542, %v7063
    %v7169 = vadd.f32 %v6543, %v7066
    %v7170 = vadd.f32 %v6544, %v7069
    %v7171 = vadd.f32 %v6545, %v7072
    %v7172 = vadd.f32 %v6546, %v7075
    %v7173 = vadd.f32 %v6547, %v7078
    %v7174 = vadd.f32 %v6548, %v7081
    %v7175 = vadd.f32 %v6549, %v7084
    %v7176 = vadd.f32 %v6550, %v7087
    %v7177 = vadd.f32 %v6551, %v7090
    %v7178 = vadd.f32 %v6552, %v7093
    %v7179 = vadd.f32 %v6553, %v7096
    %v7180 = vadd.f32 %v6554, %v7099
    %v7181 = vadd.f32 %v6555, %v7102
    %v7182 = vadd.f32 %v6556, %v7105
    %v7183 = vadd.f32 %v6557, %v7108
    %v7184 = vadd.f32 %v6558, %v7111
    %v7185 = vadd.f32 %v6559, %v7114
    %v7186 = vadd.f32 %v6560, %v7117
    %v7187 = vadd.f32 %v6561, %v7120
    %v7188 = vadd.f32 %v6562, %v7123
    %v7189 = vld [vmem:[#allocation2 + $0x29] sm:$0xff]
    %v7190 = vld [vmem:[#allocation2 + $0x31] sm:$0xff]
    %v7191 = vld [vmem:[#allocation2 + $0x39] sm:$0xff]
    %v7192 = vld [vmem:[#allocation2 + $0x41] sm:$0xff]
    %v7193 = vld [vmem:[#allocation2 + $0x49] sm:$0xff]
    %v7194 = vld [vmem:[#allocation2 + $0x51] sm:$0xff]
    %v7195 = vld [vmem:[#allocation2 + $0x59] sm:$0xff]
    %v7196 = vld [vmem:[#allocation2 + $0x61] sm:$0xff]
    %v7197 = vld [vmem:[#allocation2 + $0x69] sm:$0xff]
    %v7198 = vld [vmem:[#allocation2 + $0x71] sm:$0xff]
    %v7199 = vld [vmem:[#allocation2 + $0x79] sm:$0xff]
    %v7200 = vld [vmem:[#allocation2 + $0x81] sm:$0xff]
    %v7201 = vld [vmem:[#allocation2 + $0x89] sm:$0xff]
    %v7202 = vld [vmem:[#allocation2 + $0x91] sm:$0xff]
    %v7203 = vld [vmem:[#allocation2 + $0x99] sm:$0xff]
    %v7204 = vld [vmem:[#allocation2 + $0xa1] sm:$0xff]
    %v7205 = vld [vmem:[#allocation2 + $0xa9] sm:$0xff]
    %v7206 = vld [vmem:[#allocation2 + $0xb1] sm:$0xff]
    %v7207 = vld [vmem:[#allocation2 + $0xb9] sm:$0xff]
    %v7208 = vld [vmem:[#allocation2 + $0xc1] sm:$0xff]
    %v7209 = vld [vmem:[#allocation2 + $0xc9] sm:$0xff]
    %v7210 = vld [vmem:[#allocation2 + $0xd1] sm:$0xff]
    %v7211 = vld [vmem:[#allocation2 + $0xd9] sm:$0xff]
    %v7212 = vld [vmem:[#allocation2 + $0xe1] sm:$0xff]
    %v7213 = vld [vmem:[#allocation2 + $0xe9] sm:$0xff]
    %v7214 = vld [vmem:[#allocation2 + $0xf1] sm:$0xff]
    %v7215 = vld [vmem:[#allocation2 + $0xf9] sm:$0xff]
    %v7216 = vld [vmem:[#allocation2 + $0x101] sm:$0xff]
    %v7217 = vld [vmem:[#allocation2 + $0x109] sm:$0xff]
    %v7218 = vld [vmem:[#allocation2 + $0x111] sm:$0xff]
    %v7219 = vld [vmem:[#allocation2 + $0x119] sm:$0xff]
    %v7220 = vld [vmem:[#allocation2 + $0x121] sm:$0xff]
    %v7221 = vld [vmem:[#allocation2 + $0x129] sm:$0xff]
    %v7222 = vld [vmem:[#allocation2 + $0x131] sm:$0xff]
    %v7223 = vld [vmem:[#allocation2 + $0x139] sm:$0xff]
    %v7224 = vld [vmem:[#allocation2 + $0x141] sm:$0xff]
    %v7225 = vld [vmem:[#allocation2 + $0x149] sm:$0xff]
    %v7226 = vld [vmem:[#allocation2 + $0x151] sm:$0xff]
    %v7227 = vld [vmem:[#allocation2 + $0x159] sm:$0xff]
    %v7228 = vld [vmem:[#allocation2 + $0x161] sm:$0xff]
    %v7229 = vld [vmem:[#allocation2 + $0x169] sm:$0xff]
    %v7230 = vld [vmem:[#allocation2 + $0x171] sm:$0xff]
    %v7231 = vld [vmem:[#allocation2 + $0x179] sm:$0xff]
    %v7232 = vld [vmem:[#allocation2 + $0x181] sm:$0xff]
    %v7233 = vld [vmem:[#allocation2 + $0x189] sm:$0xff]
    %v7234 = vld [vmem:[#allocation2 + $0x191] sm:$0xff]
    %v7235 = vld [vmem:[#allocation2 + $0x199] sm:$0xff]
    %v7236 = vld [vmem:[#allocation2 + $0x1a1] sm:$0xff]
    %v7237 = vld [vmem:[#allocation2 + $0x1a9] sm:$0xff]
    %v7238 = vld [vmem:[#allocation2 + $0x1b1] sm:$0xff]
    %v7239 = vld [vmem:[#allocation2 + $0x1b9] sm:$0xff]
    %v7240 = vld [vmem:[#allocation2 + $0x1c1] sm:$0xff]
    %v7241 = vld [vmem:[#allocation2 + $0x1c9] sm:$0xff]
    %v7242 = vld [vmem:[#allocation2 + $0x1d1] sm:$0xff]
    %v7243 = vld [vmem:[#allocation2 + $0x1d9] sm:$0xff]
    %v7244 = vld [vmem:[#allocation2 + $0x1e1] sm:$0xff]
    %v7245 = vld [vmem:[#allocation2 + $0x1e9] sm:$0xff]
    %v7246 = vld [vmem:[#allocation2 + $0x1f1] sm:$0xff]
    %v7247 = vld [vmem:[#allocation2 + $0x1f9] sm:$0xff]
    %v7248 = vld [vmem:[#allocation2 + $0x201] sm:$0xff]
    %v7249 = vld [vmem:[#allocation2 + $0x209] sm:$0xff]
    %v7250 = vld [vmem:[#allocation2 + $0x211] sm:$0xff]
    %v7251 = vld [vmem:[#allocation2 + $0x219] sm:$0xff]
    %v7252 = vld [vmem:[#allocation2 + $0x221] sm:$0xff]
    %vm7253 = vmand %vm3241, %vm5937
    %vm7254 = vmand %vm3242, %vm5938
    %vm7255 = vmand %vm3243, %vm5939
    %vm7256 = vmand %vm3244, %vm5940
    %vm7257 = vmand %vm3245, %vm5941
    %vm7258 = vmand %vm3246, %vm5942
    %vm7259 = vmand %vm3247, %vm5943
    %vm7260 = vmand %vm3248, %vm5944
    %vm7261 = vmand %vm3249, %vm5945
    %vm7262 = vmand %vm3250, %vm5946
    %vm7263 = vmand %vm3251, %vm5947
    %vm7264 = vmand %vm3252, %vm5948
    %vm7265 = vmand %vm3253, %vm5949
    %vm7266 = vmand %vm3254, %vm5950
    %vm7267 = vmand %vm3255, %vm5951
    %vm7268 = vmand %vm3256, %vm5952
    %vm7269 = vmand %vm3257, %vm5953
    %vm7270 = vmand %vm3258, %vm5954
    %vm7271 = vmand %vm3259, %vm5955
    %vm7272 = vmand %vm3260, %vm5956
    %vm7273 = vmand %vm3261, %vm5957
    %vm7274 = vmand %vm3262, %vm5958
    %vm7275 = vmand %vm3263, %vm5959
    %vm7276 = vmand %vm3264, %vm5960
    %vm7277 = vmand %vm3265, %vm5961
    %vm7278 = vmand %vm3266, %vm5962
    %vm7279 = vmand %vm3267, %vm5963
    %vm7280 = vmand %vm3268, %vm5964
    %vm7281 = vmand %vm3269, %vm5965
    %vm7282 = vmand %vm3270, %vm5966
    %vm7283 = vmand %vm3271, %vm5967
    %vm7284 = vmand %vm3272, %vm5968
    %vm7285 = vmand %vm3273, %vm5969
    %vm7286 = vmand %vm3274, %vm5970
    %vm7287 = vmand %vm3275, %vm5971
    %vm7288 = vmand %vm3276, %vm5972
    %vm7289 = vmand %vm3277, %vm5973
    %vm7290 = vmand %vm3278, %vm5974
    %vm7291 = vmand %vm3279, %vm5975
    %vm7292 = vmand %vm3280, %vm5976
    %vm7293 = vmand %vm3281, %vm5977
    %vm7294 = vmand %vm3282, %vm5978
    %vm7295 = vmand %vm3283, %vm5979
    %vm7296 = vmand %vm3284, %vm5980
    %vm7297 = vmand %vm3285, %vm5981
    %vm7298 = vmand %vm3286, %vm5982
    %vm7299 = vmand %vm3287, %vm5983
    %vm7300 = vmand %vm3288, %vm5984
    %vm7301 = vmand %vm3289, %vm5985
    %vm7302 = vmand %vm3290, %vm5986
    %vm7303 = vmand %vm3291, %vm5987
    %vm7304 = vmand %vm3292, %vm5988
    %vm7305 = vmand %vm3293, %vm5989
    %vm7306 = vmand %vm3294, %vm5990
    %vm7307 = vmand %vm3295, %vm5991
    %vm7308 = vmand %vm3296, %vm5992
    %vm7309 = vmand %vm3297, %vm5993
    %vm7310 = vmand %vm3298, %vm5994
    %vm7311 = vmand %vm3299, %vm5995
    %vm7312 = vmand %vm3300, %vm5996
    %vm7313 = vmand %vm3301, %vm5997
    %vm7314 = vmand %vm3302, %vm5998
    %vm7315 = vmand %vm3303, %vm5999
    %vm7316 = vmand %vm3304, %vm6000
    %v7317 = vsel %vm7253, 1, 0
    %v7318 = vsel %vm7254, 1, 0
    %v7319 = vsel %vm7255, 1, 0
    %v7320 = vsel %vm7256, 1, 0
    %v7321 = vsel %vm7257, 1, 0
    %v7322 = vsel %vm7258, 1, 0
    %v7323 = vsel %vm7259, 1, 0
    %v7324 = vsel %vm7260, 1, 0
    %v7325 = vsel %vm7261, 1, 0
    %v7326 = vsel %vm7262, 1, 0
    %v7327 = vsel %vm7263, 1, 0
    %v7328 = vsel %vm7264, 1, 0
    %v7329 = vsel %vm7265, 1, 0
    %v7330 = vsel %vm7266, 1, 0
    %v7331 = vsel %vm7267, 1, 0
    %v7332 = vsel %vm7268, 1, 0
    %v7333 = vsel %vm7269, 1, 0
    %v7334 = vsel %vm7270, 1, 0
    %v7335 = vsel %vm7271, 1, 0
    %v7336 = vsel %vm7272, 1, 0
    %v7337 = vsel %vm7273, 1, 0
    %v7338 = vsel %vm7274, 1, 0
    %v7339 = vsel %vm7275, 1, 0
    %v7340 = vsel %vm7276, 1, 0
    %v7341 = vsel %vm7277, 1, 0
    %v7342 = vsel %vm7278, 1, 0
    %v7343 = vsel %vm7279, 1, 0
    %v7344 = vsel %vm7280, 1, 0
    %v7345 = vsel %vm7281, 1, 0
    %v7346 = vsel %vm7282, 1, 0
    %v7347 = vsel %vm7283, 1, 0
    %v7348 = vsel %vm7284, 1, 0
    %v7349 = vsel %vm7285, 1, 0
    %v7350 = vsel %vm7286, 1, 0
    %v7351 = vsel %vm7287, 1, 0
    %v7352 = vsel %vm7288, 1, 0
    %v7353 = vsel %vm7289, 1, 0
    %v7354 = vsel %vm7290, 1, 0
    %v7355 = vsel %vm7291, 1, 0
    %v7356 = vsel %vm7292, 1, 0
    %v7357 = vsel %vm7293, 1, 0
    %v7358 = vsel %vm7294, 1, 0
    %v7359 = vsel %vm7295, 1, 0
    %v7360 = vsel %vm7296, 1, 0
    %v7361 = vsel %vm7297, 1, 0
    %v7362 = vsel %vm7298, 1, 0
    %v7363 = vsel %vm7299, 1, 0
    %v7364 = vsel %vm7300, 1, 0
    %v7365 = vsel %vm7301, 1, 0
    %v7366 = vsel %vm7302, 1, 0
    %v7367 = vsel %vm7303, 1, 0
    %v7368 = vsel %vm7304, 1, 0
    %v7369 = vsel %vm7305, 1, 0
    %v7370 = vsel %vm7306, 1, 0
    %v7371 = vsel %vm7307, 1, 0
    %v7372 = vsel %vm7308, 1, 0
    %v7373 = vsel %vm7309, 1, 0
    %v7374 = vsel %vm7310, 1, 0
    %v7375 = vsel %vm7311, 1, 0
    %v7376 = vsel %vm7312, 1, 0
    %v7377 = vsel %vm7313, 1, 0
    %v7378 = vsel %vm7314, 1, 0
    %v7379 = vsel %vm7315, 1, 0
    %v7380 = vsel %vm7316, 1, 0
    %vm7381 = vcmp.eq.s32.totalorder %v7317, 1
    %vm7382 = vcmp.eq.s32.totalorder %v7318, 1
    %vm7383 = vcmp.eq.s32.totalorder %v7319, 1
    %vm7384 = vcmp.eq.s32.totalorder %v7320, 1
    %vm7385 = vcmp.eq.s32.totalorder %v7321, 1
    %vm7386 = vcmp.eq.s32.totalorder %v7322, 1
    %vm7387 = vcmp.eq.s32.totalorder %v7323, 1
    %vm7388 = vcmp.eq.s32.totalorder %v7324, 1
    %vm7389 = vcmp.eq.s32.totalorder %v7325, 1
    %vm7390 = vcmp.eq.s32.totalorder %v7326, 1
    %vm7391 = vcmp.eq.s32.totalorder %v7327, 1
    %vm7392 = vcmp.eq.s32.totalorder %v7328, 1
    %vm7393 = vcmp.eq.s32.totalorder %v7329, 1
    %vm7394 = vcmp.eq.s32.totalorder %v7330, 1
    %vm7395 = vcmp.eq.s32.totalorder %v7331, 1
    %vm7396 = vcmp.eq.s32.totalorder %v7332, 1
    %vm7397 = vcmp.eq.s32.totalorder %v7333, 1
    %vm7398 = vcmp.eq.s32.totalorder %v7334, 1
    %vm7399 = vcmp.eq.s32.totalorder %v7335, 1
    %vm7400 = vcmp.eq.s32.totalorder %v7336, 1
    %vm7401 = vcmp.eq.s32.totalorder %v7337, 1
    %vm7402 = vcmp.eq.s32.totalorder %v7338, 1
    %vm7403 = vcmp.eq.s32.totalorder %v7339, 1
    %vm7404 = vcmp.eq.s32.totalorder %v7340, 1
    %vm7405 = vcmp.eq.s32.totalorder %v7341, 1
    %vm7406 = vcmp.eq.s32.totalorder %v7342, 1
    %vm7407 = vcmp.eq.s32.totalorder %v7343, 1
    %vm7408 = vcmp.eq.s32.totalorder %v7344, 1
    %vm7409 = vcmp.eq.s32.totalorder %v7345, 1
    %vm7410 = vcmp.eq.s32.totalorder %v7346, 1
    %vm7411 = vcmp.eq.s32.totalorder %v7347, 1
    %vm7412 = vcmp.eq.s32.totalorder %v7348, 1
    %vm7413 = vcmp.eq.s32.totalorder %v7349, 1
    %vm7414 = vcmp.eq.s32.totalorder %v7350, 1
    %vm7415 = vcmp.eq.s32.totalorder %v7351, 1
    %vm7416 = vcmp.eq.s32.totalorder %v7352, 1
    %vm7417 = vcmp.eq.s32.totalorder %v7353, 1
    %vm7418 = vcmp.eq.s32.totalorder %v7354, 1
    %vm7419 = vcmp.eq.s32.totalorder %v7355, 1
    %vm7420 = vcmp.eq.s32.totalorder %v7356, 1
    %vm7421 = vcmp.eq.s32.totalorder %v7357, 1
    %vm7422 = vcmp.eq.s32.totalorder %v7358, 1
    %vm7423 = vcmp.eq.s32.totalorder %v7359, 1
    %vm7424 = vcmp.eq.s32.totalorder %v7360, 1
    %vm7425 = vcmp.eq.s32.totalorder %v7361, 1
    %vm7426 = vcmp.eq.s32.totalorder %v7362, 1
    %vm7427 = vcmp.eq.s32.totalorder %v7363, 1
    %vm7428 = vcmp.eq.s32.totalorder %v7364, 1
    %vm7429 = vcmp.eq.s32.totalorder %v7365, 1
    %vm7430 = vcmp.eq.s32.totalorder %v7366, 1
    %vm7431 = vcmp.eq.s32.totalorder %v7367, 1
    %vm7432 = vcmp.eq.s32.totalorder %v7368, 1
    %vm7433 = vcmp.eq.s32.totalorder %v7369, 1
    %vm7434 = vcmp.eq.s32.totalorder %v7370, 1
    %vm7435 = vcmp.eq.s32.totalorder %v7371, 1
    %vm7436 = vcmp.eq.s32.totalorder %v7372, 1
    %vm7437 = vcmp.eq.s32.totalorder %v7373, 1
    %vm7438 = vcmp.eq.s32.totalorder %v7374, 1
    %vm7439 = vcmp.eq.s32.totalorder %v7375, 1
    %vm7440 = vcmp.eq.s32.totalorder %v7376, 1
    %vm7441 = vcmp.eq.s32.totalorder %v7377, 1
    %vm7442 = vcmp.eq.s32.totalorder %v7378, 1
    %vm7443 = vcmp.eq.s32.totalorder %v7379, 1
    %vm7444 = vcmp.eq.s32.totalorder %v7380, 1
    %v7445 = vsel %vm7381, %v7189, 0.0
    %v7446 = vsel %vm7382, %v7190, 0.0
    %v7447 = vsel %vm7383, %v7191, 0.0
    %v7448 = vsel %vm7384, %v7192, 0.0
    %v7449 = vsel %vm7385, %v7193, 0.0
    %v7450 = vsel %vm7386, %v7194, 0.0
    %v7451 = vsel %vm7387, %v7195, 0.0
    %v7452 = vsel %vm7388, %v7196, 0.0
    %v7453 = vsel %vm7389, %v7197, 0.0
    %v7454 = vsel %vm7390, %v7198, 0.0
    %v7455 = vsel %vm7391, %v7199, 0.0
    %v7456 = vsel %vm7392, %v7200, 0.0
    %v7457 = vsel %vm7393, %v7201, 0.0
    %v7458 = vsel %vm7394, %v7202, 0.0
    %v7459 = vsel %vm7395, %v7203, 0.0
    %v7460 = vsel %vm7396, %v7204, 0.0
    %v7461 = vsel %vm7397, %v7205, 0.0
    %v7462 = vsel %vm7398, %v7206, 0.0
    %v7463 = vsel %vm7399, %v7207, 0.0
    %v7464 = vsel %vm7400, %v7208, 0.0
    %v7465 = vsel %vm7401, %v7209, 0.0
    %v7466 = vsel %vm7402, %v7210, 0.0
    %v7467 = vsel %vm7403, %v7211, 0.0
    %v7468 = vsel %vm7404, %v7212, 0.0
    %v7469 = vsel %vm7405, %v7213, 0.0
    %v7470 = vsel %vm7406, %v7214, 0.0
    %v7471 = vsel %vm7407, %v7215, 0.0
    %v7472 = vsel %vm7408, %v7216, 0.0
    %v7473 = vsel %vm7409, %v7217, 0.0
    %v7474 = vsel %vm7410, %v7218, 0.0
    %v7475 = vsel %vm7411, %v7219, 0.0
    %v7476 = vsel %vm7412, %v7220, 0.0
    %v7477 = vsel %vm7413, %v7221, 0.0
    %v7478 = vsel %vm7414, %v7222, 0.0
    %v7479 = vsel %vm7415, %v7223, 0.0
    %v7480 = vsel %vm7416, %v7224, 0.0
    %v7481 = vsel %vm7417, %v7225, 0.0
    %v7482 = vsel %vm7418, %v7226, 0.0
    %v7483 = vsel %vm7419, %v7227, 0.0
    %v7484 = vsel %vm7420, %v7228, 0.0
    %v7485 = vsel %vm7421, %v7229, 0.0
    %v7486 = vsel %vm7422, %v7230, 0.0
    %v7487 = vsel %vm7423, %v7231, 0.0
    %v7488 = vsel %vm7424, %v7232, 0.0
    %v7489 = vsel %vm7425, %v7233, 0.0
    %v7490 = vsel %vm7426, %v7234, 0.0
    %v7491 = vsel %vm7427, %v7235, 0.0
    %v7492 = vsel %vm7428, %v7236, 0.0
    %v7493 = vsel %vm7429, %v7237, 0.0
    %v7494 = vsel %vm7430, %v7238, 0.0
    %v7495 = vsel %vm7431, %v7239, 0.0
    %v7496 = vsel %vm7432, %v7240, 0.0
    %v7497 = vsel %vm7433, %v7241, 0.0
    %v7498 = vsel %vm7434, %v7242, 0.0
    %v7499 = vsel %vm7435, %v7243, 0.0
    %v7500 = vsel %vm7436, %v7244, 0.0
    %v7501 = vsel %vm7437, %v7245, 0.0
    %v7502 = vsel %vm7438, %v7246, 0.0
    %v7503 = vsel %vm7439, %v7247, 0.0
    %v7504 = vsel %vm7440, %v7248, 0.0
    %v7505 = vsel %vm7441, %v7249, 0.0
    %v7506 = vsel %vm7442, %v7250, 0.0
    %v7507 = vsel %vm7443, %v7251, 0.0
    %v7508 = vsel %vm7444, %v7252, 0.0
    %s7509 = scalar_lea.vmem [#allocation8], 512
    %v7510 = vld [vmem:[%s7509] sm:$0xf]
    %v7511 = vld [vmem:[%s7509 + $0x4] sm:$0xf]
    %v7512 = vld [vmem:[%s7509 + $0x8] sm:$0xf]
    %v7513 = vld [vmem:[%s7509 + $0xc] sm:$0xf]
    %v7514 = vld [vmem:[%s7509 + $0x10] sm:$0xf]
    %v7515 = vld [vmem:[%s7509 + $0x14] sm:$0xf]
    %v7516 = vld [vmem:[%s7509 + $0x18] sm:$0xf]
    %v7517 = vld [vmem:[%s7509 + $0x1c] sm:$0xf]
    %v7518 = vld [vmem:[%s7509 + $0x20] sm:$0xf]
    %v7519 = vld [vmem:[%s7509 + $0x24] sm:$0xf]
    %v7520 = vld [vmem:[%s7509 + $0x28] sm:$0xf]
    %v7521 = vld [vmem:[%s7509 + $0x2c] sm:$0xf]
    %v7522 = vld [vmem:[%s7509 + $0x30] sm:$0xf]
    %v7523 = vld [vmem:[%s7509 + $0x34] sm:$0xf]
    %v7524 = vld [vmem:[%s7509 + $0x38] sm:$0xf]
    %v7525 = vld [vmem:[%s7509 + $0x3c] sm:$0xf]
    %v7526 = vunpack.c.l.bf16 %v7510
    %v7527 = vunpack.c.l.bf16 %v7511
    %v7528 = vunpack.c.l.bf16 %v7512
    %v7529 = vunpack.c.l.bf16 %v7513
    %v7530 = vunpack.c.l.bf16 %v7514
    %v7531 = vunpack.c.l.bf16 %v7515
    %v7532 = vunpack.c.l.bf16 %v7516
    %v7533 = vunpack.c.l.bf16 %v7517
    %v7534 = vunpack.c.l.bf16 %v7518
    %v7535 = vunpack.c.l.bf16 %v7519
    %v7536 = vunpack.c.l.bf16 %v7520
    %v7537 = vunpack.c.l.bf16 %v7521
    %v7538 = vunpack.c.l.bf16 %v7522
    %v7539 = vunpack.c.l.bf16 %v7523
    %v7540 = vunpack.c.l.bf16 %v7524
    %v7541 = vunpack.c.l.bf16 %v7525
    %7542 = vmatpush.msra.mxu0 %v7541
    %7543 = vmatpush.msra.mxu0 %v7540
    %7544 = vmatpush.msra.mxu0 %v7539
    %7545 = vmatpush.msra.mxu0 %v7538
    %7546 = vmatpush.msra.mxu0 %v7537
    %7547 = vmatpush.msra.mxu0 %v7536
    %7548 = vmatpush.msra.mxu0 %v7535
    %7549 = vmatpush.msra.mxu0 %v7534
    %7550 = vmatpush.msra.mxu0 %v7533
    %7551 = vmatpush.msra.mxu0 %v7532
    %7552 = vmatpush.msra.mxu0 %v7531
    %7553 = vmatpush.msra.mxu0 %v7530
    %7554 = vmatpush.msra.mxu0 %v7529
    %7555 = vmatpush.msra.mxu0 %v7528
    %7556 = vmatpush.msra.mxu0 %v7527
    %7557 = vmatpush.msra.mxu0 %v7526
    %7558 = vmatmul.f32.gmra.mxu0 %v7445
    %v7559 = vpop.f32.mrf.mxu0
    %v7560 = vadd.f32 0.0, %v7559
    %7561 = vmatmul.f32.gmra.mxu0 %v7446
    %v7562 = vpop.f32.mrf.mxu0
    %v7563 = vadd.f32 0.0, %v7562
    %7564 = vmatmul.f32.gmra.mxu0 %v7447
    %v7565 = vpop.f32.mrf.mxu0
    %v7566 = vadd.f32 0.0, %v7565
    %7567 = vmatmul.f32.gmra.mxu0 %v7448
    %v7568 = vpop.f32.mrf.mxu0
    %v7569 = vadd.f32 0.0, %v7568
    %7570 = vmatmul.f32.gmra.mxu0 %v7449
    %v7571 = vpop.f32.mrf.mxu0
    %v7572 = vadd.f32 0.0, %v7571
    %7573 = vmatmul.f32.gmra.mxu0 %v7450
    %v7574 = vpop.f32.mrf.mxu0
    %v7575 = vadd.f32 0.0, %v7574
    %7576 = vmatmul.f32.gmra.mxu0 %v7451
    %v7577 = vpop.f32.mrf.mxu0
    %v7578 = vadd.f32 0.0, %v7577
    %7579 = vmatmul.f32.gmra.mxu0 %v7452
    %v7580 = vpop.f32.mrf.mxu0
    %v7581 = vadd.f32 0.0, %v7580
    %7582 = vmatmul.f32.gmra.mxu0 %v7453
    %v7583 = vpop.f32.mrf.mxu0
    %v7584 = vadd.f32 0.0, %v7583
    %7585 = vmatmul.f32.gmra.mxu0 %v7454
    %v7586 = vpop.f32.mrf.mxu0
    %v7587 = vadd.f32 0.0, %v7586
    %7588 = vmatmul.f32.gmra.mxu0 %v7455
    %v7589 = vpop.f32.mrf.mxu0
    %v7590 = vadd.f32 0.0, %v7589
    %7591 = vmatmul.f32.gmra.mxu0 %v7456
    %v7592 = vpop.f32.mrf.mxu0
    %v7593 = vadd.f32 0.0, %v7592
    %7594 = vmatmul.f32.gmra.mxu0 %v7457
    %v7595 = vpop.f32.mrf.mxu0
    %v7596 = vadd.f32 0.0, %v7595
    %7597 = vmatmul.f32.gmra.mxu0 %v7458
    %v7598 = vpop.f32.mrf.mxu0
    %v7599 = vadd.f32 0.0, %v7598
    %7600 = vmatmul.f32.gmra.mxu0 %v7459
    %v7601 = vpop.f32.mrf.mxu0
    %v7602 = vadd.f32 0.0, %v7601
    %7603 = vmatmul.f32.gmra.mxu0 %v7460
    %v7604 = vpop.f32.mrf.mxu0
    %v7605 = vadd.f32 0.0, %v7604
    %7606 = vmatmul.f32.gmra.mxu0 %v7461
    %v7607 = vpop.f32.mrf.mxu0
    %v7608 = vadd.f32 0.0, %v7607
    %7609 = vmatmul.f32.gmra.mxu0 %v7462
    %v7610 = vpop.f32.mrf.mxu0
    %v7611 = vadd.f32 0.0, %v7610
    %7612 = vmatmul.f32.gmra.mxu0 %v7463
    %v7613 = vpop.f32.mrf.mxu0
    %v7614 = vadd.f32 0.0, %v7613
    %7615 = vmatmul.f32.gmra.mxu0 %v7464
    %v7616 = vpop.f32.mrf.mxu0
    %v7617 = vadd.f32 0.0, %v7616
    %7618 = vmatmul.f32.gmra.mxu0 %v7465
    %v7619 = vpop.f32.mrf.mxu0
    %v7620 = vadd.f32 0.0, %v7619
    %7621 = vmatmul.f32.gmra.mxu0 %v7466
    %v7622 = vpop.f32.mrf.mxu0
    %v7623 = vadd.f32 0.0, %v7622
    %7624 = vmatmul.f32.gmra.mxu0 %v7467
    %v7625 = vpop.f32.mrf.mxu0
    %v7626 = vadd.f32 0.0, %v7625
    %7627 = vmatmul.f32.gmra.mxu0 %v7468
    %v7628 = vpop.f32.mrf.mxu0
    %v7629 = vadd.f32 0.0, %v7628
    %7630 = vmatmul.f32.gmra.mxu0 %v7469
    %v7631 = vpop.f32.mrf.mxu0
    %v7632 = vadd.f32 0.0, %v7631
    %7633 = vmatmul.f32.gmra.mxu0 %v7470
    %v7634 = vpop.f32.mrf.mxu0
    %v7635 = vadd.f32 0.0, %v7634
    %7636 = vmatmul.f32.gmra.mxu0 %v7471
    %v7637 = vpop.f32.mrf.mxu0
    %v7638 = vadd.f32 0.0, %v7637
    %7639 = vmatmul.f32.gmra.mxu0 %v7472
    %v7640 = vpop.f32.mrf.mxu0
    %v7641 = vadd.f32 0.0, %v7640
    %7642 = vmatmul.f32.gmra.mxu0 %v7473
    %v7643 = vpop.f32.mrf.mxu0
    %v7644 = vadd.f32 0.0, %v7643
    %7645 = vmatmul.f32.gmra.mxu0 %v7474
    %v7646 = vpop.f32.mrf.mxu0
    %v7647 = vadd.f32 0.0, %v7646
    %7648 = vmatmul.f32.gmra.mxu0 %v7475
    %v7649 = vpop.f32.mrf.mxu0
    %v7650 = vadd.f32 0.0, %v7649
    %7651 = vmatmul.f32.gmra.mxu0 %v7476
    %v7652 = vpop.f32.mrf.mxu0
    %v7653 = vadd.f32 0.0, %v7652
    %7654 = vmatmul.f32.gmra.mxu0 %v7477
    %v7655 = vpop.f32.mrf.mxu0
    %v7656 = vadd.f32 0.0, %v7655
    %7657 = vmatmul.f32.gmra.mxu0 %v7478
    %v7658 = vpop.f32.mrf.mxu0
    %v7659 = vadd.f32 0.0, %v7658
    %7660 = vmatmul.f32.gmra.mxu0 %v7479
    %v7661 = vpop.f32.mrf.mxu0
    %v7662 = vadd.f32 0.0, %v7661
    %7663 = vmatmul.f32.gmra.mxu0 %v7480
    %v7664 = vpop.f32.mrf.mxu0
    %v7665 = vadd.f32 0.0, %v7664
    %7666 = vmatmul.f32.gmra.mxu0 %v7481
    %v7667 = vpop.f32.mrf.mxu0
    %v7668 = vadd.f32 0.0, %v7667
    %7669 = vmatmul.f32.gmra.mxu0 %v7482
    %v7670 = vpop.f32.mrf.mxu0
    %v7671 = vadd.f32 0.0, %v7670
    %7672 = vmatmul.f32.gmra.mxu0 %v7483
    %v7673 = vpop.f32.mrf.mxu0
    %v7674 = vadd.f32 0.0, %v7673
    %7675 = vmatmul.f32.gmra.mxu0 %v7484
    %v7676 = vpop.f32.mrf.mxu0
    %v7677 = vadd.f32 0.0, %v7676
    %7678 = vmatmul.f32.gmra.mxu0 %v7485
    %v7679 = vpop.f32.mrf.mxu0
    %v7680 = vadd.f32 0.0, %v7679
    %7681 = vmatmul.f32.gmra.mxu0 %v7486
    %v7682 = vpop.f32.mrf.mxu0
    %v7683 = vadd.f32 0.0, %v7682
    %7684 = vmatmul.f32.gmra.mxu0 %v7487
    %v7685 = vpop.f32.mrf.mxu0
    %v7686 = vadd.f32 0.0, %v7685
    %7687 = vmatmul.f32.gmra.mxu0 %v7488
    %v7688 = vpop.f32.mrf.mxu0
    %v7689 = vadd.f32 0.0, %v7688
    %7690 = vmatmul.f32.gmra.mxu0 %v7489
    %v7691 = vpop.f32.mrf.mxu0
    %v7692 = vadd.f32 0.0, %v7691
    %7693 = vmatmul.f32.gmra.mxu0 %v7490
    %v7694 = vpop.f32.mrf.mxu0
    %v7695 = vadd.f32 0.0, %v7694
    %7696 = vmatmul.f32.gmra.mxu0 %v7491
    %v7697 = vpop.f32.mrf.mxu0
    %v7698 = vadd.f32 0.0, %v7697
    %7699 = vmatmul.f32.gmra.mxu0 %v7492
    %v7700 = vpop.f32.mrf.mxu0
    %v7701 = vadd.f32 0.0, %v7700
    %7702 = vmatmul.f32.gmra.mxu0 %v7493
    %v7703 = vpop.f32.mrf.mxu0
    %v7704 = vadd.f32 0.0, %v7703
    %7705 = vmatmul.f32.gmra.mxu0 %v7494
    %v7706 = vpop.f32.mrf.mxu0
    %v7707 = vadd.f32 0.0, %v7706
    %7708 = vmatmul.f32.gmra.mxu0 %v7495
    %v7709 = vpop.f32.mrf.mxu0
    %v7710 = vadd.f32 0.0, %v7709
    %7711 = vmatmul.f32.gmra.mxu0 %v7496
    %v7712 = vpop.f32.mrf.mxu0
    %v7713 = vadd.f32 0.0, %v7712
    %7714 = vmatmul.f32.gmra.mxu0 %v7497
    %v7715 = vpop.f32.mrf.mxu0
    %v7716 = vadd.f32 0.0, %v7715
    %7717 = vmatmul.f32.gmra.mxu0 %v7498
    %v7718 = vpop.f32.mrf.mxu0
    %v7719 = vadd.f32 0.0, %v7718
    %7720 = vmatmul.f32.gmra.mxu0 %v7499
    %v7721 = vpop.f32.mrf.mxu0
    %v7722 = vadd.f32 0.0, %v7721
    %7723 = vmatmul.f32.gmra.mxu0 %v7500
    %v7724 = vpop.f32.mrf.mxu0
    %v7725 = vadd.f32 0.0, %v7724
    %7726 = vmatmul.f32.gmra.mxu0 %v7501
    %v7727 = vpop.f32.mrf.mxu0
    %v7728 = vadd.f32 0.0, %v7727
    %7729 = vmatmul.f32.gmra.mxu0 %v7502
    %v7730 = vpop.f32.mrf.mxu0
    %v7731 = vadd.f32 0.0, %v7730
    %7732 = vmatmul.f32.gmra.mxu0 %v7503
    %v7733 = vpop.f32.mrf.mxu0
    %v7734 = vadd.f32 0.0, %v7733
    %7735 = vmatmul.f32.gmra.mxu0 %v7504
    %v7736 = vpop.f32.mrf.mxu0
    %v7737 = vadd.f32 0.0, %v7736
    %7738 = vmatmul.f32.gmra.mxu0 %v7505
    %v7739 = vpop.f32.mrf.mxu0
    %v7740 = vadd.f32 0.0, %v7739
    %7741 = vmatmul.f32.gmra.mxu0 %v7506
    %v7742 = vpop.f32.mrf.mxu0
    %v7743 = vadd.f32 0.0, %v7742
    %7744 = vmatmul.f32.gmra.mxu0 %v7507
    %v7745 = vpop.f32.mrf.mxu0
    %v7746 = vadd.f32 0.0, %v7745
    %7747 = vmatmul.f32.gmra.mxu0 %v7508
    %v7748 = vpop.f32.mrf.mxu0
    %v7749 = vadd.f32 0.0, %v7748
    %7750 = vdwg.mxu0
    %v7751 = vadd.f32 %v7125, %v7560
    %v7752 = vadd.f32 %v7126, %v7563
    %v7753 = vadd.f32 %v7127, %v7566
    %v7754 = vadd.f32 %v7128, %v7569
    %v7755 = vadd.f32 %v7129, %v7572
    %v7756 = vadd.f32 %v7130, %v7575
    %v7757 = vadd.f32 %v7131, %v7578
    %v7758 = vadd.f32 %v7132, %v7581
    %v7759 = vadd.f32 %v7133, %v7584
    %v7760 = vadd.f32 %v7134, %v7587
    %v7761 = vadd.f32 %v7135, %v7590
    %v7762 = vadd.f32 %v7136, %v7593
    %v7763 = vadd.f32 %v7137, %v7596
    %v7764 = vadd.f32 %v7138, %v7599
    %v7765 = vadd.f32 %v7139, %v7602
    %v7766 = vadd.f32 %v7140, %v7605
    %v7767 = vadd.f32 %v7141, %v7608
    %v7768 = vadd.f32 %v7142, %v7611
    %v7769 = vadd.f32 %v7143, %v7614
    %v7770 = vadd.f32 %v7144, %v7617
    %v7771 = vadd.f32 %v7145, %v7620
    %v7772 = vadd.f32 %v7146, %v7623
    %v7773 = vadd.f32 %v7147, %v7626
    %v7774 = vadd.f32 %v7148, %v7629
    %v7775 = vadd.f32 %v7149, %v7632
    %v7776 = vadd.f32 %v7150, %v7635
    %v7777 = vadd.f32 %v7151, %v7638
    %v7778 = vadd.f32 %v7152, %v7641
    %v7779 = vadd.f32 %v7153, %v7644
    %v7780 = vadd.f32 %v7154, %v7647
    %v7781 = vadd.f32 %v7155, %v7650
    %v7782 = vadd.f32 %v7156, %v7653
    %v7783 = vadd.f32 %v7157, %v7656
    %v7784 = vadd.f32 %v7158, %v7659
    %v7785 = vadd.f32 %v7159, %v7662
    %v7786 = vadd.f32 %v7160, %v7665
    %v7787 = vadd.f32 %v7161, %v7668
    %v7788 = vadd.f32 %v7162, %v7671
    %v7789 = vadd.f32 %v7163, %v7674
    %v7790 = vadd.f32 %v7164, %v7677
    %v7791 = vadd.f32 %v7165, %v7680
    %v7792 = vadd.f32 %v7166, %v7683
    %v7793 = vadd.f32 %v7167, %v7686
    %v7794 = vadd.f32 %v7168, %v7689
    %v7795 = vadd.f32 %v7169, %v7692
    %v7796 = vadd.f32 %v7170, %v7695
    %v7797 = vadd.f32 %v7171, %v7698
    %v7798 = vadd.f32 %v7172, %v7701
    %v7799 = vadd.f32 %v7173, %v7704
    %v7800 = vadd.f32 %v7174, %v7707
    %v7801 = vadd.f32 %v7175, %v7710
    %v7802 = vadd.f32 %v7176, %v7713
    %v7803 = vadd.f32 %v7177, %v7716
    %v7804 = vadd.f32 %v7178, %v7719
    %v7805 = vadd.f32 %v7179, %v7722
    %v7806 = vadd.f32 %v7180, %v7725
    %v7807 = vadd.f32 %v7181, %v7728
    %v7808 = vadd.f32 %v7182, %v7731
    %v7809 = vadd.f32 %v7183, %v7734
    %v7810 = vadd.f32 %v7184, %v7737
    %v7811 = vadd.f32 %v7185, %v7740
    %v7812 = vadd.f32 %v7186, %v7743
    %v7813 = vadd.f32 %v7187, %v7746
    %v7814 = vadd.f32 %v7188, %v7749
    %v7815 = vld [vmem:[%s6] sm:$0x1]
    %v7816 = vld [vmem:[%s7] sm:$0x1]
    %v7817 = vadd.f32 %v7751, %v7752
    %v7818 = vadd.f32 %v7817, %v7753
    %v7819 = vadd.f32 %v7818, %v7754
    %v7820 = vadd.f32 %v7819, %v7755
    %v7821 = vadd.f32 %v7820, %v7756
    %v7822 = vadd.f32 %v7821, %v7757
    %v7823 = vadd.f32 %v7822, %v7758
    %v7824 = vadd.f32 %v7823, %v7759
    %v7825 = vadd.f32 %v7824, %v7760
    %v7826 = vadd.f32 %v7825, %v7761
    %v7827 = vadd.f32 %v7826, %v7762
    %v7828 = vadd.f32 %v7827, %v7763
    %v7829 = vadd.f32 %v7828, %v7764
    %v7830 = vadd.f32 %v7829, %v7765
    %v7831 = vadd.f32 %v7830, %v7766
    %v7832 = vadd.f32 %v7831, %v7767
    %v7833 = vadd.f32 %v7832, %v7768
    %v7834 = vadd.f32 %v7833, %v7769
    %v7835 = vadd.f32 %v7834, %v7770
    %v7836 = vadd.f32 %v7835, %v7771
    %v7837 = vadd.f32 %v7836, %v7772
    %v7838 = vadd.f32 %v7837, %v7773
    %v7839 = vadd.f32 %v7838, %v7774
    %v7840 = vadd.f32 %v7839, %v7775
    %v7841 = vadd.f32 %v7840, %v7776
    %v7842 = vadd.f32 %v7841, %v7777
    %v7843 = vadd.f32 %v7842, %v7778
    %v7844 = vadd.f32 %v7843, %v7779
    %v7845 = vadd.f32 %v7844, %v7780
    %v7846 = vadd.f32 %v7845, %v7781
    %v7847 = vadd.f32 %v7846, %v7782
    %v7848 = vadd.f32 %v7847, %v7783
    %v7849 = vadd.f32 %v7848, %v7784
    %v7850 = vadd.f32 %v7849, %v7785
    %v7851 = vadd.f32 %v7850, %v7786
    %v7852 = vadd.f32 %v7851, %v7787
    %v7853 = vadd.f32 %v7852, %v7788
    %v7854 = vadd.f32 %v7853, %v7789
    %v7855 = vadd.f32 %v7854, %v7790
    %v7856 = vadd.f32 %v7855, %v7791
    %v7857 = vadd.f32 %v7856, %v7792
    %v7858 = vadd.f32 %v7857, %v7793
    %v7859 = vadd.f32 %v7858, %v7794
    %v7860 = vadd.f32 %v7859, %v7795
    %v7861 = vadd.f32 %v7860, %v7796
    %v7862 = vadd.f32 %v7861, %v7797
    %v7863 = vadd.f32 %v7862, %v7798
    %v7864 = vadd.f32 %v7863, %v7799
    %v7865 = vadd.f32 %v7864, %v7800
    %v7866 = vadd.f32 %v7865, %v7801
    %v7867 = vadd.f32 %v7866, %v7802
    %v7868 = vadd.f32 %v7867, %v7803
    %v7869 = vadd.f32 %v7868, %v7804
    %v7870 = vadd.f32 %v7869, %v7805
    %v7871 = vadd.f32 %v7870, %v7806
    %v7872 = vadd.f32 %v7871, %v7807
    %v7873 = vadd.f32 %v7872, %v7808
    %v7874 = vadd.f32 %v7873, %v7809
    %v7875 = vadd.f32 %v7874, %v7810
    %v7876 = vadd.f32 %v7875, %v7811
    %v7877 = vadd.f32 %v7876, %v7812
    %v7878 = vadd.f32 %v7877, %v7813
    %v7879 = vadd.f32 %v7878, %v7814
    %v7880 = vrot.slane %v7879, 4
    %v7881 = vadd.f32 %v7879, %v7880
    %v7882 = vrot.slane %v7881, 2
    %v7883 = vadd.f32 %v7881, %v7882
    %v7884 = vrot.slane %v7883, 1
    %v7885 = vadd.f32 %v7883, %v7884
    %v7886 = vmul.f32 %v7885, %v481
    %v7887 = vmul.f32 %v7751, %v7751
    %v7888 = vmul.f32 %v7752, %v7752
    %v7889 = vmul.f32 %v7753, %v7753
    %v7890 = vmul.f32 %v7754, %v7754
    %v7891 = vmul.f32 %v7755, %v7755
    %v7892 = vmul.f32 %v7756, %v7756
    %v7893 = vmul.f32 %v7757, %v7757
    %v7894 = vmul.f32 %v7758, %v7758
    %v7895 = vmul.f32 %v7759, %v7759
    %v7896 = vmul.f32 %v7760, %v7760
    %v7897 = vmul.f32 %v7761, %v7761
    %v7898 = vmul.f32 %v7762, %v7762
    %v7899 = vmul.f32 %v7763, %v7763
    %v7900 = vmul.f32 %v7764, %v7764
    %v7901 = vmul.f32 %v7765, %v7765
    %v7902 = vmul.f32 %v7766, %v7766
    %v7903 = vmul.f32 %v7767, %v7767
    %v7904 = vmul.f32 %v7768, %v7768
    %v7905 = vmul.f32 %v7769, %v7769
    %v7906 = vmul.f32 %v7770, %v7770
    %v7907 = vmul.f32 %v7771, %v7771
    %v7908 = vmul.f32 %v7772, %v7772
    %v7909 = vmul.f32 %v7773, %v7773
    %v7910 = vmul.f32 %v7774, %v7774
    %v7911 = vmul.f32 %v7775, %v7775
    %v7912 = vmul.f32 %v7776, %v7776
    %v7913 = vmul.f32 %v7777, %v7777
    %v7914 = vmul.f32 %v7778, %v7778
    %v7915 = vmul.f32 %v7779, %v7779
    %v7916 = vmul.f32 %v7780, %v7780
    %v7917 = vmul.f32 %v7781, %v7781
    %v7918 = vmul.f32 %v7782, %v7782
    %v7919 = vmul.f32 %v7783, %v7783
    %v7920 = vmul.f32 %v7784, %v7784
    %v7921 = vmul.f32 %v7785, %v7785
    %v7922 = vmul.f32 %v7786, %v7786
    %v7923 = vmul.f32 %v7787, %v7787
    %v7924 = vmul.f32 %v7788, %v7788
    %v7925 = vmul.f32 %v7789, %v7789
    %v7926 = vmul.f32 %v7790, %v7790
    %v7927 = vmul.f32 %v7791, %v7791
    %v7928 = vmul.f32 %v7792, %v7792
    %v7929 = vmul.f32 %v7793, %v7793
    %v7930 = vmul.f32 %v7794, %v7794
    %v7931 = vmul.f32 %v7795, %v7795
    %v7932 = vmul.f32 %v7796, %v7796
    %v7933 = vmul.f32 %v7797, %v7797
    %v7934 = vmul.f32 %v7798, %v7798
    %v7935 = vmul.f32 %v7799, %v7799
    %v7936 = vmul.f32 %v7800, %v7800
    %v7937 = vmul.f32 %v7801, %v7801
    %v7938 = vmul.f32 %v7802, %v7802
    %v7939 = vmul.f32 %v7803, %v7803
    %v7940 = vmul.f32 %v7804, %v7804
    %v7941 = vmul.f32 %v7805, %v7805
    %v7942 = vmul.f32 %v7806, %v7806
    %v7943 = vmul.f32 %v7807, %v7807
    %v7944 = vmul.f32 %v7808, %v7808
    %v7945 = vmul.f32 %v7809, %v7809
    %v7946 = vmul.f32 %v7810, %v7810
    %v7947 = vmul.f32 %v7811, %v7811
    %v7948 = vmul.f32 %v7812, %v7812
    %v7949 = vmul.f32 %v7813, %v7813
    %v7950 = vmul.f32 %v7814, %v7814
    %v7951 = vadd.f32 %v7887, %v7888
    %v7952 = vadd.f32 %v7951, %v7889
    %v7953 = vadd.f32 %v7952, %v7890
    %v7954 = vadd.f32 %v7953, %v7891
    %v7955 = vadd.f32 %v7954, %v7892
    %v7956 = vadd.f32 %v7955, %v7893
    %v7957 = vadd.f32 %v7956, %v7894
    %v7958 = vadd.f32 %v7957, %v7895
    %v7959 = vadd.f32 %v7958, %v7896
    %v7960 = vadd.f32 %v7959, %v7897
    %v7961 = vadd.f32 %v7960, %v7898
    %v7962 = vadd.f32 %v7961, %v7899
    %v7963 = vadd.f32 %v7962, %v7900
    %v7964 = vadd.f32 %v7963, %v7901
    %v7965 = vadd.f32 %v7964, %v7902
    %v7966 = vadd.f32 %v7965, %v7903
    %v7967 = vadd.f32 %v7966, %v7904
    %v7968 = vadd.f32 %v7967, %v7905
    %v7969 = vadd.f32 %v7968, %v7906
    %v7970 = vadd.f32 %v7969, %v7907
    %v7971 = vadd.f32 %v7970, %v7908
    %v7972 = vadd.f32 %v7971, %v7909
    %v7973 = vadd.f32 %v7972, %v7910
    %v7974 = vadd.f32 %v7973, %v7911
    %v7975 = vadd.f32 %v7974, %v7912
    %v7976 = vadd.f32 %v7975, %v7913
    %v7977 = vadd.f32 %v7976, %v7914
    %v7978 = vadd.f32 %v7977, %v7915
    %v7979 = vadd.f32 %v7978, %v7916
    %v7980 = vadd.f32 %v7979, %v7917
    %v7981 = vadd.f32 %v7980, %v7918
    %v7982 = vadd.f32 %v7981, %v7919
    %v7983 = vadd.f32 %v7982, %v7920
    %v7984 = vadd.f32 %v7983, %v7921
    %v7985 = vadd.f32 %v7984, %v7922
    %v7986 = vadd.f32 %v7985, %v7923
    %v7987 = vadd.f32 %v7986, %v7924
    %v7988 = vadd.f32 %v7987, %v7925
    %v7989 = vadd.f32 %v7988, %v7926
    %v7990 = vadd.f32 %v7989, %v7927
    %v7991 = vadd.f32 %v7990, %v7928
    %v7992 = vadd.f32 %v7991, %v7929
    %v7993 = vadd.f32 %v7992, %v7930
    %v7994 = vadd.f32 %v7993, %v7931
    %v7995 = vadd.f32 %v7994, %v7932
    %v7996 = vadd.f32 %v7995, %v7933
    %v7997 = vadd.f32 %v7996, %v7934
    %v7998 = vadd.f32 %v7997, %v7935
    %v7999 = vadd.f32 %v7998, %v7936
    %v8000 = vadd.f32 %v7999, %v7937
    %v8001 = vadd.f32 %v8000, %v7938
    %v8002 = vadd.f32 %v8001, %v7939
    %v8003 = vadd.f32 %v8002, %v7940
    %v8004 = vadd.f32 %v8003, %v7941
    %v8005 = vadd.f32 %v8004, %v7942
    %v8006 = vadd.f32 %v8005, %v7943
    %v8007 = vadd.f32 %v8006, %v7944
    %v8008 = vadd.f32 %v8007, %v7945
    %v8009 = vadd.f32 %v8008, %v7946
    %v8010 = vadd.f32 %v8009, %v7947
    %v8011 = vadd.f32 %v8010, %v7948
    %v8012 = vadd.f32 %v8011, %v7949
    %v8013 = vadd.f32 %v8012, %v7950
    %v8014 = vrot.slane %v8013, 4
    %v8015 = vadd.f32 %v8013, %v8014
    %v8016 = vrot.slane %v8015, 2
    %v8017 = vadd.f32 %v8015, %v8016
    %v8018 = vrot.slane %v8017, 1
    %v8019 = vadd.f32 %v8017, %v8018
    %v8020 = vmul.f32 %v8019, %v481
    %v8021 = vmul.f32 %v7886, %v7886
    %v8022 = vsub.f32 %v8020, %v8021
    %v8023 = vadd.f32 %v8022, 1e-05
    %v8024 = vrsqrt.pop %v8023
    %v8025 = vmul.f32 %v8024, %v8023
    %v8026 = vmul.f32 %v8025, %v8024
    %v8027 = vmul.f32 0.5, %v8026
    %v8028 = vsub.f32 1.5, %v8027
    %v8029 = vmul.f32 %v8024, %v8028
    %vm8030 = vweird.f32 %v8023
    %vm8031 = vweird.f32 %v8024
    %vm8032 = vmor %vm8030, %vm8031
    %v8033 = vsel %vm8032, %v8024, %v8029
    %v8034 = vmul.f32 %v7815, %v8033
    %v8035 = vmul.f32 %v7886, %v8034
    %v8036 = vsub.f32 %v7816, %v8035
    %v8038 = vperm.slane %v8034, 0
    %v8040 = vmul.f32 %v7751, %v8038
    %v8041 = vmul.f32 %v7752, %v8038
    %v8042 = vmul.f32 %v7753, %v8038
    %v8043 = vmul.f32 %v7754, %v8038
    %v8044 = vmul.f32 %v7755, %v8038
    %v8045 = vmul.f32 %v7756, %v8038
    %v8046 = vmul.f32 %v7757, %v8038
    %v8047 = vmul.f32 %v7758, %v8038
    %v8048 = vmul.f32 %v7759, %v8038
    %v8049 = vmul.f32 %v7760, %v8038
    %v8050 = vmul.f32 %v7761, %v8038
    %v8051 = vmul.f32 %v7762, %v8038
    %v8052 = vmul.f32 %v7763, %v8038
    %v8053 = vmul.f32 %v7764, %v8038
    %v8054 = vmul.f32 %v7765, %v8038
    %v8055 = vmul.f32 %v7766, %v8038
    %v8056 = vmul.f32 %v7767, %v8038
    %v8057 = vmul.f32 %v7768, %v8038
    %v8058 = vmul.f32 %v7769, %v8038
    %v8059 = vmul.f32 %v7770, %v8038
    %v8060 = vmul.f32 %v7771, %v8038
    %v8061 = vmul.f32 %v7772, %v8038
    %v8062 = vmul.f32 %v7773, %v8038
    %v8063 = vmul.f32 %v7774, %v8038
    %v8064 = vmul.f32 %v7775, %v8038
    %v8065 = vmul.f32 %v7776, %v8038
    %v8066 = vmul.f32 %v7777, %v8038
    %v8067 = vmul.f32 %v7778, %v8038
    %v8068 = vmul.f32 %v7779, %v8038
    %v8069 = vmul.f32 %v7780, %v8038
    %v8070 = vmul.f32 %v7781, %v8038
    %v8071 = vmul.f32 %v7782, %v8038
    %v8072 = vmul.f32 %v7783, %v8038
    %v8073 = vmul.f32 %v7784, %v8038
    %v8074 = vmul.f32 %v7785, %v8038
    %v8075 = vmul.f32 %v7786, %v8038
    %v8076 = vmul.f32 %v7787, %v8038
    %v8077 = vmul.f32 %v7788, %v8038
    %v8078 = vmul.f32 %v7789, %v8038
    %v8079 = vmul.f32 %v7790, %v8038
    %v8080 = vmul.f32 %v7791, %v8038
    %v8081 = vmul.f32 %v7792, %v8038
    %v8082 = vmul.f32 %v7793, %v8038
    %v8083 = vmul.f32 %v7794, %v8038
    %v8084 = vmul.f32 %v7795, %v8038
    %v8085 = vmul.f32 %v7796, %v8038
    %v8086 = vmul.f32 %v7797, %v8038
    %v8087 = vmul.f32 %v7798, %v8038
    %v8088 = vmul.f32 %v7799, %v8038
    %v8089 = vmul.f32 %v7800, %v8038
    %v8090 = vmul.f32 %v7801, %v8038
    %v8091 = vmul.f32 %v7802, %v8038
    %v8092 = vmul.f32 %v7803, %v8038
    %v8093 = vmul.f32 %v7804, %v8038
    %v8094 = vmul.f32 %v7805, %v8038
    %v8095 = vmul.f32 %v7806, %v8038
    %v8096 = vmul.f32 %v7807, %v8038
    %v8097 = vmul.f32 %v7808, %v8038
    %v8098 = vmul.f32 %v7809, %v8038
    %v8099 = vmul.f32 %v7810, %v8038
    %v8100 = vmul.f32 %v7811, %v8038
    %v8101 = vmul.f32 %v7812, %v8038
    %v8102 = vmul.f32 %v7813, %v8038
    %v8103 = vmul.f32 %v7814, %v8038
    %v8105 = vperm.slane %v8036, 0
    %v8107 = vadd.f32 %v8040, %v8105
    %v8108 = vadd.f32 %v8041, %v8105
    %v8109 = vadd.f32 %v8042, %v8105
    %v8110 = vadd.f32 %v8043, %v8105
    %v8111 = vadd.f32 %v8044, %v8105
    %v8112 = vadd.f32 %v8045, %v8105
    %v8113 = vadd.f32 %v8046, %v8105
    %v8114 = vadd.f32 %v8047, %v8105
    %v8115 = vadd.f32 %v8048, %v8105
    %v8116 = vadd.f32 %v8049, %v8105
    %v8117 = vadd.f32 %v8050, %v8105
    %v8118 = vadd.f32 %v8051, %v8105
    %v8119 = vadd.f32 %v8052, %v8105
    %v8120 = vadd.f32 %v8053, %v8105
    %v8121 = vadd.f32 %v8054, %v8105
    %v8122 = vadd.f32 %v8055, %v8105
    %v8123 = vadd.f32 %v8056, %v8105
    %v8124 = vadd.f32 %v8057, %v8105
    %v8125 = vadd.f32 %v8058, %v8105
    %v8126 = vadd.f32 %v8059, %v8105
    %v8127 = vadd.f32 %v8060, %v8105
    %v8128 = vadd.f32 %v8061, %v8105
    %v8129 = vadd.f32 %v8062, %v8105
    %v8130 = vadd.f32 %v8063, %v8105
    %v8131 = vadd.f32 %v8064, %v8105
    %v8132 = vadd.f32 %v8065, %v8105
    %v8133 = vadd.f32 %v8066, %v8105
    %v8134 = vadd.f32 %v8067, %v8105
    %v8135 = vadd.f32 %v8068, %v8105
    %v8136 = vadd.f32 %v8069, %v8105
    %v8137 = vadd.f32 %v8070, %v8105
    %v8138 = vadd.f32 %v8071, %v8105
    %v8139 = vadd.f32 %v8072, %v8105
    %v8140 = vadd.f32 %v8073, %v8105
    %v8141 = vadd.f32 %v8074, %v8105
    %v8142 = vadd.f32 %v8075, %v8105
    %v8143 = vadd.f32 %v8076, %v8105
    %v8144 = vadd.f32 %v8077, %v8105
    %v8145 = vadd.f32 %v8078, %v8105
    %v8146 = vadd.f32 %v8079, %v8105
    %v8147 = vadd.f32 %v8080, %v8105
    %v8148 = vadd.f32 %v8081, %v8105
    %v8149 = vadd.f32 %v8082, %v8105
    %v8150 = vadd.f32 %v8083, %v8105
    %v8151 = vadd.f32 %v8084, %v8105
    %v8152 = vadd.f32 %v8085, %v8105
    %v8153 = vadd.f32 %v8086, %v8105
    %v8154 = vadd.f32 %v8087, %v8105
    %v8155 = vadd.f32 %v8088, %v8105
    %v8156 = vadd.f32 %v8089, %v8105
    %v8157 = vadd.f32 %v8090, %v8105
    %v8158 = vadd.f32 %v8091, %v8105
    %v8159 = vadd.f32 %v8092, %v8105
    %v8160 = vadd.f32 %v8093, %v8105
    %v8161 = vadd.f32 %v8094, %v8105
    %v8162 = vadd.f32 %v8095, %v8105
    %v8163 = vadd.f32 %v8096, %v8105
    %v8164 = vadd.f32 %v8097, %v8105
    %v8165 = vadd.f32 %v8098, %v8105
    %v8166 = vadd.f32 %v8099, %v8105
    %v8167 = vadd.f32 %v8100, %v8105
    %v8168 = vadd.f32 %v8101, %v8105
    %v8169 = vadd.f32 %v8102, %v8105
    %v8170 = vadd.f32 %v8103, %v8105
    %v8171 = vmax.f32 %v8107, 0.0
    %v8172 = vmax.f32 %v8108, 0.0
    %v8173 = vmax.f32 %v8109, 0.0
    %v8174 = vmax.f32 %v8110, 0.0
    %v8175 = vmax.f32 %v8111, 0.0
    %v8176 = vmax.f32 %v8112, 0.0
    %v8177 = vmax.f32 %v8113, 0.0
    %v8178 = vmax.f32 %v8114, 0.0
    %v8179 = vmax.f32 %v8115, 0.0
    %v8180 = vmax.f32 %v8116, 0.0
    %v8181 = vmax.f32 %v8117, 0.0
    %v8182 = vmax.f32 %v8118, 0.0
    %v8183 = vmax.f32 %v8119, 0.0
    %v8184 = vmax.f32 %v8120, 0.0
    %v8185 = vmax.f32 %v8121, 0.0
    %v8186 = vmax.f32 %v8122, 0.0
    %v8187 = vmax.f32 %v8123, 0.0
    %v8188 = vmax.f32 %v8124, 0.0
    %v8189 = vmax.f32 %v8125, 0.0
    %v8190 = vmax.f32 %v8126, 0.0
    %v8191 = vmax.f32 %v8127, 0.0
    %v8192 = vmax.f32 %v8128, 0.0
    %v8193 = vmax.f32 %v8129, 0.0
    %v8194 = vmax.f32 %v8130, 0.0
    %v8195 = vmax.f32 %v8131, 0.0
    %v8196 = vmax.f32 %v8132, 0.0
    %v8197 = vmax.f32 %v8133, 0.0
    %v8198 = vmax.f32 %v8134, 0.0
    %v8199 = vmax.f32 %v8135, 0.0
    %v8200 = vmax.f32 %v8136, 0.0
    %v8201 = vmax.f32 %v8137, 0.0
    %v8202 = vmax.f32 %v8138, 0.0
    %v8203 = vmax.f32 %v8139, 0.0
    %v8204 = vmax.f32 %v8140, 0.0
    %v8205 = vmax.f32 %v8141, 0.0
    %v8206 = vmax.f32 %v8142, 0.0
    %v8207 = vmax.f32 %v8143, 0.0
    %v8208 = vmax.f32 %v8144, 0.0
    %v8209 = vmax.f32 %v8145, 0.0
    %v8210 = vmax.f32 %v8146, 0.0
    %v8211 = vmax.f32 %v8147, 0.0
    %v8212 = vmax.f32 %v8148, 0.0
    %v8213 = vmax.f32 %v8149, 0.0
    %v8214 = vmax.f32 %v8150, 0.0
    %v8215 = vmax.f32 %v8151, 0.0
    %v8216 = vmax.f32 %v8152, 0.0
    %v8217 = vmax.f32 %v8153, 0.0
    %v8218 = vmax.f32 %v8154, 0.0
    %v8219 = vmax.f32 %v8155, 0.0
    %v8220 = vmax.f32 %v8156, 0.0
    %v8221 = vmax.f32 %v8157, 0.0
    %v8222 = vmax.f32 %v8158, 0.0
    %v8223 = vmax.f32 %v8159, 0.0
    %v8224 = vmax.f32 %v8160, 0.0
    %v8225 = vmax.f32 %v8161, 0.0
    %v8226 = vmax.f32 %v8162, 0.0
    %v8227 = vmax.f32 %v8163, 0.0
    %v8228 = vmax.f32 %v8164, 0.0
    %v8229 = vmax.f32 %v8165, 0.0
    %v8230 = vmax.f32 %v8166, 0.0
    %v8231 = vmax.f32 %v8167, 0.0
    %v8232 = vmax.f32 %v8168, 0.0
    %v8233 = vmax.f32 %v8169, 0.0
    %v8234 = vmax.f32 %v8170, 0.0
    %v8235 = vld [vmem:[#allocation9] sm:$0xf]
    %v8236 = vld [vmem:[#allocation9 + $0x4] sm:$0xf]
    %v8237 = vld [vmem:[#allocation9 + $0x8] sm:$0xf]
    %v8238 = vld [vmem:[#allocation9 + $0xc] sm:$0xf]
    %v8239 = vld [vmem:[#allocation9 + $0x10] sm:$0xf]
    %v8240 = vld [vmem:[#allocation9 + $0x14] sm:$0xf]
    %v8241 = vld [vmem:[#allocation9 + $0x18] sm:$0xf]
    %v8242 = vld [vmem:[#allocation9 + $0x1c] sm:$0xf]
    %v8243 = vld [vmem:[#allocation9 + $0x20] sm:$0xf]
    %v8244 = vld [vmem:[#allocation9 + $0x24] sm:$0xf]
    %v8245 = vld [vmem:[#allocation9 + $0x28] sm:$0xf]
    %v8246 = vld [vmem:[#allocation9 + $0x2c] sm:$0xf]
    %v8247 = vld [vmem:[#allocation9 + $0x30] sm:$0xf]
    %v8248 = vld [vmem:[#allocation9 + $0x34] sm:$0xf]
    %v8249 = vld [vmem:[#allocation9 + $0x38] sm:$0xf]
    %v8250 = vld [vmem:[#allocation9 + $0x3c] sm:$0xf]
    %v8251 = vunpack.c.l.bf16 %v8235
    %v8252 = vunpack.c.l.bf16 %v8236
    %v8253 = vunpack.c.l.bf16 %v8237
    %v8254 = vunpack.c.l.bf16 %v8238
    %v8255 = vunpack.c.l.bf16 %v8239
    %v8256 = vunpack.c.l.bf16 %v8240
    %v8257 = vunpack.c.l.bf16 %v8241
    %v8258 = vunpack.c.l.bf16 %v8242
    %v8259 = vunpack.c.l.bf16 %v8243
    %v8260 = vunpack.c.l.bf16 %v8244
    %v8261 = vunpack.c.l.bf16 %v8245
    %v8262 = vunpack.c.l.bf16 %v8246
    %v8263 = vunpack.c.l.bf16 %v8247
    %v8264 = vunpack.c.l.bf16 %v8248
    %v8265 = vunpack.c.l.bf16 %v8249
    %v8266 = vunpack.c.l.bf16 %v8250
    %8267 = vmatpush.msra.mxu0 %v8266
    %8268 = vmatpush.msra.mxu0 %v8265
    %8269 = vmatpush.msra.mxu0 %v8264
    %8270 = vmatpush.msra.mxu0 %v8263
    %8271 = vmatpush.msra.mxu0 %v8262
    %8272 = vmatpush.msra.mxu0 %v8261
    %8273 = vmatpush.msra.mxu0 %v8260
    %8274 = vmatpush.msra.mxu0 %v8259
    %8275 = vmatpush.msra.mxu0 %v8258
    %8276 = vmatpush.msra.mxu0 %v8257
    %8277 = vmatpush.msra.mxu0 %v8256
    %8278 = vmatpush.msra.mxu0 %v8255
    %8279 = vmatpush.msra.mxu0 %v8254
    %8280 = vmatpush.msra.mxu0 %v8253
    %8281 = vmatpush.msra.mxu0 %v8252
    %8282 = vmatpush.msra.mxu0 %v8251
    %8283 = vmatmul.f32.gmra.mxu0 %v8171
    %v8284 = vpop.f32.mrf.mxu0
    %v8285 = vadd.f32 0.0, %v8284
    %8286 = vmatmul.f32.gmra.mxu0 %v8172
    %v8287 = vpop.f32.mrf.mxu0
    %v8288 = vadd.f32 0.0, %v8287
    %8289 = vmatmul.f32.gmra.mxu0 %v8173
    %v8290 = vpop.f32.mrf.mxu0
    %v8291 = vadd.f32 0.0, %v8290
    %8292 = vmatmul.f32.gmra.mxu0 %v8174
    %v8293 = vpop.f32.mrf.mxu0
    %v8294 = vadd.f32 0.0, %v8293
    %8295 = vmatmul.f32.gmra.mxu0 %v8175
    %v8296 = vpop.f32.mrf.mxu0
    %v8297 = vadd.f32 0.0, %v8296
    %8298 = vmatmul.f32.gmra.mxu0 %v8176
    %v8299 = vpop.f32.mrf.mxu0
    %v8300 = vadd.f32 0.0, %v8299
    %8301 = vmatmul.f32.gmra.mxu0 %v8177
    %v8302 = vpop.f32.mrf.mxu0
    %v8303 = vadd.f32 0.0, %v8302
    %8304 = vmatmul.f32.gmra.mxu0 %v8178
    %v8305 = vpop.f32.mrf.mxu0
    %v8306 = vadd.f32 0.0, %v8305
    %8307 = vmatmul.f32.gmra.mxu0 %v8179
    %v8308 = vpop.f32.mrf.mxu0
    %v8309 = vadd.f32 0.0, %v8308
    %8310 = vmatmul.f32.gmra.mxu0 %v8180
    %v8311 = vpop.f32.mrf.mxu0
    %v8312 = vadd.f32 0.0, %v8311
    %8313 = vmatmul.f32.gmra.mxu0 %v8181
    %v8314 = vpop.f32.mrf.mxu0
    %v8315 = vadd.f32 0.0, %v8314
    %8316 = vmatmul.f32.gmra.mxu0 %v8182
    %v8317 = vpop.f32.mrf.mxu0
    %v8318 = vadd.f32 0.0, %v8317
    %8319 = vmatmul.f32.gmra.mxu0 %v8183
    %v8320 = vpop.f32.mrf.mxu0
    %v8321 = vadd.f32 0.0, %v8320
    %8322 = vmatmul.f32.gmra.mxu0 %v8184
    %v8323 = vpop.f32.mrf.mxu0
    %v8324 = vadd.f32 0.0, %v8323
    %8325 = vmatmul.f32.gmra.mxu0 %v8185
    %v8326 = vpop.f32.mrf.mxu0
    %v8327 = vadd.f32 0.0, %v8326
    %8328 = vmatmul.f32.gmra.mxu0 %v8186
    %v8329 = vpop.f32.mrf.mxu0
    %v8330 = vadd.f32 0.0, %v8329
    %8331 = vmatmul.f32.gmra.mxu0 %v8187
    %v8332 = vpop.f32.mrf.mxu0
    %v8333 = vadd.f32 0.0, %v8332
    %8334 = vmatmul.f32.gmra.mxu0 %v8188
    %v8335 = vpop.f32.mrf.mxu0
    %v8336 = vadd.f32 0.0, %v8335
    %8337 = vmatmul.f32.gmra.mxu0 %v8189
    %v8338 = vpop.f32.mrf.mxu0
    %v8339 = vadd.f32 0.0, %v8338
    %8340 = vmatmul.f32.gmra.mxu0 %v8190
    %v8341 = vpop.f32.mrf.mxu0
    %v8342 = vadd.f32 0.0, %v8341
    %8343 = vmatmul.f32.gmra.mxu0 %v8191
    %v8344 = vpop.f32.mrf.mxu0
    %v8345 = vadd.f32 0.0, %v8344
    %8346 = vmatmul.f32.gmra.mxu0 %v8192
    %v8347 = vpop.f32.mrf.mxu0
    %v8348 = vadd.f32 0.0, %v8347
    %8349 = vmatmul.f32.gmra.mxu0 %v8193
    %v8350 = vpop.f32.mrf.mxu0
    %v8351 = vadd.f32 0.0, %v8350
    %8352 = vmatmul.f32.gmra.mxu0 %v8194
    %v8353 = vpop.f32.mrf.mxu0
    %v8354 = vadd.f32 0.0, %v8353
    %8355 = vmatmul.f32.gmra.mxu0 %v8195
    %v8356 = vpop.f32.mrf.mxu0
    %v8357 = vadd.f32 0.0, %v8356
    %8358 = vmatmul.f32.gmra.mxu0 %v8196
    %v8359 = vpop.f32.mrf.mxu0
    %v8360 = vadd.f32 0.0, %v8359
    %8361 = vmatmul.f32.gmra.mxu0 %v8197
    %v8362 = vpop.f32.mrf.mxu0
    %v8363 = vadd.f32 0.0, %v8362
    %8364 = vmatmul.f32.gmra.mxu0 %v8198
    %v8365 = vpop.f32.mrf.mxu0
    %v8366 = vadd.f32 0.0, %v8365
    %8367 = vmatmul.f32.gmra.mxu0 %v8199
    %v8368 = vpop.f32.mrf.mxu0
    %v8369 = vadd.f32 0.0, %v8368
    %8370 = vmatmul.f32.gmra.mxu0 %v8200
    %v8371 = vpop.f32.mrf.mxu0
    %v8372 = vadd.f32 0.0, %v8371
    %8373 = vmatmul.f32.gmra.mxu0 %v8201
    %v8374 = vpop.f32.mrf.mxu0
    %v8375 = vadd.f32 0.0, %v8374
    %8376 = vmatmul.f32.gmra.mxu0 %v8202
    %v8377 = vpop.f32.mrf.mxu0
    %v8378 = vadd.f32 0.0, %v8377
    %8379 = vmatmul.f32.gmra.mxu0 %v8203
    %v8380 = vpop.f32.mrf.mxu0
    %v8381 = vadd.f32 0.0, %v8380
    %8382 = vmatmul.f32.gmra.mxu0 %v8204
    %v8383 = vpop.f32.mrf.mxu0
    %v8384 = vadd.f32 0.0, %v8383
    %8385 = vmatmul.f32.gmra.mxu0 %v8205
    %v8386 = vpop.f32.mrf.mxu0
    %v8387 = vadd.f32 0.0, %v8386
    %8388 = vmatmul.f32.gmra.mxu0 %v8206
    %v8389 = vpop.f32.mrf.mxu0
    %v8390 = vadd.f32 0.0, %v8389
    %8391 = vmatmul.f32.gmra.mxu0 %v8207
    %v8392 = vpop.f32.mrf.mxu0
    %v8393 = vadd.f32 0.0, %v8392
    %8394 = vmatmul.f32.gmra.mxu0 %v8208
    %v8395 = vpop.f32.mrf.mxu0
    %v8396 = vadd.f32 0.0, %v8395
    %8397 = vmatmul.f32.gmra.mxu0 %v8209
    %v8398 = vpop.f32.mrf.mxu0
    %v8399 = vadd.f32 0.0, %v8398
    %8400 = vmatmul.f32.gmra.mxu0 %v8210
    %v8401 = vpop.f32.mrf.mxu0
    %v8402 = vadd.f32 0.0, %v8401
    %8403 = vmatmul.f32.gmra.mxu0 %v8211
    %v8404 = vpop.f32.mrf.mxu0
    %v8405 = vadd.f32 0.0, %v8404
    %8406 = vmatmul.f32.gmra.mxu0 %v8212
    %v8407 = vpop.f32.mrf.mxu0
    %v8408 = vadd.f32 0.0, %v8407
    %8409 = vmatmul.f32.gmra.mxu0 %v8213
    %v8410 = vpop.f32.mrf.mxu0
    %v8411 = vadd.f32 0.0, %v8410
    %8412 = vmatmul.f32.gmra.mxu0 %v8214
    %v8413 = vpop.f32.mrf.mxu0
    %v8414 = vadd.f32 0.0, %v8413
    %8415 = vmatmul.f32.gmra.mxu0 %v8215
    %v8416 = vpop.f32.mrf.mxu0
    %v8417 = vadd.f32 0.0, %v8416
    %8418 = vmatmul.f32.gmra.mxu0 %v8216
    %v8419 = vpop.f32.mrf.mxu0
    %v8420 = vadd.f32 0.0, %v8419
    %8421 = vmatmul.f32.gmra.mxu0 %v8217
    %v8422 = vpop.f32.mrf.mxu0
    %v8423 = vadd.f32 0.0, %v8422
    %8424 = vmatmul.f32.gmra.mxu0 %v8218
    %v8425 = vpop.f32.mrf.mxu0
    %v8426 = vadd.f32 0.0, %v8425
    %8427 = vmatmul.f32.gmra.mxu0 %v8219
    %v8428 = vpop.f32.mrf.mxu0
    %v8429 = vadd.f32 0.0, %v8428
    %8430 = vmatmul.f32.gmra.mxu0 %v8220
    %v8431 = vpop.f32.mrf.mxu0
    %v8432 = vadd.f32 0.0, %v8431
    %8433 = vmatmul.f32.gmra.mxu0 %v8221
    %v8434 = vpop.f32.mrf.mxu0
    %v8435 = vadd.f32 0.0, %v8434
    %8436 = vmatmul.f32.gmra.mxu0 %v8222
    %v8437 = vpop.f32.mrf.mxu0
    %v8438 = vadd.f32 0.0, %v8437
    %8439 = vmatmul.f32.gmra.mxu0 %v8223
    %v8440 = vpop.f32.mrf.mxu0
    %v8441 = vadd.f32 0.0, %v8440
    %8442 = vmatmul.f32.gmra.mxu0 %v8224
    %v8443 = vpop.f32.mrf.mxu0
    %v8444 = vadd.f32 0.0, %v8443
    %8445 = vmatmul.f32.gmra.mxu0 %v8225
    %v8446 = vpop.f32.mrf.mxu0
    %v8447 = vadd.f32 0.0, %v8446
    %8448 = vmatmul.f32.gmra.mxu0 %v8226
    %v8449 = vpop.f32.mrf.mxu0
    %v8450 = vadd.f32 0.0, %v8449
    %8451 = vmatmul.f32.gmra.mxu0 %v8227
    %v8452 = vpop.f32.mrf.mxu0
    %v8453 = vadd.f32 0.0, %v8452
    %8454 = vmatmul.f32.gmra.mxu0 %v8228
    %v8455 = vpop.f32.mrf.mxu0
    %v8456 = vadd.f32 0.0, %v8455
    %8457 = vmatmul.f32.gmra.mxu0 %v8229
    %v8458 = vpop.f32.mrf.mxu0
    %v8459 = vadd.f32 0.0, %v8458
    %8460 = vmatmul.f32.gmra.mxu0 %v8230
    %v8461 = vpop.f32.mrf.mxu0
    %v8462 = vadd.f32 0.0, %v8461
    %8463 = vmatmul.f32.gmra.mxu0 %v8231
    %v8464 = vpop.f32.mrf.mxu0
    %v8465 = vadd.f32 0.0, %v8464
    %8466 = vmatmul.f32.gmra.mxu0 %v8232
    %v8467 = vpop.f32.mrf.mxu0
    %v8468 = vadd.f32 0.0, %v8467
    %8469 = vmatmul.f32.gmra.mxu0 %v8233
    %v8470 = vpop.f32.mrf.mxu0
    %v8471 = vadd.f32 0.0, %v8470
    %8472 = vmatmul.f32.gmra.mxu0 %v8234
    %v8473 = vpop.f32.mrf.mxu0
    %v8474 = vadd.f32 0.0, %v8473
    %8475 = vdwg.mxu0
    %v8476 = vld [vmem:[%s8] sm:$0x1]
    %v8477 = vld [vmem:[%s9] sm:$0x1]
    %v8478 = vadd.f32 %v8285, %v8288
    %v8479 = vadd.f32 %v8478, %v8291
    %v8480 = vadd.f32 %v8479, %v8294
    %v8481 = vadd.f32 %v8480, %v8297
    %v8482 = vadd.f32 %v8481, %v8300
    %v8483 = vadd.f32 %v8482, %v8303
    %v8484 = vadd.f32 %v8483, %v8306
    %v8485 = vadd.f32 %v8484, %v8309
    %v8486 = vadd.f32 %v8485, %v8312
    %v8487 = vadd.f32 %v8486, %v8315
    %v8488 = vadd.f32 %v8487, %v8318
    %v8489 = vadd.f32 %v8488, %v8321
    %v8490 = vadd.f32 %v8489, %v8324
    %v8491 = vadd.f32 %v8490, %v8327
    %v8492 = vadd.f32 %v8491, %v8330
    %v8493 = vadd.f32 %v8492, %v8333
    %v8494 = vadd.f32 %v8493, %v8336
    %v8495 = vadd.f32 %v8494, %v8339
    %v8496 = vadd.f32 %v8495, %v8342
    %v8497 = vadd.f32 %v8496, %v8345
    %v8498 = vadd.f32 %v8497, %v8348
    %v8499 = vadd.f32 %v8498, %v8351
    %v8500 = vadd.f32 %v8499, %v8354
    %v8501 = vadd.f32 %v8500, %v8357
    %v8502 = vadd.f32 %v8501, %v8360
    %v8503 = vadd.f32 %v8502, %v8363
    %v8504 = vadd.f32 %v8503, %v8366
    %v8505 = vadd.f32 %v8504, %v8369
    %v8506 = vadd.f32 %v8505, %v8372
    %v8507 = vadd.f32 %v8506, %v8375
    %v8508 = vadd.f32 %v8507, %v8378
    %v8509 = vadd.f32 %v8508, %v8381
    %v8510 = vadd.f32 %v8509, %v8384
    %v8511 = vadd.f32 %v8510, %v8387
    %v8512 = vadd.f32 %v8511, %v8390
    %v8513 = vadd.f32 %v8512, %v8393
    %v8514 = vadd.f32 %v8513, %v8396
    %v8515 = vadd.f32 %v8514, %v8399
    %v8516 = vadd.f32 %v8515, %v8402
    %v8517 = vadd.f32 %v8516, %v8405
    %v8518 = vadd.f32 %v8517, %v8408
    %v8519 = vadd.f32 %v8518, %v8411
    %v8520 = vadd.f32 %v8519, %v8414
    %v8521 = vadd.f32 %v8520, %v8417
    %v8522 = vadd.f32 %v8521, %v8420
    %v8523 = vadd.f32 %v8522, %v8423
    %v8524 = vadd.f32 %v8523, %v8426
    %v8525 = vadd.f32 %v8524, %v8429
    %v8526 = vadd.f32 %v8525, %v8432
    %v8527 = vadd.f32 %v8526, %v8435
    %v8528 = vadd.f32 %v8527, %v8438
    %v8529 = vadd.f32 %v8528, %v8441
    %v8530 = vadd.f32 %v8529, %v8444
    %v8531 = vadd.f32 %v8530, %v8447
    %v8532 = vadd.f32 %v8531, %v8450
    %v8533 = vadd.f32 %v8532, %v8453
    %v8534 = vadd.f32 %v8533, %v8456
    %v8535 = vadd.f32 %v8534, %v8459
    %v8536 = vadd.f32 %v8535, %v8462
    %v8537 = vadd.f32 %v8536, %v8465
    %v8538 = vadd.f32 %v8537, %v8468
    %v8539 = vadd.f32 %v8538, %v8471
    %v8540 = vadd.f32 %v8539, %v8474
    %v8541 = vrot.slane %v8540, 4
    %v8542 = vadd.f32 %v8540, %v8541
    %v8543 = vrot.slane %v8542, 2
    %v8544 = vadd.f32 %v8542, %v8543
    %v8545 = vrot.slane %v8544, 1
    %v8546 = vadd.f32 %v8544, %v8545
    %v8547 = vmul.f32 %v8546, %v481
    %v8548 = vmul.f32 %v8285, %v8285
    %v8549 = vmul.f32 %v8288, %v8288
    %v8550 = vmul.f32 %v8291, %v8291
    %v8551 = vmul.f32 %v8294, %v8294
    %v8552 = vmul.f32 %v8297, %v8297
    %v8553 = vmul.f32 %v8300, %v8300
    %v8554 = vmul.f32 %v8303, %v8303
    %v8555 = vmul.f32 %v8306, %v8306
    %v8556 = vmul.f32 %v8309, %v8309
    %v8557 = vmul.f32 %v8312, %v8312
    %v8558 = vmul.f32 %v8315, %v8315
    %v8559 = vmul.f32 %v8318, %v8318
    %v8560 = vmul.f32 %v8321, %v8321
    %v8561 = vmul.f32 %v8324, %v8324
    %v8562 = vmul.f32 %v8327, %v8327
    %v8563 = vmul.f32 %v8330, %v8330
    %v8564 = vmul.f32 %v8333, %v8333
    %v8565 = vmul.f32 %v8336, %v8336
    %v8566 = vmul.f32 %v8339, %v8339
    %v8567 = vmul.f32 %v8342, %v8342
    %v8568 = vmul.f32 %v8345, %v8345
    %v8569 = vmul.f32 %v8348, %v8348
    %v8570 = vmul.f32 %v8351, %v8351
    %v8571 = vmul.f32 %v8354, %v8354
    %v8572 = vmul.f32 %v8357, %v8357
    %v8573 = vmul.f32 %v8360, %v8360
    %v8574 = vmul.f32 %v8363, %v8363
    %v8575 = vmul.f32 %v8366, %v8366
    %v8576 = vmul.f32 %v8369, %v8369
    %v8577 = vmul.f32 %v8372, %v8372
    %v8578 = vmul.f32 %v8375, %v8375
    %v8579 = vmul.f32 %v8378, %v8378
    %v8580 = vmul.f32 %v8381, %v8381
    %v8581 = vmul.f32 %v8384, %v8384
    %v8582 = vmul.f32 %v8387, %v8387
    %v8583 = vmul.f32 %v8390, %v8390
    %v8584 = vmul.f32 %v8393, %v8393
    %v8585 = vmul.f32 %v8396, %v8396
    %v8586 = vmul.f32 %v8399, %v8399
    %v8587 = vmul.f32 %v8402, %v8402
    %v8588 = vmul.f32 %v8405, %v8405
    %v8589 = vmul.f32 %v8408, %v8408
    %v8590 = vmul.f32 %v8411, %v8411
    %v8591 = vmul.f32 %v8414, %v8414
    %v8592 = vmul.f32 %v8417, %v8417
    %v8593 = vmul.f32 %v8420, %v8420
    %v8594 = vmul.f32 %v8423, %v8423
    %v8595 = vmul.f32 %v8426, %v8426
    %v8596 = vmul.f32 %v8429, %v8429
    %v8597 = vmul.f32 %v8432, %v8432
    %v8598 = vmul.f32 %v8435, %v8435
    %v8599 = vmul.f32 %v8438, %v8438
    %v8600 = vmul.f32 %v8441, %v8441
    %v8601 = vmul.f32 %v8444, %v8444
    %v8602 = vmul.f32 %v8447, %v8447
    %v8603 = vmul.f32 %v8450, %v8450
    %v8604 = vmul.f32 %v8453, %v8453
    %v8605 = vmul.f32 %v8456, %v8456
    %v8606 = vmul.f32 %v8459, %v8459
    %v8607 = vmul.f32 %v8462, %v8462
    %v8608 = vmul.f32 %v8465, %v8465
    %v8609 = vmul.f32 %v8468, %v8468
    %v8610 = vmul.f32 %v8471, %v8471
    %v8611 = vmul.f32 %v8474, %v8474
    %v8612 = vadd.f32 %v8548, %v8549
    %v8613 = vadd.f32 %v8612, %v8550
    %v8614 = vadd.f32 %v8613, %v8551
    %v8615 = vadd.f32 %v8614, %v8552
    %v8616 = vadd.f32 %v8615, %v8553
    %v8617 = vadd.f32 %v8616, %v8554
    %v8618 = vadd.f32 %v8617, %v8555
    %v8619 = vadd.f32 %v8618, %v8556
    %v8620 = vadd.f32 %v8619, %v8557
    %v8621 = vadd.f32 %v8620, %v8558
    %v8622 = vadd.f32 %v8621, %v8559
    %v8623 = vadd.f32 %v8622, %v8560
    %v8624 = vadd.f32 %v8623, %v8561
    %v8625 = vadd.f32 %v8624, %v8562
    %v8626 = vadd.f32 %v8625, %v8563
    %v8627 = vadd.f32 %v8626, %v8564
    %v8628 = vadd.f32 %v8627, %v8565
    %v8629 = vadd.f32 %v8628, %v8566
    %v8630 = vadd.f32 %v8629, %v8567
    %v8631 = vadd.f32 %v8630, %v8568
    %v8632 = vadd.f32 %v8631, %v8569
    %v8633 = vadd.f32 %v8632, %v8570
    %v8634 = vadd.f32 %v8633, %v8571
    %v8635 = vadd.f32 %v8634, %v8572
    %v8636 = vadd.f32 %v8635, %v8573
    %v8637 = vadd.f32 %v8636, %v8574
    %v8638 = vadd.f32 %v8637, %v8575
    %v8639 = vadd.f32 %v8638, %v8576
    %v8640 = vadd.f32 %v8639, %v8577
    %v8641 = vadd.f32 %v8640, %v8578
    %v8642 = vadd.f32 %v8641, %v8579
    %v8643 = vadd.f32 %v8642, %v8580
    %v8644 = vadd.f32 %v8643, %v8581
    %v8645 = vadd.f32 %v8644, %v8582
    %v8646 = vadd.f32 %v8645, %v8583
    %v8647 = vadd.f32 %v8646, %v8584
    %v8648 = vadd.f32 %v8647, %v8585
    %v8649 = vadd.f32 %v8648, %v8586
    %v8650 = vadd.f32 %v8649, %v8587
    %v8651 = vadd.f32 %v8650, %v8588
    %v8652 = vadd.f32 %v8651, %v8589
    %v8653 = vadd.f32 %v8652, %v8590
    %v8654 = vadd.f32 %v8653, %v8591
    %v8655 = vadd.f32 %v8654, %v8592
    %v8656 = vadd.f32 %v8655, %v8593
    %v8657 = vadd.f32 %v8656, %v8594
    %v8658 = vadd.f32 %v8657, %v8595
    %v8659 = vadd.f32 %v8658, %v8596
    %v8660 = vadd.f32 %v8659, %v8597
    %v8661 = vadd.f32 %v8660, %v8598
    %v8662 = vadd.f32 %v8661, %v8599
    %v8663 = vadd.f32 %v8662, %v8600
    %v8664 = vadd.f32 %v8663, %v8601
    %v8665 = vadd.f32 %v8664, %v8602
    %v8666 = vadd.f32 %v8665, %v8603
    %v8667 = vadd.f32 %v8666, %v8604
    %v8668 = vadd.f32 %v8667, %v8605
    %v8669 = vadd.f32 %v8668, %v8606
    %v8670 = vadd.f32 %v8669, %v8607
    %v8671 = vadd.f32 %v8670, %v8608
    %v8672 = vadd.f32 %v8671, %v8609
    %v8673 = vadd.f32 %v8672, %v8610
    %v8674 = vadd.f32 %v8673, %v8611
    %v8675 = vrot.slane %v8674, 4
    %v8676 = vadd.f32 %v8674, %v8675
    %v8677 = vrot.slane %v8676, 2
    %v8678 = vadd.f32 %v8676, %v8677
    %v8679 = vrot.slane %v8678, 1
    %v8680 = vadd.f32 %v8678, %v8679
    %v8681 = vmul.f32 %v8680, %v481
    %v8682 = vmul.f32 %v8547, %v8547
    %v8683 = vsub.f32 %v8681, %v8682
    %v8684 = vadd.f32 %v8683, 1e-05
    %v8685 = vrsqrt.pop %v8684
    %v8686 = vmul.f32 %v8685, %v8684
    %v8687 = vmul.f32 %v8686, %v8685
    %v8688 = vmul.f32 0.5, %v8687
    %v8689 = vsub.f32 1.5, %v8688
    %v8690 = vmul.f32 %v8685, %v8689
    %vm8691 = vweird.f32 %v8684
    %vm8692 = vweird.f32 %v8685
    %vm8693 = vmor %vm8691, %vm8692
    %v8694 = vsel %vm8693, %v8685, %v8690
    %v8695 = vmul.f32 %v8476, %v8694
    %v8696 = vmul.f32 %v8547, %v8695
    %v8697 = vsub.f32 %v8477, %v8696
    %v8699 = vperm.slane %v8695, 0
    %v8701 = vmul.f32 %v8285, %v8699
    %v8702 = vmul.f32 %v8288, %v8699
    %v8703 = vmul.f32 %v8291, %v8699
    %v8704 = vmul.f32 %v8294, %v8699
    %v8705 = vmul.f32 %v8297, %v8699
    %v8706 = vmul.f32 %v8300, %v8699
    %v8707 = vmul.f32 %v8303, %v8699
    %v8708 = vmul.f32 %v8306, %v8699
    %v8709 = vmul.f32 %v8309, %v8699
    %v8710 = vmul.f32 %v8312, %v8699
    %v8711 = vmul.f32 %v8315, %v8699
    %v8712 = vmul.f32 %v8318, %v8699
    %v8713 = vmul.f32 %v8321, %v8699
    %v8714 = vmul.f32 %v8324, %v8699
    %v8715 = vmul.f32 %v8327, %v8699
    %v8716 = vmul.f32 %v8330, %v8699
    %v8717 = vmul.f32 %v8333, %v8699
    %v8718 = vmul.f32 %v8336, %v8699
    %v8719 = vmul.f32 %v8339, %v8699
    %v8720 = vmul.f32 %v8342, %v8699
    %v8721 = vmul.f32 %v8345, %v8699
    %v8722 = vmul.f32 %v8348, %v8699
    %v8723 = vmul.f32 %v8351, %v8699
    %v8724 = vmul.f32 %v8354, %v8699
    %v8725 = vmul.f32 %v8357, %v8699
    %v8726 = vmul.f32 %v8360, %v8699
    %v8727 = vmul.f32 %v8363, %v8699
    %v8728 = vmul.f32 %v8366, %v8699
    %v8729 = vmul.f32 %v8369, %v8699
    %v8730 = vmul.f32 %v8372, %v8699
    %v8731 = vmul.f32 %v8375, %v8699
    %v8732 = vmul.f32 %v8378, %v8699
    %v8733 = vmul.f32 %v8381, %v8699
    %v8734 = vmul.f32 %v8384, %v8699
    %v8735 = vmul.f32 %v8387, %v8699
    %v8736 = vmul.f32 %v8390, %v8699
    %v8737 = vmul.f32 %v8393, %v8699
    %v8738 = vmul.f32 %v8396, %v8699
    %v8739 = vmul.f32 %v8399, %v8699
    %v8740 = vmul.f32 %v8402, %v8699
    %v8741 = vmul.f32 %v8405, %v8699
    %v8742 = vmul.f32 %v8408, %v8699
    %v8743 = vmul.f32 %v8411, %v8699
    %v8744 = vmul.f32 %v8414, %v8699
    %v8745 = vmul.f32 %v8417, %v8699
    %v8746 = vmul.f32 %v8420, %v8699
    %v8747 = vmul.f32 %v8423, %v8699
    %v8748 = vmul.f32 %v8426, %v8699
    %v8749 = vmul.f32 %v8429, %v8699
    %v8750 = vmul.f32 %v8432, %v8699
    %v8751 = vmul.f32 %v8435, %v8699
    %v8752 = vmul.f32 %v8438, %v8699
    %v8753 = vmul.f32 %v8441, %v8699
    %v8754 = vmul.f32 %v8444, %v8699
    %v8755 = vmul.f32 %v8447, %v8699
    %v8756 = vmul.f32 %v8450, %v8699
    %v8757 = vmul.f32 %v8453, %v8699
    %v8758 = vmul.f32 %v8456, %v8699
    %v8759 = vmul.f32 %v8459, %v8699
    %v8760 = vmul.f32 %v8462, %v8699
    %v8761 = vmul.f32 %v8465, %v8699
    %v8762 = vmul.f32 %v8468, %v8699
    %v8763 = vmul.f32 %v8471, %v8699
    %v8764 = vmul.f32 %v8474, %v8699
    %v8766 = vperm.slane %v8697, 0
    %v8768 = vadd.f32 %v8701, %v8766
    %v8769 = vadd.f32 %v8702, %v8766
    %v8770 = vadd.f32 %v8703, %v8766
    %v8771 = vadd.f32 %v8704, %v8766
    %v8772 = vadd.f32 %v8705, %v8766
    %v8773 = vadd.f32 %v8706, %v8766
    %v8774 = vadd.f32 %v8707, %v8766
    %v8775 = vadd.f32 %v8708, %v8766
    %v8776 = vadd.f32 %v8709, %v8766
    %v8777 = vadd.f32 %v8710, %v8766
    %v8778 = vadd.f32 %v8711, %v8766
    %v8779 = vadd.f32 %v8712, %v8766
    %v8780 = vadd.f32 %v8713, %v8766
    %v8781 = vadd.f32 %v8714, %v8766
    %v8782 = vadd.f32 %v8715, %v8766
    %v8783 = vadd.f32 %v8716, %v8766
    %v8784 = vadd.f32 %v8717, %v8766
    %v8785 = vadd.f32 %v8718, %v8766
    %v8786 = vadd.f32 %v8719, %v8766
    %v8787 = vadd.f32 %v8720, %v8766
    %v8788 = vadd.f32 %v8721, %v8766
    %v8789 = vadd.f32 %v8722, %v8766
    %v8790 = vadd.f32 %v8723, %v8766
    %v8791 = vadd.f32 %v8724, %v8766
    %v8792 = vadd.f32 %v8725, %v8766
    %v8793 = vadd.f32 %v8726, %v8766
    %v8794 = vadd.f32 %v8727, %v8766
    %v8795 = vadd.f32 %v8728, %v8766
    %v8796 = vadd.f32 %v8729, %v8766
    %v8797 = vadd.f32 %v8730, %v8766
    %v8798 = vadd.f32 %v8731, %v8766
    %v8799 = vadd.f32 %v8732, %v8766
    %v8800 = vadd.f32 %v8733, %v8766
    %v8801 = vadd.f32 %v8734, %v8766
    %v8802 = vadd.f32 %v8735, %v8766
    %v8803 = vadd.f32 %v8736, %v8766
    %v8804 = vadd.f32 %v8737, %v8766
    %v8805 = vadd.f32 %v8738, %v8766
    %v8806 = vadd.f32 %v8739, %v8766
    %v8807 = vadd.f32 %v8740, %v8766
    %v8808 = vadd.f32 %v8741, %v8766
    %v8809 = vadd.f32 %v8742, %v8766
    %v8810 = vadd.f32 %v8743, %v8766
    %v8811 = vadd.f32 %v8744, %v8766
    %v8812 = vadd.f32 %v8745, %v8766
    %v8813 = vadd.f32 %v8746, %v8766
    %v8814 = vadd.f32 %v8747, %v8766
    %v8815 = vadd.f32 %v8748, %v8766
    %v8816 = vadd.f32 %v8749, %v8766
    %v8817 = vadd.f32 %v8750, %v8766
    %v8818 = vadd.f32 %v8751, %v8766
    %v8819 = vadd.f32 %v8752, %v8766
    %v8820 = vadd.f32 %v8753, %v8766
    %v8821 = vadd.f32 %v8754, %v8766
    %v8822 = vadd.f32 %v8755, %v8766
    %v8823 = vadd.f32 %v8756, %v8766
    %v8824 = vadd.f32 %v8757, %v8766
    %v8825 = vadd.f32 %v8758, %v8766
    %v8826 = vadd.f32 %v8759, %v8766
    %v8827 = vadd.f32 %v8760, %v8766
    %v8828 = vadd.f32 %v8761, %v8766
    %v8829 = vadd.f32 %v8762, %v8766
    %v8830 = vadd.f32 %v8763, %v8766
    %v8831 = vadd.f32 %v8764, %v8766
    %v8832 = vadd.f32 %v8768, %v99
    %v8833 = vadd.f32 %v8769, %v100
    %v8834 = vadd.f32 %v8770, %v101
    %v8835 = vadd.f32 %v8771, %v102
    %v8836 = vadd.f32 %v8772, %v103
    %v8837 = vadd.f32 %v8773, %v104
    %v8838 = vadd.f32 %v8774, %v105
    %v8839 = vadd.f32 %v8775, %v106
    %v8840 = vadd.f32 %v8776, %v107
    %v8841 = vadd.f32 %v8777, %v108
    %v8842 = vadd.f32 %v8778, %v109
    %v8843 = vadd.f32 %v8779, %v110
    %v8844 = vadd.f32 %v8780, %v111
    %v8845 = vadd.f32 %v8781, %v112
    %v8846 = vadd.f32 %v8782, %v113
    %v8847 = vadd.f32 %v8783, %v114
    %v8848 = vadd.f32 %v8784, %v115
    %v8849 = vadd.f32 %v8785, %v116
    %v8850 = vadd.f32 %v8786, %v117
    %v8851 = vadd.f32 %v8787, %v118
    %v8852 = vadd.f32 %v8788, %v119
    %v8853 = vadd.f32 %v8789, %v120
    %v8854 = vadd.f32 %v8790, %v121
    %v8855 = vadd.f32 %v8791, %v122
    %v8856 = vadd.f32 %v8792, %v123
    %v8857 = vadd.f32 %v8793, %v124
    %v8858 = vadd.f32 %v8794, %v125
    %v8859 = vadd.f32 %v8795, %v126
    %v8860 = vadd.f32 %v8796, %v127
    %v8861 = vadd.f32 %v8797, %v128
    %v8862 = vadd.f32 %v8798, %v129
    %v8863 = vadd.f32 %v8799, %v130
    %v8864 = vadd.f32 %v8800, %v131
    %v8865 = vadd.f32 %v8801, %v132
    %v8866 = vadd.f32 %v8802, %v133
    %v8867 = vadd.f32 %v8803, %v134
    %v8868 = vadd.f32 %v8804, %v135
    %v8869 = vadd.f32 %v8805, %v136
    %v8870 = vadd.f32 %v8806, %v137
    %v8871 = vadd.f32 %v8807, %v138
    %v8872 = vadd.f32 %v8808, %v139
    %v8873 = vadd.f32 %v8809, %v140
    %v8874 = vadd.f32 %v8810, %v141
    %v8875 = vadd.f32 %v8811, %v142
    %v8876 = vadd.f32 %v8812, %v143
    %v8877 = vadd.f32 %v8813, %v144
    %v8878 = vadd.f32 %v8814, %v145
    %v8879 = vadd.f32 %v8815, %v146
    %v8880 = vadd.f32 %v8816, %v147
    %v8881 = vadd.f32 %v8817, %v148
    %v8882 = vadd.f32 %v8818, %v149
    %v8883 = vadd.f32 %v8819, %v150
    %v8884 = vadd.f32 %v8820, %v151
    %v8885 = vadd.f32 %v8821, %v152
    %v8886 = vadd.f32 %v8822, %v153
    %v8887 = vadd.f32 %v8823, %v154
    %v8888 = vadd.f32 %v8824, %v155
    %v8889 = vadd.f32 %v8825, %v156
    %v8890 = vadd.f32 %v8826, %v157
    %v8891 = vadd.f32 %v8827, %v158
    %v8892 = vadd.f32 %v8828, %v159
    %v8893 = vadd.f32 %v8829, %v160
    %v8894 = vadd.f32 %v8830, %v161
    %v8895 = vadd.f32 %v8831, %v162
    %v8896 = vmax.f32 %v8832, 0.0
    %v8897 = vmax.f32 %v8833, 0.0
    %v8898 = vmax.f32 %v8834, 0.0
    %v8899 = vmax.f32 %v8835, 0.0
    %v8900 = vmax.f32 %v8836, 0.0
    %v8901 = vmax.f32 %v8837, 0.0
    %v8902 = vmax.f32 %v8838, 0.0
    %v8903 = vmax.f32 %v8839, 0.0
    %v8904 = vmax.f32 %v8840, 0.0
    %v8905 = vmax.f32 %v8841, 0.0
    %v8906 = vmax.f32 %v8842, 0.0
    %v8907 = vmax.f32 %v8843, 0.0
    %v8908 = vmax.f32 %v8844, 0.0
    %v8909 = vmax.f32 %v8845, 0.0
    %v8910 = vmax.f32 %v8846, 0.0
    %v8911 = vmax.f32 %v8847, 0.0
    %v8912 = vmax.f32 %v8848, 0.0
    %v8913 = vmax.f32 %v8849, 0.0
    %v8914 = vmax.f32 %v8850, 0.0
    %v8915 = vmax.f32 %v8851, 0.0
    %v8916 = vmax.f32 %v8852, 0.0
    %v8917 = vmax.f32 %v8853, 0.0
    %v8918 = vmax.f32 %v8854, 0.0
    %v8919 = vmax.f32 %v8855, 0.0
    %v8920 = vmax.f32 %v8856, 0.0
    %v8921 = vmax.f32 %v8857, 0.0
    %v8922 = vmax.f32 %v8858, 0.0
    %v8923 = vmax.f32 %v8859, 0.0
    %v8924 = vmax.f32 %v8860, 0.0
    %v8925 = vmax.f32 %v8861, 0.0
    %v8926 = vmax.f32 %v8862, 0.0
    %v8927 = vmax.f32 %v8863, 0.0
    %v8928 = vmax.f32 %v8864, 0.0
    %v8929 = vmax.f32 %v8865, 0.0
    %v8930 = vmax.f32 %v8866, 0.0
    %v8931 = vmax.f32 %v8867, 0.0
    %v8932 = vmax.f32 %v8868, 0.0
    %v8933 = vmax.f32 %v8869, 0.0
    %v8934 = vmax.f32 %v8870, 0.0
    %v8935 = vmax.f32 %v8871, 0.0
    %v8936 = vmax.f32 %v8872, 0.0
    %v8937 = vmax.f32 %v8873, 0.0
    %v8938 = vmax.f32 %v8874, 0.0
    %v8939 = vmax.f32 %v8875, 0.0
    %v8940 = vmax.f32 %v8876, 0.0
    %v8941 = vmax.f32 %v8877, 0.0
    %v8942 = vmax.f32 %v8878, 0.0
    %v8943 = vmax.f32 %v8879, 0.0
    %v8944 = vmax.f32 %v8880, 0.0
    %v8945 = vmax.f32 %v8881, 0.0
    %v8946 = vmax.f32 %v8882, 0.0
    %v8947 = vmax.f32 %v8883, 0.0
    %v8948 = vmax.f32 %v8884, 0.0
    %v8949 = vmax.f32 %v8885, 0.0
    %v8950 = vmax.f32 %v8886, 0.0
    %v8951 = vmax.f32 %v8887, 0.0
    %v8952 = vmax.f32 %v8888, 0.0
    %v8953 = vmax.f32 %v8889, 0.0
    %v8954 = vmax.f32 %v8890, 0.0
    %v8955 = vmax.f32 %v8891, 0.0
    %v8956 = vmax.f32 %v8892, 0.0
    %v8957 = vmax.f32 %v8893, 0.0
    %v8958 = vmax.f32 %v8894, 0.0
    %v8959 = vmax.f32 %v8895, 0.0
    %8960 = vst [vmem:[#allocation11] sm:$0xff] %v8896
    %8961 = vst [vmem:[#allocation11 + $0x8] sm:$0xff] %v8897
    %8962 = vst [vmem:[#allocation11 + $0x10] sm:$0xff] %v8898
    %8963 = vst [vmem:[#allocation11 + $0x18] sm:$0xff] %v8899
    %8964 = vst [vmem:[#allocation11 + $0x20] sm:$0xff] %v8900
    %8965 = vst [vmem:[#allocation11 + $0x28] sm:$0xff] %v8901
    %8966 = vst [vmem:[#allocation11 + $0x30] sm:$0xff] %v8902
    %8967 = vst [vmem:[#allocation11 + $0x38] sm:$0xff] %v8903
    %8968 = vst [vmem:[#allocation11 + $0x40] sm:$0xff] %v8904
    %8969 = vst [vmem:[#allocation11 + $0x48] sm:$0xff] %v8905
    %8970 = vst [vmem:[#allocation11 + $0x50] sm:$0xff] %v8906
    %8971 = vst [vmem:[#allocation11 + $0x58] sm:$0xff] %v8907
    %8972 = vst [vmem:[#allocation11 + $0x60] sm:$0xff] %v8908
    %8973 = vst [vmem:[#allocation11 + $0x68] sm:$0xff] %v8909
    %8974 = vst [vmem:[#allocation11 + $0x70] sm:$0xff] %v8910
    %8975 = vst [vmem:[#allocation11 + $0x78] sm:$0xff] %v8911
    %8976 = vst [vmem:[#allocation11 + $0x80] sm:$0xff] %v8912
    %8977 = vst [vmem:[#allocation11 + $0x88] sm:$0xff] %v8913
    %8978 = vst [vmem:[#allocation11 + $0x90] sm:$0xff] %v8914
    %8979 = vst [vmem:[#allocation11 + $0x98] sm:$0xff] %v8915
    %8980 = vst [vmem:[#allocation11 + $0xa0] sm:$0xff] %v8916
    %8981 = vst [vmem:[#allocation11 + $0xa8] sm:$0xff] %v8917
    %8982 = vst [vmem:[#allocation11 + $0xb0] sm:$0xff] %v8918
    %8983 = vst [vmem:[#allocation11 + $0xb8] sm:$0xff] %v8919
    %8984 = vst [vmem:[#allocation11 + $0xc0] sm:$0xff] %v8920
    %8985 = vst [vmem:[#allocation11 + $0xc8] sm:$0xff] %v8921
    %8986 = vst [vmem:[#allocation11 + $0xd0] sm:$0xff] %v8922
    %8987 = vst [vmem:[#allocation11 + $0xd8] sm:$0xff] %v8923
    %8988 = vst [vmem:[#allocation11 + $0xe0] sm:$0xff] %v8924
    %8989 = vst [vmem:[#allocation11 + $0xe8] sm:$0xff] %v8925
    %8990 = vst [vmem:[#allocation11 + $0xf0] sm:$0xff] %v8926
    %8991 = vst [vmem:[#allocation11 + $0xf8] sm:$0xff] %v8927
    %8992 = vst [vmem:[#allocation11 + $0x100] sm:$0xff] %v8928
    %8993 = vst [vmem:[#allocation11 + $0x108] sm:$0xff] %v8929
    %8994 = vst [vmem:[#allocation11 + $0x110] sm:$0xff] %v8930
    %8995 = vst [vmem:[#allocation11 + $0x118] sm:$0xff] %v8931
    %8996 = vst [vmem:[#allocation11 + $0x120] sm:$0xff] %v8932
    %8997 = vst [vmem:[#allocation11 + $0x128] sm:$0xff] %v8933
    %8998 = vst [vmem:[#allocation11 + $0x130] sm:$0xff] %v8934
    %8999 = vst [vmem:[#allocation11 + $0x138] sm:$0xff] %v8935
    %9000 = vst [vmem:[#allocation11 + $0x140] sm:$0xff] %v8936
    %9001 = vst [vmem:[#allocation11 + $0x148] sm:$0xff] %v8937
    %9002 = vst [vmem:[#allocation11 + $0x150] sm:$0xff] %v8938
    %9003 = vst [vmem:[#allocation11 + $0x158] sm:$0xff] %v8939
    %9004 = vst [vmem:[#allocation11 + $0x160] sm:$0xff] %v8940
    %9005 = vst [vmem:[#allocation11 + $0x168] sm:$0xff] %v8941
    %9006 = vst [vmem:[#allocation11 + $0x170] sm:$0xff] %v8942
    %9007 = vst [vmem:[#allocation11 + $0x178] sm:$0xff] %v8943
    %9008 = vst [vmem:[#allocation11 + $0x180] sm:$0xff] %v8944
    %9009 = vst [vmem:[#allocation11 + $0x188] sm:$0xff] %v8945
    %9010 = vst [vmem:[#allocation11 + $0x190] sm:$0xff] %v8946
    %9011 = vst [vmem:[#allocation11 + $0x198] sm:$0xff] %v8947
    %9012 = vst [vmem:[#allocation11 + $0x1a0] sm:$0xff] %v8948
    %9013 = vst [vmem:[#allocation11 + $0x1a8] sm:$0xff] %v8949
    %9014 = vst [vmem:[#allocation11 + $0x1b0] sm:$0xff] %v8950
    %9015 = vst [vmem:[#allocation11 + $0x1b8] sm:$0xff] %v8951
    %9016 = vst [vmem:[#allocation11 + $0x1c0] sm:$0xff] %v8952
    %9017 = vst [vmem:[#allocation11 + $0x1c8] sm:$0xff] %v8953
    %9018 = vst [vmem:[#allocation11 + $0x1d0] sm:$0xff] %v8954
    %9019 = vst [vmem:[#allocation11 + $0x1d8] sm:$0xff] %v8955
    %9020 = vst [vmem:[#allocation11 + $0x1e0] sm:$0xff] %v8956
    %9021 = vst [vmem:[#allocation11 + $0x1e8] sm:$0xff] %v8957
    %9022 = vst [vmem:[#allocation11 + $0x1f0] sm:$0xff] %v8958
    %9023 = vst [vmem:[#allocation11 + $0x1f8] sm:$0xff] %v8959
    // Predicated region
    $region58: #{tpu_custom_call.1} parent=1 // pred_check
      _
    $region59: #{tpu_custom_call.1} parent=1 // pred_check_branch
      %9025 = sbr.rel (0) target = $region61
    $region60: #{tpu_custom_call.1} parent=1 // pred_region
      %9027 = vsyncadd [#allocation5], 0
      %s9028 = sshll.u32 [#allocation11], 4
      %s9029 = int_to_ptr.vmem [resolvable:$true] %s9028
      %s9030 = sshll.u32 %s10, 4
      %s9031 = int_to_ptr.hbm [resolvable:$true] %s9030
      %9036 = dma.vmem_to_hbm [thread:$0]  %s9029, 8192, %s9031, [#allocation5], 128, 128, 8
    $region61: #{tpu_custom_call.1} parent=1 // pred_fallthru
      _
    // Predicated region
    $region62: #{tpu_custom_call.1} parent=1 // pred_check
      _
    $region63: #{tpu_custom_call.1} parent=1 // pred_check_branch
      %9038 = sbr.rel (0) target = $region65
    $region64: #{tpu_custom_call.1} parent=1 // pred_region
      %9040 = dma.done [#allocation5], 8192
    $region65: #{tpu_custom_call.1} parent=1 // pred_fallthru
      _
    %9041 = vsyncpa [#allocation4], 1
    %9042 = vsyncpa [#allocation7], 1
    %9043 = vsyncpa [#allocation10], 1
    %9044 = vsyncpa [#allocation5], 1

</llo_original>
